<compile_context>
chip_gen: v7x
topology: tpu7x:2x2x1
jax: 0.10.0
libtpu: 0.0.40
codegen_flags: <defaults>
</compile_context>

<pallas_src>
import jax
import jax.numpy as jnp
from jax.experimental import pallas as pl
from jax.experimental.pallas import tpu as pltpu

# ----- module hyper-parameters (d is the free input dim in the reference) ---
D = 8            # `d` in the PyTorch script (input feature dim for z / omega)
EMB = 3          # embedding_dim
H = 70           # f1 / f3 hidden width
H2 = 30          # f2 hidden width

WPAD = 128       # packed weight slab width (feature axis, zero padded)
NLAYERS = 7      # 3 fused (f1 || f2) layers + 4 f3 layers

# ReLU behavior per fused layer:
#   layers 0,1: full ReLU (f1 and f2 both have ReLU)
#   layer  2  : ReLU only on f1's 70 columns (f2's last Linear has no ReLU)
#   layers 3-5: full ReLU (f3)
#   layer  6  : none (final Linear(70, 1))
RELU = ("full", "full", "partial", "full", "full", "full", "none")


def penn_kernel(z_ref, om_ref, w0_ref, w_ref, b_ref, o_ref):
    # z_ref, om_ref: (tb, D) f32 batch-major input tiles
    # w0_ref: (2, D, 128)  bf16 first-layer weights (slab 0 reads z, slab 1 omega)
    # w_ref : (6, 128, 128) bf16 packed block-diagonal slabs for layers 1..6
    # b_ref : (7, 1, 128)   f32 packed bias rows
    # o_ref : (tb, 8)       f32 output block; real output lives in column 0
    wdt = w_ref.dtype

    # Fused layer 0: [f1(z) | f2(omega)] -> columns [0:70) and [70:100).
    h = (jnp.dot(z_ref[...].astype(wdt), w0_ref[0],
                 preferred_element_type=jnp.float32)
         + jnp.dot(om_ref[...].astype(wdt), w0_ref[1],
                   preferred_element_type=jnp.float32)
         + b_ref[0])
    h = jnp.maximum(h, 0.0)

    # Layers 1..6: constant (tb, 128) activation, full 128x128 weight slabs.
    for k in range(1, NLAYERS):
        h = jnp.dot(h.astype(wdt), w_ref[k - 1],
                    preferred_element_type=jnp.float32) + b_ref[k]
        if RELU[k] == "full":
            h = jnp.maximum(h, 0.0)
        elif RELU[k] == "partial":
            cols = jax.lax.broadcasted_iota(jnp.int32, h.shape, 1)
            h = jnp.where(cols < H, jnp.maximum(h, 0.0), h)
        # "none": fall through

    o_ref[...] = h[:, 0:8].astype(o_ref.dtype)   # column 0 is the real output


def penn_forward(z, omega, w0_stack, w_stack, b_stack, *, tb=1024):
    """z, omega: (B, D).  Packed params from pack_params().  Returns (B, 1).

    tb: batch tile (sweep 1024-4096).  Keep Bp/tb >= 2 on v7x so the
    "parallel" grid axis can shard tiles across its two TensorCores.
    """
    assert tb % 8 == 0, "batch tile must be a multiple of 8 sublanes"
    B, d = z.shape
    Bp = pl.cdiv(B, tb) * tb

    z_p = z.astype(jnp.float32)
    om_p = omega.astype(jnp.float32)
    if Bp != B:
        z_p = jnp.pad(z_p, ((0, Bp - B), (0, 0)))
        om_p = jnp.pad(om_p, ((0, Bp - B), (0, 0)))

    out = pl.pallas_call(
        penn_kernel,
        out_shape=jax.ShapeDtypeStruct((Bp, 8), jnp.float32),
        grid_spec=pltpu.PrefetchScalarGridSpec(
            num_scalar_prefetch=0,
            grid=(Bp // tb,),
            in_specs=[
                pl.BlockSpec((tb, d), lambda i: (i, 0)),
                pl.BlockSpec((tb, d), lambda i: (i, 0)),
                pl.BlockSpec(w0_stack.shape, lambda i: (0, 0, 0)),
                pl.BlockSpec(w_stack.shape, lambda i: (0, 0, 0)),
                pl.BlockSpec(b_stack.shape, lambda i: (0, 0, 0)),
            ],
            out_specs=pl.BlockSpec((tb, 8), lambda i: (i, 0)),
        ),
        compiler_params=pltpu.CompilerParams(
            dimension_semantics=("parallel",),   # shard batch tiles across v7x TCs
        ),
    )(z_p, om_p, w0_stack, w_stack, b_stack)

    return out[:B, 0:1]


# ------------------------- parameter construction ---------------------------
def init_params(key):
    """Synthetic init matching the PyTorch module's 10 Linear layers.
    Returns flat list [W, b, ...] with W:(in, out), b:(1, out)."""
    layer_dims = [
        (D, H), (H, H), (H, H),                 # f1
        (D, H2), (H2, H2), (H2, EMB),           # f2
        (H + EMB, H), (H, H), (H, H), (H, 1),   # f3
    ]
    params = []
    for (fan_in, fan_out) in layer_dims:
        key, kw, kb = jax.random.split(key, 3)
        bound = 1.0 / jnp.sqrt(fan_in)
        w = jax.random.uniform(kw, (fan_in, fan_out), jnp.float32, -bound, bound)
        b = jax.random.uniform(kb, (1, fan_out), jnp.float32, -bound, bound)
        params += [w, b]
    return params


def pack_params(params, weight_dtype=jnp.bfloat16):
    """Pack the 10 Linears into:
       w0_stack (2, D, 128)   : fused first layer (slab 0 <- z, slab 1 <- omega)
       w_stack  (6, 128, 128) : block-diagonal, zero-padded slabs, layers 1..6
       b_stack  (7, 1, 128)   : zero-padded bias rows (kept in f32)
       Padded rows/columns are exactly zero (kernel relies on it)."""
    def wb(i):
        return params[2 * i], params[2 * i + 1]

    W0 = jnp.zeros((2, D, WPAD), jnp.float32)
    Ws = jnp.zeros((NLAYERS - 1, WPAD, WPAD), jnp.float32)
    Bs = jnp.zeros((NLAYERS, 1, WPAD), jnp.float32)

    def put_w(A, layer, r0, c0, w):
        return A.at[layer, r0:r0 + w.shape[0], c0:c0 + w.shape[1]].set(w)

    def put_b(Bv, layer, c0, b):
        return Bv.at[layer, 0, c0:c0 + b.shape[1]].set(b[0])

    f1 = [wb(0), wb(1), wb(2)]
    f2 = [wb(3), wb(4), wb(5)]
    f3 = [wb(6), wb(7), wb(8), wb(9)]

    # fused layer 0: z -> cols [0:70) (f1), omega -> cols [70:100) (f2)
    W0 = W0.at[0, :, 0:H].set(f1[0][0])
    W0 = W0.at[1, :, H:H + H2].set(f2[0][0])
    Bs = put_b(Bs, 0, 0, f1[0][1]); Bs = put_b(Bs, 0, H, f2[0][1])
    # fused layer 1 (block-diagonal 100x100)
    Ws = put_w(Ws, 0, 0, 0, f1[1][0]); Ws = put_w(Ws, 0, H, H, f2[1][0])
    Bs = put_b(Bs, 1, 0, f1[1][1]);    Bs = put_b(Bs, 1, H, f2[1][1])
    # fused layer 2 (100 -> [f1 70 | f2 embedding 3])
    Ws = put_w(Ws, 1, 0, 0, f1[2][0]); Ws = put_w(Ws, 1, H, H, f2[2][0])
    Bs = put_b(Bs, 2, 0, f1[2][1]);    Bs = put_b(Bs, 2, H, f2[2][1])
    # f3 layers (input cols [0:73) hold the concatenated features)
    Ws = put_w(Ws, 2, 0, 0, f3[0][0]); Bs = put_b(Bs, 3, 0, f3[0][1])
    Ws = put_w(Ws, 3, 0, 0, f3[1][0]); Bs = put_b(Bs, 4, 0, f3[1][1])
    Ws = put_w(Ws, 4, 0, 0, f3[2][0]); Bs = put_b(Bs, 5, 0, f3[2][1])
    Ws = put_w(Ws, 5, 0, 0, f3[3][0]); Bs = put_b(Bs, 6, 0, f3[3][1])

    return W0.astype(weight_dtype), Ws.astype(weight_dtype), Bs


def penn_reference(z, omega, params, compute_dtype=jnp.float32):
    """Pure-JAX reference of the PyTorch forward (unfused, unpacked).
    With compute_dtype=bfloat16 it emulates the kernel's matmul precision
    (bf16 operands, f32 accumulation, f32 bias/ReLU)."""
    p = params

    def lin(x, i):
        w = p[2 * i].astype(compute_dtype)
        return jnp.dot(x.astype(compute_dtype), w,
                       preferred_element_type=jnp.float32) + p[2 * i + 1]

    relu = lambda x: jnp.maximum(x, 0.0)
    h1 = relu(lin(z, 0)); h1 = relu(lin(h1, 1)); h1 = relu(lin(h1, 2))
    h2 = relu(lin(omega, 3)); h2 = relu(lin(h2, 4)); h2 = lin(h2, 5)
    c = jnp.concatenate([h1, h2], axis=-1)
    h3 = relu(lin(c, 6)); h3 = relu(lin(h3, 7)); h3 = relu(lin(h3, 8))
    return lin(h3, 9)


if __name__ == "__main__":
    key = jax.random.PRNGKey(0)
    kp, kz, ko = jax.random.split(key, 3)

    B = 2000  # -> Bp=2048: 2 grid steps (v7x megacore) + exercises padding
    params = init_params(kp)
    w0_stack, w_stack, b_stack = pack_params(params, weight_dtype=jnp.bfloat16)
    z = jax.random.normal(kz, (B, D), jnp.float32)
    omega = jax.random.normal(ko, (B, D), jnp.float32)

    out = penn_forward(z, omega, w0_stack, w_stack, b_stack, tb=1024)
    out = jax.block_until_ready(out)
    assert out.shape == (B, 1), out.shape

    # Precision-matched check (same bf16-operand / f32-accumulate math).
    ref_bf16 = penn_reference(z, omega, params, compute_dtype=jnp.bfloat16)
    err_bf16 = jnp.max(jnp.abs(out - ref_bf16))
    assert jnp.allclose(out, ref_bf16, atol=2e-3, rtol=2e-3), \
        f"bf16-matched max abs err = {err_bf16}"

    # Loose sanity check against the pure-f32 reference.
    ref_f32 = penn_reference(z, omega, params)
    err_f32 = jnp.max(jnp.abs(out - ref_f32))
    assert jnp.allclose(out, ref_f32, atol=5e-2, rtol=5e-2), \
        f"f32 max abs err = {err_f32}"

    print("KERNEL_OK")
</pallas_src>

<mosaic_0001>
module attributes {stable_mosaic.version = 11 : i64} {
  func.func @penn_kernel(%arg0: i32, %arg1: memref<1024x8xf32, #tpu.memory_space<vmem>>, %arg2: memref<1024x8xf32, #tpu.memory_space<vmem>>, %arg3: memref<2x8x128xbf16, #tpu.memory_space<vmem>>, %arg4: memref<6x128x128xbf16, #tpu.memory_space<vmem>>, %arg5: memref<7x1x128xf32, #tpu.memory_space<vmem>>, %arg6: memref<1024x8xf32, #tpu.memory_space<vmem>>) attributes {dimension_semantics = [#tpu.dimension_semantics<parallel>], iteration_bounds = array<i64: 2>, scalar_prefetch = 0 : i64, scratch_operands = 0 : i64, tpu.core_type = #tpu.core_type<tc>, window_params = [{transform_indices = @transform_0, window_bounds = array<i64: 1024, 8>}, {transform_indices = @transform_1, window_bounds = array<i64: 1024, 8>}, {pipeline_mode = #tpu.pipeline_mode<synchronous>, transform_indices = @transform_2, window_bounds = array<i64: 2, 8, 128>}, {pipeline_mode = #tpu.pipeline_mode<synchronous>, transform_indices = @transform_3, window_bounds = array<i64: 6, 128, 128>}, {pipeline_mode = #tpu.pipeline_mode<synchronous>, transform_indices = @transform_4, window_bounds = array<i64: 7, 1, 128>}, {transform_indices = @transform_5, window_bounds = array<i64: 1024, 8>}]} {
    %c0 = arith.constant 0 : index
    %c0_0 = arith.constant 0 : index
    %0 = vector.load %arg1[%c0, %c0_0] : memref<1024x8xf32, #tpu.memory_space<vmem>>, vector<1024x8xf32>
    %1 = arith.truncf %0 : vector<1024x8xf32> to vector<1024x8xbf16>
    %c0_1 = arith.constant 0 : index
    %c0_2 = arith.constant 0 : index
    %c0_3 = arith.constant 0 : index
    %2 = vector.load %arg3[%c0_1, %c0_2, %c0_3] : memref<2x8x128xbf16, #tpu.memory_space<vmem>>, vector<1x8x128xbf16>
    %3 = vector.shape_cast %2 : vector<1x8x128xbf16> to vector<8x128xbf16>
    %cst = arith.constant dense<0.000000e+00> : vector<1024x128xf32>
    %4 = tpu.matmul %1, %3, %cst {dimension_numbers = #tpu.dot_dimension_numbers<[1], [0], [0], [1], [0, 0, 1, 1], [], []>} : vector<1024x8xbf16>, vector<8x128xbf16>, vector<1024x128xf32> -> vector<1024x128xf32>
    %c0_4 = arith.constant 0 : index
    %c0_5 = arith.constant 0 : index
    %5 = vector.load %arg2[%c0_4, %c0_5] : memref<1024x8xf32, #tpu.memory_space<vmem>>, vector<1024x8xf32>
    %6 = arith.truncf %5 : vector<1024x8xf32> to vector<1024x8xbf16>
    %c1 = arith.constant 1 : index
    %c0_6 = arith.constant 0 : index
    %c0_7 = arith.constant 0 : index
    %7 = vector.load %arg3[%c1, %c0_6, %c0_7] : memref<2x8x128xbf16, #tpu.memory_space<vmem>>, vector<1x8x128xbf16>
    %8 = vector.shape_cast %7 : vector<1x8x128xbf16> to vector<8x128xbf16>
    %cst_8 = arith.constant dense<0.000000e+00> : vector<1024x128xf32>
    %9 = tpu.matmul %6, %8, %cst_8 {dimension_numbers = #tpu.dot_dimension_numbers<[1], [0], [0], [1], [0, 0, 1, 1], [], []>} : vector<1024x8xbf16>, vector<8x128xbf16>, vector<1024x128xf32> -> vector<1024x128xf32>
    %10 = arith.addf %4, %9 : vector<1024x128xf32>
    %c0_9 = arith.constant 0 : index
    %c0_10 = arith.constant 0 : index
    %c0_11 = arith.constant 0 : index
    %11 = vector.load %arg5[%c0_9, %c0_10, %c0_11] : memref<7x1x128xf32, #tpu.memory_space<vmem>>, vector<1x1x128xf32>
    %12 = vector.shape_cast %11 : vector<1x1x128xf32> to vector<1x128xf32>
    %13 = vector.broadcast %12 : vector<1x128xf32> to vector<1024x128xf32>
    %14 = arith.addf %10, %13 : vector<1024x128xf32>
    %cst_12 = arith.constant 0.000000e+00 : f32
    %15 = vector.broadcast %cst_12 : f32 to vector<1024x128xf32>
    %16 = arith.maximumf %14, %15 : vector<1024x128xf32>
    %17 = arith.truncf %16 : vector<1024x128xf32> to vector<1024x128xbf16>
    %c0_13 = arith.constant 0 : index
    %c0_14 = arith.constant 0 : index
    %c0_15 = arith.constant 0 : index
    %18 = vector.load %arg4[%c0_13, %c0_14, %c0_15] : memref<6x128x128xbf16, #tpu.memory_space<vmem>>, vector<1x128x128xbf16>
    %19 = vector.shape_cast %18 : vector<1x128x128xbf16> to vector<128x128xbf16>
    %cst_16 = arith.constant dense<0.000000e+00> : vector<1024x128xf32>
    %20 = tpu.matmul %17, %19, %cst_16 {dimension_numbers = #tpu.dot_dimension_numbers<[1], [0], [0], [1], [0, 0, 1, 1], [], []>} : vector<1024x128xbf16>, vector<128x128xbf16>, vector<1024x128xf32> -> vector<1024x128xf32>
    %c1_17 = arith.constant 1 : index
    %c0_18 = arith.constant 0 : index
    %c0_19 = arith.constant 0 : index
    %21 = vector.load %arg5[%c1_17, %c0_18, %c0_19] : memref<7x1x128xf32, #tpu.memory_space<vmem>>, vector<1x1x128xf32>
    %22 = vector.shape_cast %21 : vector<1x1x128xf32> to vector<1x128xf32>
    %23 = vector.broadcast %22 : vector<1x128xf32> to vector<1024x128xf32>
    %24 = arith.addf %20, %23 : vector<1024x128xf32>
    %cst_20 = arith.constant 0.000000e+00 : f32
    %25 = vector.broadcast %cst_20 : f32 to vector<1024x128xf32>
    %26 = arith.maximumf %24, %25 : vector<1024x128xf32>
    %27 = arith.truncf %26 : vector<1024x128xf32> to vector<1024x128xbf16>
    %c1_21 = arith.constant 1 : index
    %c0_22 = arith.constant 0 : index
    %c0_23 = arith.constant 0 : index
    %28 = vector.load %arg4[%c1_21, %c0_22, %c0_23] : memref<6x128x128xbf16, #tpu.memory_space<vmem>>, vector<1x128x128xbf16>
    %29 = vector.shape_cast %28 : vector<1x128x128xbf16> to vector<128x128xbf16>
    %cst_24 = arith.constant dense<0.000000e+00> : vector<1024x128xf32>
    %30 = tpu.matmul %27, %29, %cst_24 {dimension_numbers = #tpu.dot_dimension_numbers<[1], [0], [0], [1], [0, 0, 1, 1], [], []>} : vector<1024x128xbf16>, vector<128x128xbf16>, vector<1024x128xf32> -> vector<1024x128xf32>
    %c2 = arith.constant 2 : index
    %c0_25 = arith.constant 0 : index
    %c0_26 = arith.constant 0 : index
    %31 = vector.load %arg5[%c2, %c0_25, %c0_26] : memref<7x1x128xf32, #tpu.memory_space<vmem>>, vector<1x1x128xf32>
    %32 = vector.shape_cast %31 : vector<1x1x128xf32> to vector<1x128xf32>
    %33 = vector.broadcast %32 : vector<1x128xf32> to vector<1024x128xf32>
    %34 = arith.addf %30, %33 : vector<1024x128xf32>
    %35 = tpu.iota {dimensions = array<i32: 1>} : vector<1024x128xi32>
    %c70_i32 = arith.constant 70 : i32
    %36 = vector.broadcast %c70_i32 : i32 to vector<1024x128xi32>
    %37 = arith.cmpi slt, %35, %36 : vector<1024x128xi32>
    %cst_27 = arith.constant 0.000000e+00 : f32
    %38 = vector.broadcast %cst_27 : f32 to vector<1024x128xf32>
    %39 = arith.maximumf %34, %38 : vector<1024x128xf32>
    %40 = arith.select %37, %39, %34 : vector<1024x128xi1>, vector<1024x128xf32>
    %41 = arith.truncf %40 : vector<1024x128xf32> to vector<1024x128xbf16>
    %c2_28 = arith.constant 2 : index
    %c0_29 = arith.constant 0 : index
    %c0_30 = arith.constant 0 : index
    %42 = vector.load %arg4[%c2_28, %c0_29, %c0_30] : memref<6x128x128xbf16, #tpu.memory_space<vmem>>, vector<1x128x128xbf16>
    %43 = vector.shape_cast %42 : vector<1x128x128xbf16> to vector<128x128xbf16>
    %cst_31 = arith.constant dense<0.000000e+00> : vector<1024x128xf32>
    %44 = tpu.matmul %41, %43, %cst_31 {dimension_numbers = #tpu.dot_dimension_numbers<[1], [0], [0], [1], [0, 0, 1, 1], [], []>} : vector<1024x128xbf16>, vector<128x128xbf16>, vector<1024x128xf32> -> vector<1024x128xf32>
    %c3 = arith.constant 3 : index
    %c0_32 = arith.constant 0 : index
    %c0_33 = arith.constant 0 : index
    %45 = vector.load %arg5[%c3, %c0_32, %c0_33] : memref<7x1x128xf32, #tpu.memory_space<vmem>>, vector<1x1x128xf32>
    %46 = vector.shape_cast %45 : vector<1x1x128xf32> to vector<1x128xf32>
    %47 = vector.broadcast %46 : vector<1x128xf32> to vector<1024x128xf32>
    %48 = arith.addf %44, %47 : vector<1024x128xf32>
    %cst_34 = arith.constant 0.000000e+00 : f32
    %49 = vector.broadcast %cst_34 : f32 to vector<1024x128xf32>
    %50 = arith.maximumf %48, %49 : vector<1024x128xf32>
    %51 = arith.truncf %50 : vector<1024x128xf32> to vector<1024x128xbf16>
    %c3_35 = arith.constant 3 : index
    %c0_36 = arith.constant 0 : index
    %c0_37 = arith.constant 0 : index
    %52 = vector.load %arg4[%c3_35, %c0_36, %c0_37] : memref<6x128x128xbf16, #tpu.memory_space<vmem>>, vector<1x128x128xbf16>
    %53 = vector.shape_cast %52 : vector<1x128x128xbf16> to vector<128x128xbf16>
    %cst_38 = arith.constant dense<0.000000e+00> : vector<1024x128xf32>
    %54 = tpu.matmul %51, %53, %cst_38 {dimension_numbers = #tpu.dot_dimension_numbers<[1], [0], [0], [1], [0, 0, 1, 1], [], []>} : vector<1024x128xbf16>, vector<128x128xbf16>, vector<1024x128xf32> -> vector<1024x128xf32>
    %c4 = arith.constant 4 : index
    %c0_39 = arith.constant 0 : index
    %c0_40 = arith.constant 0 : index
    %55 = vector.load %arg5[%c4, %c0_39, %c0_40] : memref<7x1x128xf32, #tpu.memory_space<vmem>>, vector<1x1x128xf32>
    %56 = vector.shape_cast %55 : vector<1x1x128xf32> to vector<1x128xf32>
    %57 = vector.broadcast %56 : vector<1x128xf32> to vector<1024x128xf32>
    %58 = arith.addf %54, %57 : vector<1024x128xf32>
    %cst_41 = arith.constant 0.000000e+00 : f32
    %59 = vector.broadcast %cst_41 : f32 to vector<1024x128xf32>
    %60 = arith.maximumf %58, %59 : vector<1024x128xf32>
    %61 = arith.truncf %60 : vector<1024x128xf32> to vector<1024x128xbf16>
    %c4_42 = arith.constant 4 : index
    %c0_43 = arith.constant 0 : index
    %c0_44 = arith.constant 0 : index
    %62 = vector.load %arg4[%c4_42, %c0_43, %c0_44] : memref<6x128x128xbf16, #tpu.memory_space<vmem>>, vector<1x128x128xbf16>
    %63 = vector.shape_cast %62 : vector<1x128x128xbf16> to vector<128x128xbf16>
    %cst_45 = arith.constant dense<0.000000e+00> : vector<1024x128xf32>
    %64 = tpu.matmul %61, %63, %cst_45 {dimension_numbers = #tpu.dot_dimension_numbers<[1], [0], [0], [1], [0, 0, 1, 1], [], []>} : vector<1024x128xbf16>, vector<128x128xbf16>, vector<1024x128xf32> -> vector<1024x128xf32>
    %c5 = arith.constant 5 : index
    %c0_46 = arith.constant 0 : index
    %c0_47 = arith.constant 0 : index
    %65 = vector.load %arg5[%c5, %c0_46, %c0_47] : memref<7x1x128xf32, #tpu.memory_space<vmem>>, vector<1x1x128xf32>
    %66 = vector.shape_cast %65 : vector<1x1x128xf32> to vector<1x128xf32>
    %67 = vector.broadcast %66 : vector<1x128xf32> to vector<1024x128xf32>
    %68 = arith.addf %64, %67 : vector<1024x128xf32>
    %cst_48 = arith.constant 0.000000e+00 : f32
    %69 = vector.broadcast %cst_48 : f32 to vector<1024x128xf32>
    %70 = arith.maximumf %68, %69 : vector<1024x128xf32>
    %71 = arith.truncf %70 : vector<1024x128xf32> to vector<1024x128xbf16>
    %c5_49 = arith.constant 5 : index
    %c0_50 = arith.constant 0 : index
    %c0_51 = arith.constant 0 : index
    %72 = vector.load %arg4[%c5_49, %c0_50, %c0_51] : memref<6x128x128xbf16, #tpu.memory_space<vmem>>, vector<1x128x128xbf16>
    %73 = vector.shape_cast %72 : vector<1x128x128xbf16> to vector<128x128xbf16>
    %cst_52 = arith.constant dense<0.000000e+00> : vector<1024x128xf32>
    %74 = tpu.matmul %71, %73, %cst_52 {dimension_numbers = #tpu.dot_dimension_numbers<[1], [0], [0], [1], [0, 0, 1, 1], [], []>} : vector<1024x128xbf16>, vector<128x128xbf16>, vector<1024x128xf32> -> vector<1024x128xf32>
    %c6 = arith.constant 6 : index
    %c0_53 = arith.constant 0 : index
    %c0_54 = arith.constant 0 : index
    %75 = vector.load %arg5[%c6, %c0_53, %c0_54] : memref<7x1x128xf32, #tpu.memory_space<vmem>>, vector<1x1x128xf32>
    %76 = vector.shape_cast %75 : vector<1x1x128xf32> to vector<1x128xf32>
    %77 = vector.broadcast %76 : vector<1x128xf32> to vector<1024x128xf32>
    %78 = arith.addf %74, %77 : vector<1024x128xf32>
    %79 = vector.extract_strided_slice %78 {offsets = [0, 0], sizes = [1024, 8], strides = [1, 1]} : vector<1024x128xf32> to vector<1024x8xf32>
    %c0_55 = arith.constant 0 : index
    %c0_56 = arith.constant 0 : index
    %80 = vector.load %arg6[%c0_55, %c0_56] : memref<1024x8xf32, #tpu.memory_space<vmem>>, vector<1024x8xf32>
    tpu.vector_store %arg6[%c0_55, %c0_56], %79 {strides = array<i32>} : memref<1024x8xf32, #tpu.memory_space<vmem>>, vector<1024x8xf32>,
    return
  }
  func.func @transform_0(%arg0: i32) -> (i32, i32) {
    %c0_i32 = arith.constant 0 : i32
    %c0_i32_0 = arith.constant 0 : i32
    return %arg0, %c0_i32 : i32, i32
  }
  func.func @transform_1(%arg0: i32) -> (i32, i32) {
    %c0_i32 = arith.constant 0 : i32
    %c0_i32_0 = arith.constant 0 : i32
    return %arg0, %c0_i32 : i32, i32
  }
  func.func @transform_2(%arg0: i32) -> (i32, i32, i32) {
    %c0_i32 = arith.constant 0 : i32
    %c0_i32_0 = arith.constant 0 : i32
    %c0_i32_1 = arith.constant 0 : i32
    %c0_i32_2 = arith.constant 0 : i32
    return %c0_i32, %c0_i32_0, %c0_i32_1 : i32, i32, i32
  }
  func.func @transform_3(%arg0: i32) -> (i32, i32, i32) {
    %c0_i32 = arith.constant 0 : i32
    %c0_i32_0 = arith.constant 0 : i32
    %c0_i32_1 = arith.constant 0 : i32
    %c0_i32_2 = arith.constant 0 : i32
    return %c0_i32, %c0_i32_0, %c0_i32_1 : i32, i32, i32
  }
  func.func @transform_4(%arg0: i32) -> (i32, i32, i32) {
    %c0_i32 = arith.constant 0 : i32
    %c0_i32_0 = arith.constant 0 : i32
    %c0_i32_1 = arith.constant 0 : i32
    %c0_i32_2 = arith.constant 0 : i32
    return %c0_i32, %c0_i32_0, %c0_i32_1 : i32, i32, i32
  }
  func.func @transform_5(%arg0: i32) -> (i32, i32) {
    %c0_i32 = arith.constant 0 : i32
    %c0_i32_0 = arith.constant 0 : i32
    return %arg0, %c0_i32 : i32, i32
  }
}

</mosaic_0001>

<llo_original>
// kernel: tpu_custom_call.1
$region0: #{tpu_custom_call.1}
  #allocation0 [shape = 'u32[]', space=smem, size = 0x4, offset = 0x4, fixed_abs, tag = 'smem constant byte address 0x4 - core index']
  #allocation1 [shape = 'u32[144,128]{1,0:T(1,128)}', space=vmem, size = 0x12000, scoped, tag = 'internal scratch']
  %s0 = inlined_call_operand.vmem [shape: f32[2048,8], index: 0, kind: input, shape index: {}]
  %s1 = inlined_call_operand.vmem [shape: f32[2048,8], index: 1, kind: input, shape index: {}]
  %s2 = inlined_call_operand.vmem [shape: bf16[2,8,128], index: 2, kind: input, shape index: {}]
  %s3 = inlined_call_operand.vmem [shape: bf16[6,128,128], index: 3, kind: input, shape index: {}]
  %s4 = inlined_call_operand.vmem [shape: f32[7,1,128], index: 4, kind: input, shape index: {}]
  %s5 = inlined_call_operand.vmem [shape: f32[2048,8], index: 5, kind: output, shape index: {}]
  %s6 = sld [smem:[#allocation0]]
  $region53: #{tpu_custom_call.1} parent=0
    _
  %s8 = ssub.s32 1, %s6
  %s9 = scalar_select 0, %s8, %s6
  loop: start=0, step=1, limit=4
  $region2: #{tpu_custom_call.1} parent=0 // loop_pre_header
    _
  $region3: #{tpu_custom_call.1} parent=0 // loop_header
    %s11 = sphi 0, %s15
    %p12 = scmp.ge.s32.totalorder %s11, 4
    %s21 = sphi 0, %s23
    %s24 = sphi 0, %s21
    %s25 = sphi 0, %s24
    %s41 = sphi 0, %s25
    %s47 = sphi 0, %s49
    %s50 = sphi 0, %s47
    %s51 = sphi 0, %s50
    %s67 = sphi 0, %s51
    %s71 = sphi 0, %s71
    %s73 = sphi 0, %s71
    %s74 = sphi 0, %s73
    %s88 = sphi 0, %s74
    %s92 = sphi 0, %s92
    %s94 = sphi 0, %s92
    %s95 = sphi 0, %s94
    %s109 = sphi 0, %s95
    %s113 = sphi 0, %s113
    %s115 = sphi 0, %s113
    %s116 = sphi 0, %s115
    %s130 = sphi 0, %s116
    %s136 = sphi 0, %s138
    %s139 = sphi 0, %s136
    %s140 = sphi 0, %s139
    %s156 = sphi 0, %s140
  $region4: #{tpu_custom_call.1} parent=0 // loop_header_branch
    %14 = sbr.rel (%p12) target = $region8
  $region5: #{tpu_custom_call.1} parent=0 // loop_body
    %s16 = ssub.s32 %s11, 1
    %s17 = ssub.s32 %s11, 2
    %s18 = sadd.s32 %s11, 1
    %s19 = ssub.s32 %s11, %s18
    %p20 = scmp.eq.s32.totalorder %s19, 0
    %s22 = sadd.s32 %s21, 1
    %s23 = scalar_select %p20, %s21, %s22
    %p26 = pneg %p20
    %p27 = scmp.eq.s32.totalorder %s11, 1
    %p28 = por %p26, %p27
    %p29 = scmp.ne.s32.totalorder %s21, %s24
    %p30 = scmp.eq.s32.totalorder %s11, 0
    %p31 = por %p29, %p30
    %p32 = scmp.ne.s32.totalorder %s21, %s24
    %p33 = scmp.eq.s32.totalorder %s16, 1
    %p34 = por %p32, %p33
    %p35 = scmp.ne.s32.totalorder %s24, %s25
    %p36 = scmp.eq.s32.totalorder %s16, 0
    %p37 = por %p35, %p36
    %p38 = scmp.ne.s32.totalorder %s24, %s25
    %p39 = scmp.eq.s32.totalorder %s17, 1
    %p40 = por %p38, %p39
    %p42 = scmp.ne.s32.totalorder %s25, %s41
    %p43 = scmp.eq.s32.totalorder %s17, 0
    %p44 = por %p42, %p43
    %s45 = ssub.s32 %s11, %s18
    %p46 = scmp.eq.s32.totalorder %s45, 0
    %s48 = sadd.s32 %s47, 1
    %s49 = scalar_select %p46, %s47, %s48
    %p52 = pneg %p46
    %p53 = scmp.eq.s32.totalorder %s11, 1
    %p54 = por %p52, %p53
    %p55 = scmp.ne.s32.totalorder %s47, %s50
    %p56 = scmp.eq.s32.totalorder %s11, 0
    %p57 = por %p55, %p56
    %p58 = scmp.ne.s32.totalorder %s47, %s50
    %p59 = scmp.eq.s32.totalorder %s16, 1
    %p60 = por %p58, %p59
    %p61 = scmp.ne.s32.totalorder %s50, %s51
    %p62 = scmp.eq.s32.totalorder %s16, 0
    %p63 = por %p61, %p62
    %p64 = scmp.ne.s32.totalorder %s50, %s51
    %p65 = scmp.eq.s32.totalorder %s17, 1
    %p66 = por %p64, %p65
    %p68 = scmp.ne.s32.totalorder %s51, %s67
    %p69 = scmp.eq.s32.totalorder %s17, 0
    %p70 = por %p68, %p69
    %s72 = sadd.s32 %s71, 1
    %p75 = scmp.eq.s32.totalorder %s11, 1
    %p76 = scmp.ne.s32.totalorder %s71, %s73
    %p77 = scmp.eq.s32.totalorder %s11, 0
    %p78 = por %p76, %p77
    %p79 = scmp.ne.s32.totalorder %s71, %s73
    %p80 = scmp.eq.s32.totalorder %s16, 1
    %p81 = por %p79, %p80
    %p82 = scmp.ne.s32.totalorder %s73, %s74
    %p83 = scmp.eq.s32.totalorder %s16, 0
    %p84 = por %p82, %p83
    %p85 = scmp.ne.s32.totalorder %s73, %s74
    %p86 = scmp.eq.s32.totalorder %s17, 1
    %p87 = por %p85, %p86
    %p89 = scmp.ne.s32.totalorder %s74, %s88
    %p90 = scmp.eq.s32.totalorder %s17, 0
    %p91 = por %p89, %p90
    %s93 = sadd.s32 %s92, 1
    %p96 = scmp.eq.s32.totalorder %s11, 1
    %p97 = scmp.ne.s32.totalorder %s92, %s94
    %p98 = scmp.eq.s32.totalorder %s11, 0
    %p99 = por %p97, %p98
    %p100 = scmp.ne.s32.totalorder %s92, %s94
    %p101 = scmp.eq.s32.totalorder %s16, 1
    %p102 = por %p100, %p101
    %p103 = scmp.ne.s32.totalorder %s94, %s95
    %p104 = scmp.eq.s32.totalorder %s16, 0
    %p105 = por %p103, %p104
    %p106 = scmp.ne.s32.totalorder %s94, %s95
    %p107 = scmp.eq.s32.totalorder %s17, 1
    %p108 = por %p106, %p107
    %p110 = scmp.ne.s32.totalorder %s95, %s109
    %p111 = scmp.eq.s32.totalorder %s17, 0
    %p112 = por %p110, %p111
    %s114 = sadd.s32 %s113, 1
    %p117 = scmp.eq.s32.totalorder %s11, 1
    %p118 = scmp.ne.s32.totalorder %s113, %s115
    %p119 = scmp.eq.s32.totalorder %s11, 0
    %p120 = por %p118, %p119
    %p121 = scmp.ne.s32.totalorder %s113, %s115
    %p122 = scmp.eq.s32.totalorder %s16, 1
    %p123 = por %p121, %p122
    %p124 = scmp.ne.s32.totalorder %s115, %s116
    %p125 = scmp.eq.s32.totalorder %s16, 0
    %p126 = por %p124, %p125
    %p127 = scmp.ne.s32.totalorder %s115, %s116
    %p128 = scmp.eq.s32.totalorder %s17, 1
    %p129 = por %p127, %p128
    %p131 = scmp.ne.s32.totalorder %s116, %s130
    %p132 = scmp.eq.s32.totalorder %s17, 0
    %p133 = por %p131, %p132
    %s134 = ssub.s32 %s11, %s18
    %p135 = scmp.eq.s32.totalorder %s134, 0
    %s137 = sadd.s32 %s136, 1
    %s138 = scalar_select %p135, %s136, %s137
    %p141 = pneg %p135
    %p142 = scmp.eq.s32.totalorder %s11, 1
    %p143 = por %p141, %p142
    %p144 = scmp.ne.s32.totalorder %s136, %s139
    %p145 = scmp.eq.s32.totalorder %s11, 0
    %p146 = por %p144, %p145
    %p147 = scmp.ne.s32.totalorder %s136, %s139
    %p148 = scmp.eq.s32.totalorder %s16, 1
    %p149 = por %p147, %p148
    %p150 = scmp.ne.s32.totalorder %s139, %s140
    %p151 = scmp.eq.s32.totalorder %s16, 0
    %p152 = por %p150, %p151
    %p153 = scmp.ne.s32.totalorder %s139, %s140
    %p154 = scmp.eq.s32.totalorder %s17, 1
    %p155 = por %p153, %p154
    %p157 = scmp.ne.s32.totalorder %s140, %s156
    %p158 = scmp.eq.s32.totalorder %s17, 0
    %p159 = por %p157, %p158
    %p160 = scmp.le.s32.totalorder 1, %s11
    %p161 = scmp.lt.s32.totalorder %s11, 3
    %p162 = pnand %p160, %p161
    %p163 = pneg %p162
    // Predicated region
    $region9: #{tpu_custom_call.1} parent=5 // pred_check
      _
    $region10: #{tpu_custom_call.1} parent=5 // pred_check_branch
      %165 = sbr.rel (%p162) target = $region12
    $region11: #{tpu_custom_call.1} parent=5 // pred_region
      %s166 = ssub.s32 %s11, 1
      // Predicated region
      $region13: #{tpu_custom_call.1} parent=11 // pred_check
        %p167 = pneg %p84
      $region14: #{tpu_custom_call.1} parent=11 // pred_check_branch
        %169 = sbr.rel (%p167) target = $region16
      $region15: #{tpu_custom_call.1} parent=11 // pred_region
        _
      $region16: #{tpu_custom_call.1} parent=11 // pred_fallthru
        _
      // Predicated region
      $region17: #{tpu_custom_call.1} parent=11 // pred_check
        %p170 = pneg %p105
      $region18: #{tpu_custom_call.1} parent=11 // pred_check_branch
        %172 = sbr.rel (%p170) target = $region20
      $region19: #{tpu_custom_call.1} parent=11 // pred_region
        _
      $region20: #{tpu_custom_call.1} parent=11 // pred_fallthru
        _
      // Predicated region
      $region21: #{tpu_custom_call.1} parent=11 // pred_check
        %p173 = pneg %p126
      $region22: #{tpu_custom_call.1} parent=11 // pred_check_branch
        %175 = sbr.rel (%p173) target = $region24
      $region23: #{tpu_custom_call.1} parent=11 // pred_region
        _
      $region24: #{tpu_custom_call.1} parent=11 // pred_fallthru
        _
    $region12: #{tpu_custom_call.1} parent=5 // pred_fallthru
      _
    %p176 = scmp.lt.s32.totalorder %s11, 2
    // Predicated region
    $region25: #{tpu_custom_call.1} parent=5 // pred_check
      %p177 = pneg %p176
    $region26: #{tpu_custom_call.1} parent=5 // pred_check_branch
      %179 = sbr.rel (%p177) target = $region28
    $region27: #{tpu_custom_call.1} parent=5 // pred_region
      // Predicated region
      $region29: #{tpu_custom_call.1} parent=27 // pred_check
        %p180 = pneg %p31
      $region30: #{tpu_custom_call.1} parent=27 // pred_check_branch
        %182 = sbr.rel (%p180) target = $region32
      $region31: #{tpu_custom_call.1} parent=27 // pred_region
        %s183 = smul.u32 128, %s11
        %p184 = scmp.lt.s32.totalorder %s183, 255
        %s185 = scalar_select %p184, %s183, 255
        %s186 = smul.addr %s185, 8
        %s187 = scalar_lea.vmem %s0, %s186
        %s188 = smul.u32 128, %s11
      $region32: #{tpu_custom_call.1} parent=27 // pred_fallthru
        _
      // Predicated region
      $region33: #{tpu_custom_call.1} parent=27 // pred_check
        %p189 = pneg %p57
      $region34: #{tpu_custom_call.1} parent=27 // pred_check_branch
        %191 = sbr.rel (%p189) target = $region36
      $region35: #{tpu_custom_call.1} parent=27 // pred_region
        %s192 = smul.u32 128, %s11
        %p193 = scmp.lt.s32.totalorder %s192, 255
        %s194 = scalar_select %p193, %s192, 255
        %s195 = smul.addr %s194, 8
        %s196 = scalar_lea.vmem %s1, %s195
        %s197 = smul.u32 128, %s11
      $region36: #{tpu_custom_call.1} parent=27 // pred_fallthru
        _
    $region28: #{tpu_custom_call.1} parent=5 // pred_fallthru
      _
    %p198 = scmp.le.s32.totalorder 1, %s11
    %p199 = scmp.lt.s32.totalorder %s11, 3
    %p200 = pnand %p198, %p199
    %p201 = pneg %p200
    // Predicated region
    $region37: #{tpu_custom_call.1} parent=5 // pred_check
      _
    $region38: #{tpu_custom_call.1} parent=5 // pred_check_branch
      %203 = sbr.rel (%p200) target = $region40
    $region39: #{tpu_custom_call.1} parent=5 // pred_region
      %s204 = ssub.s32 %s11, 1
      %s205 = smul.u32 128, %s16
      %p206 = scmp.lt.s32.totalorder %s205, 255
      %s207 = scalar_select %p206, %s205, 255
      %s208 = smul.addr %s207, 8
      %s209 = scalar_lea.vmem %s0, %s208
      %p210 = pneg %p37
      %p211 = pneg %p34
      %s212 = smul.u32 128, %s16
      %p213 = scmp.lt.s32.totalorder %s212, 255
      %s214 = scalar_select %p213, %s212, 255
      %s215 = smul.addr %s214, 8
      %s216 = scalar_lea.vmem %s1, %s215
      %p217 = pneg %p63
      %p218 = pneg %p60
      %p219 = pneg %p84
      %p220 = pneg %p81
      %p221 = pneg %p105
      %p222 = pneg %p102
      %p223 = pneg %p126
      %p224 = pneg %p123
      %p225 = pneg %p152
      %p226 = pneg %p149
      %s227 = smul.u32 128, %s16
      %p228 = scmp.lt.s32.totalorder %s227, 255
      %s229 = scalar_select %p228, %s227, 255
      %s230 = smul.addr %s229, 8
      %s231 = scalar_lea.vmem %s5, %s230
      %s232 = smul.u32 128, %s16
      %p233 = scmp.lt.s32.totalorder %s232, 255
      %s234 = scalar_select %p233, %s232, 255
      %s235 = smul.addr %s234, 8
      %s236 = scalar_lea.vmem %s0, %s235
      %s237 = smul.u32 128, %s16
      %s238 = smul.u32 128, %s16
      %p239 = scmp.lt.s32.totalorder %s238, 255
      %s240 = scalar_select %p239, %s238, 255
      %s241 = smul.addr %s240, 8
      %s242 = scalar_lea.vmem %s1, %s241
      %s243 = smul.u32 128, %s16
      %s244 = smul.u32 128, %s16
      %p245 = scmp.lt.s32.totalorder %s244, 255
      %s246 = scalar_select %p245, %s244, 255
      %s247 = smul.addr %s246, 8
      %s248 = scalar_lea.vmem %s5, %s247
      %s249 = smul.u32 128, %s16
      %v251 = vld [vmem:[%s236] sm:$0xff]
      %v252 = vld [vmem:[%s236 + $0x8] sm:$0xff]
      %v253 = vld [vmem:[%s236 + $0x10] sm:$0xff]
      %v254 = vld [vmem:[%s236 + $0x18] sm:$0xff]
      %v255 = vld [vmem:[%s236 + $0x20] sm:$0xff]
      %v256 = vld [vmem:[%s236 + $0x28] sm:$0xff]
      %v257 = vld [vmem:[%s236 + $0x30] sm:$0xff]
      %v258 = vld [vmem:[%s236 + $0x38] sm:$0xff]
      %v259 = vld [vmem:[%s236 + $0x40] sm:$0xff]
      %v260 = vld [vmem:[%s236 + $0x48] sm:$0xff]
      %v261 = vld [vmem:[%s236 + $0x50] sm:$0xff]
      %v262 = vld [vmem:[%s236 + $0x58] sm:$0xff]
      %v263 = vld [vmem:[%s236 + $0x60] sm:$0xff]
      %v264 = vld [vmem:[%s236 + $0x68] sm:$0xff]
      %v265 = vld [vmem:[%s236 + $0x70] sm:$0xff]
      %v266 = vld [vmem:[%s236 + $0x78] sm:$0xff]
      %v267 = vld [vmem:[%s236 + $0x80] sm:$0xff]
      %v268 = vld [vmem:[%s236 + $0x88] sm:$0xff]
      %v269 = vld [vmem:[%s236 + $0x90] sm:$0xff]
      %v270 = vld [vmem:[%s236 + $0x98] sm:$0xff]
      %v271 = vld [vmem:[%s236 + $0xa0] sm:$0xff]
      %v272 = vld [vmem:[%s236 + $0xa8] sm:$0xff]
      %v273 = vld [vmem:[%s236 + $0xb0] sm:$0xff]
      %v274 = vld [vmem:[%s236 + $0xb8] sm:$0xff]
      %v275 = vld [vmem:[%s236 + $0xc0] sm:$0xff]
      %v276 = vld [vmem:[%s236 + $0xc8] sm:$0xff]
      %v277 = vld [vmem:[%s236 + $0xd0] sm:$0xff]
      %v278 = vld [vmem:[%s236 + $0xd8] sm:$0xff]
      %v279 = vld [vmem:[%s236 + $0xe0] sm:$0xff]
      %v280 = vld [vmem:[%s236 + $0xe8] sm:$0xff]
      %v281 = vld [vmem:[%s236 + $0xf0] sm:$0xff]
      %v282 = vld [vmem:[%s236 + $0xf8] sm:$0xff]
      %v283 = vld [vmem:[%s236 + $0x100] sm:$0xff]
      %v284 = vld [vmem:[%s236 + $0x108] sm:$0xff]
      %v285 = vld [vmem:[%s236 + $0x110] sm:$0xff]
      %v286 = vld [vmem:[%s236 + $0x118] sm:$0xff]
      %v287 = vld [vmem:[%s236 + $0x120] sm:$0xff]
      %v288 = vld [vmem:[%s236 + $0x128] sm:$0xff]
      %v289 = vld [vmem:[%s236 + $0x130] sm:$0xff]
      %v290 = vld [vmem:[%s236 + $0x138] sm:$0xff]
      %v291 = vld [vmem:[%s236 + $0x140] sm:$0xff]
      %v292 = vld [vmem:[%s236 + $0x148] sm:$0xff]
      %v293 = vld [vmem:[%s236 + $0x150] sm:$0xff]
      %v294 = vld [vmem:[%s236 + $0x158] sm:$0xff]
      %v295 = vld [vmem:[%s236 + $0x160] sm:$0xff]
      %v296 = vld [vmem:[%s236 + $0x168] sm:$0xff]
      %v297 = vld [vmem:[%s236 + $0x170] sm:$0xff]
      %v298 = vld [vmem:[%s236 + $0x178] sm:$0xff]
      %v299 = vld [vmem:[%s236 + $0x180] sm:$0xff]
      %v300 = vld [vmem:[%s236 + $0x188] sm:$0xff]
      %v301 = vld [vmem:[%s236 + $0x190] sm:$0xff]
      %v302 = vld [vmem:[%s236 + $0x198] sm:$0xff]
      %v303 = vld [vmem:[%s236 + $0x1a0] sm:$0xff]
      %v304 = vld [vmem:[%s236 + $0x1a8] sm:$0xff]
      %v305 = vld [vmem:[%s236 + $0x1b0] sm:$0xff]
      %v306 = vld [vmem:[%s236 + $0x1b8] sm:$0xff]
      %v307 = vld [vmem:[%s236 + $0x1c0] sm:$0xff]
      %v308 = vld [vmem:[%s236 + $0x1c8] sm:$0xff]
      %v309 = vld [vmem:[%s236 + $0x1d0] sm:$0xff]
      %v310 = vld [vmem:[%s236 + $0x1d8] sm:$0xff]
      %v311 = vld [vmem:[%s236 + $0x1e0] sm:$0xff]
      %v312 = vld [vmem:[%s236 + $0x1e8] sm:$0xff]
      %v313 = vld [vmem:[%s236 + $0x1f0] sm:$0xff]
      %v314 = vld [vmem:[%s236 + $0x1f8] sm:$0xff]
      %v315 = vld [vmem:[%s236 + $0x200] sm:$0xff]
      %v316 = vld [vmem:[%s236 + $0x208] sm:$0xff]
      %v317 = vld [vmem:[%s236 + $0x210] sm:$0xff]
      %v318 = vld [vmem:[%s236 + $0x218] sm:$0xff]
      %v319 = vld [vmem:[%s236 + $0x220] sm:$0xff]
      %v320 = vld [vmem:[%s236 + $0x228] sm:$0xff]
      %v321 = vld [vmem:[%s236 + $0x230] sm:$0xff]
      %v322 = vld [vmem:[%s236 + $0x238] sm:$0xff]
      %v323 = vld [vmem:[%s236 + $0x240] sm:$0xff]
      %v324 = vld [vmem:[%s236 + $0x248] sm:$0xff]
      %v325 = vld [vmem:[%s236 + $0x250] sm:$0xff]
      %v326 = vld [vmem:[%s236 + $0x258] sm:$0xff]
      %v327 = vld [vmem:[%s236 + $0x260] sm:$0xff]
      %v328 = vld [vmem:[%s236 + $0x268] sm:$0xff]
      %v329 = vld [vmem:[%s236 + $0x270] sm:$0xff]
      %v330 = vld [vmem:[%s236 + $0x278] sm:$0xff]
      %v331 = vld [vmem:[%s236 + $0x280] sm:$0xff]
      %v332 = vld [vmem:[%s236 + $0x288] sm:$0xff]
      %v333 = vld [vmem:[%s236 + $0x290] sm:$0xff]
      %v334 = vld [vmem:[%s236 + $0x298] sm:$0xff]
      %v335 = vld [vmem:[%s236 + $0x2a0] sm:$0xff]
      %v336 = vld [vmem:[%s236 + $0x2a8] sm:$0xff]
      %v337 = vld [vmem:[%s236 + $0x2b0] sm:$0xff]
      %v338 = vld [vmem:[%s236 + $0x2b8] sm:$0xff]
      %v339 = vld [vmem:[%s236 + $0x2c0] sm:$0xff]
      %v340 = vld [vmem:[%s236 + $0x2c8] sm:$0xff]
      %v341 = vld [vmem:[%s236 + $0x2d0] sm:$0xff]
      %v342 = vld [vmem:[%s236 + $0x2d8] sm:$0xff]
      %v343 = vld [vmem:[%s236 + $0x2e0] sm:$0xff]
      %v344 = vld [vmem:[%s236 + $0x2e8] sm:$0xff]
      %v345 = vld [vmem:[%s236 + $0x2f0] sm:$0xff]
      %v346 = vld [vmem:[%s236 + $0x2f8] sm:$0xff]
      %v347 = vld [vmem:[%s236 + $0x300] sm:$0xff]
      %v348 = vld [vmem:[%s236 + $0x308] sm:$0xff]
      %v349 = vld [vmem:[%s236 + $0x310] sm:$0xff]
      %v350 = vld [vmem:[%s236 + $0x318] sm:$0xff]
      %v351 = vld [vmem:[%s236 + $0x320] sm:$0xff]
      %v352 = vld [vmem:[%s236 + $0x328] sm:$0xff]
      %v353 = vld [vmem:[%s236 + $0x330] sm:$0xff]
      %v354 = vld [vmem:[%s236 + $0x338] sm:$0xff]
      %v355 = vld [vmem:[%s236 + $0x340] sm:$0xff]
      %v356 = vld [vmem:[%s236 + $0x348] sm:$0xff]
      %v357 = vld [vmem:[%s236 + $0x350] sm:$0xff]
      %v358 = vld [vmem:[%s236 + $0x358] sm:$0xff]
      %v359 = vld [vmem:[%s236 + $0x360] sm:$0xff]
      %v360 = vld [vmem:[%s236 + $0x368] sm:$0xff]
      %v361 = vld [vmem:[%s236 + $0x370] sm:$0xff]
      %v362 = vld [vmem:[%s236 + $0x378] sm:$0xff]
      %v363 = vld [vmem:[%s236 + $0x380] sm:$0xff]
      %v364 = vld [vmem:[%s236 + $0x388] sm:$0xff]
      %v365 = vld [vmem:[%s236 + $0x390] sm:$0xff]
      %v366 = vld [vmem:[%s236 + $0x398] sm:$0xff]
      %v367 = vld [vmem:[%s236 + $0x3a0] sm:$0xff]
      %v368 = vld [vmem:[%s236 + $0x3a8] sm:$0xff]
      %v369 = vld [vmem:[%s236 + $0x3b0] sm:$0xff]
      %v370 = vld [vmem:[%s236 + $0x3b8] sm:$0xff]
      %v371 = vld [vmem:[%s236 + $0x3c0] sm:$0xff]
      %v372 = vld [vmem:[%s236 + $0x3c8] sm:$0xff]
      %v373 = vld [vmem:[%s236 + $0x3d0] sm:$0xff]
      %v374 = vld [vmem:[%s236 + $0x3d8] sm:$0xff]
      %v375 = vld [vmem:[%s236 + $0x3e0] sm:$0xff]
      %v376 = vld [vmem:[%s236 + $0x3e8] sm:$0xff]
      %v377 = vld [vmem:[%s236 + $0x3f0] sm:$0xff]
      %v378 = vld [vmem:[%s236 + $0x3f8] sm:$0xff]
      %v379 = vpack.c.bf16 %v252, %v251
      %v380 = vpack.c.bf16 %v254, %v253
      %v381 = vpack.c.bf16 %v256, %v255
      %v382 = vpack.c.bf16 %v258, %v257
      %v383 = vpack.c.bf16 %v260, %v259
      %v384 = vpack.c.bf16 %v262, %v261
      %v385 = vpack.c.bf16 %v264, %v263
      %v386 = vpack.c.bf16 %v266, %v265
      %v387 = vpack.c.bf16 %v268, %v267
      %v388 = vpack.c.bf16 %v270, %v269
      %v389 = vpack.c.bf16 %v272, %v271
      %v390 = vpack.c.bf16 %v274, %v273
      %v391 = vpack.c.bf16 %v276, %v275
      %v392 = vpack.c.bf16 %v278, %v277
      %v393 = vpack.c.bf16 %v280, %v279
      %v394 = vpack.c.bf16 %v282, %v281
      %v395 = vpack.c.bf16 %v284, %v283
      %v396 = vpack.c.bf16 %v286, %v285
      %v397 = vpack.c.bf16 %v288, %v287
      %v398 = vpack.c.bf16 %v290, %v289
      %v399 = vpack.c.bf16 %v292, %v291
      %v400 = vpack.c.bf16 %v294, %v293
      %v401 = vpack.c.bf16 %v296, %v295
      %v402 = vpack.c.bf16 %v298, %v297
      %v403 = vpack.c.bf16 %v300, %v299
      %v404 = vpack.c.bf16 %v302, %v301
      %v405 = vpack.c.bf16 %v304, %v303
      %v406 = vpack.c.bf16 %v306, %v305
      %v407 = vpack.c.bf16 %v308, %v307
      %v408 = vpack.c.bf16 %v310, %v309
      %v409 = vpack.c.bf16 %v312, %v311
      %v410 = vpack.c.bf16 %v314, %v313
      %v411 = vpack.c.bf16 %v316, %v315
      %v412 = vpack.c.bf16 %v318, %v317
      %v413 = vpack.c.bf16 %v320, %v319
      %v414 = vpack.c.bf16 %v322, %v321
      %v415 = vpack.c.bf16 %v324, %v323
      %v416 = vpack.c.bf16 %v326, %v325
      %v417 = vpack.c.bf16 %v328, %v327
      %v418 = vpack.c.bf16 %v330, %v329
      %v419 = vpack.c.bf16 %v332, %v331
      %v420 = vpack.c.bf16 %v334, %v333
      %v421 = vpack.c.bf16 %v336, %v335
      %v422 = vpack.c.bf16 %v338, %v337
      %v423 = vpack.c.bf16 %v340, %v339
      %v424 = vpack.c.bf16 %v342, %v341
      %v425 = vpack.c.bf16 %v344, %v343
      %v426 = vpack.c.bf16 %v346, %v345
      %v427 = vpack.c.bf16 %v348, %v347
      %v428 = vpack.c.bf16 %v350, %v349
      %v429 = vpack.c.bf16 %v352, %v351
      %v430 = vpack.c.bf16 %v354, %v353
      %v431 = vpack.c.bf16 %v356, %v355
      %v432 = vpack.c.bf16 %v358, %v357
      %v433 = vpack.c.bf16 %v360, %v359
      %v434 = vpack.c.bf16 %v362, %v361
      %v435 = vpack.c.bf16 %v364, %v363
      %v436 = vpack.c.bf16 %v366, %v365
      %v437 = vpack.c.bf16 %v368, %v367
      %v438 = vpack.c.bf16 %v370, %v369
      %v439 = vpack.c.bf16 %v372, %v371
      %v440 = vpack.c.bf16 %v374, %v373
      %v441 = vpack.c.bf16 %v376, %v375
      %v442 = vpack.c.bf16 %v378, %v377
      %v443 = vld [vmem:[%s2] sm:$0xf]
      %v444 = vld [vmem:[%s242] sm:$0xff]
      %v445 = vld [vmem:[%s242 + $0x8] sm:$0xff]
      %v446 = vld [vmem:[%s242 + $0x10] sm:$0xff]
      %v447 = vld [vmem:[%s242 + $0x18] sm:$0xff]
      %v448 = vld [vmem:[%s242 + $0x20] sm:$0xff]
      %v449 = vld [vmem:[%s242 + $0x28] sm:$0xff]
      %v450 = vld [vmem:[%s242 + $0x30] sm:$0xff]
      %v451 = vld [vmem:[%s242 + $0x38] sm:$0xff]
      %v452 = vld [vmem:[%s242 + $0x40] sm:$0xff]
      %v453 = vld [vmem:[%s242 + $0x48] sm:$0xff]
      %v454 = vld [vmem:[%s242 + $0x50] sm:$0xff]
      %v455 = vld [vmem:[%s242 + $0x58] sm:$0xff]
      %v456 = vld [vmem:[%s242 + $0x60] sm:$0xff]
      %v457 = vld [vmem:[%s242 + $0x68] sm:$0xff]
      %v458 = vld [vmem:[%s242 + $0x70] sm:$0xff]
      %v459 = vld [vmem:[%s242 + $0x78] sm:$0xff]
      %v460 = vld [vmem:[%s242 + $0x80] sm:$0xff]
      %v461 = vld [vmem:[%s242 + $0x88] sm:$0xff]
      %v462 = vld [vmem:[%s242 + $0x90] sm:$0xff]
      %v463 = vld [vmem:[%s242 + $0x98] sm:$0xff]
      %v464 = vld [vmem:[%s242 + $0xa0] sm:$0xff]
      %v465 = vld [vmem:[%s242 + $0xa8] sm:$0xff]
      %v466 = vld [vmem:[%s242 + $0xb0] sm:$0xff]
      %v467 = vld [vmem:[%s242 + $0xb8] sm:$0xff]
      %v468 = vld [vmem:[%s242 + $0xc0] sm:$0xff]
      %v469 = vld [vmem:[%s242 + $0xc8] sm:$0xff]
      %v470 = vld [vmem:[%s242 + $0xd0] sm:$0xff]
      %v471 = vld [vmem:[%s242 + $0xd8] sm:$0xff]
      %v472 = vld [vmem:[%s242 + $0xe0] sm:$0xff]
      %v473 = vld [vmem:[%s242 + $0xe8] sm:$0xff]
      %v474 = vld [vmem:[%s242 + $0xf0] sm:$0xff]
      %v475 = vld [vmem:[%s242 + $0xf8] sm:$0xff]
      %v476 = vld [vmem:[%s242 + $0x100] sm:$0xff]
      %v477 = vld [vmem:[%s242 + $0x108] sm:$0xff]
      %v478 = vld [vmem:[%s242 + $0x110] sm:$0xff]
      %v479 = vld [vmem:[%s242 + $0x118] sm:$0xff]
      %v480 = vld [vmem:[%s242 + $0x120] sm:$0xff]
      %v481 = vld [vmem:[%s242 + $0x128] sm:$0xff]
      %v482 = vld [vmem:[%s242 + $0x130] sm:$0xff]
      %v483 = vld [vmem:[%s242 + $0x138] sm:$0xff]
      %v484 = vld [vmem:[%s242 + $0x140] sm:$0xff]
      %v485 = vld [vmem:[%s242 + $0x148] sm:$0xff]
      %v486 = vld [vmem:[%s242 + $0x150] sm:$0xff]
      %v487 = vld [vmem:[%s242 + $0x158] sm:$0xff]
      %v488 = vld [vmem:[%s242 + $0x160] sm:$0xff]
      %v489 = vld [vmem:[%s242 + $0x168] sm:$0xff]
      %v490 = vld [vmem:[%s242 + $0x170] sm:$0xff]
      %v491 = vld [vmem:[%s242 + $0x178] sm:$0xff]
      %v492 = vld [vmem:[%s242 + $0x180] sm:$0xff]
      %v493 = vld [vmem:[%s242 + $0x188] sm:$0xff]
      %v494 = vld [vmem:[%s242 + $0x190] sm:$0xff]
      %v495 = vld [vmem:[%s242 + $0x198] sm:$0xff]
      %v496 = vld [vmem:[%s242 + $0x1a0] sm:$0xff]
      %v497 = vld [vmem:[%s242 + $0x1a8] sm:$0xff]
      %v498 = vld [vmem:[%s242 + $0x1b0] sm:$0xff]
      %v499 = vld [vmem:[%s242 + $0x1b8] sm:$0xff]
      %v500 = vld [vmem:[%s242 + $0x1c0] sm:$0xff]
      %v501 = vld [vmem:[%s242 + $0x1c8] sm:$0xff]
      %v502 = vld [vmem:[%s242 + $0x1d0] sm:$0xff]
      %v503 = vld [vmem:[%s242 + $0x1d8] sm:$0xff]
      %v504 = vld [vmem:[%s242 + $0x1e0] sm:$0xff]
      %v505 = vld [vmem:[%s242 + $0x1e8] sm:$0xff]
      %v506 = vld [vmem:[%s242 + $0x1f0] sm:$0xff]
      %v507 = vld [vmem:[%s242 + $0x1f8] sm:$0xff]
      %v508 = vld [vmem:[%s242 + $0x200] sm:$0xff]
      %v509 = vld [vmem:[%s242 + $0x208] sm:$0xff]
      %v510 = vld [vmem:[%s242 + $0x210] sm:$0xff]
      %v511 = vld [vmem:[%s242 + $0x218] sm:$0xff]
      %v512 = vld [vmem:[%s242 + $0x220] sm:$0xff]
      %v513 = vld [vmem:[%s242 + $0x228] sm:$0xff]
      %v514 = vld [vmem:[%s242 + $0x230] sm:$0xff]
      %v515 = vld [vmem:[%s242 + $0x238] sm:$0xff]
      %v516 = vld [vmem:[%s242 + $0x240] sm:$0xff]
      %v517 = vld [vmem:[%s242 + $0x248] sm:$0xff]
      %v518 = vld [vmem:[%s242 + $0x250] sm:$0xff]
      %v519 = vld [vmem:[%s242 + $0x258] sm:$0xff]
      %v520 = vld [vmem:[%s242 + $0x260] sm:$0xff]
      %v521 = vld [vmem:[%s242 + $0x268] sm:$0xff]
      %v522 = vld [vmem:[%s242 + $0x270] sm:$0xff]
      %v523 = vld [vmem:[%s242 + $0x278] sm:$0xff]
      %v524 = vld [vmem:[%s242 + $0x280] sm:$0xff]
      %v525 = vld [vmem:[%s242 + $0x288] sm:$0xff]
      %v526 = vld [vmem:[%s242 + $0x290] sm:$0xff]
      %v527 = vld [vmem:[%s242 + $0x298] sm:$0xff]
      %v528 = vld [vmem:[%s242 + $0x2a0] sm:$0xff]
      %v529 = vld [vmem:[%s242 + $0x2a8] sm:$0xff]
      %v530 = vld [vmem:[%s242 + $0x2b0] sm:$0xff]
      %v531 = vld [vmem:[%s242 + $0x2b8] sm:$0xff]
      %v532 = vld [vmem:[%s242 + $0x2c0] sm:$0xff]
      %v533 = vld [vmem:[%s242 + $0x2c8] sm:$0xff]
      %v534 = vld [vmem:[%s242 + $0x2d0] sm:$0xff]
      %v535 = vld [vmem:[%s242 + $0x2d8] sm:$0xff]
      %v536 = vld [vmem:[%s242 + $0x2e0] sm:$0xff]
      %v537 = vld [vmem:[%s242 + $0x2e8] sm:$0xff]
      %v538 = vld [vmem:[%s242 + $0x2f0] sm:$0xff]
      %v539 = vld [vmem:[%s242 + $0x2f8] sm:$0xff]
      %v540 = vld [vmem:[%s242 + $0x300] sm:$0xff]
      %v541 = vld [vmem:[%s242 + $0x308] sm:$0xff]
      %v542 = vld [vmem:[%s242 + $0x310] sm:$0xff]
      %v543 = vld [vmem:[%s242 + $0x318] sm:$0xff]
      %v544 = vld [vmem:[%s242 + $0x320] sm:$0xff]
      %v545 = vld [vmem:[%s242 + $0x328] sm:$0xff]
      %v546 = vld [vmem:[%s242 + $0x330] sm:$0xff]
      %v547 = vld [vmem:[%s242 + $0x338] sm:$0xff]
      %v548 = vld [vmem:[%s242 + $0x340] sm:$0xff]
      %v549 = vld [vmem:[%s242 + $0x348] sm:$0xff]
      %v550 = vld [vmem:[%s242 + $0x350] sm:$0xff]
      %v551 = vld [vmem:[%s242 + $0x358] sm:$0xff]
      %v552 = vld [vmem:[%s242 + $0x360] sm:$0xff]
      %v553 = vld [vmem:[%s242 + $0x368] sm:$0xff]
      %v554 = vld [vmem:[%s242 + $0x370] sm:$0xff]
      %v555 = vld [vmem:[%s242 + $0x378] sm:$0xff]
      %v556 = vld [vmem:[%s242 + $0x380] sm:$0xff]
      %v557 = vld [vmem:[%s242 + $0x388] sm:$0xff]
      %v558 = vld [vmem:[%s242 + $0x390] sm:$0xff]
      %v559 = vld [vmem:[%s242 + $0x398] sm:$0xff]
      %v560 = vld [vmem:[%s242 + $0x3a0] sm:$0xff]
      %v561 = vld [vmem:[%s242 + $0x3a8] sm:$0xff]
      %v562 = vld [vmem:[%s242 + $0x3b0] sm:$0xff]
      %v563 = vld [vmem:[%s242 + $0x3b8] sm:$0xff]
      %v564 = vld [vmem:[%s242 + $0x3c0] sm:$0xff]
      %v565 = vld [vmem:[%s242 + $0x3c8] sm:$0xff]
      %v566 = vld [vmem:[%s242 + $0x3d0] sm:$0xff]
      %v567 = vld [vmem:[%s242 + $0x3d8] sm:$0xff]
      %v568 = vld [vmem:[%s242 + $0x3e0] sm:$0xff]
      %v569 = vld [vmem:[%s242 + $0x3e8] sm:$0xff]
      %v570 = vld [vmem:[%s242 + $0x3f0] sm:$0xff]
      %v571 = vld [vmem:[%s242 + $0x3f8] sm:$0xff]
      %v572 = vpack.c.bf16 %v445, %v444
      %v573 = vpack.c.bf16 %v447, %v446
      %v574 = vpack.c.bf16 %v449, %v448
      %v575 = vpack.c.bf16 %v451, %v450
      %v576 = vpack.c.bf16 %v453, %v452
      %v577 = vpack.c.bf16 %v455, %v454
      %v578 = vpack.c.bf16 %v457, %v456
      %v579 = vpack.c.bf16 %v459, %v458
      %v580 = vpack.c.bf16 %v461, %v460
      %v581 = vpack.c.bf16 %v463, %v462
      %v582 = vpack.c.bf16 %v465, %v464
      %v583 = vpack.c.bf16 %v467, %v466
      %v584 = vpack.c.bf16 %v469, %v468
      %v585 = vpack.c.bf16 %v471, %v470
      %v586 = vpack.c.bf16 %v473, %v472
      %v587 = vpack.c.bf16 %v475, %v474
      %v588 = vpack.c.bf16 %v477, %v476
      %v589 = vpack.c.bf16 %v479, %v478
      %v590 = vpack.c.bf16 %v481, %v480
      %v591 = vpack.c.bf16 %v483, %v482
      %v592 = vpack.c.bf16 %v485, %v484
      %v593 = vpack.c.bf16 %v487, %v486
      %v594 = vpack.c.bf16 %v489, %v488
      %v595 = vpack.c.bf16 %v491, %v490
      %v596 = vpack.c.bf16 %v493, %v492
      %v597 = vpack.c.bf16 %v495, %v494
      %v598 = vpack.c.bf16 %v497, %v496
      %v599 = vpack.c.bf16 %v499, %v498
      %v600 = vpack.c.bf16 %v501, %v500
      %v601 = vpack.c.bf16 %v503, %v502
      %v602 = vpack.c.bf16 %v505, %v504
      %v603 = vpack.c.bf16 %v507, %v506
      %v604 = vpack.c.bf16 %v509, %v508
      %v605 = vpack.c.bf16 %v511, %v510
      %v606 = vpack.c.bf16 %v513, %v512
      %v607 = vpack.c.bf16 %v515, %v514
      %v608 = vpack.c.bf16 %v517, %v516
      %v609 = vpack.c.bf16 %v519, %v518
      %v610 = vpack.c.bf16 %v521, %v520
      %v611 = vpack.c.bf16 %v523, %v522
      %v612 = vpack.c.bf16 %v525, %v524
      %v613 = vpack.c.bf16 %v527, %v526
      %v614 = vpack.c.bf16 %v529, %v528
      %v615 = vpack.c.bf16 %v531, %v530
      %v616 = vpack.c.bf16 %v533, %v532
      %v617 = vpack.c.bf16 %v535, %v534
      %v618 = vpack.c.bf16 %v537, %v536
      %v619 = vpack.c.bf16 %v539, %v538
      %v620 = vpack.c.bf16 %v541, %v540
      %v621 = vpack.c.bf16 %v543, %v542
      %v622 = vpack.c.bf16 %v545, %v544
      %v623 = vpack.c.bf16 %v547, %v546
      %v624 = vpack.c.bf16 %v549, %v548
      %v625 = vpack.c.bf16 %v551, %v550
      %v626 = vpack.c.bf16 %v553, %v552
      %v627 = vpack.c.bf16 %v555, %v554
      %v628 = vpack.c.bf16 %v557, %v556
      %v629 = vpack.c.bf16 %v559, %v558
      %v630 = vpack.c.bf16 %v561, %v560
      %v631 = vpack.c.bf16 %v563, %v562
      %v632 = vpack.c.bf16 %v565, %v564
      %v633 = vpack.c.bf16 %v567, %v566
      %v634 = vpack.c.bf16 %v569, %v568
      %v635 = vpack.c.bf16 %v571, %v570
      %s636 = scalar_lea.vmem %s2, 4
      %v637 = vld [vmem:[%s636] sm:$0xf]
      %vm638 = vcmask 64512
      %v640 = vsel %vm638, %v572, 0
      %v643 = vsel %vm638, %v573, 0
      %v646 = vsel %vm638, %v574, 0
      %v649 = vsel %vm638, %v575, 0
      %v652 = vsel %vm638, %v576, 0
      %v655 = vsel %vm638, %v577, 0
      %v658 = vsel %vm638, %v578, 0
      %v661 = vsel %vm638, %v579, 0
      %v664 = vsel %vm638, %v580, 0
      %v667 = vsel %vm638, %v581, 0
      %v670 = vsel %vm638, %v582, 0
      %v673 = vsel %vm638, %v583, 0
      %v676 = vsel %vm638, %v584, 0
      %v679 = vsel %vm638, %v585, 0
      %v682 = vsel %vm638, %v586, 0
      %v685 = vsel %vm638, %v587, 0
      %v688 = vsel %vm638, %v588, 0
      %v691 = vsel %vm638, %v589, 0
      %v694 = vsel %vm638, %v590, 0
      %v697 = vsel %vm638, %v591, 0
      %v700 = vsel %vm638, %v592, 0
      %v703 = vsel %vm638, %v593, 0
      %v706 = vsel %vm638, %v594, 0
      %v709 = vsel %vm638, %v595, 0
      %v712 = vsel %vm638, %v596, 0
      %v715 = vsel %vm638, %v597, 0
      %v718 = vsel %vm638, %v598, 0
      %v721 = vsel %vm638, %v599, 0
      %v724 = vsel %vm638, %v600, 0
      %v727 = vsel %vm638, %v601, 0
      %v730 = vsel %vm638, %v602, 0
      %v733 = vsel %vm638, %v603, 0
      %v736 = vsel %vm638, %v604, 0
      %v739 = vsel %vm638, %v605, 0
      %v742 = vsel %vm638, %v606, 0
      %v745 = vsel %vm638, %v607, 0
      %v748 = vsel %vm638, %v608, 0
      %v751 = vsel %vm638, %v609, 0
      %v754 = vsel %vm638, %v610, 0
      %v757 = vsel %vm638, %v611, 0
      %v760 = vsel %vm638, %v612, 0
      %v763 = vsel %vm638, %v613, 0
      %v766 = vsel %vm638, %v614, 0
      %v769 = vsel %vm638, %v615, 0
      %v772 = vsel %vm638, %v616, 0
      %v775 = vsel %vm638, %v617, 0
      %v778 = vsel %vm638, %v618, 0
      %v781 = vsel %vm638, %v619, 0
      %v784 = vsel %vm638, %v620, 0
      %v787 = vsel %vm638, %v621, 0
      %v790 = vsel %vm638, %v622, 0
      %v793 = vsel %vm638, %v623, 0
      %v796 = vsel %vm638, %v624, 0
      %v799 = vsel %vm638, %v625, 0
      %v802 = vsel %vm638, %v626, 0
      %v805 = vsel %vm638, %v627, 0
      %v808 = vsel %vm638, %v628, 0
      %v811 = vsel %vm638, %v629, 0
      %v814 = vsel %vm638, %v630, 0
      %v817 = vsel %vm638, %v631, 0
      %v820 = vsel %vm638, %v632, 0
      %v823 = vsel %vm638, %v633, 0
      %v826 = vsel %vm638, %v634, 0
      %v829 = vsel %vm638, %v635, 0
      %vm831 = vcmask 1043456
      %v833 = vsel %vm831, %v637, 0
      %835 = vmatprep.subr.bf16.mxu0 0
      %836 = vmatpush1.bf16.msra.mxu0 %v833
      %837 = vmatprep.subr.bf16.mxu0 0
      %838 = vmatpush1.bf16.msra.mxu0 0
      %839 = vmatprep.subr.bf16.mxu0 0
      %840 = vmatpush1.bf16.msra.mxu0 0
      %841 = vmatprep.subr.bf16.mxu0 0
      %842 = vmatpush1.bf16.msra.mxu0 0
      %843 = vmatprep.subr.bf16.mxu0 0
      %844 = vmatpush1.bf16.msra.mxu0 0
      %845 = vmatprep.subr.bf16.mxu0 0
      %846 = vmatpush1.bf16.msra.mxu0 0
      %847 = vmatprep.subr.bf16.mxu0 0
      %848 = vmatpush1.bf16.msra.mxu0 0
      %849 = vmatprep.subr.bf16.mxu0 0
      %850 = vmatpush1.bf16.msra.mxu0 0
      %851 = vmatprep.subr.bf16.mxu0 0
      %852 = vmatpush1.bf16.msra.mxu0 0
      %853 = vmatprep.subr.bf16.mxu0 0
      %854 = vmatpush1.bf16.msra.mxu0 0
      %855 = vmatprep.subr.bf16.mxu0 0
      %856 = vmatpush1.bf16.msra.mxu0 0
      %857 = vmatprep.subr.bf16.mxu0 0
      %858 = vmatpush1.bf16.msra.mxu0 0
      %859 = vmatprep.subr.bf16.mxu0 0
      %860 = vmatpush1.bf16.msra.mxu0 0
      %861 = vmatprep.subr.bf16.mxu0 0
      %862 = vmatpush1.bf16.msra.mxu0 0
      %863 = vmatprep.subr.bf16.mxu0 0
      %864 = vmatpush1.bf16.msra.mxu0 0
      %865 = vmatprep.subr.bf16.mxu0 0
      %866 = vmatpush1.bf16.msra.mxu0 0
      %867 = vmatprep.mubr.bf16.mxu0 0
      %868 = vmatmul.mubr.bf16.gmra.mrb[0].mxu0 %v640
      %v869 = vpop.f32.mrb[0].mxu0
      %v870 = vadd.f32 0.0, %v869
      %v871 = vpop.f32.mrb[0].mxu0
      %v872 = vpop.f32.mrb[0].mxu0
      %v873 = vadd.f32 0.0, %v872
      %v874 = vpop.f32.mrb[0].mxu0
      %875 = vmatprep.mubr.bf16.mxu0 0
      %876 = vmatmul.mubr.bf16.gmra.mrb[0].mxu0 %v643
      %v877 = vpop.f32.mrb[0].mxu0
      %v878 = vadd.f32 0.0, %v877
      %v879 = vpop.f32.mrb[0].mxu0
      %v880 = vpop.f32.mrb[0].mxu0
      %v881 = vadd.f32 0.0, %v880
      %v882 = vpop.f32.mrb[0].mxu0
      %883 = vmatprep.mubr.bf16.mxu0 0
      %884 = vmatmul.mubr.bf16.gmra.mrb[0].mxu0 %v646
      %v885 = vpop.f32.mrb[0].mxu0
      %v886 = vadd.f32 0.0, %v885
      %v887 = vpop.f32.mrb[0].mxu0
      %v888 = vpop.f32.mrb[0].mxu0
      %v889 = vadd.f32 0.0, %v888
      %v890 = vpop.f32.mrb[0].mxu0
      %891 = vmatprep.mubr.bf16.mxu0 0
      %892 = vmatmul.mubr.bf16.gmra.mrb[0].mxu0 %v649
      %v893 = vpop.f32.mrb[0].mxu0
      %v894 = vadd.f32 0.0, %v893
      %v895 = vpop.f32.mrb[0].mxu0
      %v896 = vpop.f32.mrb[0].mxu0
      %v897 = vadd.f32 0.0, %v896
      %v898 = vpop.f32.mrb[0].mxu0
      %899 = vmatprep.mubr.bf16.mxu0 0
      %900 = vmatmul.mubr.bf16.gmra.mrb[0].mxu0 %v652
      %v901 = vpop.f32.mrb[0].mxu0
      %v902 = vadd.f32 0.0, %v901
      %v903 = vpop.f32.mrb[0].mxu0
      %v904 = vpop.f32.mrb[0].mxu0
      %v905 = vadd.f32 0.0, %v904
      %v906 = vpop.f32.mrb[0].mxu0
      %907 = vmatprep.mubr.bf16.mxu0 0
      %908 = vmatmul.mubr.bf16.gmra.mrb[0].mxu0 %v655
      %v909 = vpop.f32.mrb[0].mxu0
      %v910 = vadd.f32 0.0, %v909
      %v911 = vpop.f32.mrb[0].mxu0
      %v912 = vpop.f32.mrb[0].mxu0
      %v913 = vadd.f32 0.0, %v912
      %v914 = vpop.f32.mrb[0].mxu0
      %915 = vmatprep.mubr.bf16.mxu0 0
      %916 = vmatmul.mubr.bf16.gmra.mrb[0].mxu0 %v658
      %v917 = vpop.f32.mrb[0].mxu0
      %v918 = vadd.f32 0.0, %v917
      %v919 = vpop.f32.mrb[0].mxu0
      %v920 = vpop.f32.mrb[0].mxu0
      %v921 = vadd.f32 0.0, %v920
      %v922 = vpop.f32.mrb[0].mxu0
      %923 = vmatprep.mubr.bf16.mxu0 0
      %924 = vmatmul.mubr.bf16.gmra.mrb[0].mxu0 %v661
      %v925 = vpop.f32.mrb[0].mxu0
      %v926 = vadd.f32 0.0, %v925
      %v927 = vpop.f32.mrb[0].mxu0
      %v928 = vpop.f32.mrb[0].mxu0
      %v929 = vadd.f32 0.0, %v928
      %v930 = vpop.f32.mrb[0].mxu0
      %931 = vmatprep.mubr.bf16.mxu0 0
      %932 = vmatmul.mubr.bf16.gmra.mrb[0].mxu0 %v664
      %v933 = vpop.f32.mrb[0].mxu0
      %v934 = vadd.f32 0.0, %v933
      %v935 = vpop.f32.mrb[0].mxu0
      %v936 = vpop.f32.mrb[0].mxu0
      %v937 = vadd.f32 0.0, %v936
      %v938 = vpop.f32.mrb[0].mxu0
      %939 = vmatprep.mubr.bf16.mxu0 0
      %940 = vmatmul.mubr.bf16.gmra.mrb[0].mxu0 %v667
      %v941 = vpop.f32.mrb[0].mxu0
      %v942 = vadd.f32 0.0, %v941
      %v943 = vpop.f32.mrb[0].mxu0
      %v944 = vpop.f32.mrb[0].mxu0
      %v945 = vadd.f32 0.0, %v944
      %v946 = vpop.f32.mrb[0].mxu0
      %947 = vmatprep.mubr.bf16.mxu0 0
      %948 = vmatmul.mubr.bf16.gmra.mrb[0].mxu0 %v670
      %v949 = vpop.f32.mrb[0].mxu0
      %v950 = vadd.f32 0.0, %v949
      %v951 = vpop.f32.mrb[0].mxu0
      %v952 = vpop.f32.mrb[0].mxu0
      %v953 = vadd.f32 0.0, %v952
      %v954 = vpop.f32.mrb[0].mxu0
      %955 = vmatprep.mubr.bf16.mxu0 0
      %956 = vmatmul.mubr.bf16.gmra.mrb[0].mxu0 %v673
      %v957 = vpop.f32.mrb[0].mxu0
      %v958 = vadd.f32 0.0, %v957
      %v959 = vpop.f32.mrb[0].mxu0
      %v960 = vpop.f32.mrb[0].mxu0
      %v961 = vadd.f32 0.0, %v960
      %v962 = vpop.f32.mrb[0].mxu0
      %963 = vmatprep.mubr.bf16.mxu0 0
      %964 = vmatmul.mubr.bf16.gmra.mrb[0].mxu0 %v676
      %v965 = vpop.f32.mrb[0].mxu0
      %v966 = vadd.f32 0.0, %v965
      %v967 = vpop.f32.mrb[0].mxu0
      %v968 = vpop.f32.mrb[0].mxu0
      %v969 = vadd.f32 0.0, %v968
      %v970 = vpop.f32.mrb[0].mxu0
      %971 = vmatprep.mubr.bf16.mxu0 0
      %972 = vmatmul.mubr.bf16.gmra.mrb[0].mxu0 %v679
      %v973 = vpop.f32.mrb[0].mxu0
      %v974 = vadd.f32 0.0, %v973
      %v975 = vpop.f32.mrb[0].mxu0
      %v976 = vpop.f32.mrb[0].mxu0
      %v977 = vadd.f32 0.0, %v976
      %v978 = vpop.f32.mrb[0].mxu0
      %979 = vmatprep.mubr.bf16.mxu0 0
      %980 = vmatmul.mubr.bf16.gmra.mrb[0].mxu0 %v682
      %v981 = vpop.f32.mrb[0].mxu0
      %v982 = vadd.f32 0.0, %v981
      %v983 = vpop.f32.mrb[0].mxu0
      %v984 = vpop.f32.mrb[0].mxu0
      %v985 = vadd.f32 0.0, %v984
      %v986 = vpop.f32.mrb[0].mxu0
      %987 = vmatprep.mubr.bf16.mxu0 0
      %988 = vmatmul.mubr.bf16.gmra.mrb[0].mxu0 %v685
      %v989 = vpop.f32.mrb[0].mxu0
      %v990 = vadd.f32 0.0, %v989
      %v991 = vpop.f32.mrb[0].mxu0
      %v992 = vpop.f32.mrb[0].mxu0
      %v993 = vadd.f32 0.0, %v992
      %v994 = vpop.f32.mrb[0].mxu0
      %995 = vmatprep.mubr.bf16.mxu0 0
      %996 = vmatmul.mubr.bf16.gmra.mrb[0].mxu0 %v688
      %v997 = vpop.f32.mrb[0].mxu0
      %v998 = vadd.f32 0.0, %v997
      %v999 = vpop.f32.mrb[0].mxu0
      %v1000 = vpop.f32.mrb[0].mxu0
      %v1001 = vadd.f32 0.0, %v1000
      %v1002 = vpop.f32.mrb[0].mxu0
      %1003 = vmatprep.mubr.bf16.mxu0 0
      %1004 = vmatmul.mubr.bf16.gmra.mrb[0].mxu0 %v691
      %v1005 = vpop.f32.mrb[0].mxu0
      %v1006 = vadd.f32 0.0, %v1005
      %v1007 = vpop.f32.mrb[0].mxu0
      %v1008 = vpop.f32.mrb[0].mxu0
      %v1009 = vadd.f32 0.0, %v1008
      %v1010 = vpop.f32.mrb[0].mxu0
      %1011 = vmatprep.mubr.bf16.mxu0 0
      %1012 = vmatmul.mubr.bf16.gmra.mrb[0].mxu0 %v694
      %v1013 = vpop.f32.mrb[0].mxu0
      %v1014 = vadd.f32 0.0, %v1013
      %v1015 = vpop.f32.mrb[0].mxu0
      %v1016 = vpop.f32.mrb[0].mxu0
      %v1017 = vadd.f32 0.0, %v1016
      %v1018 = vpop.f32.mrb[0].mxu0
      %1019 = vmatprep.mubr.bf16.mxu0 0
      %1020 = vmatmul.mubr.bf16.gmra.mrb[0].mxu0 %v697
      %v1021 = vpop.f32.mrb[0].mxu0
      %v1022 = vadd.f32 0.0, %v1021
      %v1023 = vpop.f32.mrb[0].mxu0
      %v1024 = vpop.f32.mrb[0].mxu0
      %v1025 = vadd.f32 0.0, %v1024
      %v1026 = vpop.f32.mrb[0].mxu0
      %1027 = vmatprep.mubr.bf16.mxu0 0
      %1028 = vmatmul.mubr.bf16.gmra.mrb[0].mxu0 %v700
      %v1029 = vpop.f32.mrb[0].mxu0
      %v1030 = vadd.f32 0.0, %v1029
      %v1031 = vpop.f32.mrb[0].mxu0
      %v1032 = vpop.f32.mrb[0].mxu0
      %v1033 = vadd.f32 0.0, %v1032
      %v1034 = vpop.f32.mrb[0].mxu0
      %1035 = vmatprep.mubr.bf16.mxu0 0
      %1036 = vmatmul.mubr.bf16.gmra.mrb[0].mxu0 %v703
      %v1037 = vpop.f32.mrb[0].mxu0
      %v1038 = vadd.f32 0.0, %v1037
      %v1039 = vpop.f32.mrb[0].mxu0
      %v1040 = vpop.f32.mrb[0].mxu0
      %v1041 = vadd.f32 0.0, %v1040
      %v1042 = vpop.f32.mrb[0].mxu0
      %1043 = vmatprep.mubr.bf16.mxu0 0
      %1044 = vmatmul.mubr.bf16.gmra.mrb[0].mxu0 %v706
      %v1045 = vpop.f32.mrb[0].mxu0
      %v1046 = vadd.f32 0.0, %v1045
      %v1047 = vpop.f32.mrb[0].mxu0
      %v1048 = vpop.f32.mrb[0].mxu0
      %v1049 = vadd.f32 0.0, %v1048
      %v1050 = vpop.f32.mrb[0].mxu0
      %1051 = vmatprep.mubr.bf16.mxu0 0
      %1052 = vmatmul.mubr.bf16.gmra.mrb[0].mxu0 %v709
      %v1053 = vpop.f32.mrb[0].mxu0
      %v1054 = vadd.f32 0.0, %v1053
      %v1055 = vpop.f32.mrb[0].mxu0
      %v1056 = vpop.f32.mrb[0].mxu0
      %v1057 = vadd.f32 0.0, %v1056
      %v1058 = vpop.f32.mrb[0].mxu0
      %1059 = vmatprep.mubr.bf16.mxu0 0
      %1060 = vmatmul.mubr.bf16.gmra.mrb[0].mxu0 %v712
      %v1061 = vpop.f32.mrb[0].mxu0
      %v1062 = vadd.f32 0.0, %v1061
      %v1063 = vpop.f32.mrb[0].mxu0
      %v1064 = vpop.f32.mrb[0].mxu0
      %v1065 = vadd.f32 0.0, %v1064
      %v1066 = vpop.f32.mrb[0].mxu0
      %1067 = vmatprep.mubr.bf16.mxu0 0
      %1068 = vmatmul.mubr.bf16.gmra.mrb[0].mxu0 %v715
      %v1069 = vpop.f32.mrb[0].mxu0
      %v1070 = vadd.f32 0.0, %v1069
      %v1071 = vpop.f32.mrb[0].mxu0
      %v1072 = vpop.f32.mrb[0].mxu0
      %v1073 = vadd.f32 0.0, %v1072
      %v1074 = vpop.f32.mrb[0].mxu0
      %1075 = vmatprep.mubr.bf16.mxu0 0
      %1076 = vmatmul.mubr.bf16.gmra.mrb[0].mxu0 %v718
      %v1077 = vpop.f32.mrb[0].mxu0
      %v1078 = vadd.f32 0.0, %v1077
      %v1079 = vpop.f32.mrb[0].mxu0
      %v1080 = vpop.f32.mrb[0].mxu0
      %v1081 = vadd.f32 0.0, %v1080
      %v1082 = vpop.f32.mrb[0].mxu0
      %1083 = vmatprep.mubr.bf16.mxu0 0
      %1084 = vmatmul.mubr.bf16.gmra.mrb[0].mxu0 %v721
      %v1085 = vpop.f32.mrb[0].mxu0
      %v1086 = vadd.f32 0.0, %v1085
      %v1087 = vpop.f32.mrb[0].mxu0
      %v1088 = vpop.f32.mrb[0].mxu0
      %v1089 = vadd.f32 0.0, %v1088
      %v1090 = vpop.f32.mrb[0].mxu0
      %1091 = vmatprep.mubr.bf16.mxu0 0
      %1092 = vmatmul.mubr.bf16.gmra.mrb[0].mxu0 %v724
      %v1093 = vpop.f32.mrb[0].mxu0
      %v1094 = vadd.f32 0.0, %v1093
      %v1095 = vpop.f32.mrb[0].mxu0
      %v1096 = vpop.f32.mrb[0].mxu0
      %v1097 = vadd.f32 0.0, %v1096
      %v1098 = vpop.f32.mrb[0].mxu0
      %1099 = vmatprep.mubr.bf16.mxu0 0
      %1100 = vmatmul.mubr.bf16.gmra.mrb[0].mxu0 %v727
      %v1101 = vpop.f32.mrb[0].mxu0
      %v1102 = vadd.f32 0.0, %v1101
      %v1103 = vpop.f32.mrb[0].mxu0
      %v1104 = vpop.f32.mrb[0].mxu0
      %v1105 = vadd.f32 0.0, %v1104
      %v1106 = vpop.f32.mrb[0].mxu0
      %1107 = vmatprep.mubr.bf16.mxu0 0
      %1108 = vmatmul.mubr.bf16.gmra.mrb[0].mxu0 %v730
      %v1109 = vpop.f32.mrb[0].mxu0
      %v1110 = vadd.f32 0.0, %v1109
      %v1111 = vpop.f32.mrb[0].mxu0
      %v1112 = vpop.f32.mrb[0].mxu0
      %v1113 = vadd.f32 0.0, %v1112
      %v1114 = vpop.f32.mrb[0].mxu0
      %1115 = vmatprep.mubr.bf16.mxu0 0
      %1116 = vmatmul.mubr.bf16.gmra.mrb[0].mxu0 %v733
      %v1117 = vpop.f32.mrb[0].mxu0
      %v1118 = vadd.f32 0.0, %v1117
      %v1119 = vpop.f32.mrb[0].mxu0
      %v1120 = vpop.f32.mrb[0].mxu0
      %v1121 = vadd.f32 0.0, %v1120
      %v1122 = vpop.f32.mrb[0].mxu0
      %1123 = vmatprep.mubr.bf16.mxu0 0
      %1124 = vmatmul.mubr.bf16.gmra.mrb[0].mxu0 %v736
      %v1125 = vpop.f32.mrb[0].mxu0
      %v1126 = vadd.f32 0.0, %v1125
      %v1127 = vpop.f32.mrb[0].mxu0
      %v1128 = vpop.f32.mrb[0].mxu0
      %v1129 = vadd.f32 0.0, %v1128
      %v1130 = vpop.f32.mrb[0].mxu0
      %1131 = vmatprep.mubr.bf16.mxu0 0
      %1132 = vmatmul.mubr.bf16.gmra.mrb[0].mxu0 %v739
      %v1133 = vpop.f32.mrb[0].mxu0
      %v1134 = vadd.f32 0.0, %v1133
      %v1135 = vpop.f32.mrb[0].mxu0
      %v1136 = vpop.f32.mrb[0].mxu0
      %v1137 = vadd.f32 0.0, %v1136
      %v1138 = vpop.f32.mrb[0].mxu0
      %1139 = vmatprep.mubr.bf16.mxu0 0
      %1140 = vmatmul.mubr.bf16.gmra.mrb[0].mxu0 %v742
      %v1141 = vpop.f32.mrb[0].mxu0
      %v1142 = vadd.f32 0.0, %v1141
      %v1143 = vpop.f32.mrb[0].mxu0
      %v1144 = vpop.f32.mrb[0].mxu0
      %v1145 = vadd.f32 0.0, %v1144
      %v1146 = vpop.f32.mrb[0].mxu0
      %1147 = vmatprep.mubr.bf16.mxu0 0
      %1148 = vmatmul.mubr.bf16.gmra.mrb[0].mxu0 %v745
      %v1149 = vpop.f32.mrb[0].mxu0
      %v1150 = vadd.f32 0.0, %v1149
      %v1151 = vpop.f32.mrb[0].mxu0
      %v1152 = vpop.f32.mrb[0].mxu0
      %v1153 = vadd.f32 0.0, %v1152
      %v1154 = vpop.f32.mrb[0].mxu0
      %1155 = vmatprep.mubr.bf16.mxu0 0
      %1156 = vmatmul.mubr.bf16.gmra.mrb[0].mxu0 %v748
      %v1157 = vpop.f32.mrb[0].mxu0
      %v1158 = vadd.f32 0.0, %v1157
      %v1159 = vpop.f32.mrb[0].mxu0
      %v1160 = vpop.f32.mrb[0].mxu0
      %v1161 = vadd.f32 0.0, %v1160
      %v1162 = vpop.f32.mrb[0].mxu0
      %1163 = vmatprep.mubr.bf16.mxu0 0
      %1164 = vmatmul.mubr.bf16.gmra.mrb[0].mxu0 %v751
      %v1165 = vpop.f32.mrb[0].mxu0
      %v1166 = vadd.f32 0.0, %v1165
      %v1167 = vpop.f32.mrb[0].mxu0
      %v1168 = vpop.f32.mrb[0].mxu0
      %v1169 = vadd.f32 0.0, %v1168
      %v1170 = vpop.f32.mrb[0].mxu0
      %1171 = vmatprep.mubr.bf16.mxu0 0
      %1172 = vmatmul.mubr.bf16.gmra.mrb[0].mxu0 %v754
      %v1173 = vpop.f32.mrb[0].mxu0
      %v1174 = vadd.f32 0.0, %v1173
      %v1175 = vpop.f32.mrb[0].mxu0
      %v1176 = vpop.f32.mrb[0].mxu0
      %v1177 = vadd.f32 0.0, %v1176
      %v1178 = vpop.f32.mrb[0].mxu0
      %1179 = vmatprep.mubr.bf16.mxu0 0
      %1180 = vmatmul.mubr.bf16.gmra.mrb[0].mxu0 %v757
      %v1181 = vpop.f32.mrb[0].mxu0
      %v1182 = vadd.f32 0.0, %v1181
      %v1183 = vpop.f32.mrb[0].mxu0
      %v1184 = vpop.f32.mrb[0].mxu0
      %v1185 = vadd.f32 0.0, %v1184
      %v1186 = vpop.f32.mrb[0].mxu0
      %1187 = vmatprep.mubr.bf16.mxu0 0
      %1188 = vmatmul.mubr.bf16.gmra.mrb[0].mxu0 %v760
      %v1189 = vpop.f32.mrb[0].mxu0
      %v1190 = vadd.f32 0.0, %v1189
      %v1191 = vpop.f32.mrb[0].mxu0
      %v1192 = vpop.f32.mrb[0].mxu0
      %v1193 = vadd.f32 0.0, %v1192
      %v1194 = vpop.f32.mrb[0].mxu0
      %1195 = vmatprep.mubr.bf16.mxu0 0
      %1196 = vmatmul.mubr.bf16.gmra.mrb[0].mxu0 %v763
      %v1197 = vpop.f32.mrb[0].mxu0
      %v1198 = vadd.f32 0.0, %v1197
      %v1199 = vpop.f32.mrb[0].mxu0
      %v1200 = vpop.f32.mrb[0].mxu0
      %v1201 = vadd.f32 0.0, %v1200
      %v1202 = vpop.f32.mrb[0].mxu0
      %1203 = vmatprep.mubr.bf16.mxu0 0
      %1204 = vmatmul.mubr.bf16.gmra.mrb[0].mxu0 %v766
      %v1205 = vpop.f32.mrb[0].mxu0
      %v1206 = vadd.f32 0.0, %v1205
      %v1207 = vpop.f32.mrb[0].mxu0
      %v1208 = vpop.f32.mrb[0].mxu0
      %v1209 = vadd.f32 0.0, %v1208
      %v1210 = vpop.f32.mrb[0].mxu0
      %1211 = vmatprep.mubr.bf16.mxu0 0
      %1212 = vmatmul.mubr.bf16.gmra.mrb[0].mxu0 %v769
      %v1213 = vpop.f32.mrb[0].mxu0
      %v1214 = vadd.f32 0.0, %v1213
      %v1215 = vpop.f32.mrb[0].mxu0
      %v1216 = vpop.f32.mrb[0].mxu0
      %v1217 = vadd.f32 0.0, %v1216
      %v1218 = vpop.f32.mrb[0].mxu0
      %1219 = vmatprep.mubr.bf16.mxu0 0
      %1220 = vmatmul.mubr.bf16.gmra.mrb[0].mxu0 %v772
      %v1221 = vpop.f32.mrb[0].mxu0
      %v1222 = vadd.f32 0.0, %v1221
      %v1223 = vpop.f32.mrb[0].mxu0
      %v1224 = vpop.f32.mrb[0].mxu0
      %v1225 = vadd.f32 0.0, %v1224
      %v1226 = vpop.f32.mrb[0].mxu0
      %1227 = vmatprep.mubr.bf16.mxu0 0
      %1228 = vmatmul.mubr.bf16.gmra.mrb[0].mxu0 %v775
      %v1229 = vpop.f32.mrb[0].mxu0
      %v1230 = vadd.f32 0.0, %v1229
      %v1231 = vpop.f32.mrb[0].mxu0
      %v1232 = vpop.f32.mrb[0].mxu0
      %v1233 = vadd.f32 0.0, %v1232
      %v1234 = vpop.f32.mrb[0].mxu0
      %1235 = vmatprep.mubr.bf16.mxu0 0
      %1236 = vmatmul.mubr.bf16.gmra.mrb[0].mxu0 %v778
      %v1237 = vpop.f32.mrb[0].mxu0
      %v1238 = vadd.f32 0.0, %v1237
      %v1239 = vpop.f32.mrb[0].mxu0
      %v1240 = vpop.f32.mrb[0].mxu0
      %v1241 = vadd.f32 0.0, %v1240
      %v1242 = vpop.f32.mrb[0].mxu0
      %1243 = vmatprep.mubr.bf16.mxu0 0
      %1244 = vmatmul.mubr.bf16.gmra.mrb[0].mxu0 %v781
      %v1245 = vpop.f32.mrb[0].mxu0
      %v1246 = vadd.f32 0.0, %v1245
      %v1247 = vpop.f32.mrb[0].mxu0
      %v1248 = vpop.f32.mrb[0].mxu0
      %v1249 = vadd.f32 0.0, %v1248
      %v1250 = vpop.f32.mrb[0].mxu0
      %1251 = vmatprep.mubr.bf16.mxu0 0
      %1252 = vmatmul.mubr.bf16.gmra.mrb[0].mxu0 %v784
      %v1253 = vpop.f32.mrb[0].mxu0
      %v1254 = vadd.f32 0.0, %v1253
      %v1255 = vpop.f32.mrb[0].mxu0
      %v1256 = vpop.f32.mrb[0].mxu0
      %v1257 = vadd.f32 0.0, %v1256
      %v1258 = vpop.f32.mrb[0].mxu0
      %1259 = vmatprep.mubr.bf16.mxu0 0
      %1260 = vmatmul.mubr.bf16.gmra.mrb[0].mxu0 %v787
      %v1261 = vpop.f32.mrb[0].mxu0
      %v1262 = vadd.f32 0.0, %v1261
      %v1263 = vpop.f32.mrb[0].mxu0
      %v1264 = vpop.f32.mrb[0].mxu0
      %v1265 = vadd.f32 0.0, %v1264
      %v1266 = vpop.f32.mrb[0].mxu0
      %1267 = vmatprep.mubr.bf16.mxu0 0
      %1268 = vmatmul.mubr.bf16.gmra.mrb[0].mxu0 %v790
      %v1269 = vpop.f32.mrb[0].mxu0
      %v1270 = vadd.f32 0.0, %v1269
      %v1271 = vpop.f32.mrb[0].mxu0
      %v1272 = vpop.f32.mrb[0].mxu0
      %v1273 = vadd.f32 0.0, %v1272
      %v1274 = vpop.f32.mrb[0].mxu0
      %1275 = vmatprep.mubr.bf16.mxu0 0
      %1276 = vmatmul.mubr.bf16.gmra.mrb[0].mxu0 %v793
      %v1277 = vpop.f32.mrb[0].mxu0
      %v1278 = vadd.f32 0.0, %v1277
      %v1279 = vpop.f32.mrb[0].mxu0
      %v1280 = vpop.f32.mrb[0].mxu0
      %v1281 = vadd.f32 0.0, %v1280
      %v1282 = vpop.f32.mrb[0].mxu0
      %1283 = vmatprep.mubr.bf16.mxu0 0
      %1284 = vmatmul.mubr.bf16.gmra.mrb[0].mxu0 %v796
      %v1285 = vpop.f32.mrb[0].mxu0
      %v1286 = vadd.f32 0.0, %v1285
      %v1287 = vpop.f32.mrb[0].mxu0
      %v1288 = vpop.f32.mrb[0].mxu0
      %v1289 = vadd.f32 0.0, %v1288
      %v1290 = vpop.f32.mrb[0].mxu0
      %1291 = vmatprep.mubr.bf16.mxu0 0
      %1292 = vmatmul.mubr.bf16.gmra.mrb[0].mxu0 %v799
      %v1293 = vpop.f32.mrb[0].mxu0
      %v1294 = vadd.f32 0.0, %v1293
      %v1295 = vpop.f32.mrb[0].mxu0
      %v1296 = vpop.f32.mrb[0].mxu0
      %v1297 = vadd.f32 0.0, %v1296
      %v1298 = vpop.f32.mrb[0].mxu0
      %1299 = vmatprep.mubr.bf16.mxu0 0
      %1300 = vmatmul.mubr.bf16.gmra.mrb[0].mxu0 %v802
      %v1301 = vpop.f32.mrb[0].mxu0
      %v1302 = vadd.f32 0.0, %v1301
      %v1303 = vpop.f32.mrb[0].mxu0
      %v1304 = vpop.f32.mrb[0].mxu0
      %v1305 = vadd.f32 0.0, %v1304
      %v1306 = vpop.f32.mrb[0].mxu0
      %1307 = vmatprep.mubr.bf16.mxu0 0
      %1308 = vmatmul.mubr.bf16.gmra.mrb[0].mxu0 %v805
      %v1309 = vpop.f32.mrb[0].mxu0
      %v1310 = vadd.f32 0.0, %v1309
      %v1311 = vpop.f32.mrb[0].mxu0
      %v1312 = vpop.f32.mrb[0].mxu0
      %v1313 = vadd.f32 0.0, %v1312
      %v1314 = vpop.f32.mrb[0].mxu0
      %1315 = vmatprep.mubr.bf16.mxu0 0
      %1316 = vmatmul.mubr.bf16.gmra.mrb[0].mxu0 %v808
      %v1317 = vpop.f32.mrb[0].mxu0
      %v1318 = vadd.f32 0.0, %v1317
      %v1319 = vpop.f32.mrb[0].mxu0
      %v1320 = vpop.f32.mrb[0].mxu0
      %v1321 = vadd.f32 0.0, %v1320
      %v1322 = vpop.f32.mrb[0].mxu0
      %1323 = vmatprep.mubr.bf16.mxu0 0
      %1324 = vmatmul.mubr.bf16.gmra.mrb[0].mxu0 %v811
      %v1325 = vpop.f32.mrb[0].mxu0
      %v1326 = vadd.f32 0.0, %v1325
      %v1327 = vpop.f32.mrb[0].mxu0
      %v1328 = vpop.f32.mrb[0].mxu0
      %v1329 = vadd.f32 0.0, %v1328
      %v1330 = vpop.f32.mrb[0].mxu0
      %1331 = vmatprep.mubr.bf16.mxu0 0
      %1332 = vmatmul.mubr.bf16.gmra.mrb[0].mxu0 %v814
      %v1333 = vpop.f32.mrb[0].mxu0
      %v1334 = vadd.f32 0.0, %v1333
      %v1335 = vpop.f32.mrb[0].mxu0
      %v1336 = vpop.f32.mrb[0].mxu0
      %v1337 = vadd.f32 0.0, %v1336
      %v1338 = vpop.f32.mrb[0].mxu0
      %1339 = vmatprep.mubr.bf16.mxu0 0
      %1340 = vmatmul.mubr.bf16.gmra.mrb[0].mxu0 %v817
      %v1341 = vpop.f32.mrb[0].mxu0
      %v1342 = vadd.f32 0.0, %v1341
      %v1343 = vpop.f32.mrb[0].mxu0
      %v1344 = vpop.f32.mrb[0].mxu0
      %v1345 = vadd.f32 0.0, %v1344
      %v1346 = vpop.f32.mrb[0].mxu0
      %1347 = vmatprep.mubr.bf16.mxu0 0
      %1348 = vmatmul.mubr.bf16.gmra.mrb[0].mxu0 %v820
      %v1349 = vpop.f32.mrb[0].mxu0
      %v1350 = vadd.f32 0.0, %v1349
      %v1351 = vpop.f32.mrb[0].mxu0
      %v1352 = vpop.f32.mrb[0].mxu0
      %v1353 = vadd.f32 0.0, %v1352
      %v1354 = vpop.f32.mrb[0].mxu0
      %1355 = vmatprep.mubr.bf16.mxu0 0
      %1356 = vmatmul.mubr.bf16.gmra.mrb[0].mxu0 %v823
      %v1357 = vpop.f32.mrb[0].mxu0
      %v1358 = vadd.f32 0.0, %v1357
      %v1359 = vpop.f32.mrb[0].mxu0
      %v1360 = vpop.f32.mrb[0].mxu0
      %v1361 = vadd.f32 0.0, %v1360
      %v1362 = vpop.f32.mrb[0].mxu0
      %1363 = vmatprep.mubr.bf16.mxu0 0
      %1364 = vmatmul.mubr.bf16.gmra.mrb[0].mxu0 %v826
      %v1365 = vpop.f32.mrb[0].mxu0
      %v1366 = vadd.f32 0.0, %v1365
      %v1367 = vpop.f32.mrb[0].mxu0
      %v1368 = vpop.f32.mrb[0].mxu0
      %v1369 = vadd.f32 0.0, %v1368
      %v1370 = vpop.f32.mrb[0].mxu0
      %1371 = vmatprep.mubr.bf16.mxu0 0
      %1372 = vmatmul.mubr.bf16.gmra.mrb[0].mxu0 %v829
      %v1373 = vpop.f32.mrb[0].mxu0
      %v1374 = vadd.f32 0.0, %v1373
      %v1375 = vpop.f32.mrb[0].mxu0
      %v1376 = vpop.f32.mrb[0].mxu0
      %v1377 = vadd.f32 0.0, %v1376
      %v1378 = vpop.f32.mrb[0].mxu0
      %1379 = vdwg.mxu0
      %v1381 = vsel %vm638, %v379, 0
      %v1384 = vsel %vm638, %v380, 0
      %v1387 = vsel %vm638, %v381, 0
      %v1390 = vsel %vm638, %v382, 0
      %v1393 = vsel %vm638, %v383, 0
      %v1396 = vsel %vm638, %v384, 0
      %v1399 = vsel %vm638, %v385, 0
      %v1402 = vsel %vm638, %v386, 0
      %v1405 = vsel %vm638, %v387, 0
      %v1408 = vsel %vm638, %v388, 0
      %v1411 = vsel %vm638, %v389, 0
      %v1414 = vsel %vm638, %v390, 0
      %v1417 = vsel %vm638, %v391, 0
      %v1420 = vsel %vm638, %v392, 0
      %v1423 = vsel %vm638, %v393, 0
      %v1426 = vsel %vm638, %v394, 0
      %v1429 = vsel %vm638, %v395, 0
      %v1432 = vsel %vm638, %v396, 0
      %v1435 = vsel %vm638, %v397, 0
      %v1438 = vsel %vm638, %v398, 0
      %v1441 = vsel %vm638, %v399, 0
      %v1444 = vsel %vm638, %v400, 0
      %v1447 = vsel %vm638, %v401, 0
      %v1450 = vsel %vm638, %v402, 0
      %v1453 = vsel %vm638, %v403, 0
      %v1456 = vsel %vm638, %v404, 0
      %v1459 = vsel %vm638, %v405, 0
      %v1462 = vsel %vm638, %v406, 0
      %v1465 = vsel %vm638, %v407, 0
      %v1468 = vsel %vm638, %v408, 0
      %v1471 = vsel %vm638, %v409, 0
      %v1474 = vsel %vm638, %v410, 0
      %v1477 = vsel %vm638, %v411, 0
      %v1480 = vsel %vm638, %v412, 0
      %v1483 = vsel %vm638, %v413, 0
      %v1486 = vsel %vm638, %v414, 0
      %v1489 = vsel %vm638, %v415, 0
      %v1492 = vsel %vm638, %v416, 0
      %v1495 = vsel %vm638, %v417, 0
      %v1498 = vsel %vm638, %v418, 0
      %v1501 = vsel %vm638, %v419, 0
      %v1504 = vsel %vm638, %v420, 0
      %v1507 = vsel %vm638, %v421, 0
      %v1510 = vsel %vm638, %v422, 0
      %v1513 = vsel %vm638, %v423, 0
      %v1516 = vsel %vm638, %v424, 0
      %v1519 = vsel %vm638, %v425, 0
      %v1522 = vsel %vm638, %v426, 0
      %v1525 = vsel %vm638, %v427, 0
      %v1528 = vsel %vm638, %v428, 0
      %v1531 = vsel %vm638, %v429, 0
      %v1534 = vsel %vm638, %v430, 0
      %v1537 = vsel %vm638, %v431, 0
      %v1540 = vsel %vm638, %v432, 0
      %v1543 = vsel %vm638, %v433, 0
      %v1546 = vsel %vm638, %v434, 0
      %v1549 = vsel %vm638, %v435, 0
      %v1552 = vsel %vm638, %v436, 0
      %v1555 = vsel %vm638, %v437, 0
      %v1558 = vsel %vm638, %v438, 0
      %v1561 = vsel %vm638, %v439, 0
      %v1564 = vsel %vm638, %v440, 0
      %v1567 = vsel %vm638, %v441, 0
      %v1570 = vsel %vm638, %v442, 0
      %v1573 = vsel %vm831, %v443, 0
      %1575 = vmatprep.subr.bf16.mxu0 0
      %1576 = vmatpush1.bf16.msra.mxu0 %v1573
      %1577 = vmatprep.subr.bf16.mxu0 0
      %1578 = vmatpush1.bf16.msra.mxu0 0
      %1579 = vmatprep.subr.bf16.mxu0 0
      %1580 = vmatpush1.bf16.msra.mxu0 0
      %1581 = vmatprep.subr.bf16.mxu0 0
      %1582 = vmatpush1.bf16.msra.mxu0 0
      %1583 = vmatprep.subr.bf16.mxu0 0
      %1584 = vmatpush1.bf16.msra.mxu0 0
      %1585 = vmatprep.subr.bf16.mxu0 0
      %1586 = vmatpush1.bf16.msra.mxu0 0
      %1587 = vmatprep.subr.bf16.mxu0 0
      %1588 = vmatpush1.bf16.msra.mxu0 0
      %1589 = vmatprep.subr.bf16.mxu0 0
      %1590 = vmatpush1.bf16.msra.mxu0 0
      %1591 = vmatprep.subr.bf16.mxu0 0
      %1592 = vmatpush1.bf16.msra.mxu0 0
      %1593 = vmatprep.subr.bf16.mxu0 0
      %1594 = vmatpush1.bf16.msra.mxu0 0
      %1595 = vmatprep.subr.bf16.mxu0 0
      %1596 = vmatpush1.bf16.msra.mxu0 0
      %1597 = vmatprep.subr.bf16.mxu0 0
      %1598 = vmatpush1.bf16.msra.mxu0 0
      %1599 = vmatprep.subr.bf16.mxu0 0
      %1600 = vmatpush1.bf16.msra.mxu0 0
      %1601 = vmatprep.subr.bf16.mxu0 0
      %1602 = vmatpush1.bf16.msra.mxu0 0
      %1603 = vmatprep.subr.bf16.mxu0 0
      %1604 = vmatpush1.bf16.msra.mxu0 0
      %1605 = vmatprep.subr.bf16.mxu0 0
      %1606 = vmatpush1.bf16.msra.mxu0 0
      %1607 = vmatprep.mubr.bf16.mxu0 0
      %1608 = vmatmul.mubr.bf16.gmra.mrb[0].mxu0 %v1381
      %v1609 = vpop.f32.mrb[0].mxu0
      %v1610 = vadd.f32 %v870, %v1609
      %v1611 = vpop.f32.mrb[0].mxu0
      %v1612 = vpop.f32.mrb[0].mxu0
      %v1613 = vadd.f32 %v873, %v1612
      %v1614 = vpop.f32.mrb[0].mxu0
      %1615 = vmatprep.mubr.bf16.mxu0 0
      %1616 = vmatmul.mubr.bf16.gmra.mrb[0].mxu0 %v1384
      %v1617 = vpop.f32.mrb[0].mxu0
      %v1618 = vadd.f32 %v878, %v1617
      %v1619 = vpop.f32.mrb[0].mxu0
      %v1620 = vpop.f32.mrb[0].mxu0
      %v1621 = vadd.f32 %v881, %v1620
      %v1622 = vpop.f32.mrb[0].mxu0
      %1623 = vmatprep.mubr.bf16.mxu0 0
      %1624 = vmatmul.mubr.bf16.gmra.mrb[0].mxu0 %v1387
      %v1625 = vpop.f32.mrb[0].mxu0
      %v1626 = vadd.f32 %v886, %v1625
      %v1627 = vpop.f32.mrb[0].mxu0
      %v1628 = vpop.f32.mrb[0].mxu0
      %v1629 = vadd.f32 %v889, %v1628
      %v1630 = vpop.f32.mrb[0].mxu0
      %1631 = vmatprep.mubr.bf16.mxu0 0
      %1632 = vmatmul.mubr.bf16.gmra.mrb[0].mxu0 %v1390
      %v1633 = vpop.f32.mrb[0].mxu0
      %v1634 = vadd.f32 %v894, %v1633
      %v1635 = vpop.f32.mrb[0].mxu0
      %v1636 = vpop.f32.mrb[0].mxu0
      %v1637 = vadd.f32 %v897, %v1636
      %v1638 = vpop.f32.mrb[0].mxu0
      %1639 = vmatprep.mubr.bf16.mxu0 0
      %1640 = vmatmul.mubr.bf16.gmra.mrb[0].mxu0 %v1393
      %v1641 = vpop.f32.mrb[0].mxu0
      %v1642 = vadd.f32 %v902, %v1641
      %v1643 = vpop.f32.mrb[0].mxu0
      %v1644 = vpop.f32.mrb[0].mxu0
      %v1645 = vadd.f32 %v905, %v1644
      %v1646 = vpop.f32.mrb[0].mxu0
      %1647 = vmatprep.mubr.bf16.mxu0 0
      %1648 = vmatmul.mubr.bf16.gmra.mrb[0].mxu0 %v1396
      %v1649 = vpop.f32.mrb[0].mxu0
      %v1650 = vadd.f32 %v910, %v1649
      %v1651 = vpop.f32.mrb[0].mxu0
      %v1652 = vpop.f32.mrb[0].mxu0
      %v1653 = vadd.f32 %v913, %v1652
      %v1654 = vpop.f32.mrb[0].mxu0
      %1655 = vmatprep.mubr.bf16.mxu0 0
      %1656 = vmatmul.mubr.bf16.gmra.mrb[0].mxu0 %v1399
      %v1657 = vpop.f32.mrb[0].mxu0
      %v1658 = vadd.f32 %v918, %v1657
      %v1659 = vpop.f32.mrb[0].mxu0
      %v1660 = vpop.f32.mrb[0].mxu0
      %v1661 = vadd.f32 %v921, %v1660
      %v1662 = vpop.f32.mrb[0].mxu0
      %1663 = vmatprep.mubr.bf16.mxu0 0
      %1664 = vmatmul.mubr.bf16.gmra.mrb[0].mxu0 %v1402
      %v1665 = vpop.f32.mrb[0].mxu0
      %v1666 = vadd.f32 %v926, %v1665
      %v1667 = vpop.f32.mrb[0].mxu0
      %v1668 = vpop.f32.mrb[0].mxu0
      %v1669 = vadd.f32 %v929, %v1668
      %v1670 = vpop.f32.mrb[0].mxu0
      %1671 = vmatprep.mubr.bf16.mxu0 0
      %1672 = vmatmul.mubr.bf16.gmra.mrb[0].mxu0 %v1405
      %v1673 = vpop.f32.mrb[0].mxu0
      %v1674 = vadd.f32 %v934, %v1673
      %v1675 = vpop.f32.mrb[0].mxu0
      %v1676 = vpop.f32.mrb[0].mxu0
      %v1677 = vadd.f32 %v937, %v1676
      %v1678 = vpop.f32.mrb[0].mxu0
      %1679 = vmatprep.mubr.bf16.mxu0 0
      %1680 = vmatmul.mubr.bf16.gmra.mrb[0].mxu0 %v1408
      %v1681 = vpop.f32.mrb[0].mxu0
      %v1682 = vadd.f32 %v942, %v1681
      %v1683 = vpop.f32.mrb[0].mxu0
      %v1684 = vpop.f32.mrb[0].mxu0
      %v1685 = vadd.f32 %v945, %v1684
      %v1686 = vpop.f32.mrb[0].mxu0
      %1687 = vmatprep.mubr.bf16.mxu0 0
      %1688 = vmatmul.mubr.bf16.gmra.mrb[0].mxu0 %v1411
      %v1689 = vpop.f32.mrb[0].mxu0
      %v1690 = vadd.f32 %v950, %v1689
      %v1691 = vpop.f32.mrb[0].mxu0
      %v1692 = vpop.f32.mrb[0].mxu0
      %v1693 = vadd.f32 %v953, %v1692
      %v1694 = vpop.f32.mrb[0].mxu0
      %1695 = vmatprep.mubr.bf16.mxu0 0
      %1696 = vmatmul.mubr.bf16.gmra.mrb[0].mxu0 %v1414
      %v1697 = vpop.f32.mrb[0].mxu0
      %v1698 = vadd.f32 %v958, %v1697
      %v1699 = vpop.f32.mrb[0].mxu0
      %v1700 = vpop.f32.mrb[0].mxu0
      %v1701 = vadd.f32 %v961, %v1700
      %v1702 = vpop.f32.mrb[0].mxu0
      %1703 = vmatprep.mubr.bf16.mxu0 0
      %1704 = vmatmul.mubr.bf16.gmra.mrb[0].mxu0 %v1417
      %v1705 = vpop.f32.mrb[0].mxu0
      %v1706 = vadd.f32 %v966, %v1705
      %v1707 = vpop.f32.mrb[0].mxu0
      %v1708 = vpop.f32.mrb[0].mxu0
      %v1709 = vadd.f32 %v969, %v1708
      %v1710 = vpop.f32.mrb[0].mxu0
      %1711 = vmatprep.mubr.bf16.mxu0 0
      %1712 = vmatmul.mubr.bf16.gmra.mrb[0].mxu0 %v1420
      %v1713 = vpop.f32.mrb[0].mxu0
      %v1714 = vadd.f32 %v974, %v1713
      %v1715 = vpop.f32.mrb[0].mxu0
      %v1716 = vpop.f32.mrb[0].mxu0
      %v1717 = vadd.f32 %v977, %v1716
      %v1718 = vpop.f32.mrb[0].mxu0
      %1719 = vmatprep.mubr.bf16.mxu0 0
      %1720 = vmatmul.mubr.bf16.gmra.mrb[0].mxu0 %v1423
      %v1721 = vpop.f32.mrb[0].mxu0
      %v1722 = vadd.f32 %v982, %v1721
      %v1723 = vpop.f32.mrb[0].mxu0
      %v1724 = vpop.f32.mrb[0].mxu0
      %v1725 = vadd.f32 %v985, %v1724
      %v1726 = vpop.f32.mrb[0].mxu0
      %1727 = vmatprep.mubr.bf16.mxu0 0
      %1728 = vmatmul.mubr.bf16.gmra.mrb[0].mxu0 %v1426
      %v1729 = vpop.f32.mrb[0].mxu0
      %v1730 = vadd.f32 %v990, %v1729
      %v1731 = vpop.f32.mrb[0].mxu0
      %v1732 = vpop.f32.mrb[0].mxu0
      %v1733 = vadd.f32 %v993, %v1732
      %v1734 = vpop.f32.mrb[0].mxu0
      %1735 = vmatprep.mubr.bf16.mxu0 0
      %1736 = vmatmul.mubr.bf16.gmra.mrb[0].mxu0 %v1429
      %v1737 = vpop.f32.mrb[0].mxu0
      %v1738 = vadd.f32 %v998, %v1737
      %v1739 = vpop.f32.mrb[0].mxu0
      %v1740 = vpop.f32.mrb[0].mxu0
      %v1741 = vadd.f32 %v1001, %v1740
      %v1742 = vpop.f32.mrb[0].mxu0
      %1743 = vmatprep.mubr.bf16.mxu0 0
      %1744 = vmatmul.mubr.bf16.gmra.mrb[0].mxu0 %v1432
      %v1745 = vpop.f32.mrb[0].mxu0
      %v1746 = vadd.f32 %v1006, %v1745
      %v1747 = vpop.f32.mrb[0].mxu0
      %v1748 = vpop.f32.mrb[0].mxu0
      %v1749 = vadd.f32 %v1009, %v1748
      %v1750 = vpop.f32.mrb[0].mxu0
      %1751 = vmatprep.mubr.bf16.mxu0 0
      %1752 = vmatmul.mubr.bf16.gmra.mrb[0].mxu0 %v1435
      %v1753 = vpop.f32.mrb[0].mxu0
      %v1754 = vadd.f32 %v1014, %v1753
      %v1755 = vpop.f32.mrb[0].mxu0
      %v1756 = vpop.f32.mrb[0].mxu0
      %v1757 = vadd.f32 %v1017, %v1756
      %v1758 = vpop.f32.mrb[0].mxu0
      %1759 = vmatprep.mubr.bf16.mxu0 0
      %1760 = vmatmul.mubr.bf16.gmra.mrb[0].mxu0 %v1438
      %v1761 = vpop.f32.mrb[0].mxu0
      %v1762 = vadd.f32 %v1022, %v1761
      %v1763 = vpop.f32.mrb[0].mxu0
      %v1764 = vpop.f32.mrb[0].mxu0
      %v1765 = vadd.f32 %v1025, %v1764
      %v1766 = vpop.f32.mrb[0].mxu0
      %1767 = vmatprep.mubr.bf16.mxu0 0
      %1768 = vmatmul.mubr.bf16.gmra.mrb[0].mxu0 %v1441
      %v1769 = vpop.f32.mrb[0].mxu0
      %v1770 = vadd.f32 %v1030, %v1769
      %v1771 = vpop.f32.mrb[0].mxu0
      %v1772 = vpop.f32.mrb[0].mxu0
      %v1773 = vadd.f32 %v1033, %v1772
      %v1774 = vpop.f32.mrb[0].mxu0
      %1775 = vmatprep.mubr.bf16.mxu0 0
      %1776 = vmatmul.mubr.bf16.gmra.mrb[0].mxu0 %v1444
      %v1777 = vpop.f32.mrb[0].mxu0
      %v1778 = vadd.f32 %v1038, %v1777
      %v1779 = vpop.f32.mrb[0].mxu0
      %v1780 = vpop.f32.mrb[0].mxu0
      %v1781 = vadd.f32 %v1041, %v1780
      %v1782 = vpop.f32.mrb[0].mxu0
      %1783 = vmatprep.mubr.bf16.mxu0 0
      %1784 = vmatmul.mubr.bf16.gmra.mrb[0].mxu0 %v1447
      %v1785 = vpop.f32.mrb[0].mxu0
      %v1786 = vadd.f32 %v1046, %v1785
      %v1787 = vpop.f32.mrb[0].mxu0
      %v1788 = vpop.f32.mrb[0].mxu0
      %v1789 = vadd.f32 %v1049, %v1788
      %v1790 = vpop.f32.mrb[0].mxu0
      %1791 = vmatprep.mubr.bf16.mxu0 0
      %1792 = vmatmul.mubr.bf16.gmra.mrb[0].mxu0 %v1450
      %v1793 = vpop.f32.mrb[0].mxu0
      %v1794 = vadd.f32 %v1054, %v1793
      %v1795 = vpop.f32.mrb[0].mxu0
      %v1796 = vpop.f32.mrb[0].mxu0
      %v1797 = vadd.f32 %v1057, %v1796
      %v1798 = vpop.f32.mrb[0].mxu0
      %1799 = vmatprep.mubr.bf16.mxu0 0
      %1800 = vmatmul.mubr.bf16.gmra.mrb[0].mxu0 %v1453
      %v1801 = vpop.f32.mrb[0].mxu0
      %v1802 = vadd.f32 %v1062, %v1801
      %v1803 = vpop.f32.mrb[0].mxu0
      %v1804 = vpop.f32.mrb[0].mxu0
      %v1805 = vadd.f32 %v1065, %v1804
      %v1806 = vpop.f32.mrb[0].mxu0
      %1807 = vmatprep.mubr.bf16.mxu0 0
      %1808 = vmatmul.mubr.bf16.gmra.mrb[0].mxu0 %v1456
      %v1809 = vpop.f32.mrb[0].mxu0
      %v1810 = vadd.f32 %v1070, %v1809
      %v1811 = vpop.f32.mrb[0].mxu0
      %v1812 = vpop.f32.mrb[0].mxu0
      %v1813 = vadd.f32 %v1073, %v1812
      %v1814 = vpop.f32.mrb[0].mxu0
      %1815 = vmatprep.mubr.bf16.mxu0 0
      %1816 = vmatmul.mubr.bf16.gmra.mrb[0].mxu0 %v1459
      %v1817 = vpop.f32.mrb[0].mxu0
      %v1818 = vadd.f32 %v1078, %v1817
      %v1819 = vpop.f32.mrb[0].mxu0
      %v1820 = vpop.f32.mrb[0].mxu0
      %v1821 = vadd.f32 %v1081, %v1820
      %v1822 = vpop.f32.mrb[0].mxu0
      %1823 = vmatprep.mubr.bf16.mxu0 0
      %1824 = vmatmul.mubr.bf16.gmra.mrb[0].mxu0 %v1462
      %v1825 = vpop.f32.mrb[0].mxu0
      %v1826 = vadd.f32 %v1086, %v1825
      %v1827 = vpop.f32.mrb[0].mxu0
      %v1828 = vpop.f32.mrb[0].mxu0
      %v1829 = vadd.f32 %v1089, %v1828
      %v1830 = vpop.f32.mrb[0].mxu0
      %1831 = vmatprep.mubr.bf16.mxu0 0
      %1832 = vmatmul.mubr.bf16.gmra.mrb[0].mxu0 %v1465
      %v1833 = vpop.f32.mrb[0].mxu0
      %v1834 = vadd.f32 %v1094, %v1833
      %v1835 = vpop.f32.mrb[0].mxu0
      %v1836 = vpop.f32.mrb[0].mxu0
      %v1837 = vadd.f32 %v1097, %v1836
      %v1838 = vpop.f32.mrb[0].mxu0
      %1839 = vmatprep.mubr.bf16.mxu0 0
      %1840 = vmatmul.mubr.bf16.gmra.mrb[0].mxu0 %v1468
      %v1841 = vpop.f32.mrb[0].mxu0
      %v1842 = vadd.f32 %v1102, %v1841
      %v1843 = vpop.f32.mrb[0].mxu0
      %v1844 = vpop.f32.mrb[0].mxu0
      %v1845 = vadd.f32 %v1105, %v1844
      %v1846 = vpop.f32.mrb[0].mxu0
      %1847 = vmatprep.mubr.bf16.mxu0 0
      %1848 = vmatmul.mubr.bf16.gmra.mrb[0].mxu0 %v1471
      %v1849 = vpop.f32.mrb[0].mxu0
      %v1850 = vadd.f32 %v1110, %v1849
      %v1851 = vpop.f32.mrb[0].mxu0
      %v1852 = vpop.f32.mrb[0].mxu0
      %v1853 = vadd.f32 %v1113, %v1852
      %v1854 = vpop.f32.mrb[0].mxu0
      %1855 = vmatprep.mubr.bf16.mxu0 0
      %1856 = vmatmul.mubr.bf16.gmra.mrb[0].mxu0 %v1474
      %v1857 = vpop.f32.mrb[0].mxu0
      %v1858 = vadd.f32 %v1118, %v1857
      %v1859 = vpop.f32.mrb[0].mxu0
      %v1860 = vpop.f32.mrb[0].mxu0
      %v1861 = vadd.f32 %v1121, %v1860
      %v1862 = vpop.f32.mrb[0].mxu0
      %1863 = vmatprep.mubr.bf16.mxu0 0
      %1864 = vmatmul.mubr.bf16.gmra.mrb[0].mxu0 %v1477
      %v1865 = vpop.f32.mrb[0].mxu0
      %v1866 = vadd.f32 %v1126, %v1865
      %v1867 = vpop.f32.mrb[0].mxu0
      %v1868 = vpop.f32.mrb[0].mxu0
      %v1869 = vadd.f32 %v1129, %v1868
      %v1870 = vpop.f32.mrb[0].mxu0
      %1871 = vmatprep.mubr.bf16.mxu0 0
      %1872 = vmatmul.mubr.bf16.gmra.mrb[0].mxu0 %v1480
      %v1873 = vpop.f32.mrb[0].mxu0
      %v1874 = vadd.f32 %v1134, %v1873
      %v1875 = vpop.f32.mrb[0].mxu0
      %v1876 = vpop.f32.mrb[0].mxu0
      %v1877 = vadd.f32 %v1137, %v1876
      %v1878 = vpop.f32.mrb[0].mxu0
      %1879 = vmatprep.mubr.bf16.mxu0 0
      %1880 = vmatmul.mubr.bf16.gmra.mrb[0].mxu0 %v1483
      %v1881 = vpop.f32.mrb[0].mxu0
      %v1882 = vadd.f32 %v1142, %v1881
      %v1883 = vpop.f32.mrb[0].mxu0
      %v1884 = vpop.f32.mrb[0].mxu0
      %v1885 = vadd.f32 %v1145, %v1884
      %v1886 = vpop.f32.mrb[0].mxu0
      %1887 = vmatprep.mubr.bf16.mxu0 0
      %1888 = vmatmul.mubr.bf16.gmra.mrb[0].mxu0 %v1486
      %v1889 = vpop.f32.mrb[0].mxu0
      %v1890 = vadd.f32 %v1150, %v1889
      %v1891 = vpop.f32.mrb[0].mxu0
      %v1892 = vpop.f32.mrb[0].mxu0
      %v1893 = vadd.f32 %v1153, %v1892
      %v1894 = vpop.f32.mrb[0].mxu0
      %1895 = vmatprep.mubr.bf16.mxu0 0
      %1896 = vmatmul.mubr.bf16.gmra.mrb[0].mxu0 %v1489
      %v1897 = vpop.f32.mrb[0].mxu0
      %v1898 = vadd.f32 %v1158, %v1897
      %v1899 = vpop.f32.mrb[0].mxu0
      %v1900 = vpop.f32.mrb[0].mxu0
      %v1901 = vadd.f32 %v1161, %v1900
      %v1902 = vpop.f32.mrb[0].mxu0
      %1903 = vmatprep.mubr.bf16.mxu0 0
      %1904 = vmatmul.mubr.bf16.gmra.mrb[0].mxu0 %v1492
      %v1905 = vpop.f32.mrb[0].mxu0
      %v1906 = vadd.f32 %v1166, %v1905
      %v1907 = vpop.f32.mrb[0].mxu0
      %v1908 = vpop.f32.mrb[0].mxu0
      %v1909 = vadd.f32 %v1169, %v1908
      %v1910 = vpop.f32.mrb[0].mxu0
      %1911 = vmatprep.mubr.bf16.mxu0 0
      %1912 = vmatmul.mubr.bf16.gmra.mrb[0].mxu0 %v1495
      %v1913 = vpop.f32.mrb[0].mxu0
      %v1914 = vadd.f32 %v1174, %v1913
      %v1915 = vpop.f32.mrb[0].mxu0
      %v1916 = vpop.f32.mrb[0].mxu0
      %v1917 = vadd.f32 %v1177, %v1916
      %v1918 = vpop.f32.mrb[0].mxu0
      %1919 = vmatprep.mubr.bf16.mxu0 0
      %1920 = vmatmul.mubr.bf16.gmra.mrb[0].mxu0 %v1498
      %v1921 = vpop.f32.mrb[0].mxu0
      %v1922 = vadd.f32 %v1182, %v1921
      %v1923 = vpop.f32.mrb[0].mxu0
      %v1924 = vpop.f32.mrb[0].mxu0
      %v1925 = vadd.f32 %v1185, %v1924
      %v1926 = vpop.f32.mrb[0].mxu0
      %1927 = vmatprep.mubr.bf16.mxu0 0
      %1928 = vmatmul.mubr.bf16.gmra.mrb[0].mxu0 %v1501
      %v1929 = vpop.f32.mrb[0].mxu0
      %v1930 = vadd.f32 %v1190, %v1929
      %v1931 = vpop.f32.mrb[0].mxu0
      %v1932 = vpop.f32.mrb[0].mxu0
      %v1933 = vadd.f32 %v1193, %v1932
      %v1934 = vpop.f32.mrb[0].mxu0
      %1935 = vmatprep.mubr.bf16.mxu0 0
      %1936 = vmatmul.mubr.bf16.gmra.mrb[0].mxu0 %v1504
      %v1937 = vpop.f32.mrb[0].mxu0
      %v1938 = vadd.f32 %v1198, %v1937
      %v1939 = vpop.f32.mrb[0].mxu0
      %v1940 = vpop.f32.mrb[0].mxu0
      %v1941 = vadd.f32 %v1201, %v1940
      %v1942 = vpop.f32.mrb[0].mxu0
      %1943 = vmatprep.mubr.bf16.mxu0 0
      %1944 = vmatmul.mubr.bf16.gmra.mrb[0].mxu0 %v1507
      %v1945 = vpop.f32.mrb[0].mxu0
      %v1946 = vadd.f32 %v1206, %v1945
      %v1947 = vpop.f32.mrb[0].mxu0
      %v1948 = vpop.f32.mrb[0].mxu0
      %v1949 = vadd.f32 %v1209, %v1948
      %v1950 = vpop.f32.mrb[0].mxu0
      %1951 = vmatprep.mubr.bf16.mxu0 0
      %1952 = vmatmul.mubr.bf16.gmra.mrb[0].mxu0 %v1510
      %v1953 = vpop.f32.mrb[0].mxu0
      %v1954 = vadd.f32 %v1214, %v1953
      %v1955 = vpop.f32.mrb[0].mxu0
      %v1956 = vpop.f32.mrb[0].mxu0
      %v1957 = vadd.f32 %v1217, %v1956
      %v1958 = vpop.f32.mrb[0].mxu0
      %1959 = vmatprep.mubr.bf16.mxu0 0
      %1960 = vmatmul.mubr.bf16.gmra.mrb[0].mxu0 %v1513
      %v1961 = vpop.f32.mrb[0].mxu0
      %v1962 = vadd.f32 %v1222, %v1961
      %v1963 = vpop.f32.mrb[0].mxu0
      %v1964 = vpop.f32.mrb[0].mxu0
      %v1965 = vadd.f32 %v1225, %v1964
      %v1966 = vpop.f32.mrb[0].mxu0
      %1967 = vmatprep.mubr.bf16.mxu0 0
      %1968 = vmatmul.mubr.bf16.gmra.mrb[0].mxu0 %v1516
      %v1969 = vpop.f32.mrb[0].mxu0
      %v1970 = vadd.f32 %v1230, %v1969
      %v1971 = vpop.f32.mrb[0].mxu0
      %v1972 = vpop.f32.mrb[0].mxu0
      %v1973 = vadd.f32 %v1233, %v1972
      %v1974 = vpop.f32.mrb[0].mxu0
      %1975 = vmatprep.mubr.bf16.mxu0 0
      %1976 = vmatmul.mubr.bf16.gmra.mrb[0].mxu0 %v1519
      %v1977 = vpop.f32.mrb[0].mxu0
      %v1978 = vadd.f32 %v1238, %v1977
      %v1979 = vpop.f32.mrb[0].mxu0
      %v1980 = vpop.f32.mrb[0].mxu0
      %v1981 = vadd.f32 %v1241, %v1980
      %v1982 = vpop.f32.mrb[0].mxu0
      %1983 = vmatprep.mubr.bf16.mxu0 0
      %1984 = vmatmul.mubr.bf16.gmra.mrb[0].mxu0 %v1522
      %v1985 = vpop.f32.mrb[0].mxu0
      %v1986 = vadd.f32 %v1246, %v1985
      %v1987 = vpop.f32.mrb[0].mxu0
      %v1988 = vpop.f32.mrb[0].mxu0
      %v1989 = vadd.f32 %v1249, %v1988
      %v1990 = vpop.f32.mrb[0].mxu0
      %1991 = vmatprep.mubr.bf16.mxu0 0
      %1992 = vmatmul.mubr.bf16.gmra.mrb[0].mxu0 %v1525
      %v1993 = vpop.f32.mrb[0].mxu0
      %v1994 = vadd.f32 %v1254, %v1993
      %v1995 = vpop.f32.mrb[0].mxu0
      %v1996 = vpop.f32.mrb[0].mxu0
      %v1997 = vadd.f32 %v1257, %v1996
      %v1998 = vpop.f32.mrb[0].mxu0
      %1999 = vmatprep.mubr.bf16.mxu0 0
      %2000 = vmatmul.mubr.bf16.gmra.mrb[0].mxu0 %v1528
      %v2001 = vpop.f32.mrb[0].mxu0
      %v2002 = vadd.f32 %v1262, %v2001
      %v2003 = vpop.f32.mrb[0].mxu0
      %v2004 = vpop.f32.mrb[0].mxu0
      %v2005 = vadd.f32 %v1265, %v2004
      %v2006 = vpop.f32.mrb[0].mxu0
      %2007 = vmatprep.mubr.bf16.mxu0 0
      %2008 = vmatmul.mubr.bf16.gmra.mrb[0].mxu0 %v1531
      %v2009 = vpop.f32.mrb[0].mxu0
      %v2010 = vadd.f32 %v1270, %v2009
      %v2011 = vpop.f32.mrb[0].mxu0
      %v2012 = vpop.f32.mrb[0].mxu0
      %v2013 = vadd.f32 %v1273, %v2012
      %v2014 = vpop.f32.mrb[0].mxu0
      %2015 = vmatprep.mubr.bf16.mxu0 0
      %2016 = vmatmul.mubr.bf16.gmra.mrb[0].mxu0 %v1534
      %v2017 = vpop.f32.mrb[0].mxu0
      %v2018 = vadd.f32 %v1278, %v2017
      %v2019 = vpop.f32.mrb[0].mxu0
      %v2020 = vpop.f32.mrb[0].mxu0
      %v2021 = vadd.f32 %v1281, %v2020
      %v2022 = vpop.f32.mrb[0].mxu0
      %2023 = vmatprep.mubr.bf16.mxu0 0
      %2024 = vmatmul.mubr.bf16.gmra.mrb[0].mxu0 %v1537
      %v2025 = vpop.f32.mrb[0].mxu0
      %v2026 = vadd.f32 %v1286, %v2025
      %v2027 = vpop.f32.mrb[0].mxu0
      %v2028 = vpop.f32.mrb[0].mxu0
      %v2029 = vadd.f32 %v1289, %v2028
      %v2030 = vpop.f32.mrb[0].mxu0
      %2031 = vmatprep.mubr.bf16.mxu0 0
      %2032 = vmatmul.mubr.bf16.gmra.mrb[0].mxu0 %v1540
      %v2033 = vpop.f32.mrb[0].mxu0
      %v2034 = vadd.f32 %v1294, %v2033
      %v2035 = vpop.f32.mrb[0].mxu0
      %v2036 = vpop.f32.mrb[0].mxu0
      %v2037 = vadd.f32 %v1297, %v2036
      %v2038 = vpop.f32.mrb[0].mxu0
      %2039 = vmatprep.mubr.bf16.mxu0 0
      %2040 = vmatmul.mubr.bf16.gmra.mrb[0].mxu0 %v1543
      %v2041 = vpop.f32.mrb[0].mxu0
      %v2042 = vadd.f32 %v1302, %v2041
      %v2043 = vpop.f32.mrb[0].mxu0
      %v2044 = vpop.f32.mrb[0].mxu0
      %v2045 = vadd.f32 %v1305, %v2044
      %v2046 = vpop.f32.mrb[0].mxu0
      %2047 = vmatprep.mubr.bf16.mxu0 0
      %2048 = vmatmul.mubr.bf16.gmra.mrb[0].mxu0 %v1546
      %v2049 = vpop.f32.mrb[0].mxu0
      %v2050 = vadd.f32 %v1310, %v2049
      %v2051 = vpop.f32.mrb[0].mxu0
      %v2052 = vpop.f32.mrb[0].mxu0
      %v2053 = vadd.f32 %v1313, %v2052
      %v2054 = vpop.f32.mrb[0].mxu0
      %2055 = vmatprep.mubr.bf16.mxu0 0
      %2056 = vmatmul.mubr.bf16.gmra.mrb[0].mxu0 %v1549
      %v2057 = vpop.f32.mrb[0].mxu0
      %v2058 = vadd.f32 %v1318, %v2057
      %v2059 = vpop.f32.mrb[0].mxu0
      %v2060 = vpop.f32.mrb[0].mxu0
      %v2061 = vadd.f32 %v1321, %v2060
      %v2062 = vpop.f32.mrb[0].mxu0
      %2063 = vmatprep.mubr.bf16.mxu0 0
      %2064 = vmatmul.mubr.bf16.gmra.mrb[0].mxu0 %v1552
      %v2065 = vpop.f32.mrb[0].mxu0
      %v2066 = vadd.f32 %v1326, %v2065
      %v2067 = vpop.f32.mrb[0].mxu0
      %v2068 = vpop.f32.mrb[0].mxu0
      %v2069 = vadd.f32 %v1329, %v2068
      %v2070 = vpop.f32.mrb[0].mxu0
      %2071 = vmatprep.mubr.bf16.mxu0 0
      %2072 = vmatmul.mubr.bf16.gmra.mrb[0].mxu0 %v1555
      %v2073 = vpop.f32.mrb[0].mxu0
      %v2074 = vadd.f32 %v1334, %v2073
      %v2075 = vpop.f32.mrb[0].mxu0
      %v2076 = vpop.f32.mrb[0].mxu0
      %v2077 = vadd.f32 %v1337, %v2076
      %v2078 = vpop.f32.mrb[0].mxu0
      %2079 = vmatprep.mubr.bf16.mxu0 0
      %2080 = vmatmul.mubr.bf16.gmra.mrb[0].mxu0 %v1558
      %v2081 = vpop.f32.mrb[0].mxu0
      %v2082 = vadd.f32 %v1342, %v2081
      %v2083 = vpop.f32.mrb[0].mxu0
      %v2084 = vpop.f32.mrb[0].mxu0
      %v2085 = vadd.f32 %v1345, %v2084
      %v2086 = vpop.f32.mrb[0].mxu0
      %2087 = vmatprep.mubr.bf16.mxu0 0
      %2088 = vmatmul.mubr.bf16.gmra.mrb[0].mxu0 %v1561
      %v2089 = vpop.f32.mrb[0].mxu0
      %v2090 = vadd.f32 %v1350, %v2089
      %v2091 = vpop.f32.mrb[0].mxu0
      %v2092 = vpop.f32.mrb[0].mxu0
      %v2093 = vadd.f32 %v1353, %v2092
      %v2094 = vpop.f32.mrb[0].mxu0
      %2095 = vmatprep.mubr.bf16.mxu0 0
      %2096 = vmatmul.mubr.bf16.gmra.mrb[0].mxu0 %v1564
      %v2097 = vpop.f32.mrb[0].mxu0
      %v2098 = vadd.f32 %v1358, %v2097
      %v2099 = vpop.f32.mrb[0].mxu0
      %v2100 = vpop.f32.mrb[0].mxu0
      %v2101 = vadd.f32 %v1361, %v2100
      %v2102 = vpop.f32.mrb[0].mxu0
      %2103 = vmatprep.mubr.bf16.mxu0 0
      %2104 = vmatmul.mubr.bf16.gmra.mrb[0].mxu0 %v1567
      %v2105 = vpop.f32.mrb[0].mxu0
      %v2106 = vadd.f32 %v1366, %v2105
      %v2107 = vpop.f32.mrb[0].mxu0
      %v2108 = vpop.f32.mrb[0].mxu0
      %v2109 = vadd.f32 %v1369, %v2108
      %v2110 = vpop.f32.mrb[0].mxu0
      %2111 = vmatprep.mubr.bf16.mxu0 0
      %2112 = vmatmul.mubr.bf16.gmra.mrb[0].mxu0 %v1570
      %v2113 = vpop.f32.mrb[0].mxu0
      %v2114 = vadd.f32 %v1374, %v2113
      %v2115 = vpop.f32.mrb[0].mxu0
      %v2116 = vpop.f32.mrb[0].mxu0
      %v2117 = vadd.f32 %v1377, %v2116
      %v2118 = vpop.f32.mrb[0].mxu0
      %2119 = vdwg.mxu0
      %v2120 = vld [vmem:[%s4] sm:$0x1]
      %v2122 = vlaneseq
      %v2123 = vshrl.u32 %v2122, 7
      %v2124 = vsub.s32 0, %v2123
      %v2125 = vrot.slane %v2120, %v2124
      %v2127 = vadd.f32 %v1610, %v2125
      %v2128 = vadd.f32 %v1613, %v2125
      %v2129 = vadd.f32 %v1618, %v2125
      %v2130 = vadd.f32 %v1621, %v2125
      %v2131 = vadd.f32 %v1626, %v2125
      %v2132 = vadd.f32 %v1629, %v2125
      %v2133 = vadd.f32 %v1634, %v2125
      %v2134 = vadd.f32 %v1637, %v2125
      %v2135 = vadd.f32 %v1642, %v2125
      %v2136 = vadd.f32 %v1645, %v2125
      %v2137 = vadd.f32 %v1650, %v2125
      %v2138 = vadd.f32 %v1653, %v2125
      %v2139 = vadd.f32 %v1658, %v2125
      %v2140 = vadd.f32 %v1661, %v2125
      %v2141 = vadd.f32 %v1666, %v2125
      %v2142 = vadd.f32 %v1669, %v2125
      %v2143 = vadd.f32 %v1674, %v2125
      %v2144 = vadd.f32 %v1677, %v2125
      %v2145 = vadd.f32 %v1682, %v2125
      %v2146 = vadd.f32 %v1685, %v2125
      %v2147 = vadd.f32 %v1690, %v2125
      %v2148 = vadd.f32 %v1693, %v2125
      %v2149 = vadd.f32 %v1698, %v2125
      %v2150 = vadd.f32 %v1701, %v2125
      %v2151 = vadd.f32 %v1706, %v2125
      %v2152 = vadd.f32 %v1709, %v2125
      %v2153 = vadd.f32 %v1714, %v2125
      %v2154 = vadd.f32 %v1717, %v2125
      %v2155 = vadd.f32 %v1722, %v2125
      %v2156 = vadd.f32 %v1725, %v2125
      %v2157 = vadd.f32 %v1730, %v2125
      %v2158 = vadd.f32 %v1733, %v2125
      %v2159 = vadd.f32 %v1738, %v2125
      %v2160 = vadd.f32 %v1741, %v2125
      %v2161 = vadd.f32 %v1746, %v2125
      %v2162 = vadd.f32 %v1749, %v2125
      %v2163 = vadd.f32 %v1754, %v2125
      %v2164 = vadd.f32 %v1757, %v2125
      %v2165 = vadd.f32 %v1762, %v2125
      %v2166 = vadd.f32 %v1765, %v2125
      %v2167 = vadd.f32 %v1770, %v2125
      %v2168 = vadd.f32 %v1773, %v2125
      %v2169 = vadd.f32 %v1778, %v2125
      %v2170 = vadd.f32 %v1781, %v2125
      %v2171 = vadd.f32 %v1786, %v2125
      %v2172 = vadd.f32 %v1789, %v2125
      %v2173 = vadd.f32 %v1794, %v2125
      %v2174 = vadd.f32 %v1797, %v2125
      %v2175 = vadd.f32 %v1802, %v2125
      %v2176 = vadd.f32 %v1805, %v2125
      %v2177 = vadd.f32 %v1810, %v2125
      %v2178 = vadd.f32 %v1813, %v2125
      %v2179 = vadd.f32 %v1818, %v2125
      %v2180 = vadd.f32 %v1821, %v2125
      %v2181 = vadd.f32 %v1826, %v2125
      %v2182 = vadd.f32 %v1829, %v2125
      %v2183 = vadd.f32 %v1834, %v2125
      %v2184 = vadd.f32 %v1837, %v2125
      %v2185 = vadd.f32 %v1842, %v2125
      %v2186 = vadd.f32 %v1845, %v2125
      %v2187 = vadd.f32 %v1850, %v2125
      %v2188 = vadd.f32 %v1853, %v2125
      %v2189 = vadd.f32 %v1858, %v2125
      %v2190 = vadd.f32 %v1861, %v2125
      %v2191 = vadd.f32 %v1866, %v2125
      %v2192 = vadd.f32 %v1869, %v2125
      %v2193 = vadd.f32 %v1874, %v2125
      %v2194 = vadd.f32 %v1877, %v2125
      %v2195 = vadd.f32 %v1882, %v2125
      %v2196 = vadd.f32 %v1885, %v2125
      %v2197 = vadd.f32 %v1890, %v2125
      %v2198 = vadd.f32 %v1893, %v2125
      %v2199 = vadd.f32 %v1898, %v2125
      %v2200 = vadd.f32 %v1901, %v2125
      %v2201 = vadd.f32 %v1906, %v2125
      %v2202 = vadd.f32 %v1909, %v2125
      %v2203 = vadd.f32 %v1914, %v2125
      %v2204 = vadd.f32 %v1917, %v2125
      %v2205 = vadd.f32 %v1922, %v2125
      %v2206 = vadd.f32 %v1925, %v2125
      %v2207 = vadd.f32 %v1930, %v2125
      %v2208 = vadd.f32 %v1933, %v2125
      %v2209 = vadd.f32 %v1938, %v2125
      %v2210 = vadd.f32 %v1941, %v2125
      %v2211 = vadd.f32 %v1946, %v2125
      %v2212 = vadd.f32 %v1949, %v2125
      %v2213 = vadd.f32 %v1954, %v2125
      %v2214 = vadd.f32 %v1957, %v2125
      %v2215 = vadd.f32 %v1962, %v2125
      %v2216 = vadd.f32 %v1965, %v2125
      %v2217 = vadd.f32 %v1970, %v2125
      %v2218 = vadd.f32 %v1973, %v2125
      %v2219 = vadd.f32 %v1978, %v2125
      %v2220 = vadd.f32 %v1981, %v2125
      %v2221 = vadd.f32 %v1986, %v2125
      %v2222 = vadd.f32 %v1989, %v2125
      %v2223 = vadd.f32 %v1994, %v2125
      %v2224 = vadd.f32 %v1997, %v2125
      %v2225 = vadd.f32 %v2002, %v2125
      %v2226 = vadd.f32 %v2005, %v2125
      %v2227 = vadd.f32 %v2010, %v2125
      %v2228 = vadd.f32 %v2013, %v2125
      %v2229 = vadd.f32 %v2018, %v2125
      %v2230 = vadd.f32 %v2021, %v2125
      %v2231 = vadd.f32 %v2026, %v2125
      %v2232 = vadd.f32 %v2029, %v2125
      %v2233 = vadd.f32 %v2034, %v2125
      %v2234 = vadd.f32 %v2037, %v2125
      %v2235 = vadd.f32 %v2042, %v2125
      %v2236 = vadd.f32 %v2045, %v2125
      %v2237 = vadd.f32 %v2050, %v2125
      %v2238 = vadd.f32 %v2053, %v2125
      %v2239 = vadd.f32 %v2058, %v2125
      %v2240 = vadd.f32 %v2061, %v2125
      %v2241 = vadd.f32 %v2066, %v2125
      %v2242 = vadd.f32 %v2069, %v2125
      %v2243 = vadd.f32 %v2074, %v2125
      %v2244 = vadd.f32 %v2077, %v2125
      %v2245 = vadd.f32 %v2082, %v2125
      %v2246 = vadd.f32 %v2085, %v2125
      %v2247 = vadd.f32 %v2090, %v2125
      %v2248 = vadd.f32 %v2093, %v2125
      %v2249 = vadd.f32 %v2098, %v2125
      %v2250 = vadd.f32 %v2101, %v2125
      %v2251 = vadd.f32 %v2106, %v2125
      %v2252 = vadd.f32 %v2109, %v2125
      %v2253 = vadd.f32 %v2114, %v2125
      %v2254 = vadd.f32 %v2117, %v2125
      %v2255 = vmax.f32 %v2127, 0.0
      %v2256 = vmax.f32 %v2128, 0.0
      %v2257 = vmax.f32 %v2129, 0.0
      %v2258 = vmax.f32 %v2130, 0.0
      %v2259 = vmax.f32 %v2131, 0.0
      %v2260 = vmax.f32 %v2132, 0.0
      %v2261 = vmax.f32 %v2133, 0.0
      %v2262 = vmax.f32 %v2134, 0.0
      %v2263 = vmax.f32 %v2135, 0.0
      %v2264 = vmax.f32 %v2136, 0.0
      %v2265 = vmax.f32 %v2137, 0.0
      %v2266 = vmax.f32 %v2138, 0.0
      %v2267 = vmax.f32 %v2139, 0.0
      %v2268 = vmax.f32 %v2140, 0.0
      %v2269 = vmax.f32 %v2141, 0.0
      %v2270 = vmax.f32 %v2142, 0.0
      %v2271 = vmax.f32 %v2143, 0.0
      %v2272 = vmax.f32 %v2144, 0.0
      %v2273 = vmax.f32 %v2145, 0.0
      %v2274 = vmax.f32 %v2146, 0.0
      %v2275 = vmax.f32 %v2147, 0.0
      %v2276 = vmax.f32 %v2148, 0.0
      %v2277 = vmax.f32 %v2149, 0.0
      %v2278 = vmax.f32 %v2150, 0.0
      %v2279 = vmax.f32 %v2151, 0.0
      %v2280 = vmax.f32 %v2152, 0.0
      %v2281 = vmax.f32 %v2153, 0.0
      %v2282 = vmax.f32 %v2154, 0.0
      %v2283 = vmax.f32 %v2155, 0.0
      %v2284 = vmax.f32 %v2156, 0.0
      %v2285 = vmax.f32 %v2157, 0.0
      %v2286 = vmax.f32 %v2158, 0.0
      %v2287 = vmax.f32 %v2159, 0.0
      %v2288 = vmax.f32 %v2160, 0.0
      %v2289 = vmax.f32 %v2161, 0.0
      %v2290 = vmax.f32 %v2162, 0.0
      %v2291 = vmax.f32 %v2163, 0.0
      %v2292 = vmax.f32 %v2164, 0.0
      %v2293 = vmax.f32 %v2165, 0.0
      %v2294 = vmax.f32 %v2166, 0.0
      %v2295 = vmax.f32 %v2167, 0.0
      %v2296 = vmax.f32 %v2168, 0.0
      %v2297 = vmax.f32 %v2169, 0.0
      %v2298 = vmax.f32 %v2170, 0.0
      %v2299 = vmax.f32 %v2171, 0.0
      %v2300 = vmax.f32 %v2172, 0.0
      %v2301 = vmax.f32 %v2173, 0.0
      %v2302 = vmax.f32 %v2174, 0.0
      %v2303 = vmax.f32 %v2175, 0.0
      %v2304 = vmax.f32 %v2176, 0.0
      %v2305 = vmax.f32 %v2177, 0.0
      %v2306 = vmax.f32 %v2178, 0.0
      %v2307 = vmax.f32 %v2179, 0.0
      %v2308 = vmax.f32 %v2180, 0.0
      %v2309 = vmax.f32 %v2181, 0.0
      %v2310 = vmax.f32 %v2182, 0.0
      %v2311 = vmax.f32 %v2183, 0.0
      %v2312 = vmax.f32 %v2184, 0.0
      %v2313 = vmax.f32 %v2185, 0.0
      %v2314 = vmax.f32 %v2186, 0.0
      %v2315 = vmax.f32 %v2187, 0.0
      %v2316 = vmax.f32 %v2188, 0.0
      %v2317 = vmax.f32 %v2189, 0.0
      %v2318 = vmax.f32 %v2190, 0.0
      %v2319 = vmax.f32 %v2191, 0.0
      %v2320 = vmax.f32 %v2192, 0.0
      %v2321 = vmax.f32 %v2193, 0.0
      %v2322 = vmax.f32 %v2194, 0.0
      %v2323 = vmax.f32 %v2195, 0.0
      %v2324 = vmax.f32 %v2196, 0.0
      %v2325 = vmax.f32 %v2197, 0.0
      %v2326 = vmax.f32 %v2198, 0.0
      %v2327 = vmax.f32 %v2199, 0.0
      %v2328 = vmax.f32 %v2200, 0.0
      %v2329 = vmax.f32 %v2201, 0.0
      %v2330 = vmax.f32 %v2202, 0.0
      %v2331 = vmax.f32 %v2203, 0.0
      %v2332 = vmax.f32 %v2204, 0.0
      %v2333 = vmax.f32 %v2205, 0.0
      %v2334 = vmax.f32 %v2206, 0.0
      %v2335 = vmax.f32 %v2207, 0.0
      %v2336 = vmax.f32 %v2208, 0.0
      %v2337 = vmax.f32 %v2209, 0.0
      %v2338 = vmax.f32 %v2210, 0.0
      %v2339 = vmax.f32 %v2211, 0.0
      %v2340 = vmax.f32 %v2212, 0.0
      %v2341 = vmax.f32 %v2213, 0.0
      %v2342 = vmax.f32 %v2214, 0.0
      %v2343 = vmax.f32 %v2215, 0.0
      %v2344 = vmax.f32 %v2216, 0.0
      %v2345 = vmax.f32 %v2217, 0.0
      %v2346 = vmax.f32 %v2218, 0.0
      %v2347 = vmax.f32 %v2219, 0.0
      %v2348 = vmax.f32 %v2220, 0.0
      %v2349 = vmax.f32 %v2221, 0.0
      %v2350 = vmax.f32 %v2222, 0.0
      %v2351 = vmax.f32 %v2223, 0.0
      %v2352 = vmax.f32 %v2224, 0.0
      %v2353 = vmax.f32 %v2225, 0.0
      %v2354 = vmax.f32 %v2226, 0.0
      %v2355 = vmax.f32 %v2227, 0.0
      %v2356 = vmax.f32 %v2228, 0.0
      %v2357 = vmax.f32 %v2229, 0.0
      %v2358 = vmax.f32 %v2230, 0.0
      %v2359 = vmax.f32 %v2231, 0.0
      %v2360 = vmax.f32 %v2232, 0.0
      %v2361 = vmax.f32 %v2233, 0.0
      %v2362 = vmax.f32 %v2234, 0.0
      %v2363 = vmax.f32 %v2235, 0.0
      %v2364 = vmax.f32 %v2236, 0.0
      %v2365 = vmax.f32 %v2237, 0.0
      %v2366 = vmax.f32 %v2238, 0.0
      %v2367 = vmax.f32 %v2239, 0.0
      %v2368 = vmax.f32 %v2240, 0.0
      %v2369 = vmax.f32 %v2241, 0.0
      %v2370 = vmax.f32 %v2242, 0.0
      %v2371 = vmax.f32 %v2243, 0.0
      %v2372 = vmax.f32 %v2244, 0.0
      %v2373 = vmax.f32 %v2245, 0.0
      %v2374 = vmax.f32 %v2246, 0.0
      %v2375 = vmax.f32 %v2247, 0.0
      %v2376 = vmax.f32 %v2248, 0.0
      %v2377 = vmax.f32 %v2249, 0.0
      %v2378 = vmax.f32 %v2250, 0.0
      %v2379 = vmax.f32 %v2251, 0.0
      %v2380 = vmax.f32 %v2252, 0.0
      %v2381 = vmax.f32 %v2253, 0.0
      %v2382 = vmax.f32 %v2254, 0.0
      %v2383 = vpack.c.bf16 %v2256, %v2255
      %v2384 = vpack.c.bf16 %v2258, %v2257
      %v2385 = vpack.c.bf16 %v2260, %v2259
      %v2386 = vpack.c.bf16 %v2262, %v2261
      %v2387 = vpack.c.bf16 %v2264, %v2263
      %v2388 = vpack.c.bf16 %v2266, %v2265
      %v2389 = vpack.c.bf16 %v2268, %v2267
      %v2390 = vpack.c.bf16 %v2270, %v2269
      %v2391 = vpack.c.bf16 %v2272, %v2271
      %v2392 = vpack.c.bf16 %v2274, %v2273
      %v2393 = vpack.c.bf16 %v2276, %v2275
      %v2394 = vpack.c.bf16 %v2278, %v2277
      %v2395 = vpack.c.bf16 %v2280, %v2279
      %v2396 = vpack.c.bf16 %v2282, %v2281
      %v2397 = vpack.c.bf16 %v2284, %v2283
      %v2398 = vpack.c.bf16 %v2286, %v2285
      %v2399 = vpack.c.bf16 %v2288, %v2287
      %v2400 = vpack.c.bf16 %v2290, %v2289
      %v2401 = vpack.c.bf16 %v2292, %v2291
      %v2402 = vpack.c.bf16 %v2294, %v2293
      %v2403 = vpack.c.bf16 %v2296, %v2295
      %v2404 = vpack.c.bf16 %v2298, %v2297
      %v2405 = vpack.c.bf16 %v2300, %v2299
      %v2406 = vpack.c.bf16 %v2302, %v2301
      %v2407 = vpack.c.bf16 %v2304, %v2303
      %v2408 = vpack.c.bf16 %v2306, %v2305
      %v2409 = vpack.c.bf16 %v2308, %v2307
      %v2410 = vpack.c.bf16 %v2310, %v2309
      %v2411 = vpack.c.bf16 %v2312, %v2311
      %v2412 = vpack.c.bf16 %v2314, %v2313
      %v2413 = vpack.c.bf16 %v2316, %v2315
      %v2414 = vpack.c.bf16 %v2318, %v2317
      %v2415 = vpack.c.bf16 %v2320, %v2319
      %v2416 = vpack.c.bf16 %v2322, %v2321
      %v2417 = vpack.c.bf16 %v2324, %v2323
      %v2418 = vpack.c.bf16 %v2326, %v2325
      %v2419 = vpack.c.bf16 %v2328, %v2327
      %v2420 = vpack.c.bf16 %v2330, %v2329
      %v2421 = vpack.c.bf16 %v2332, %v2331
      %v2422 = vpack.c.bf16 %v2334, %v2333
      %v2423 = vpack.c.bf16 %v2336, %v2335
      %v2424 = vpack.c.bf16 %v2338, %v2337
      %v2425 = vpack.c.bf16 %v2340, %v2339
      %v2426 = vpack.c.bf16 %v2342, %v2341
      %v2427 = vpack.c.bf16 %v2344, %v2343
      %v2428 = vpack.c.bf16 %v2346, %v2345
      %v2429 = vpack.c.bf16 %v2348, %v2347
      %v2430 = vpack.c.bf16 %v2350, %v2349
      %v2431 = vpack.c.bf16 %v2352, %v2351
      %v2432 = vpack.c.bf16 %v2354, %v2353
      %v2433 = vpack.c.bf16 %v2356, %v2355
      %v2434 = vpack.c.bf16 %v2358, %v2357
      %v2435 = vpack.c.bf16 %v2360, %v2359
      %v2436 = vpack.c.bf16 %v2362, %v2361
      %v2437 = vpack.c.bf16 %v2364, %v2363
      %v2438 = vpack.c.bf16 %v2366, %v2365
      %v2439 = vpack.c.bf16 %v2368, %v2367
      %v2440 = vpack.c.bf16 %v2370, %v2369
      %v2441 = vpack.c.bf16 %v2372, %v2371
      %v2442 = vpack.c.bf16 %v2374, %v2373
      %v2443 = vpack.c.bf16 %v2376, %v2375
      %v2444 = vpack.c.bf16 %v2378, %v2377
      %v2445 = vpack.c.bf16 %v2380, %v2379
      %v2446 = vpack.c.bf16 %v2382, %v2381
      %v2447 = vld [vmem:[%s3] sm:$0xf]
      %v2448 = vld [vmem:[%s3 + $0x4] sm:$0xf]
      %v2449 = vld [vmem:[%s3 + $0x8] sm:$0xf]
      %v2450 = vld [vmem:[%s3 + $0xc] sm:$0xf]
      %v2451 = vld [vmem:[%s3 + $0x10] sm:$0xf]
      %v2452 = vld [vmem:[%s3 + $0x14] sm:$0xf]
      %v2453 = vld [vmem:[%s3 + $0x18] sm:$0xf]
      %v2454 = vld [vmem:[%s3 + $0x1c] sm:$0xf]
      %v2455 = vld [vmem:[%s3 + $0x20] sm:$0xf]
      %v2456 = vld [vmem:[%s3 + $0x24] sm:$0xf]
      %v2457 = vld [vmem:[%s3 + $0x28] sm:$0xf]
      %v2458 = vld [vmem:[%s3 + $0x2c] sm:$0xf]
      %v2459 = vld [vmem:[%s3 + $0x30] sm:$0xf]
      %v2460 = vld [vmem:[%s3 + $0x34] sm:$0xf]
      %v2461 = vld [vmem:[%s3 + $0x38] sm:$0xf]
      %v2462 = vld [vmem:[%s3 + $0x3c] sm:$0xf]
      %s2463 = scalar_lea.vmem %s4, 1
      %v2464 = vld [vmem:[%s2463] sm:$0x1]
      %v2466 = vlaneseq
      %v2467 = vshrl.u32 %v2466, 7
      %v2468 = vsub.s32 0, %v2467
      %v2469 = vrot.slane %v2464, %v2468
      %v2487 = vunpack.c.l.b16 %v2447
      %v2488 = vunpack.c.l.b16 %v2448
      %v2489 = vunpack.c.l.b16 %v2449
      %v2490 = vunpack.c.l.b16 %v2450
      %v2491 = vunpack.c.l.b16 %v2451
      %v2492 = vunpack.c.l.b16 %v2452
      %v2493 = vunpack.c.l.b16 %v2453
      %v2494 = vunpack.c.l.b16 %v2454
      %v2495 = vunpack.c.l.b16 %v2455
      %v2496 = vunpack.c.l.b16 %v2456
      %v2497 = vunpack.c.l.b16 %v2457
      %v2498 = vunpack.c.l.b16 %v2458
      %v2499 = vunpack.c.l.b16 %v2459
      %v2500 = vunpack.c.l.b16 %v2460
      %v2501 = vunpack.c.l.b16 %v2461
      %v2502 = vunpack.c.l.b16 %v2462
      %v2503 = vpack.c.b16 %v2488, %v2487
      %v2504 = vpack.c.b16 %v2490, %v2489
      %v2505 = vpack.c.b16 %v2492, %v2491
      %v2506 = vpack.c.b16 %v2494, %v2493
      %v2507 = vpack.c.b16 %v2496, %v2495
      %v2508 = vpack.c.b16 %v2498, %v2497
      %v2509 = vpack.c.b16 %v2500, %v2499
      %v2510 = vpack.c.b16 %v2502, %v2501
      %2519 = vmatprep.subr.bf16.mxu0 0
      %2520 = vmatpush1.bf16.msra.mxu0 %v2503
      %2521 = vmatprep.subr.bf16.mxu0 0
      %2522 = vmatpush1.bf16.msra.mxu0 %v2504
      %2523 = vmatprep.subr.bf16.mxu0 0
      %2524 = vmatpush1.bf16.msra.mxu0 %v2505
      %2525 = vmatprep.subr.bf16.mxu0 0
      %2526 = vmatpush1.bf16.msra.mxu0 %v2506
      %2527 = vmatprep.subr.bf16.mxu0 0
      %2528 = vmatpush1.bf16.msra.mxu0 %v2507
      %2529 = vmatprep.subr.bf16.mxu0 0
      %2530 = vmatpush1.bf16.msra.mxu0 %v2508
      %2531 = vmatprep.subr.bf16.mxu0 0
      %2532 = vmatpush1.bf16.msra.mxu0 %v2509
      %2533 = vmatprep.subr.bf16.mxu0 0
      %2534 = vmatpush1.bf16.msra.mxu0 %v2510
      %2535 = vmatprep.subr.bf16.mxu0 0
      %2536 = vmatpush1.bf16.msra.mxu0 0
      %2537 = vmatprep.subr.bf16.mxu0 0
      %2538 = vmatpush1.bf16.msra.mxu0 0
      %2539 = vmatprep.subr.bf16.mxu0 0
      %2540 = vmatpush1.bf16.msra.mxu0 0
      %2541 = vmatprep.subr.bf16.mxu0 0
      %2542 = vmatpush1.bf16.msra.mxu0 0
      %2543 = vmatprep.subr.bf16.mxu0 0
      %2544 = vmatpush1.bf16.msra.mxu0 0
      %2545 = vmatprep.subr.bf16.mxu0 0
      %2546 = vmatpush1.bf16.msra.mxu0 0
      %2547 = vmatprep.subr.bf16.mxu0 0
      %2548 = vmatpush1.bf16.msra.mxu0 0
      %2549 = vmatprep.subr.bf16.mxu0 0
      %2550 = vmatpush1.bf16.msra.mxu0 0
      %2551 = vmatprep.mubr.bf16.mxu0 0
      %2552 = vmatmul.mubr.bf16.gmra.mrb[0].mxu0 %v2383
      %v2553 = vpop.f32.mrb[0].mxu0
      %v2554 = vadd.f32 %v2469, %v2553
      %v2555 = vpop.f32.mrb[0].mxu0
      %v2556 = vpop.f32.mrb[0].mxu0
      %v2557 = vadd.f32 %v2469, %v2556
      %v2558 = vpop.f32.mrb[0].mxu0
      %2559 = vmatprep.mubr.bf16.mxu0 0
      %2560 = vmatmul.mubr.bf16.gmra.mrb[0].mxu0 %v2384
      %v2561 = vpop.f32.mrb[0].mxu0
      %v2562 = vadd.f32 %v2469, %v2561
      %v2563 = vpop.f32.mrb[0].mxu0
      %v2564 = vpop.f32.mrb[0].mxu0
      %v2565 = vadd.f32 %v2469, %v2564
      %v2566 = vpop.f32.mrb[0].mxu0
      %2567 = vmatprep.mubr.bf16.mxu0 0
      %2568 = vmatmul.mubr.bf16.gmra.mrb[0].mxu0 %v2385
      %v2569 = vpop.f32.mrb[0].mxu0
      %v2570 = vadd.f32 %v2469, %v2569
      %v2571 = vpop.f32.mrb[0].mxu0
      %v2572 = vpop.f32.mrb[0].mxu0
      %v2573 = vadd.f32 %v2469, %v2572
      %v2574 = vpop.f32.mrb[0].mxu0
      %2575 = vmatprep.mubr.bf16.mxu0 0
      %2576 = vmatmul.mubr.bf16.gmra.mrb[0].mxu0 %v2386
      %v2577 = vpop.f32.mrb[0].mxu0
      %v2578 = vadd.f32 %v2469, %v2577
      %v2579 = vpop.f32.mrb[0].mxu0
      %v2580 = vpop.f32.mrb[0].mxu0
      %v2581 = vadd.f32 %v2469, %v2580
      %v2582 = vpop.f32.mrb[0].mxu0
      %2583 = vmatprep.mubr.bf16.mxu0 0
      %2584 = vmatmul.mubr.bf16.gmra.mrb[0].mxu0 %v2387
      %v2585 = vpop.f32.mrb[0].mxu0
      %v2586 = vadd.f32 %v2469, %v2585
      %v2587 = vpop.f32.mrb[0].mxu0
      %v2588 = vpop.f32.mrb[0].mxu0
      %v2589 = vadd.f32 %v2469, %v2588
      %v2590 = vpop.f32.mrb[0].mxu0
      %2591 = vmatprep.mubr.bf16.mxu0 0
      %2592 = vmatmul.mubr.bf16.gmra.mrb[0].mxu0 %v2388
      %v2593 = vpop.f32.mrb[0].mxu0
      %v2594 = vadd.f32 %v2469, %v2593
      %v2595 = vpop.f32.mrb[0].mxu0
      %v2596 = vpop.f32.mrb[0].mxu0
      %v2597 = vadd.f32 %v2469, %v2596
      %v2598 = vpop.f32.mrb[0].mxu0
      %2599 = vmatprep.mubr.bf16.mxu0 0
      %2600 = vmatmul.mubr.bf16.gmra.mrb[0].mxu0 %v2389
      %v2601 = vpop.f32.mrb[0].mxu0
      %v2602 = vadd.f32 %v2469, %v2601
      %v2603 = vpop.f32.mrb[0].mxu0
      %v2604 = vpop.f32.mrb[0].mxu0
      %v2605 = vadd.f32 %v2469, %v2604
      %v2606 = vpop.f32.mrb[0].mxu0
      %2607 = vmatprep.mubr.bf16.mxu0 0
      %2608 = vmatmul.mubr.bf16.gmra.mrb[0].mxu0 %v2390
      %v2609 = vpop.f32.mrb[0].mxu0
      %v2610 = vadd.f32 %v2469, %v2609
      %v2611 = vpop.f32.mrb[0].mxu0
      %v2612 = vpop.f32.mrb[0].mxu0
      %v2613 = vadd.f32 %v2469, %v2612
      %v2614 = vpop.f32.mrb[0].mxu0
      %2615 = vmatprep.mubr.bf16.mxu0 0
      %2616 = vmatmul.mubr.bf16.gmra.mrb[0].mxu0 %v2391
      %v2617 = vpop.f32.mrb[0].mxu0
      %v2618 = vadd.f32 %v2469, %v2617
      %v2619 = vpop.f32.mrb[0].mxu0
      %v2620 = vpop.f32.mrb[0].mxu0
      %v2621 = vadd.f32 %v2469, %v2620
      %v2622 = vpop.f32.mrb[0].mxu0
      %2623 = vmatprep.mubr.bf16.mxu0 0
      %2624 = vmatmul.mubr.bf16.gmra.mrb[0].mxu0 %v2392
      %v2625 = vpop.f32.mrb[0].mxu0
      %v2626 = vadd.f32 %v2469, %v2625
      %v2627 = vpop.f32.mrb[0].mxu0
      %v2628 = vpop.f32.mrb[0].mxu0
      %v2629 = vadd.f32 %v2469, %v2628
      %v2630 = vpop.f32.mrb[0].mxu0
      %2631 = vmatprep.mubr.bf16.mxu0 0
      %2632 = vmatmul.mubr.bf16.gmra.mrb[0].mxu0 %v2393
      %v2633 = vpop.f32.mrb[0].mxu0
      %v2634 = vadd.f32 %v2469, %v2633
      %v2635 = vpop.f32.mrb[0].mxu0
      %v2636 = vpop.f32.mrb[0].mxu0
      %v2637 = vadd.f32 %v2469, %v2636
      %v2638 = vpop.f32.mrb[0].mxu0
      %2639 = vmatprep.mubr.bf16.mxu0 0
      %2640 = vmatmul.mubr.bf16.gmra.mrb[0].mxu0 %v2394
      %v2641 = vpop.f32.mrb[0].mxu0
      %v2642 = vadd.f32 %v2469, %v2641
      %v2643 = vpop.f32.mrb[0].mxu0
      %v2644 = vpop.f32.mrb[0].mxu0
      %v2645 = vadd.f32 %v2469, %v2644
      %v2646 = vpop.f32.mrb[0].mxu0
      %2647 = vmatprep.mubr.bf16.mxu0 0
      %2648 = vmatmul.mubr.bf16.gmra.mrb[0].mxu0 %v2395
      %v2649 = vpop.f32.mrb[0].mxu0
      %v2650 = vadd.f32 %v2469, %v2649
      %v2651 = vpop.f32.mrb[0].mxu0
      %v2652 = vpop.f32.mrb[0].mxu0
      %v2653 = vadd.f32 %v2469, %v2652
      %v2654 = vpop.f32.mrb[0].mxu0
      %2655 = vmatprep.mubr.bf16.mxu0 0
      %2656 = vmatmul.mubr.bf16.gmra.mrb[0].mxu0 %v2396
      %v2657 = vpop.f32.mrb[0].mxu0
      %v2658 = vadd.f32 %v2469, %v2657
      %v2659 = vpop.f32.mrb[0].mxu0
      %v2660 = vpop.f32.mrb[0].mxu0
      %v2661 = vadd.f32 %v2469, %v2660
      %v2662 = vpop.f32.mrb[0].mxu0
      %2663 = vmatprep.mubr.bf16.mxu0 0
      %2664 = vmatmul.mubr.bf16.gmra.mrb[0].mxu0 %v2397
      %v2665 = vpop.f32.mrb[0].mxu0
      %v2666 = vadd.f32 %v2469, %v2665
      %v2667 = vpop.f32.mrb[0].mxu0
      %v2668 = vpop.f32.mrb[0].mxu0
      %v2669 = vadd.f32 %v2469, %v2668
      %v2670 = vpop.f32.mrb[0].mxu0
      %2671 = vmatprep.mubr.bf16.mxu0 0
      %2672 = vmatmul.mubr.bf16.gmra.mrb[0].mxu0 %v2398
      %v2673 = vpop.f32.mrb[0].mxu0
      %v2674 = vadd.f32 %v2469, %v2673
      %v2675 = vpop.f32.mrb[0].mxu0
      %v2676 = vpop.f32.mrb[0].mxu0
      %v2677 = vadd.f32 %v2469, %v2676
      %v2678 = vpop.f32.mrb[0].mxu0
      %2679 = vmatprep.mubr.bf16.mxu0 0
      %2680 = vmatmul.mubr.bf16.gmra.mrb[0].mxu0 %v2399
      %v2681 = vpop.f32.mrb[0].mxu0
      %v2682 = vadd.f32 %v2469, %v2681
      %v2683 = vpop.f32.mrb[0].mxu0
      %v2684 = vpop.f32.mrb[0].mxu0
      %v2685 = vadd.f32 %v2469, %v2684
      %v2686 = vpop.f32.mrb[0].mxu0
      %2687 = vmatprep.mubr.bf16.mxu0 0
      %2688 = vmatmul.mubr.bf16.gmra.mrb[0].mxu0 %v2400
      %v2689 = vpop.f32.mrb[0].mxu0
      %v2690 = vadd.f32 %v2469, %v2689
      %v2691 = vpop.f32.mrb[0].mxu0
      %v2692 = vpop.f32.mrb[0].mxu0
      %v2693 = vadd.f32 %v2469, %v2692
      %v2694 = vpop.f32.mrb[0].mxu0
      %2695 = vmatprep.mubr.bf16.mxu0 0
      %2696 = vmatmul.mubr.bf16.gmra.mrb[0].mxu0 %v2401
      %v2697 = vpop.f32.mrb[0].mxu0
      %v2698 = vadd.f32 %v2469, %v2697
      %v2699 = vpop.f32.mrb[0].mxu0
      %v2700 = vpop.f32.mrb[0].mxu0
      %v2701 = vadd.f32 %v2469, %v2700
      %v2702 = vpop.f32.mrb[0].mxu0
      %2703 = vmatprep.mubr.bf16.mxu0 0
      %2704 = vmatmul.mubr.bf16.gmra.mrb[0].mxu0 %v2402
      %v2705 = vpop.f32.mrb[0].mxu0
      %v2706 = vadd.f32 %v2469, %v2705
      %v2707 = vpop.f32.mrb[0].mxu0
      %v2708 = vpop.f32.mrb[0].mxu0
      %v2709 = vadd.f32 %v2469, %v2708
      %v2710 = vpop.f32.mrb[0].mxu0
      %2711 = vmatprep.mubr.bf16.mxu0 0
      %2712 = vmatmul.mubr.bf16.gmra.mrb[0].mxu0 %v2403
      %v2713 = vpop.f32.mrb[0].mxu0
      %v2714 = vadd.f32 %v2469, %v2713
      %v2715 = vpop.f32.mrb[0].mxu0
      %v2716 = vpop.f32.mrb[0].mxu0
      %v2717 = vadd.f32 %v2469, %v2716
      %v2718 = vpop.f32.mrb[0].mxu0
      %2719 = vmatprep.mubr.bf16.mxu0 0
      %2720 = vmatmul.mubr.bf16.gmra.mrb[0].mxu0 %v2404
      %v2721 = vpop.f32.mrb[0].mxu0
      %v2722 = vadd.f32 %v2469, %v2721
      %v2723 = vpop.f32.mrb[0].mxu0
      %v2724 = vpop.f32.mrb[0].mxu0
      %v2725 = vadd.f32 %v2469, %v2724
      %v2726 = vpop.f32.mrb[0].mxu0
      %2727 = vmatprep.mubr.bf16.mxu0 0
      %2728 = vmatmul.mubr.bf16.gmra.mrb[0].mxu0 %v2405
      %v2729 = vpop.f32.mrb[0].mxu0
      %v2730 = vadd.f32 %v2469, %v2729
      %v2731 = vpop.f32.mrb[0].mxu0
      %v2732 = vpop.f32.mrb[0].mxu0
      %v2733 = vadd.f32 %v2469, %v2732
      %v2734 = vpop.f32.mrb[0].mxu0
      %2735 = vmatprep.mubr.bf16.mxu0 0
      %2736 = vmatmul.mubr.bf16.gmra.mrb[0].mxu0 %v2406
      %v2737 = vpop.f32.mrb[0].mxu0
      %v2738 = vadd.f32 %v2469, %v2737
      %v2739 = vpop.f32.mrb[0].mxu0
      %v2740 = vpop.f32.mrb[0].mxu0
      %v2741 = vadd.f32 %v2469, %v2740
      %v2742 = vpop.f32.mrb[0].mxu0
      %2743 = vmatprep.mubr.bf16.mxu0 0
      %2744 = vmatmul.mubr.bf16.gmra.mrb[0].mxu0 %v2407
      %v2745 = vpop.f32.mrb[0].mxu0
      %v2746 = vadd.f32 %v2469, %v2745
      %v2747 = vpop.f32.mrb[0].mxu0
      %v2748 = vpop.f32.mrb[0].mxu0
      %v2749 = vadd.f32 %v2469, %v2748
      %v2750 = vpop.f32.mrb[0].mxu0
      %2751 = vmatprep.mubr.bf16.mxu0 0
      %2752 = vmatmul.mubr.bf16.gmra.mrb[0].mxu0 %v2408
      %v2753 = vpop.f32.mrb[0].mxu0
      %v2754 = vadd.f32 %v2469, %v2753
      %v2755 = vpop.f32.mrb[0].mxu0
      %v2756 = vpop.f32.mrb[0].mxu0
      %v2757 = vadd.f32 %v2469, %v2756
      %v2758 = vpop.f32.mrb[0].mxu0
      %2759 = vmatprep.mubr.bf16.mxu0 0
      %2760 = vmatmul.mubr.bf16.gmra.mrb[0].mxu0 %v2409
      %v2761 = vpop.f32.mrb[0].mxu0
      %v2762 = vadd.f32 %v2469, %v2761
      %v2763 = vpop.f32.mrb[0].mxu0
      %v2764 = vpop.f32.mrb[0].mxu0
      %v2765 = vadd.f32 %v2469, %v2764
      %v2766 = vpop.f32.mrb[0].mxu0
      %2767 = vmatprep.mubr.bf16.mxu0 0
      %2768 = vmatmul.mubr.bf16.gmra.mrb[0].mxu0 %v2410
      %v2769 = vpop.f32.mrb[0].mxu0
      %v2770 = vadd.f32 %v2469, %v2769
      %v2771 = vpop.f32.mrb[0].mxu0
      %v2772 = vpop.f32.mrb[0].mxu0
      %v2773 = vadd.f32 %v2469, %v2772
      %v2774 = vpop.f32.mrb[0].mxu0
      %2775 = vmatprep.mubr.bf16.mxu0 0
      %2776 = vmatmul.mubr.bf16.gmra.mrb[0].mxu0 %v2411
      %v2777 = vpop.f32.mrb[0].mxu0
      %v2778 = vadd.f32 %v2469, %v2777
      %v2779 = vpop.f32.mrb[0].mxu0
      %v2780 = vpop.f32.mrb[0].mxu0
      %v2781 = vadd.f32 %v2469, %v2780
      %v2782 = vpop.f32.mrb[0].mxu0
      %2783 = vmatprep.mubr.bf16.mxu0 0
      %2784 = vmatmul.mubr.bf16.gmra.mrb[0].mxu0 %v2412
      %v2785 = vpop.f32.mrb[0].mxu0
      %v2786 = vadd.f32 %v2469, %v2785
      %v2787 = vpop.f32.mrb[0].mxu0
      %v2788 = vpop.f32.mrb[0].mxu0
      %v2789 = vadd.f32 %v2469, %v2788
      %v2790 = vpop.f32.mrb[0].mxu0
      %2791 = vmatprep.mubr.bf16.mxu0 0
      %2792 = vmatmul.mubr.bf16.gmra.mrb[0].mxu0 %v2413
      %v2793 = vpop.f32.mrb[0].mxu0
      %v2794 = vadd.f32 %v2469, %v2793
      %v2795 = vpop.f32.mrb[0].mxu0
      %v2796 = vpop.f32.mrb[0].mxu0
      %v2797 = vadd.f32 %v2469, %v2796
      %v2798 = vpop.f32.mrb[0].mxu0
      %2799 = vmatprep.mubr.bf16.mxu0 0
      %2800 = vmatmul.mubr.bf16.gmra.mrb[0].mxu0 %v2414
      %v2801 = vpop.f32.mrb[0].mxu0
      %v2802 = vadd.f32 %v2469, %v2801
      %v2803 = vpop.f32.mrb[0].mxu0
      %v2804 = vpop.f32.mrb[0].mxu0
      %v2805 = vadd.f32 %v2469, %v2804
      %v2806 = vpop.f32.mrb[0].mxu0
      %2807 = vmatprep.mubr.bf16.mxu0 0
      %2808 = vmatmul.mubr.bf16.gmra.mrb[0].mxu0 %v2415
      %v2809 = vpop.f32.mrb[0].mxu0
      %v2810 = vadd.f32 %v2469, %v2809
      %v2811 = vpop.f32.mrb[0].mxu0
      %v2812 = vpop.f32.mrb[0].mxu0
      %v2813 = vadd.f32 %v2469, %v2812
      %v2814 = vpop.f32.mrb[0].mxu0
      %2815 = vmatprep.mubr.bf16.mxu0 0
      %2816 = vmatmul.mubr.bf16.gmra.mrb[0].mxu0 %v2416
      %v2817 = vpop.f32.mrb[0].mxu0
      %v2818 = vadd.f32 %v2469, %v2817
      %v2819 = vpop.f32.mrb[0].mxu0
      %v2820 = vpop.f32.mrb[0].mxu0
      %v2821 = vadd.f32 %v2469, %v2820
      %v2822 = vpop.f32.mrb[0].mxu0
      %2823 = vmatprep.mubr.bf16.mxu0 0
      %2824 = vmatmul.mubr.bf16.gmra.mrb[0].mxu0 %v2417
      %v2825 = vpop.f32.mrb[0].mxu0
      %v2826 = vadd.f32 %v2469, %v2825
      %v2827 = vpop.f32.mrb[0].mxu0
      %v2828 = vpop.f32.mrb[0].mxu0
      %v2829 = vadd.f32 %v2469, %v2828
      %v2830 = vpop.f32.mrb[0].mxu0
      %2831 = vmatprep.mubr.bf16.mxu0 0
      %2832 = vmatmul.mubr.bf16.gmra.mrb[0].mxu0 %v2418
      %v2833 = vpop.f32.mrb[0].mxu0
      %v2834 = vadd.f32 %v2469, %v2833
      %v2835 = vpop.f32.mrb[0].mxu0
      %v2836 = vpop.f32.mrb[0].mxu0
      %v2837 = vadd.f32 %v2469, %v2836
      %v2838 = vpop.f32.mrb[0].mxu0
      %2839 = vmatprep.mubr.bf16.mxu0 0
      %2840 = vmatmul.mubr.bf16.gmra.mrb[0].mxu0 %v2419
      %v2841 = vpop.f32.mrb[0].mxu0
      %v2842 = vadd.f32 %v2469, %v2841
      %v2843 = vpop.f32.mrb[0].mxu0
      %v2844 = vpop.f32.mrb[0].mxu0
      %v2845 = vadd.f32 %v2469, %v2844
      %v2846 = vpop.f32.mrb[0].mxu0
      %2847 = vmatprep.mubr.bf16.mxu0 0
      %2848 = vmatmul.mubr.bf16.gmra.mrb[0].mxu0 %v2420
      %v2849 = vpop.f32.mrb[0].mxu0
      %v2850 = vadd.f32 %v2469, %v2849
      %v2851 = vpop.f32.mrb[0].mxu0
      %v2852 = vpop.f32.mrb[0].mxu0
      %v2853 = vadd.f32 %v2469, %v2852
      %v2854 = vpop.f32.mrb[0].mxu0
      %2855 = vmatprep.mubr.bf16.mxu0 0
      %2856 = vmatmul.mubr.bf16.gmra.mrb[0].mxu0 %v2421
      %v2857 = vpop.f32.mrb[0].mxu0
      %v2858 = vadd.f32 %v2469, %v2857
      %v2859 = vpop.f32.mrb[0].mxu0
      %v2860 = vpop.f32.mrb[0].mxu0
      %v2861 = vadd.f32 %v2469, %v2860
      %v2862 = vpop.f32.mrb[0].mxu0
      %2863 = vmatprep.mubr.bf16.mxu0 0
      %2864 = vmatmul.mubr.bf16.gmra.mrb[0].mxu0 %v2422
      %v2865 = vpop.f32.mrb[0].mxu0
      %v2866 = vadd.f32 %v2469, %v2865
      %v2867 = vpop.f32.mrb[0].mxu0
      %v2868 = vpop.f32.mrb[0].mxu0
      %v2869 = vadd.f32 %v2469, %v2868
      %v2870 = vpop.f32.mrb[0].mxu0
      %2871 = vmatprep.mubr.bf16.mxu0 0
      %2872 = vmatmul.mubr.bf16.gmra.mrb[0].mxu0 %v2423
      %v2873 = vpop.f32.mrb[0].mxu0
      %v2874 = vadd.f32 %v2469, %v2873
      %v2875 = vpop.f32.mrb[0].mxu0
      %v2876 = vpop.f32.mrb[0].mxu0
      %v2877 = vadd.f32 %v2469, %v2876
      %v2878 = vpop.f32.mrb[0].mxu0
      %2879 = vmatprep.mubr.bf16.mxu0 0
      %2880 = vmatmul.mubr.bf16.gmra.mrb[0].mxu0 %v2424
      %v2881 = vpop.f32.mrb[0].mxu0
      %v2882 = vadd.f32 %v2469, %v2881
      %v2883 = vpop.f32.mrb[0].mxu0
      %v2884 = vpop.f32.mrb[0].mxu0
      %v2885 = vadd.f32 %v2469, %v2884
      %v2886 = vpop.f32.mrb[0].mxu0
      %2887 = vmatprep.mubr.bf16.mxu0 0
      %2888 = vmatmul.mubr.bf16.gmra.mrb[0].mxu0 %v2425
      %v2889 = vpop.f32.mrb[0].mxu0
      %v2890 = vadd.f32 %v2469, %v2889
      %v2891 = vpop.f32.mrb[0].mxu0
      %v2892 = vpop.f32.mrb[0].mxu0
      %v2893 = vadd.f32 %v2469, %v2892
      %v2894 = vpop.f32.mrb[0].mxu0
      %2895 = vmatprep.mubr.bf16.mxu0 0
      %2896 = vmatmul.mubr.bf16.gmra.mrb[0].mxu0 %v2426
      %v2897 = vpop.f32.mrb[0].mxu0
      %v2898 = vadd.f32 %v2469, %v2897
      %v2899 = vpop.f32.mrb[0].mxu0
      %v2900 = vpop.f32.mrb[0].mxu0
      %v2901 = vadd.f32 %v2469, %v2900
      %v2902 = vpop.f32.mrb[0].mxu0
      %2903 = vmatprep.mubr.bf16.mxu0 0
      %2904 = vmatmul.mubr.bf16.gmra.mrb[0].mxu0 %v2427
      %v2905 = vpop.f32.mrb[0].mxu0
      %v2906 = vadd.f32 %v2469, %v2905
      %v2907 = vpop.f32.mrb[0].mxu0
      %v2908 = vpop.f32.mrb[0].mxu0
      %v2909 = vadd.f32 %v2469, %v2908
      %v2910 = vpop.f32.mrb[0].mxu0
      %2911 = vmatprep.mubr.bf16.mxu0 0
      %2912 = vmatmul.mubr.bf16.gmra.mrb[0].mxu0 %v2428
      %v2913 = vpop.f32.mrb[0].mxu0
      %v2914 = vadd.f32 %v2469, %v2913
      %v2915 = vpop.f32.mrb[0].mxu0
      %v2916 = vpop.f32.mrb[0].mxu0
      %v2917 = vadd.f32 %v2469, %v2916
      %v2918 = vpop.f32.mrb[0].mxu0
      %2919 = vmatprep.mubr.bf16.mxu0 0
      %2920 = vmatmul.mubr.bf16.gmra.mrb[0].mxu0 %v2429
      %v2921 = vpop.f32.mrb[0].mxu0
      %v2922 = vadd.f32 %v2469, %v2921
      %v2923 = vpop.f32.mrb[0].mxu0
      %v2924 = vpop.f32.mrb[0].mxu0
      %v2925 = vadd.f32 %v2469, %v2924
      %v2926 = vpop.f32.mrb[0].mxu0
      %2927 = vmatprep.mubr.bf16.mxu0 0
      %2928 = vmatmul.mubr.bf16.gmra.mrb[0].mxu0 %v2430
      %v2929 = vpop.f32.mrb[0].mxu0
      %v2930 = vadd.f32 %v2469, %v2929
      %v2931 = vpop.f32.mrb[0].mxu0
      %v2932 = vpop.f32.mrb[0].mxu0
      %v2933 = vadd.f32 %v2469, %v2932
      %v2934 = vpop.f32.mrb[0].mxu0
      %2935 = vmatprep.mubr.bf16.mxu0 0
      %2936 = vmatmul.mubr.bf16.gmra.mrb[0].mxu0 %v2431
      %v2937 = vpop.f32.mrb[0].mxu0
      %v2938 = vadd.f32 %v2469, %v2937
      %v2939 = vpop.f32.mrb[0].mxu0
      %v2940 = vpop.f32.mrb[0].mxu0
      %v2941 = vadd.f32 %v2469, %v2940
      %v2942 = vpop.f32.mrb[0].mxu0
      %2943 = vmatprep.mubr.bf16.mxu0 0
      %2944 = vmatmul.mubr.bf16.gmra.mrb[0].mxu0 %v2432
      %v2945 = vpop.f32.mrb[0].mxu0
      %v2946 = vadd.f32 %v2469, %v2945
      %v2947 = vpop.f32.mrb[0].mxu0
      %v2948 = vpop.f32.mrb[0].mxu0
      %v2949 = vadd.f32 %v2469, %v2948
      %v2950 = vpop.f32.mrb[0].mxu0
      %2951 = vmatprep.mubr.bf16.mxu0 0
      %2952 = vmatmul.mubr.bf16.gmra.mrb[0].mxu0 %v2433
      %v2953 = vpop.f32.mrb[0].mxu0
      %v2954 = vadd.f32 %v2469, %v2953
      %v2955 = vpop.f32.mrb[0].mxu0
      %v2956 = vpop.f32.mrb[0].mxu0
      %v2957 = vadd.f32 %v2469, %v2956
      %v2958 = vpop.f32.mrb[0].mxu0
      %2959 = vmatprep.mubr.bf16.mxu0 0
      %2960 = vmatmul.mubr.bf16.gmra.mrb[0].mxu0 %v2434
      %v2961 = vpop.f32.mrb[0].mxu0
      %v2962 = vadd.f32 %v2469, %v2961
      %v2963 = vpop.f32.mrb[0].mxu0
      %v2964 = vpop.f32.mrb[0].mxu0
      %v2965 = vadd.f32 %v2469, %v2964
      %v2966 = vpop.f32.mrb[0].mxu0
      %2967 = vmatprep.mubr.bf16.mxu0 0
      %2968 = vmatmul.mubr.bf16.gmra.mrb[0].mxu0 %v2435
      %v2969 = vpop.f32.mrb[0].mxu0
      %v2970 = vadd.f32 %v2469, %v2969
      %v2971 = vpop.f32.mrb[0].mxu0
      %v2972 = vpop.f32.mrb[0].mxu0
      %v2973 = vadd.f32 %v2469, %v2972
      %v2974 = vpop.f32.mrb[0].mxu0
      %2975 = vmatprep.mubr.bf16.mxu0 0
      %2976 = vmatmul.mubr.bf16.gmra.mrb[0].mxu0 %v2436
      %v2977 = vpop.f32.mrb[0].mxu0
      %v2978 = vadd.f32 %v2469, %v2977
      %v2979 = vpop.f32.mrb[0].mxu0
      %v2980 = vpop.f32.mrb[0].mxu0
      %v2981 = vadd.f32 %v2469, %v2980
      %v2982 = vpop.f32.mrb[0].mxu0
      %2983 = vmatprep.mubr.bf16.mxu0 0
      %2984 = vmatmul.mubr.bf16.gmra.mrb[0].mxu0 %v2437
      %v2985 = vpop.f32.mrb[0].mxu0
      %v2986 = vadd.f32 %v2469, %v2985
      %v2987 = vpop.f32.mrb[0].mxu0
      %v2988 = vpop.f32.mrb[0].mxu0
      %v2989 = vadd.f32 %v2469, %v2988
      %v2990 = vpop.f32.mrb[0].mxu0
      %2991 = vmatprep.mubr.bf16.mxu0 0
      %2992 = vmatmul.mubr.bf16.gmra.mrb[0].mxu0 %v2438
      %v2993 = vpop.f32.mrb[0].mxu0
      %v2994 = vadd.f32 %v2469, %v2993
      %v2995 = vpop.f32.mrb[0].mxu0
      %v2996 = vpop.f32.mrb[0].mxu0
      %v2997 = vadd.f32 %v2469, %v2996
      %v2998 = vpop.f32.mrb[0].mxu0
      %2999 = vmatprep.mubr.bf16.mxu0 0
      %3000 = vmatmul.mubr.bf16.gmra.mrb[0].mxu0 %v2439
      %v3001 = vpop.f32.mrb[0].mxu0
      %v3002 = vadd.f32 %v2469, %v3001
      %v3003 = vpop.f32.mrb[0].mxu0
      %v3004 = vpop.f32.mrb[0].mxu0
      %v3005 = vadd.f32 %v2469, %v3004
      %v3006 = vpop.f32.mrb[0].mxu0
      %3007 = vmatprep.mubr.bf16.mxu0 0
      %3008 = vmatmul.mubr.bf16.gmra.mrb[0].mxu0 %v2440
      %v3009 = vpop.f32.mrb[0].mxu0
      %v3010 = vadd.f32 %v2469, %v3009
      %v3011 = vpop.f32.mrb[0].mxu0
      %v3012 = vpop.f32.mrb[0].mxu0
      %v3013 = vadd.f32 %v2469, %v3012
      %v3014 = vpop.f32.mrb[0].mxu0
      %3015 = vmatprep.mubr.bf16.mxu0 0
      %3016 = vmatmul.mubr.bf16.gmra.mrb[0].mxu0 %v2441
      %v3017 = vpop.f32.mrb[0].mxu0
      %v3018 = vadd.f32 %v2469, %v3017
      %v3019 = vpop.f32.mrb[0].mxu0
      %v3020 = vpop.f32.mrb[0].mxu0
      %v3021 = vadd.f32 %v2469, %v3020
      %v3022 = vpop.f32.mrb[0].mxu0
      %3023 = vmatprep.mubr.bf16.mxu0 0
      %3024 = vmatmul.mubr.bf16.gmra.mrb[0].mxu0 %v2442
      %v3025 = vpop.f32.mrb[0].mxu0
      %v3026 = vadd.f32 %v2469, %v3025
      %v3027 = vpop.f32.mrb[0].mxu0
      %v3028 = vpop.f32.mrb[0].mxu0
      %v3029 = vadd.f32 %v2469, %v3028
      %v3030 = vpop.f32.mrb[0].mxu0
      %3031 = vmatprep.mubr.bf16.mxu0 0
      %3032 = vmatmul.mubr.bf16.gmra.mrb[0].mxu0 %v2443
      %v3033 = vpop.f32.mrb[0].mxu0
      %v3034 = vadd.f32 %v2469, %v3033
      %v3035 = vpop.f32.mrb[0].mxu0
      %v3036 = vpop.f32.mrb[0].mxu0
      %v3037 = vadd.f32 %v2469, %v3036
      %v3038 = vpop.f32.mrb[0].mxu0
      %3039 = vmatprep.mubr.bf16.mxu0 0
      %3040 = vmatmul.mubr.bf16.gmra.mrb[0].mxu0 %v2444
      %v3041 = vpop.f32.mrb[0].mxu0
      %v3042 = vadd.f32 %v2469, %v3041
      %v3043 = vpop.f32.mrb[0].mxu0
      %v3044 = vpop.f32.mrb[0].mxu0
      %v3045 = vadd.f32 %v2469, %v3044
      %v3046 = vpop.f32.mrb[0].mxu0
      %3047 = vmatprep.mubr.bf16.mxu0 0
      %3048 = vmatmul.mubr.bf16.gmra.mrb[0].mxu0 %v2445
      %v3049 = vpop.f32.mrb[0].mxu0
      %v3050 = vadd.f32 %v2469, %v3049
      %v3051 = vpop.f32.mrb[0].mxu0
      %v3052 = vpop.f32.mrb[0].mxu0
      %v3053 = vadd.f32 %v2469, %v3052
      %v3054 = vpop.f32.mrb[0].mxu0
      %3055 = vmatprep.mubr.bf16.mxu0 0
      %3056 = vmatmul.mubr.bf16.gmra.mrb[0].mxu0 %v2446
      %v3057 = vpop.f32.mrb[0].mxu0
      %v3058 = vadd.f32 %v2469, %v3057
      %v3059 = vpop.f32.mrb[0].mxu0
      %v3060 = vpop.f32.mrb[0].mxu0
      %v3061 = vadd.f32 %v2469, %v3060
      %v3062 = vpop.f32.mrb[0].mxu0
      %3063 = vdwg.mxu0
      %v3064 = vmax.f32 %v2554, 0.0
      %v3065 = vmax.f32 %v2557, 0.0
      %v3066 = vmax.f32 %v2562, 0.0
      %v3067 = vmax.f32 %v2565, 0.0
      %v3068 = vmax.f32 %v2570, 0.0
      %v3069 = vmax.f32 %v2573, 0.0
      %v3070 = vmax.f32 %v2578, 0.0
      %v3071 = vmax.f32 %v2581, 0.0
      %v3072 = vmax.f32 %v2586, 0.0
      %v3073 = vmax.f32 %v2589, 0.0
      %v3074 = vmax.f32 %v2594, 0.0
      %v3075 = vmax.f32 %v2597, 0.0
      %v3076 = vmax.f32 %v2602, 0.0
      %v3077 = vmax.f32 %v2605, 0.0
      %v3078 = vmax.f32 %v2610, 0.0
      %v3079 = vmax.f32 %v2613, 0.0
      %v3080 = vmax.f32 %v2618, 0.0
      %v3081 = vmax.f32 %v2621, 0.0
      %v3082 = vmax.f32 %v2626, 0.0
      %v3083 = vmax.f32 %v2629, 0.0
      %v3084 = vmax.f32 %v2634, 0.0
      %v3085 = vmax.f32 %v2637, 0.0
      %v3086 = vmax.f32 %v2642, 0.0
      %v3087 = vmax.f32 %v2645, 0.0
      %v3088 = vmax.f32 %v2650, 0.0
      %v3089 = vmax.f32 %v2653, 0.0
      %v3090 = vmax.f32 %v2658, 0.0
      %v3091 = vmax.f32 %v2661, 0.0
      %v3092 = vmax.f32 %v2666, 0.0
      %v3093 = vmax.f32 %v2669, 0.0
      %v3094 = vmax.f32 %v2674, 0.0
      %v3095 = vmax.f32 %v2677, 0.0
      %v3096 = vmax.f32 %v2682, 0.0
      %v3097 = vmax.f32 %v2685, 0.0
      %v3098 = vmax.f32 %v2690, 0.0
      %v3099 = vmax.f32 %v2693, 0.0
      %v3100 = vmax.f32 %v2698, 0.0
      %v3101 = vmax.f32 %v2701, 0.0
      %v3102 = vmax.f32 %v2706, 0.0
      %v3103 = vmax.f32 %v2709, 0.0
      %v3104 = vmax.f32 %v2714, 0.0
      %v3105 = vmax.f32 %v2717, 0.0
      %v3106 = vmax.f32 %v2722, 0.0
      %v3107 = vmax.f32 %v2725, 0.0
      %v3108 = vmax.f32 %v2730, 0.0
      %v3109 = vmax.f32 %v2733, 0.0
      %v3110 = vmax.f32 %v2738, 0.0
      %v3111 = vmax.f32 %v2741, 0.0
      %v3112 = vmax.f32 %v2746, 0.0
      %v3113 = vmax.f32 %v2749, 0.0
      %v3114 = vmax.f32 %v2754, 0.0
      %v3115 = vmax.f32 %v2757, 0.0
      %v3116 = vmax.f32 %v2762, 0.0
      %v3117 = vmax.f32 %v2765, 0.0
      %v3118 = vmax.f32 %v2770, 0.0
      %v3119 = vmax.f32 %v2773, 0.0
      %v3120 = vmax.f32 %v2778, 0.0
      %v3121 = vmax.f32 %v2781, 0.0
      %v3122 = vmax.f32 %v2786, 0.0
      %v3123 = vmax.f32 %v2789, 0.0
      %v3124 = vmax.f32 %v2794, 0.0
      %v3125 = vmax.f32 %v2797, 0.0
      %v3126 = vmax.f32 %v2802, 0.0
      %v3127 = vmax.f32 %v2805, 0.0
      %v3128 = vmax.f32 %v2810, 0.0
      %v3129 = vmax.f32 %v2813, 0.0
      %v3130 = vmax.f32 %v2818, 0.0
      %v3131 = vmax.f32 %v2821, 0.0
      %v3132 = vmax.f32 %v2826, 0.0
      %v3133 = vmax.f32 %v2829, 0.0
      %v3134 = vmax.f32 %v2834, 0.0
      %v3135 = vmax.f32 %v2837, 0.0
      %v3136 = vmax.f32 %v2842, 0.0
      %v3137 = vmax.f32 %v2845, 0.0
      %v3138 = vmax.f32 %v2850, 0.0
      %v3139 = vmax.f32 %v2853, 0.0
      %v3140 = vmax.f32 %v2858, 0.0
      %v3141 = vmax.f32 %v2861, 0.0
      %v3142 = vmax.f32 %v2866, 0.0
      %v3143 = vmax.f32 %v2869, 0.0
      %v3144 = vmax.f32 %v2874, 0.0
      %v3145 = vmax.f32 %v2877, 0.0
      %v3146 = vmax.f32 %v2882, 0.0
      %v3147 = vmax.f32 %v2885, 0.0
      %v3148 = vmax.f32 %v2890, 0.0
      %v3149 = vmax.f32 %v2893, 0.0
      %v3150 = vmax.f32 %v2898, 0.0
      %v3151 = vmax.f32 %v2901, 0.0
      %v3152 = vmax.f32 %v2906, 0.0
      %v3153 = vmax.f32 %v2909, 0.0
      %v3154 = vmax.f32 %v2914, 0.0
      %v3155 = vmax.f32 %v2917, 0.0
      %v3156 = vmax.f32 %v2922, 0.0
      %v3157 = vmax.f32 %v2925, 0.0
      %v3158 = vmax.f32 %v2930, 0.0
      %v3159 = vmax.f32 %v2933, 0.0
      %v3160 = vmax.f32 %v2938, 0.0
      %v3161 = vmax.f32 %v2941, 0.0
      %v3162 = vmax.f32 %v2946, 0.0
      %v3163 = vmax.f32 %v2949, 0.0
      %v3164 = vmax.f32 %v2954, 0.0
      %v3165 = vmax.f32 %v2957, 0.0
      %v3166 = vmax.f32 %v2962, 0.0
      %v3167 = vmax.f32 %v2965, 0.0
      %v3168 = vmax.f32 %v2970, 0.0
      %v3169 = vmax.f32 %v2973, 0.0
      %v3170 = vmax.f32 %v2978, 0.0
      %v3171 = vmax.f32 %v2981, 0.0
      %v3172 = vmax.f32 %v2986, 0.0
      %v3173 = vmax.f32 %v2989, 0.0
      %v3174 = vmax.f32 %v2994, 0.0
      %v3175 = vmax.f32 %v2997, 0.0
      %v3176 = vmax.f32 %v3002, 0.0
      %v3177 = vmax.f32 %v3005, 0.0
      %v3178 = vmax.f32 %v3010, 0.0
      %v3179 = vmax.f32 %v3013, 0.0
      %v3180 = vmax.f32 %v3018, 0.0
      %v3181 = vmax.f32 %v3021, 0.0
      %v3182 = vmax.f32 %v3026, 0.0
      %v3183 = vmax.f32 %v3029, 0.0
      %v3184 = vmax.f32 %v3034, 0.0
      %v3185 = vmax.f32 %v3037, 0.0
      %v3186 = vmax.f32 %v3042, 0.0
      %v3187 = vmax.f32 %v3045, 0.0
      %v3188 = vmax.f32 %v3050, 0.0
      %v3189 = vmax.f32 %v3053, 0.0
      %v3190 = vmax.f32 %v3058, 0.0
      %v3191 = vmax.f32 %v3061, 0.0
      %v3192 = vpack.c.bf16 %v3065, %v3064
      %v3193 = vpack.c.bf16 %v3067, %v3066
      %v3194 = vpack.c.bf16 %v3069, %v3068
      %v3195 = vpack.c.bf16 %v3071, %v3070
      %v3196 = vpack.c.bf16 %v3073, %v3072
      %v3197 = vpack.c.bf16 %v3075, %v3074
      %v3198 = vpack.c.bf16 %v3077, %v3076
      %v3199 = vpack.c.bf16 %v3079, %v3078
      %v3200 = vpack.c.bf16 %v3081, %v3080
      %v3201 = vpack.c.bf16 %v3083, %v3082
      %v3202 = vpack.c.bf16 %v3085, %v3084
      %v3203 = vpack.c.bf16 %v3087, %v3086
      %v3204 = vpack.c.bf16 %v3089, %v3088
      %v3205 = vpack.c.bf16 %v3091, %v3090
      %v3206 = vpack.c.bf16 %v3093, %v3092
      %v3207 = vpack.c.bf16 %v3095, %v3094
      %v3208 = vpack.c.bf16 %v3097, %v3096
      %v3209 = vpack.c.bf16 %v3099, %v3098
      %v3210 = vpack.c.bf16 %v3101, %v3100
      %v3211 = vpack.c.bf16 %v3103, %v3102
      %v3212 = vpack.c.bf16 %v3105, %v3104
      %v3213 = vpack.c.bf16 %v3107, %v3106
      %v3214 = vpack.c.bf16 %v3109, %v3108
      %v3215 = vpack.c.bf16 %v3111, %v3110
      %v3216 = vpack.c.bf16 %v3113, %v3112
      %v3217 = vpack.c.bf16 %v3115, %v3114
      %v3218 = vpack.c.bf16 %v3117, %v3116
      %v3219 = vpack.c.bf16 %v3119, %v3118
      %v3220 = vpack.c.bf16 %v3121, %v3120
      %v3221 = vpack.c.bf16 %v3123, %v3122
      %v3222 = vpack.c.bf16 %v3125, %v3124
      %v3223 = vpack.c.bf16 %v3127, %v3126
      %v3224 = vpack.c.bf16 %v3129, %v3128
      %v3225 = vpack.c.bf16 %v3131, %v3130
      %v3226 = vpack.c.bf16 %v3133, %v3132
      %v3227 = vpack.c.bf16 %v3135, %v3134
      %v3228 = vpack.c.bf16 %v3137, %v3136
      %v3229 = vpack.c.bf16 %v3139, %v3138
      %v3230 = vpack.c.bf16 %v3141, %v3140
      %v3231 = vpack.c.bf16 %v3143, %v3142
      %v3232 = vpack.c.bf16 %v3145, %v3144
      %v3233 = vpack.c.bf16 %v3147, %v3146
      %v3234 = vpack.c.bf16 %v3149, %v3148
      %v3235 = vpack.c.bf16 %v3151, %v3150
      %v3236 = vpack.c.bf16 %v3153, %v3152
      %v3237 = vpack.c.bf16 %v3155, %v3154
      %v3238 = vpack.c.bf16 %v3157, %v3156
      %v3239 = vpack.c.bf16 %v3159, %v3158
      %v3240 = vpack.c.bf16 %v3161, %v3160
      %v3241 = vpack.c.bf16 %v3163, %v3162
      %v3242 = vpack.c.bf16 %v3165, %v3164
      %v3243 = vpack.c.bf16 %v3167, %v3166
      %v3244 = vpack.c.bf16 %v3169, %v3168
      %v3245 = vpack.c.bf16 %v3171, %v3170
      %v3246 = vpack.c.bf16 %v3173, %v3172
      %v3247 = vpack.c.bf16 %v3175, %v3174
      %v3248 = vpack.c.bf16 %v3177, %v3176
      %v3249 = vpack.c.bf16 %v3179, %v3178
      %v3250 = vpack.c.bf16 %v3181, %v3180
      %v3251 = vpack.c.bf16 %v3183, %v3182
      %v3252 = vpack.c.bf16 %v3185, %v3184
      %v3253 = vpack.c.bf16 %v3187, %v3186
      %v3254 = vpack.c.bf16 %v3189, %v3188
      %v3255 = vpack.c.bf16 %v3191, %v3190
      %s3256 = scalar_lea.vmem %s3, 64
      %v3257 = vld [vmem:[%s3256] sm:$0xf]
      %v3258 = vld [vmem:[%s3256 + $0x4] sm:$0xf]
      %v3259 = vld [vmem:[%s3256 + $0x8] sm:$0xf]
      %v3260 = vld [vmem:[%s3256 + $0xc] sm:$0xf]
      %v3261 = vld [vmem:[%s3256 + $0x10] sm:$0xf]
      %v3262 = vld [vmem:[%s3256 + $0x14] sm:$0xf]
      %v3263 = vld [vmem:[%s3256 + $0x18] sm:$0xf]
      %v3264 = vld [vmem:[%s3256 + $0x1c] sm:$0xf]
      %v3265 = vld [vmem:[%s3256 + $0x20] sm:$0xf]
      %v3266 = vld [vmem:[%s3256 + $0x24] sm:$0xf]
      %v3267 = vld [vmem:[%s3256 + $0x28] sm:$0xf]
      %v3268 = vld [vmem:[%s3256 + $0x2c] sm:$0xf]
      %v3269 = vld [vmem:[%s3256 + $0x30] sm:$0xf]
      %v3270 = vld [vmem:[%s3256 + $0x34] sm:$0xf]
      %v3271 = vld [vmem:[%s3256 + $0x38] sm:$0xf]
      %v3272 = vld [vmem:[%s3256 + $0x3c] sm:$0xf]
      %s3273 = scalar_lea.vmem %s4, 2
      %v3274 = vld [vmem:[%s3273] sm:$0x1]
      %v3276 = vlaneseq
      %v3277 = vshrl.u32 %v3276, 7
      %v3278 = vsub.s32 0, %v3277
      %v3279 = vrot.slane %v3274, %v3278
      %v3297 = vunpack.c.l.b16 %v3257
      %v3298 = vunpack.c.l.b16 %v3258
      %v3299 = vunpack.c.l.b16 %v3259
      %v3300 = vunpack.c.l.b16 %v3260
      %v3301 = vunpack.c.l.b16 %v3261
      %v3302 = vunpack.c.l.b16 %v3262
      %v3303 = vunpack.c.l.b16 %v3263
      %v3304 = vunpack.c.l.b16 %v3264
      %v3305 = vunpack.c.l.b16 %v3265
      %v3306 = vunpack.c.l.b16 %v3266
      %v3307 = vunpack.c.l.b16 %v3267
      %v3308 = vunpack.c.l.b16 %v3268
      %v3309 = vunpack.c.l.b16 %v3269
      %v3310 = vunpack.c.l.b16 %v3270
      %v3311 = vunpack.c.l.b16 %v3271
      %v3312 = vunpack.c.l.b16 %v3272
      %v3313 = vpack.c.b16 %v3298, %v3297
      %v3314 = vpack.c.b16 %v3300, %v3299
      %v3315 = vpack.c.b16 %v3302, %v3301
      %v3316 = vpack.c.b16 %v3304, %v3303
      %v3317 = vpack.c.b16 %v3306, %v3305
      %v3318 = vpack.c.b16 %v3308, %v3307
      %v3319 = vpack.c.b16 %v3310, %v3309
      %v3320 = vpack.c.b16 %v3312, %v3311
      %3329 = vmatprep.subr.bf16.mxu0 0
      %3330 = vmatpush1.bf16.msra.mxu0 %v3313
      %3331 = vmatprep.subr.bf16.mxu0 0
      %3332 = vmatpush1.bf16.msra.mxu0 %v3314
      %3333 = vmatprep.subr.bf16.mxu0 0
      %3334 = vmatpush1.bf16.msra.mxu0 %v3315
      %3335 = vmatprep.subr.bf16.mxu0 0
      %3336 = vmatpush1.bf16.msra.mxu0 %v3316
      %3337 = vmatprep.subr.bf16.mxu0 0
      %3338 = vmatpush1.bf16.msra.mxu0 %v3317
      %3339 = vmatprep.subr.bf16.mxu0 0
      %3340 = vmatpush1.bf16.msra.mxu0 %v3318
      %3341 = vmatprep.subr.bf16.mxu0 0
      %3342 = vmatpush1.bf16.msra.mxu0 %v3319
      %3343 = vmatprep.subr.bf16.mxu0 0
      %3344 = vmatpush1.bf16.msra.mxu0 %v3320
      %3345 = vmatprep.subr.bf16.mxu0 0
      %3346 = vmatpush1.bf16.msra.mxu0 0
      %3347 = vmatprep.subr.bf16.mxu0 0
      %3348 = vmatpush1.bf16.msra.mxu0 0
      %3349 = vmatprep.subr.bf16.mxu0 0
      %3350 = vmatpush1.bf16.msra.mxu0 0
      %3351 = vmatprep.subr.bf16.mxu0 0
      %3352 = vmatpush1.bf16.msra.mxu0 0
      %3353 = vmatprep.subr.bf16.mxu0 0
      %3354 = vmatpush1.bf16.msra.mxu0 0
      %3355 = vmatprep.subr.bf16.mxu0 0
      %3356 = vmatpush1.bf16.msra.mxu0 0
      %3357 = vmatprep.subr.bf16.mxu0 0
      %3358 = vmatpush1.bf16.msra.mxu0 0
      %3359 = vmatprep.subr.bf16.mxu0 0
      %3360 = vmatpush1.bf16.msra.mxu0 0
      %3361 = vmatprep.mubr.bf16.mxu0 0
      %3362 = vmatmul.mubr.bf16.gmra.mrb[0].mxu0 %v3192
      %v3363 = vpop.f32.mrb[0].mxu0
      %v3364 = vadd.f32 %v3279, %v3363
      %v3365 = vpop.f32.mrb[0].mxu0
      %v3366 = vpop.f32.mrb[0].mxu0
      %v3367 = vadd.f32 %v3279, %v3366
      %v3368 = vpop.f32.mrb[0].mxu0
      %3369 = vmatprep.mubr.bf16.mxu0 0
      %3370 = vmatmul.mubr.bf16.gmra.mrb[0].mxu0 %v3193
      %v3371 = vpop.f32.mrb[0].mxu0
      %v3372 = vadd.f32 %v3279, %v3371
      %v3373 = vpop.f32.mrb[0].mxu0
      %v3374 = vpop.f32.mrb[0].mxu0
      %v3375 = vadd.f32 %v3279, %v3374
      %v3376 = vpop.f32.mrb[0].mxu0
      %3377 = vmatprep.mubr.bf16.mxu0 0
      %3378 = vmatmul.mubr.bf16.gmra.mrb[0].mxu0 %v3194
      %v3379 = vpop.f32.mrb[0].mxu0
      %v3380 = vadd.f32 %v3279, %v3379
      %v3381 = vpop.f32.mrb[0].mxu0
      %v3382 = vpop.f32.mrb[0].mxu0
      %v3383 = vadd.f32 %v3279, %v3382
      %v3384 = vpop.f32.mrb[0].mxu0
      %3385 = vmatprep.mubr.bf16.mxu0 0
      %3386 = vmatmul.mubr.bf16.gmra.mrb[0].mxu0 %v3195
      %v3387 = vpop.f32.mrb[0].mxu0
      %v3388 = vadd.f32 %v3279, %v3387
      %v3389 = vpop.f32.mrb[0].mxu0
      %v3390 = vpop.f32.mrb[0].mxu0
      %v3391 = vadd.f32 %v3279, %v3390
      %v3392 = vpop.f32.mrb[0].mxu0
      %3393 = vmatprep.mubr.bf16.mxu0 0
      %3394 = vmatmul.mubr.bf16.gmra.mrb[0].mxu0 %v3196
      %v3395 = vpop.f32.mrb[0].mxu0
      %v3396 = vadd.f32 %v3279, %v3395
      %v3397 = vpop.f32.mrb[0].mxu0
      %v3398 = vpop.f32.mrb[0].mxu0
      %v3399 = vadd.f32 %v3279, %v3398
      %v3400 = vpop.f32.mrb[0].mxu0
      %3401 = vmatprep.mubr.bf16.mxu0 0
      %3402 = vmatmul.mubr.bf16.gmra.mrb[0].mxu0 %v3197
      %v3403 = vpop.f32.mrb[0].mxu0
      %v3404 = vadd.f32 %v3279, %v3403
      %v3405 = vpop.f32.mrb[0].mxu0
      %v3406 = vpop.f32.mrb[0].mxu0
      %v3407 = vadd.f32 %v3279, %v3406
      %v3408 = vpop.f32.mrb[0].mxu0
      %3409 = vmatprep.mubr.bf16.mxu0 0
      %3410 = vmatmul.mubr.bf16.gmra.mrb[0].mxu0 %v3198
      %v3411 = vpop.f32.mrb[0].mxu0
      %v3412 = vadd.f32 %v3279, %v3411
      %v3413 = vpop.f32.mrb[0].mxu0
      %v3414 = vpop.f32.mrb[0].mxu0
      %v3415 = vadd.f32 %v3279, %v3414
      %v3416 = vpop.f32.mrb[0].mxu0
      %3417 = vmatprep.mubr.bf16.mxu0 0
      %3418 = vmatmul.mubr.bf16.gmra.mrb[0].mxu0 %v3199
      %v3419 = vpop.f32.mrb[0].mxu0
      %v3420 = vadd.f32 %v3279, %v3419
      %v3421 = vpop.f32.mrb[0].mxu0
      %v3422 = vpop.f32.mrb[0].mxu0
      %v3423 = vadd.f32 %v3279, %v3422
      %v3424 = vpop.f32.mrb[0].mxu0
      %3425 = vmatprep.mubr.bf16.mxu0 0
      %3426 = vmatmul.mubr.bf16.gmra.mrb[0].mxu0 %v3200
      %v3427 = vpop.f32.mrb[0].mxu0
      %v3428 = vadd.f32 %v3279, %v3427
      %v3429 = vpop.f32.mrb[0].mxu0
      %v3430 = vpop.f32.mrb[0].mxu0
      %v3431 = vadd.f32 %v3279, %v3430
      %v3432 = vpop.f32.mrb[0].mxu0
      %3433 = vmatprep.mubr.bf16.mxu0 0
      %3434 = vmatmul.mubr.bf16.gmra.mrb[0].mxu0 %v3201
      %v3435 = vpop.f32.mrb[0].mxu0
      %v3436 = vadd.f32 %v3279, %v3435
      %v3437 = vpop.f32.mrb[0].mxu0
      %v3438 = vpop.f32.mrb[0].mxu0
      %v3439 = vadd.f32 %v3279, %v3438
      %v3440 = vpop.f32.mrb[0].mxu0
      %3441 = vmatprep.mubr.bf16.mxu0 0
      %3442 = vmatmul.mubr.bf16.gmra.mrb[0].mxu0 %v3202
      %v3443 = vpop.f32.mrb[0].mxu0
      %v3444 = vadd.f32 %v3279, %v3443
      %v3445 = vpop.f32.mrb[0].mxu0
      %v3446 = vpop.f32.mrb[0].mxu0
      %v3447 = vadd.f32 %v3279, %v3446
      %v3448 = vpop.f32.mrb[0].mxu0
      %3449 = vmatprep.mubr.bf16.mxu0 0
      %3450 = vmatmul.mubr.bf16.gmra.mrb[0].mxu0 %v3203
      %v3451 = vpop.f32.mrb[0].mxu0
      %v3452 = vadd.f32 %v3279, %v3451
      %v3453 = vpop.f32.mrb[0].mxu0
      %v3454 = vpop.f32.mrb[0].mxu0
      %v3455 = vadd.f32 %v3279, %v3454
      %v3456 = vpop.f32.mrb[0].mxu0
      %3457 = vmatprep.mubr.bf16.mxu0 0
      %3458 = vmatmul.mubr.bf16.gmra.mrb[0].mxu0 %v3204
      %v3459 = vpop.f32.mrb[0].mxu0
      %v3460 = vadd.f32 %v3279, %v3459
      %v3461 = vpop.f32.mrb[0].mxu0
      %v3462 = vpop.f32.mrb[0].mxu0
      %v3463 = vadd.f32 %v3279, %v3462
      %v3464 = vpop.f32.mrb[0].mxu0
      %3465 = vmatprep.mubr.bf16.mxu0 0
      %3466 = vmatmul.mubr.bf16.gmra.mrb[0].mxu0 %v3205
      %v3467 = vpop.f32.mrb[0].mxu0
      %v3468 = vadd.f32 %v3279, %v3467
      %v3469 = vpop.f32.mrb[0].mxu0
      %v3470 = vpop.f32.mrb[0].mxu0
      %v3471 = vadd.f32 %v3279, %v3470
      %v3472 = vpop.f32.mrb[0].mxu0
      %3473 = vmatprep.mubr.bf16.mxu0 0
      %3474 = vmatmul.mubr.bf16.gmra.mrb[0].mxu0 %v3206
      %v3475 = vpop.f32.mrb[0].mxu0
      %v3476 = vadd.f32 %v3279, %v3475
      %v3477 = vpop.f32.mrb[0].mxu0
      %v3478 = vpop.f32.mrb[0].mxu0
      %v3479 = vadd.f32 %v3279, %v3478
      %v3480 = vpop.f32.mrb[0].mxu0
      %3481 = vmatprep.mubr.bf16.mxu0 0
      %3482 = vmatmul.mubr.bf16.gmra.mrb[0].mxu0 %v3207
      %v3483 = vpop.f32.mrb[0].mxu0
      %v3484 = vadd.f32 %v3279, %v3483
      %v3485 = vpop.f32.mrb[0].mxu0
      %v3486 = vpop.f32.mrb[0].mxu0
      %v3487 = vadd.f32 %v3279, %v3486
      %v3488 = vpop.f32.mrb[0].mxu0
      %3489 = vmatprep.mubr.bf16.mxu0 0
      %3490 = vmatmul.mubr.bf16.gmra.mrb[0].mxu0 %v3208
      %v3491 = vpop.f32.mrb[0].mxu0
      %v3492 = vadd.f32 %v3279, %v3491
      %v3493 = vpop.f32.mrb[0].mxu0
      %v3494 = vpop.f32.mrb[0].mxu0
      %v3495 = vadd.f32 %v3279, %v3494
      %v3496 = vpop.f32.mrb[0].mxu0
      %3497 = vmatprep.mubr.bf16.mxu0 0
      %3498 = vmatmul.mubr.bf16.gmra.mrb[0].mxu0 %v3209
      %v3499 = vpop.f32.mrb[0].mxu0
      %v3500 = vadd.f32 %v3279, %v3499
      %v3501 = vpop.f32.mrb[0].mxu0
      %v3502 = vpop.f32.mrb[0].mxu0
      %v3503 = vadd.f32 %v3279, %v3502
      %v3504 = vpop.f32.mrb[0].mxu0
      %3505 = vmatprep.mubr.bf16.mxu0 0
      %3506 = vmatmul.mubr.bf16.gmra.mrb[0].mxu0 %v3210
      %v3507 = vpop.f32.mrb[0].mxu0
      %v3508 = vadd.f32 %v3279, %v3507
      %v3509 = vpop.f32.mrb[0].mxu0
      %v3510 = vpop.f32.mrb[0].mxu0
      %v3511 = vadd.f32 %v3279, %v3510
      %v3512 = vpop.f32.mrb[0].mxu0
      %3513 = vmatprep.mubr.bf16.mxu0 0
      %3514 = vmatmul.mubr.bf16.gmra.mrb[0].mxu0 %v3211
      %v3515 = vpop.f32.mrb[0].mxu0
      %v3516 = vadd.f32 %v3279, %v3515
      %v3517 = vpop.f32.mrb[0].mxu0
      %v3518 = vpop.f32.mrb[0].mxu0
      %v3519 = vadd.f32 %v3279, %v3518
      %v3520 = vpop.f32.mrb[0].mxu0
      %3521 = vmatprep.mubr.bf16.mxu0 0
      %3522 = vmatmul.mubr.bf16.gmra.mrb[0].mxu0 %v3212
      %v3523 = vpop.f32.mrb[0].mxu0
      %v3524 = vadd.f32 %v3279, %v3523
      %v3525 = vpop.f32.mrb[0].mxu0
      %v3526 = vpop.f32.mrb[0].mxu0
      %v3527 = vadd.f32 %v3279, %v3526
      %v3528 = vpop.f32.mrb[0].mxu0
      %3529 = vmatprep.mubr.bf16.mxu0 0
      %3530 = vmatmul.mubr.bf16.gmra.mrb[0].mxu0 %v3213
      %v3531 = vpop.f32.mrb[0].mxu0
      %v3532 = vadd.f32 %v3279, %v3531
      %v3533 = vpop.f32.mrb[0].mxu0
      %v3534 = vpop.f32.mrb[0].mxu0
      %v3535 = vadd.f32 %v3279, %v3534
      %v3536 = vpop.f32.mrb[0].mxu0
      %3537 = vmatprep.mubr.bf16.mxu0 0
      %3538 = vmatmul.mubr.bf16.gmra.mrb[0].mxu0 %v3214
      %v3539 = vpop.f32.mrb[0].mxu0
      %v3540 = vadd.f32 %v3279, %v3539
      %v3541 = vpop.f32.mrb[0].mxu0
      %v3542 = vpop.f32.mrb[0].mxu0
      %v3543 = vadd.f32 %v3279, %v3542
      %v3544 = vpop.f32.mrb[0].mxu0
      %3545 = vmatprep.mubr.bf16.mxu0 0
      %3546 = vmatmul.mubr.bf16.gmra.mrb[0].mxu0 %v3215
      %v3547 = vpop.f32.mrb[0].mxu0
      %v3548 = vadd.f32 %v3279, %v3547
      %v3549 = vpop.f32.mrb[0].mxu0
      %v3550 = vpop.f32.mrb[0].mxu0
      %v3551 = vadd.f32 %v3279, %v3550
      %v3552 = vpop.f32.mrb[0].mxu0
      %3553 = vmatprep.mubr.bf16.mxu0 0
      %3554 = vmatmul.mubr.bf16.gmra.mrb[0].mxu0 %v3216
      %v3555 = vpop.f32.mrb[0].mxu0
      %v3556 = vadd.f32 %v3279, %v3555
      %v3557 = vpop.f32.mrb[0].mxu0
      %v3558 = vpop.f32.mrb[0].mxu0
      %v3559 = vadd.f32 %v3279, %v3558
      %v3560 = vpop.f32.mrb[0].mxu0
      %3561 = vmatprep.mubr.bf16.mxu0 0
      %3562 = vmatmul.mubr.bf16.gmra.mrb[0].mxu0 %v3217
      %v3563 = vpop.f32.mrb[0].mxu0
      %v3564 = vadd.f32 %v3279, %v3563
      %v3565 = vpop.f32.mrb[0].mxu0
      %v3566 = vpop.f32.mrb[0].mxu0
      %v3567 = vadd.f32 %v3279, %v3566
      %v3568 = vpop.f32.mrb[0].mxu0
      %3569 = vmatprep.mubr.bf16.mxu0 0
      %3570 = vmatmul.mubr.bf16.gmra.mrb[0].mxu0 %v3218
      %v3571 = vpop.f32.mrb[0].mxu0
      %v3572 = vadd.f32 %v3279, %v3571
      %v3573 = vpop.f32.mrb[0].mxu0
      %v3574 = vpop.f32.mrb[0].mxu0
      %v3575 = vadd.f32 %v3279, %v3574
      %v3576 = vpop.f32.mrb[0].mxu0
      %3577 = vmatprep.mubr.bf16.mxu0 0
      %3578 = vmatmul.mubr.bf16.gmra.mrb[0].mxu0 %v3219
      %v3579 = vpop.f32.mrb[0].mxu0
      %v3580 = vadd.f32 %v3279, %v3579
      %v3581 = vpop.f32.mrb[0].mxu0
      %v3582 = vpop.f32.mrb[0].mxu0
      %v3583 = vadd.f32 %v3279, %v3582
      %v3584 = vpop.f32.mrb[0].mxu0
      %3585 = vmatprep.mubr.bf16.mxu0 0
      %3586 = vmatmul.mubr.bf16.gmra.mrb[0].mxu0 %v3220
      %v3587 = vpop.f32.mrb[0].mxu0
      %v3588 = vadd.f32 %v3279, %v3587
      %v3589 = vpop.f32.mrb[0].mxu0
      %v3590 = vpop.f32.mrb[0].mxu0
      %v3591 = vadd.f32 %v3279, %v3590
      %v3592 = vpop.f32.mrb[0].mxu0
      %3593 = vmatprep.mubr.bf16.mxu0 0
      %3594 = vmatmul.mubr.bf16.gmra.mrb[0].mxu0 %v3221
      %v3595 = vpop.f32.mrb[0].mxu0
      %v3596 = vadd.f32 %v3279, %v3595
      %v3597 = vpop.f32.mrb[0].mxu0
      %v3598 = vpop.f32.mrb[0].mxu0
      %v3599 = vadd.f32 %v3279, %v3598
      %v3600 = vpop.f32.mrb[0].mxu0
      %3601 = vmatprep.mubr.bf16.mxu0 0
      %3602 = vmatmul.mubr.bf16.gmra.mrb[0].mxu0 %v3222
      %v3603 = vpop.f32.mrb[0].mxu0
      %v3604 = vadd.f32 %v3279, %v3603
      %v3605 = vpop.f32.mrb[0].mxu0
      %v3606 = vpop.f32.mrb[0].mxu0
      %v3607 = vadd.f32 %v3279, %v3606
      %v3608 = vpop.f32.mrb[0].mxu0
      %3609 = vmatprep.mubr.bf16.mxu0 0
      %3610 = vmatmul.mubr.bf16.gmra.mrb[0].mxu0 %v3223
      %v3611 = vpop.f32.mrb[0].mxu0
      %v3612 = vadd.f32 %v3279, %v3611
      %v3613 = vpop.f32.mrb[0].mxu0
      %v3614 = vpop.f32.mrb[0].mxu0
      %v3615 = vadd.f32 %v3279, %v3614
      %v3616 = vpop.f32.mrb[0].mxu0
      %3617 = vmatprep.mubr.bf16.mxu0 0
      %3618 = vmatmul.mubr.bf16.gmra.mrb[0].mxu0 %v3224
      %v3619 = vpop.f32.mrb[0].mxu0
      %v3620 = vadd.f32 %v3279, %v3619
      %v3621 = vpop.f32.mrb[0].mxu0
      %v3622 = vpop.f32.mrb[0].mxu0
      %v3623 = vadd.f32 %v3279, %v3622
      %v3624 = vpop.f32.mrb[0].mxu0
      %3625 = vmatprep.mubr.bf16.mxu0 0
      %3626 = vmatmul.mubr.bf16.gmra.mrb[0].mxu0 %v3225
      %v3627 = vpop.f32.mrb[0].mxu0
      %v3628 = vadd.f32 %v3279, %v3627
      %v3629 = vpop.f32.mrb[0].mxu0
      %v3630 = vpop.f32.mrb[0].mxu0
      %v3631 = vadd.f32 %v3279, %v3630
      %v3632 = vpop.f32.mrb[0].mxu0
      %3633 = vmatprep.mubr.bf16.mxu0 0
      %3634 = vmatmul.mubr.bf16.gmra.mrb[0].mxu0 %v3226
      %v3635 = vpop.f32.mrb[0].mxu0
      %v3636 = vadd.f32 %v3279, %v3635
      %v3637 = vpop.f32.mrb[0].mxu0
      %v3638 = vpop.f32.mrb[0].mxu0
      %v3639 = vadd.f32 %v3279, %v3638
      %v3640 = vpop.f32.mrb[0].mxu0
      %3641 = vmatprep.mubr.bf16.mxu0 0
      %3642 = vmatmul.mubr.bf16.gmra.mrb[0].mxu0 %v3227
      %v3643 = vpop.f32.mrb[0].mxu0
      %v3644 = vadd.f32 %v3279, %v3643
      %v3645 = vpop.f32.mrb[0].mxu0
      %v3646 = vpop.f32.mrb[0].mxu0
      %v3647 = vadd.f32 %v3279, %v3646
      %v3648 = vpop.f32.mrb[0].mxu0
      %3649 = vmatprep.mubr.bf16.mxu0 0
      %3650 = vmatmul.mubr.bf16.gmra.mrb[0].mxu0 %v3228
      %v3651 = vpop.f32.mrb[0].mxu0
      %v3652 = vadd.f32 %v3279, %v3651
      %v3653 = vpop.f32.mrb[0].mxu0
      %v3654 = vpop.f32.mrb[0].mxu0
      %v3655 = vadd.f32 %v3279, %v3654
      %v3656 = vpop.f32.mrb[0].mxu0
      %3657 = vmatprep.mubr.bf16.mxu0 0
      %3658 = vmatmul.mubr.bf16.gmra.mrb[0].mxu0 %v3229
      %v3659 = vpop.f32.mrb[0].mxu0
      %v3660 = vadd.f32 %v3279, %v3659
      %v3661 = vpop.f32.mrb[0].mxu0
      %v3662 = vpop.f32.mrb[0].mxu0
      %v3663 = vadd.f32 %v3279, %v3662
      %v3664 = vpop.f32.mrb[0].mxu0
      %3665 = vmatprep.mubr.bf16.mxu0 0
      %3666 = vmatmul.mubr.bf16.gmra.mrb[0].mxu0 %v3230
      %v3667 = vpop.f32.mrb[0].mxu0
      %v3668 = vadd.f32 %v3279, %v3667
      %v3669 = vpop.f32.mrb[0].mxu0
      %v3670 = vpop.f32.mrb[0].mxu0
      %v3671 = vadd.f32 %v3279, %v3670
      %v3672 = vpop.f32.mrb[0].mxu0
      %3673 = vmatprep.mubr.bf16.mxu0 0
      %3674 = vmatmul.mubr.bf16.gmra.mrb[0].mxu0 %v3231
      %v3675 = vpop.f32.mrb[0].mxu0
      %v3676 = vadd.f32 %v3279, %v3675
      %v3677 = vpop.f32.mrb[0].mxu0
      %v3678 = vpop.f32.mrb[0].mxu0
      %v3679 = vadd.f32 %v3279, %v3678
      %v3680 = vpop.f32.mrb[0].mxu0
      %3681 = vmatprep.mubr.bf16.mxu0 0
      %3682 = vmatmul.mubr.bf16.gmra.mrb[0].mxu0 %v3232
      %v3683 = vpop.f32.mrb[0].mxu0
      %v3684 = vadd.f32 %v3279, %v3683
      %v3685 = vpop.f32.mrb[0].mxu0
      %v3686 = vpop.f32.mrb[0].mxu0
      %v3687 = vadd.f32 %v3279, %v3686
      %v3688 = vpop.f32.mrb[0].mxu0
      %3689 = vmatprep.mubr.bf16.mxu0 0
      %3690 = vmatmul.mubr.bf16.gmra.mrb[0].mxu0 %v3233
      %v3691 = vpop.f32.mrb[0].mxu0
      %v3692 = vadd.f32 %v3279, %v3691
      %v3693 = vpop.f32.mrb[0].mxu0
      %v3694 = vpop.f32.mrb[0].mxu0
      %v3695 = vadd.f32 %v3279, %v3694
      %v3696 = vpop.f32.mrb[0].mxu0
      %3697 = vmatprep.mubr.bf16.mxu0 0
      %3698 = vmatmul.mubr.bf16.gmra.mrb[0].mxu0 %v3234
      %v3699 = vpop.f32.mrb[0].mxu0
      %v3700 = vadd.f32 %v3279, %v3699
      %v3701 = vpop.f32.mrb[0].mxu0
      %v3702 = vpop.f32.mrb[0].mxu0
      %v3703 = vadd.f32 %v3279, %v3702
      %v3704 = vpop.f32.mrb[0].mxu0
      %3705 = vmatprep.mubr.bf16.mxu0 0
      %3706 = vmatmul.mubr.bf16.gmra.mrb[0].mxu0 %v3235
      %v3707 = vpop.f32.mrb[0].mxu0
      %v3708 = vadd.f32 %v3279, %v3707
      %v3709 = vpop.f32.mrb[0].mxu0
      %v3710 = vpop.f32.mrb[0].mxu0
      %v3711 = vadd.f32 %v3279, %v3710
      %v3712 = vpop.f32.mrb[0].mxu0
      %3713 = vmatprep.mubr.bf16.mxu0 0
      %3714 = vmatmul.mubr.bf16.gmra.mrb[0].mxu0 %v3236
      %v3715 = vpop.f32.mrb[0].mxu0
      %v3716 = vadd.f32 %v3279, %v3715
      %v3717 = vpop.f32.mrb[0].mxu0
      %v3718 = vpop.f32.mrb[0].mxu0
      %v3719 = vadd.f32 %v3279, %v3718
      %v3720 = vpop.f32.mrb[0].mxu0
      %3721 = vmatprep.mubr.bf16.mxu0 0
      %3722 = vmatmul.mubr.bf16.gmra.mrb[0].mxu0 %v3237
      %v3723 = vpop.f32.mrb[0].mxu0
      %v3724 = vadd.f32 %v3279, %v3723
      %v3725 = vpop.f32.mrb[0].mxu0
      %v3726 = vpop.f32.mrb[0].mxu0
      %v3727 = vadd.f32 %v3279, %v3726
      %v3728 = vpop.f32.mrb[0].mxu0
      %3729 = vmatprep.mubr.bf16.mxu0 0
      %3730 = vmatmul.mubr.bf16.gmra.mrb[0].mxu0 %v3238
      %v3731 = vpop.f32.mrb[0].mxu0
      %v3732 = vadd.f32 %v3279, %v3731
      %v3733 = vpop.f32.mrb[0].mxu0
      %v3734 = vpop.f32.mrb[0].mxu0
      %v3735 = vadd.f32 %v3279, %v3734
      %v3736 = vpop.f32.mrb[0].mxu0
      %3737 = vmatprep.mubr.bf16.mxu0 0
      %3738 = vmatmul.mubr.bf16.gmra.mrb[0].mxu0 %v3239
      %v3739 = vpop.f32.mrb[0].mxu0
      %v3740 = vadd.f32 %v3279, %v3739
      %v3741 = vpop.f32.mrb[0].mxu0
      %v3742 = vpop.f32.mrb[0].mxu0
      %v3743 = vadd.f32 %v3279, %v3742
      %v3744 = vpop.f32.mrb[0].mxu0
      %3745 = vmatprep.mubr.bf16.mxu0 0
      %3746 = vmatmul.mubr.bf16.gmra.mrb[0].mxu0 %v3240
      %v3747 = vpop.f32.mrb[0].mxu0
      %v3748 = vadd.f32 %v3279, %v3747
      %v3749 = vpop.f32.mrb[0].mxu0
      %v3750 = vpop.f32.mrb[0].mxu0
      %v3751 = vadd.f32 %v3279, %v3750
      %v3752 = vpop.f32.mrb[0].mxu0
      %3753 = vmatprep.mubr.bf16.mxu0 0
      %3754 = vmatmul.mubr.bf16.gmra.mrb[0].mxu0 %v3241
      %v3755 = vpop.f32.mrb[0].mxu0
      %v3756 = vadd.f32 %v3279, %v3755
      %v3757 = vpop.f32.mrb[0].mxu0
      %v3758 = vpop.f32.mrb[0].mxu0
      %v3759 = vadd.f32 %v3279, %v3758
      %v3760 = vpop.f32.mrb[0].mxu0
      %3761 = vmatprep.mubr.bf16.mxu0 0
      %3762 = vmatmul.mubr.bf16.gmra.mrb[0].mxu0 %v3242
      %v3763 = vpop.f32.mrb[0].mxu0
      %v3764 = vadd.f32 %v3279, %v3763
      %v3765 = vpop.f32.mrb[0].mxu0
      %v3766 = vpop.f32.mrb[0].mxu0
      %v3767 = vadd.f32 %v3279, %v3766
      %v3768 = vpop.f32.mrb[0].mxu0
      %3769 = vmatprep.mubr.bf16.mxu0 0
      %3770 = vmatmul.mubr.bf16.gmra.mrb[0].mxu0 %v3243
      %v3771 = vpop.f32.mrb[0].mxu0
      %v3772 = vadd.f32 %v3279, %v3771
      %v3773 = vpop.f32.mrb[0].mxu0
      %v3774 = vpop.f32.mrb[0].mxu0
      %v3775 = vadd.f32 %v3279, %v3774
      %v3776 = vpop.f32.mrb[0].mxu0
      %3777 = vmatprep.mubr.bf16.mxu0 0
      %3778 = vmatmul.mubr.bf16.gmra.mrb[0].mxu0 %v3244
      %v3779 = vpop.f32.mrb[0].mxu0
      %v3780 = vadd.f32 %v3279, %v3779
      %v3781 = vpop.f32.mrb[0].mxu0
      %v3782 = vpop.f32.mrb[0].mxu0
      %v3783 = vadd.f32 %v3279, %v3782
      %v3784 = vpop.f32.mrb[0].mxu0
      %3785 = vmatprep.mubr.bf16.mxu0 0
      %3786 = vmatmul.mubr.bf16.gmra.mrb[0].mxu0 %v3245
      %v3787 = vpop.f32.mrb[0].mxu0
      %v3788 = vadd.f32 %v3279, %v3787
      %v3789 = vpop.f32.mrb[0].mxu0
      %v3790 = vpop.f32.mrb[0].mxu0
      %v3791 = vadd.f32 %v3279, %v3790
      %v3792 = vpop.f32.mrb[0].mxu0
      %3793 = vmatprep.mubr.bf16.mxu0 0
      %3794 = vmatmul.mubr.bf16.gmra.mrb[0].mxu0 %v3246
      %v3795 = vpop.f32.mrb[0].mxu0
      %v3796 = vadd.f32 %v3279, %v3795
      %v3797 = vpop.f32.mrb[0].mxu0
      %v3798 = vpop.f32.mrb[0].mxu0
      %v3799 = vadd.f32 %v3279, %v3798
      %v3800 = vpop.f32.mrb[0].mxu0
      %3801 = vmatprep.mubr.bf16.mxu0 0
      %3802 = vmatmul.mubr.bf16.gmra.mrb[0].mxu0 %v3247
      %v3803 = vpop.f32.mrb[0].mxu0
      %v3804 = vadd.f32 %v3279, %v3803
      %v3805 = vpop.f32.mrb[0].mxu0
      %v3806 = vpop.f32.mrb[0].mxu0
      %v3807 = vadd.f32 %v3279, %v3806
      %v3808 = vpop.f32.mrb[0].mxu0
      %3809 = vmatprep.mubr.bf16.mxu0 0
      %3810 = vmatmul.mubr.bf16.gmra.mrb[0].mxu0 %v3248
      %v3811 = vpop.f32.mrb[0].mxu0
      %v3812 = vadd.f32 %v3279, %v3811
      %v3813 = vpop.f32.mrb[0].mxu0
      %v3814 = vpop.f32.mrb[0].mxu0
      %v3815 = vadd.f32 %v3279, %v3814
      %v3816 = vpop.f32.mrb[0].mxu0
      %3817 = vmatprep.mubr.bf16.mxu0 0
      %3818 = vmatmul.mubr.bf16.gmra.mrb[0].mxu0 %v3249
      %v3819 = vpop.f32.mrb[0].mxu0
      %v3820 = vadd.f32 %v3279, %v3819
      %v3821 = vpop.f32.mrb[0].mxu0
      %v3822 = vpop.f32.mrb[0].mxu0
      %v3823 = vadd.f32 %v3279, %v3822
      %v3824 = vpop.f32.mrb[0].mxu0
      %3825 = vmatprep.mubr.bf16.mxu0 0
      %3826 = vmatmul.mubr.bf16.gmra.mrb[0].mxu0 %v3250
      %v3827 = vpop.f32.mrb[0].mxu0
      %v3828 = vadd.f32 %v3279, %v3827
      %v3829 = vpop.f32.mrb[0].mxu0
      %v3830 = vpop.f32.mrb[0].mxu0
      %v3831 = vadd.f32 %v3279, %v3830
      %v3832 = vpop.f32.mrb[0].mxu0
      %3833 = vmatprep.mubr.bf16.mxu0 0
      %3834 = vmatmul.mubr.bf16.gmra.mrb[0].mxu0 %v3251
      %v3835 = vpop.f32.mrb[0].mxu0
      %v3836 = vadd.f32 %v3279, %v3835
      %v3837 = vpop.f32.mrb[0].mxu0
      %v3838 = vpop.f32.mrb[0].mxu0
      %v3839 = vadd.f32 %v3279, %v3838
      %v3840 = vpop.f32.mrb[0].mxu0
      %3841 = vmatprep.mubr.bf16.mxu0 0
      %3842 = vmatmul.mubr.bf16.gmra.mrb[0].mxu0 %v3252
      %v3843 = vpop.f32.mrb[0].mxu0
      %v3844 = vadd.f32 %v3279, %v3843
      %v3845 = vpop.f32.mrb[0].mxu0
      %v3846 = vpop.f32.mrb[0].mxu0
      %v3847 = vadd.f32 %v3279, %v3846
      %v3848 = vpop.f32.mrb[0].mxu0
      %3849 = vmatprep.mubr.bf16.mxu0 0
      %3850 = vmatmul.mubr.bf16.gmra.mrb[0].mxu0 %v3253
      %v3851 = vpop.f32.mrb[0].mxu0
      %v3852 = vadd.f32 %v3279, %v3851
      %v3853 = vpop.f32.mrb[0].mxu0
      %v3854 = vpop.f32.mrb[0].mxu0
      %v3855 = vadd.f32 %v3279, %v3854
      %v3856 = vpop.f32.mrb[0].mxu0
      %3857 = vmatprep.mubr.bf16.mxu0 0
      %3858 = vmatmul.mubr.bf16.gmra.mrb[0].mxu0 %v3254
      %v3859 = vpop.f32.mrb[0].mxu0
      %v3860 = vadd.f32 %v3279, %v3859
      %v3861 = vpop.f32.mrb[0].mxu0
      %v3862 = vpop.f32.mrb[0].mxu0
      %v3863 = vadd.f32 %v3279, %v3862
      %v3864 = vpop.f32.mrb[0].mxu0
      %3865 = vmatprep.mubr.bf16.mxu0 0
      %3866 = vmatmul.mubr.bf16.gmra.mrb[0].mxu0 %v3255
      %v3867 = vpop.f32.mrb[0].mxu0
      %v3868 = vadd.f32 %v3279, %v3867
      %v3869 = vpop.f32.mrb[0].mxu0
      %v3870 = vpop.f32.mrb[0].mxu0
      %v3871 = vadd.f32 %v3279, %v3870
      %v3872 = vpop.f32.mrb[0].mxu0
      %3873 = vdwg.mxu0
      %v3874 = vlaneseq
      %v3875 = vand.u32 %v3874, 127
      %vm3876 = vcmp.lt.s32.totalorder %v3875, 70
      %v3877 = vmax.f32 %v3364, 0.0
      %v3878 = vmax.f32 %v3367, 0.0
      %v3879 = vmax.f32 %v3372, 0.0
      %v3880 = vmax.f32 %v3375, 0.0
      %v3881 = vmax.f32 %v3380, 0.0
      %v3882 = vmax.f32 %v3383, 0.0
      %v3883 = vmax.f32 %v3388, 0.0
      %v3884 = vmax.f32 %v3391, 0.0
      %v3885 = vmax.f32 %v3396, 0.0
      %v3886 = vmax.f32 %v3399, 0.0
      %v3887 = vmax.f32 %v3404, 0.0
      %v3888 = vmax.f32 %v3407, 0.0
      %v3889 = vmax.f32 %v3412, 0.0
      %v3890 = vmax.f32 %v3415, 0.0
      %v3891 = vmax.f32 %v3420, 0.0
      %v3892 = vmax.f32 %v3423, 0.0
      %v3893 = vmax.f32 %v3428, 0.0
      %v3894 = vmax.f32 %v3431, 0.0
      %v3895 = vmax.f32 %v3436, 0.0
      %v3896 = vmax.f32 %v3439, 0.0
      %v3897 = vmax.f32 %v3444, 0.0
      %v3898 = vmax.f32 %v3447, 0.0
      %v3899 = vmax.f32 %v3452, 0.0
      %v3900 = vmax.f32 %v3455, 0.0
      %v3901 = vmax.f32 %v3460, 0.0
      %v3902 = vmax.f32 %v3463, 0.0
      %v3903 = vmax.f32 %v3468, 0.0
      %v3904 = vmax.f32 %v3471, 0.0
      %v3905 = vmax.f32 %v3476, 0.0
      %v3906 = vmax.f32 %v3479, 0.0
      %v3907 = vmax.f32 %v3484, 0.0
      %v3908 = vmax.f32 %v3487, 0.0
      %v3909 = vmax.f32 %v3492, 0.0
      %v3910 = vmax.f32 %v3495, 0.0
      %v3911 = vmax.f32 %v3500, 0.0
      %v3912 = vmax.f32 %v3503, 0.0
      %v3913 = vmax.f32 %v3508, 0.0
      %v3914 = vmax.f32 %v3511, 0.0
      %v3915 = vmax.f32 %v3516, 0.0
      %v3916 = vmax.f32 %v3519, 0.0
      %v3917 = vmax.f32 %v3524, 0.0
      %v3918 = vmax.f32 %v3527, 0.0
      %v3919 = vmax.f32 %v3532, 0.0
      %v3920 = vmax.f32 %v3535, 0.0
      %v3921 = vmax.f32 %v3540, 0.0
      %v3922 = vmax.f32 %v3543, 0.0
      %v3923 = vmax.f32 %v3548, 0.0
      %v3924 = vmax.f32 %v3551, 0.0
      %v3925 = vmax.f32 %v3556, 0.0
      %v3926 = vmax.f32 %v3559, 0.0
      %v3927 = vmax.f32 %v3564, 0.0
      %v3928 = vmax.f32 %v3567, 0.0
      %v3929 = vmax.f32 %v3572, 0.0
      %v3930 = vmax.f32 %v3575, 0.0
      %v3931 = vmax.f32 %v3580, 0.0
      %v3932 = vmax.f32 %v3583, 0.0
      %v3933 = vmax.f32 %v3588, 0.0
      %v3934 = vmax.f32 %v3591, 0.0
      %v3935 = vmax.f32 %v3596, 0.0
      %v3936 = vmax.f32 %v3599, 0.0
      %v3937 = vmax.f32 %v3604, 0.0
      %v3938 = vmax.f32 %v3607, 0.0
      %v3939 = vmax.f32 %v3612, 0.0
      %v3940 = vmax.f32 %v3615, 0.0
      %v3941 = vmax.f32 %v3620, 0.0
      %v3942 = vmax.f32 %v3623, 0.0
      %v3943 = vmax.f32 %v3628, 0.0
      %v3944 = vmax.f32 %v3631, 0.0
      %v3945 = vmax.f32 %v3636, 0.0
      %v3946 = vmax.f32 %v3639, 0.0
      %v3947 = vmax.f32 %v3644, 0.0
      %v3948 = vmax.f32 %v3647, 0.0
      %v3949 = vmax.f32 %v3652, 0.0
      %v3950 = vmax.f32 %v3655, 0.0
      %v3951 = vmax.f32 %v3660, 0.0
      %v3952 = vmax.f32 %v3663, 0.0
      %v3953 = vmax.f32 %v3668, 0.0
      %v3954 = vmax.f32 %v3671, 0.0
      %v3955 = vmax.f32 %v3676, 0.0
      %v3956 = vmax.f32 %v3679, 0.0
      %v3957 = vmax.f32 %v3684, 0.0
      %v3958 = vmax.f32 %v3687, 0.0
      %v3959 = vmax.f32 %v3692, 0.0
      %v3960 = vmax.f32 %v3695, 0.0
      %v3961 = vmax.f32 %v3700, 0.0
      %v3962 = vmax.f32 %v3703, 0.0
      %v3963 = vmax.f32 %v3708, 0.0
      %v3964 = vmax.f32 %v3711, 0.0
      %v3965 = vmax.f32 %v3716, 0.0
      %v3966 = vmax.f32 %v3719, 0.0
      %v3967 = vmax.f32 %v3724, 0.0
      %v3968 = vmax.f32 %v3727, 0.0
      %v3969 = vmax.f32 %v3732, 0.0
      %v3970 = vmax.f32 %v3735, 0.0
      %v3971 = vmax.f32 %v3740, 0.0
      %v3972 = vmax.f32 %v3743, 0.0
      %v3973 = vmax.f32 %v3748, 0.0
      %v3974 = vmax.f32 %v3751, 0.0
      %v3975 = vmax.f32 %v3756, 0.0
      %v3976 = vmax.f32 %v3759, 0.0
      %v3977 = vmax.f32 %v3764, 0.0
      %v3978 = vmax.f32 %v3767, 0.0
      %v3979 = vmax.f32 %v3772, 0.0
      %v3980 = vmax.f32 %v3775, 0.0
      %v3981 = vmax.f32 %v3780, 0.0
      %v3982 = vmax.f32 %v3783, 0.0
      %v3983 = vmax.f32 %v3788, 0.0
      %v3984 = vmax.f32 %v3791, 0.0
      %v3985 = vmax.f32 %v3796, 0.0
      %v3986 = vmax.f32 %v3799, 0.0
      %v3987 = vmax.f32 %v3804, 0.0
      %v3988 = vmax.f32 %v3807, 0.0
      %v3989 = vmax.f32 %v3812, 0.0
      %v3990 = vmax.f32 %v3815, 0.0
      %v3991 = vmax.f32 %v3820, 0.0
      %v3992 = vmax.f32 %v3823, 0.0
      %v3993 = vmax.f32 %v3828, 0.0
      %v3994 = vmax.f32 %v3831, 0.0
      %v3995 = vmax.f32 %v3836, 0.0
      %v3996 = vmax.f32 %v3839, 0.0
      %v3997 = vmax.f32 %v3844, 0.0
      %v3998 = vmax.f32 %v3847, 0.0
      %v3999 = vmax.f32 %v3852, 0.0
      %v4000 = vmax.f32 %v3855, 0.0
      %v4001 = vmax.f32 %v3860, 0.0
      %v4002 = vmax.f32 %v3863, 0.0
      %v4003 = vmax.f32 %v3868, 0.0
      %v4004 = vmax.f32 %v3871, 0.0
      %v4005 = vsel %vm3876, %v3877, %v3364
      %v4006 = vsel %vm3876, %v3878, %v3367
      %v4007 = vsel %vm3876, %v3879, %v3372
      %v4008 = vsel %vm3876, %v3880, %v3375
      %v4009 = vsel %vm3876, %v3881, %v3380
      %v4010 = vsel %vm3876, %v3882, %v3383
      %v4011 = vsel %vm3876, %v3883, %v3388
      %v4012 = vsel %vm3876, %v3884, %v3391
      %v4013 = vsel %vm3876, %v3885, %v3396
      %v4014 = vsel %vm3876, %v3886, %v3399
      %v4015 = vsel %vm3876, %v3887, %v3404
      %v4016 = vsel %vm3876, %v3888, %v3407
      %v4017 = vsel %vm3876, %v3889, %v3412
      %v4018 = vsel %vm3876, %v3890, %v3415
      %v4019 = vsel %vm3876, %v3891, %v3420
      %v4020 = vsel %vm3876, %v3892, %v3423
      %v4021 = vsel %vm3876, %v3893, %v3428
      %v4022 = vsel %vm3876, %v3894, %v3431
      %v4023 = vsel %vm3876, %v3895, %v3436
      %v4024 = vsel %vm3876, %v3896, %v3439
      %v4025 = vsel %vm3876, %v3897, %v3444
      %v4026 = vsel %vm3876, %v3898, %v3447
      %v4027 = vsel %vm3876, %v3899, %v3452
      %v4028 = vsel %vm3876, %v3900, %v3455
      %v4029 = vsel %vm3876, %v3901, %v3460
      %v4030 = vsel %vm3876, %v3902, %v3463
      %v4031 = vsel %vm3876, %v3903, %v3468
      %v4032 = vsel %vm3876, %v3904, %v3471
      %v4033 = vsel %vm3876, %v3905, %v3476
      %v4034 = vsel %vm3876, %v3906, %v3479
      %v4035 = vsel %vm3876, %v3907, %v3484
      %v4036 = vsel %vm3876, %v3908, %v3487
      %v4037 = vsel %vm3876, %v3909, %v3492
      %v4038 = vsel %vm3876, %v3910, %v3495
      %v4039 = vsel %vm3876, %v3911, %v3500
      %v4040 = vsel %vm3876, %v3912, %v3503
      %v4041 = vsel %vm3876, %v3913, %v3508
      %v4042 = vsel %vm3876, %v3914, %v3511
      %v4043 = vsel %vm3876, %v3915, %v3516
      %v4044 = vsel %vm3876, %v3916, %v3519
      %v4045 = vsel %vm3876, %v3917, %v3524
      %v4046 = vsel %vm3876, %v3918, %v3527
      %v4047 = vsel %vm3876, %v3919, %v3532
      %v4048 = vsel %vm3876, %v3920, %v3535
      %v4049 = vsel %vm3876, %v3921, %v3540
      %v4050 = vsel %vm3876, %v3922, %v3543
      %v4051 = vsel %vm3876, %v3923, %v3548
      %v4052 = vsel %vm3876, %v3924, %v3551
      %v4053 = vsel %vm3876, %v3925, %v3556
      %v4054 = vsel %vm3876, %v3926, %v3559
      %v4055 = vsel %vm3876, %v3927, %v3564
      %v4056 = vsel %vm3876, %v3928, %v3567
      %v4057 = vsel %vm3876, %v3929, %v3572
      %v4058 = vsel %vm3876, %v3930, %v3575
      %v4059 = vsel %vm3876, %v3931, %v3580
      %v4060 = vsel %vm3876, %v3932, %v3583
      %v4061 = vsel %vm3876, %v3933, %v3588
      %v4062 = vsel %vm3876, %v3934, %v3591
      %v4063 = vsel %vm3876, %v3935, %v3596
      %v4064 = vsel %vm3876, %v3936, %v3599
      %v4065 = vsel %vm3876, %v3937, %v3604
      %v4066 = vsel %vm3876, %v3938, %v3607
      %v4067 = vsel %vm3876, %v3939, %v3612
      %v4068 = vsel %vm3876, %v3940, %v3615
      %v4069 = vsel %vm3876, %v3941, %v3620
      %v4070 = vsel %vm3876, %v3942, %v3623
      %v4071 = vsel %vm3876, %v3943, %v3628
      %v4072 = vsel %vm3876, %v3944, %v3631
      %v4073 = vsel %vm3876, %v3945, %v3636
      %v4074 = vsel %vm3876, %v3946, %v3639
      %v4075 = vsel %vm3876, %v3947, %v3644
      %v4076 = vsel %vm3876, %v3948, %v3647
      %v4077 = vsel %vm3876, %v3949, %v3652
      %v4078 = vsel %vm3876, %v3950, %v3655
      %v4079 = vsel %vm3876, %v3951, %v3660
      %v4080 = vsel %vm3876, %v3952, %v3663
      %v4081 = vsel %vm3876, %v3953, %v3668
      %v4082 = vsel %vm3876, %v3954, %v3671
      %v4083 = vsel %vm3876, %v3955, %v3676
      %v4084 = vsel %vm3876, %v3956, %v3679
      %v4085 = vsel %vm3876, %v3957, %v3684
      %v4086 = vsel %vm3876, %v3958, %v3687
      %v4087 = vsel %vm3876, %v3959, %v3692
      %v4088 = vsel %vm3876, %v3960, %v3695
      %v4089 = vsel %vm3876, %v3961, %v3700
      %v4090 = vsel %vm3876, %v3962, %v3703
      %v4091 = vsel %vm3876, %v3963, %v3708
      %v4092 = vsel %vm3876, %v3964, %v3711
      %v4093 = vsel %vm3876, %v3965, %v3716
      %v4094 = vsel %vm3876, %v3966, %v3719
      %v4095 = vsel %vm3876, %v3967, %v3724
      %v4096 = vsel %vm3876, %v3968, %v3727
      %v4097 = vsel %vm3876, %v3969, %v3732
      %v4098 = vsel %vm3876, %v3970, %v3735
      %v4099 = vsel %vm3876, %v3971, %v3740
      %v4100 = vsel %vm3876, %v3972, %v3743
      %v4101 = vsel %vm3876, %v3973, %v3748
      %v4102 = vsel %vm3876, %v3974, %v3751
      %v4103 = vsel %vm3876, %v3975, %v3756
      %v4104 = vsel %vm3876, %v3976, %v3759
      %v4105 = vsel %vm3876, %v3977, %v3764
      %v4106 = vsel %vm3876, %v3978, %v3767
      %v4107 = vsel %vm3876, %v3979, %v3772
      %v4108 = vsel %vm3876, %v3980, %v3775
      %v4109 = vsel %vm3876, %v3981, %v3780
      %v4110 = vsel %vm3876, %v3982, %v3783
      %v4111 = vsel %vm3876, %v3983, %v3788
      %v4112 = vsel %vm3876, %v3984, %v3791
      %v4113 = vsel %vm3876, %v3985, %v3796
      %v4114 = vsel %vm3876, %v3986, %v3799
      %v4115 = vsel %vm3876, %v3987, %v3804
      %v4116 = vsel %vm3876, %v3988, %v3807
      %v4117 = vsel %vm3876, %v3989, %v3812
      %v4118 = vsel %vm3876, %v3990, %v3815
      %v4119 = vsel %vm3876, %v3991, %v3820
      %v4120 = vsel %vm3876, %v3992, %v3823
      %v4121 = vsel %vm3876, %v3993, %v3828
      %v4122 = vsel %vm3876, %v3994, %v3831
      %v4123 = vsel %vm3876, %v3995, %v3836
      %v4124 = vsel %vm3876, %v3996, %v3839
      %v4125 = vsel %vm3876, %v3997, %v3844
      %v4126 = vsel %vm3876, %v3998, %v3847
      %v4127 = vsel %vm3876, %v3999, %v3852
      %v4128 = vsel %vm3876, %v4000, %v3855
      %v4129 = vsel %vm3876, %v4001, %v3860
      %v4130 = vsel %vm3876, %v4002, %v3863
      %v4131 = vsel %vm3876, %v4003, %v3868
      %v4132 = vsel %vm3876, %v4004, %v3871
      %v4133 = vpack.c.bf16 %v4006, %v4005
      %v4134 = vpack.c.bf16 %v4008, %v4007
      %v4135 = vpack.c.bf16 %v4010, %v4009
      %v4136 = vpack.c.bf16 %v4012, %v4011
      %v4137 = vpack.c.bf16 %v4014, %v4013
      %v4138 = vpack.c.bf16 %v4016, %v4015
      %v4139 = vpack.c.bf16 %v4018, %v4017
      %v4140 = vpack.c.bf16 %v4020, %v4019
      %v4141 = vpack.c.bf16 %v4022, %v4021
      %v4142 = vpack.c.bf16 %v4024, %v4023
      %v4143 = vpack.c.bf16 %v4026, %v4025
      %v4144 = vpack.c.bf16 %v4028, %v4027
      %v4145 = vpack.c.bf16 %v4030, %v4029
      %v4146 = vpack.c.bf16 %v4032, %v4031
      %v4147 = vpack.c.bf16 %v4034, %v4033
      %v4148 = vpack.c.bf16 %v4036, %v4035
      %v4149 = vpack.c.bf16 %v4038, %v4037
      %v4150 = vpack.c.bf16 %v4040, %v4039
      %v4151 = vpack.c.bf16 %v4042, %v4041
      %v4152 = vpack.c.bf16 %v4044, %v4043
      %v4153 = vpack.c.bf16 %v4046, %v4045
      %v4154 = vpack.c.bf16 %v4048, %v4047
      %v4155 = vpack.c.bf16 %v4050, %v4049
      %v4156 = vpack.c.bf16 %v4052, %v4051
      %v4157 = vpack.c.bf16 %v4054, %v4053
      %v4158 = vpack.c.bf16 %v4056, %v4055
      %v4159 = vpack.c.bf16 %v4058, %v4057
      %v4160 = vpack.c.bf16 %v4060, %v4059
      %v4161 = vpack.c.bf16 %v4062, %v4061
      %v4162 = vpack.c.bf16 %v4064, %v4063
      %v4163 = vpack.c.bf16 %v4066, %v4065
      %v4164 = vpack.c.bf16 %v4068, %v4067
      %v4165 = vpack.c.bf16 %v4070, %v4069
      %v4166 = vpack.c.bf16 %v4072, %v4071
      %v4167 = vpack.c.bf16 %v4074, %v4073
      %v4168 = vpack.c.bf16 %v4076, %v4075
      %v4169 = vpack.c.bf16 %v4078, %v4077
      %v4170 = vpack.c.bf16 %v4080, %v4079
      %v4171 = vpack.c.bf16 %v4082, %v4081
      %v4172 = vpack.c.bf16 %v4084, %v4083
      %v4173 = vpack.c.bf16 %v4086, %v4085
      %v4174 = vpack.c.bf16 %v4088, %v4087
      %v4175 = vpack.c.bf16 %v4090, %v4089
      %v4176 = vpack.c.bf16 %v4092, %v4091
      %v4177 = vpack.c.bf16 %v4094, %v4093
      %v4178 = vpack.c.bf16 %v4096, %v4095
      %v4179 = vpack.c.bf16 %v4098, %v4097
      %v4180 = vpack.c.bf16 %v4100, %v4099
      %v4181 = vpack.c.bf16 %v4102, %v4101
      %v4182 = vpack.c.bf16 %v4104, %v4103
      %v4183 = vpack.c.bf16 %v4106, %v4105
      %v4184 = vpack.c.bf16 %v4108, %v4107
      %v4185 = vpack.c.bf16 %v4110, %v4109
      %v4186 = vpack.c.bf16 %v4112, %v4111
      %v4187 = vpack.c.bf16 %v4114, %v4113
      %v4188 = vpack.c.bf16 %v4116, %v4115
      %v4189 = vpack.c.bf16 %v4118, %v4117
      %v4190 = vpack.c.bf16 %v4120, %v4119
      %v4191 = vpack.c.bf16 %v4122, %v4121
      %v4192 = vpack.c.bf16 %v4124, %v4123
      %v4193 = vpack.c.bf16 %v4126, %v4125
      %v4194 = vpack.c.bf16 %v4128, %v4127
      %v4195 = vpack.c.bf16 %v4130, %v4129
      %v4196 = vpack.c.bf16 %v4132, %v4131
      %s4197 = scalar_lea.vmem %s3, 128
      %v4198 = vld [vmem:[%s4197] sm:$0xf]
      %v4199 = vld [vmem:[%s4197 + $0x4] sm:$0xf]
      %v4200 = vld [vmem:[%s4197 + $0x8] sm:$0xf]
      %v4201 = vld [vmem:[%s4197 + $0xc] sm:$0xf]
      %v4202 = vld [vmem:[%s4197 + $0x10] sm:$0xf]
      %v4203 = vld [vmem:[%s4197 + $0x14] sm:$0xf]
      %v4204 = vld [vmem:[%s4197 + $0x18] sm:$0xf]
      %v4205 = vld [vmem:[%s4197 + $0x1c] sm:$0xf]
      %v4206 = vld [vmem:[%s4197 + $0x20] sm:$0xf]
      %v4207 = vld [vmem:[%s4197 + $0x24] sm:$0xf]
      %v4208 = vld [vmem:[%s4197 + $0x28] sm:$0xf]
      %v4209 = vld [vmem:[%s4197 + $0x2c] sm:$0xf]
      %v4210 = vld [vmem:[%s4197 + $0x30] sm:$0xf]
      %v4211 = vld [vmem:[%s4197 + $0x34] sm:$0xf]
      %v4212 = vld [vmem:[%s4197 + $0x38] sm:$0xf]
      %v4213 = vld [vmem:[%s4197 + $0x3c] sm:$0xf]
      %s4214 = scalar_lea.vmem %s4, 3
      %v4215 = vld [vmem:[%s4214] sm:$0x1]
      %v4217 = vlaneseq
      %v4218 = vshrl.u32 %v4217, 7
      %v4219 = vsub.s32 0, %v4218
      %v4220 = vrot.slane %v4215, %v4219
      %v4238 = vunpack.c.l.b16 %v4198
      %v4239 = vunpack.c.l.b16 %v4199
      %v4240 = vunpack.c.l.b16 %v4200
      %v4241 = vunpack.c.l.b16 %v4201
      %v4242 = vunpack.c.l.b16 %v4202
      %v4243 = vunpack.c.l.b16 %v4203
      %v4244 = vunpack.c.l.b16 %v4204
      %v4245 = vunpack.c.l.b16 %v4205
      %v4246 = vunpack.c.l.b16 %v4206
      %v4247 = vunpack.c.l.b16 %v4207
      %v4248 = vunpack.c.l.b16 %v4208
      %v4249 = vunpack.c.l.b16 %v4209
      %v4250 = vunpack.c.l.b16 %v4210
      %v4251 = vunpack.c.l.b16 %v4211
      %v4252 = vunpack.c.l.b16 %v4212
      %v4253 = vunpack.c.l.b16 %v4213
      %v4254 = vpack.c.b16 %v4239, %v4238
      %v4255 = vpack.c.b16 %v4241, %v4240
      %v4256 = vpack.c.b16 %v4243, %v4242
      %v4257 = vpack.c.b16 %v4245, %v4244
      %v4258 = vpack.c.b16 %v4247, %v4246
      %v4259 = vpack.c.b16 %v4249, %v4248
      %v4260 = vpack.c.b16 %v4251, %v4250
      %v4261 = vpack.c.b16 %v4253, %v4252
      %4270 = vmatprep.subr.bf16.mxu0 0
      %4271 = vmatpush1.bf16.msra.mxu0 %v4254
      %4272 = vmatprep.subr.bf16.mxu0 0
      %4273 = vmatpush1.bf16.msra.mxu0 %v4255
      %4274 = vmatprep.subr.bf16.mxu0 0
      %4275 = vmatpush1.bf16.msra.mxu0 %v4256
      %4276 = vmatprep.subr.bf16.mxu0 0
      %4277 = vmatpush1.bf16.msra.mxu0 %v4257
      %4278 = vmatprep.subr.bf16.mxu0 0
      %4279 = vmatpush1.bf16.msra.mxu0 %v4258
      %4280 = vmatprep.subr.bf16.mxu0 0
      %4281 = vmatpush1.bf16.msra.mxu0 %v4259
      %4282 = vmatprep.subr.bf16.mxu0 0
      %4283 = vmatpush1.bf16.msra.mxu0 %v4260
      %4284 = vmatprep.subr.bf16.mxu0 0
      %4285 = vmatpush1.bf16.msra.mxu0 %v4261
      %4286 = vmatprep.subr.bf16.mxu0 0
      %4287 = vmatpush1.bf16.msra.mxu0 0
      %4288 = vmatprep.subr.bf16.mxu0 0
      %4289 = vmatpush1.bf16.msra.mxu0 0
      %4290 = vmatprep.subr.bf16.mxu0 0
      %4291 = vmatpush1.bf16.msra.mxu0 0
      %4292 = vmatprep.subr.bf16.mxu0 0
      %4293 = vmatpush1.bf16.msra.mxu0 0
      %4294 = vmatprep.subr.bf16.mxu0 0
      %4295 = vmatpush1.bf16.msra.mxu0 0
      %4296 = vmatprep.subr.bf16.mxu0 0
      %4297 = vmatpush1.bf16.msra.mxu0 0
      %4298 = vmatprep.subr.bf16.mxu0 0
      %4299 = vmatpush1.bf16.msra.mxu0 0
      %4300 = vmatprep.subr.bf16.mxu0 0
      %4301 = vmatpush1.bf16.msra.mxu0 0
      %4302 = vmatprep.mubr.bf16.mxu0 0
      %4303 = vmatmul.mubr.bf16.gmra.mrb[0].mxu0 %v4133
      %v4304 = vpop.f32.mrb[0].mxu0
      %v4305 = vadd.f32 %v4220, %v4304
      %v4306 = vpop.f32.mrb[0].mxu0
      %v4307 = vpop.f32.mrb[0].mxu0
      %v4308 = vadd.f32 %v4220, %v4307
      %v4309 = vpop.f32.mrb[0].mxu0
      %4310 = vmatprep.mubr.bf16.mxu0 0
      %4311 = vmatmul.mubr.bf16.gmra.mrb[0].mxu0 %v4134
      %v4312 = vpop.f32.mrb[0].mxu0
      %v4313 = vadd.f32 %v4220, %v4312
      %v4314 = vpop.f32.mrb[0].mxu0
      %v4315 = vpop.f32.mrb[0].mxu0
      %v4316 = vadd.f32 %v4220, %v4315
      %v4317 = vpop.f32.mrb[0].mxu0
      %4318 = vmatprep.mubr.bf16.mxu0 0
      %4319 = vmatmul.mubr.bf16.gmra.mrb[0].mxu0 %v4135
      %v4320 = vpop.f32.mrb[0].mxu0
      %v4321 = vadd.f32 %v4220, %v4320
      %v4322 = vpop.f32.mrb[0].mxu0
      %v4323 = vpop.f32.mrb[0].mxu0
      %v4324 = vadd.f32 %v4220, %v4323
      %v4325 = vpop.f32.mrb[0].mxu0
      %4326 = vmatprep.mubr.bf16.mxu0 0
      %4327 = vmatmul.mubr.bf16.gmra.mrb[0].mxu0 %v4136
      %v4328 = vpop.f32.mrb[0].mxu0
      %v4329 = vadd.f32 %v4220, %v4328
      %v4330 = vpop.f32.mrb[0].mxu0
      %v4331 = vpop.f32.mrb[0].mxu0
      %v4332 = vadd.f32 %v4220, %v4331
      %v4333 = vpop.f32.mrb[0].mxu0
      %4334 = vmatprep.mubr.bf16.mxu0 0
      %4335 = vmatmul.mubr.bf16.gmra.mrb[0].mxu0 %v4137
      %v4336 = vpop.f32.mrb[0].mxu0
      %v4337 = vadd.f32 %v4220, %v4336
      %v4338 = vpop.f32.mrb[0].mxu0
      %v4339 = vpop.f32.mrb[0].mxu0
      %v4340 = vadd.f32 %v4220, %v4339
      %v4341 = vpop.f32.mrb[0].mxu0
      %4342 = vmatprep.mubr.bf16.mxu0 0
      %4343 = vmatmul.mubr.bf16.gmra.mrb[0].mxu0 %v4138
      %v4344 = vpop.f32.mrb[0].mxu0
      %v4345 = vadd.f32 %v4220, %v4344
      %v4346 = vpop.f32.mrb[0].mxu0
      %v4347 = vpop.f32.mrb[0].mxu0
      %v4348 = vadd.f32 %v4220, %v4347
      %v4349 = vpop.f32.mrb[0].mxu0
      %4350 = vmatprep.mubr.bf16.mxu0 0
      %4351 = vmatmul.mubr.bf16.gmra.mrb[0].mxu0 %v4139
      %v4352 = vpop.f32.mrb[0].mxu0
      %v4353 = vadd.f32 %v4220, %v4352
      %v4354 = vpop.f32.mrb[0].mxu0
      %v4355 = vpop.f32.mrb[0].mxu0
      %v4356 = vadd.f32 %v4220, %v4355
      %v4357 = vpop.f32.mrb[0].mxu0
      %4358 = vmatprep.mubr.bf16.mxu0 0
      %4359 = vmatmul.mubr.bf16.gmra.mrb[0].mxu0 %v4140
      %v4360 = vpop.f32.mrb[0].mxu0
      %v4361 = vadd.f32 %v4220, %v4360
      %v4362 = vpop.f32.mrb[0].mxu0
      %v4363 = vpop.f32.mrb[0].mxu0
      %v4364 = vadd.f32 %v4220, %v4363
      %v4365 = vpop.f32.mrb[0].mxu0
      %4366 = vmatprep.mubr.bf16.mxu0 0
      %4367 = vmatmul.mubr.bf16.gmra.mrb[0].mxu0 %v4141
      %v4368 = vpop.f32.mrb[0].mxu0
      %v4369 = vadd.f32 %v4220, %v4368
      %v4370 = vpop.f32.mrb[0].mxu0
      %v4371 = vpop.f32.mrb[0].mxu0
      %v4372 = vadd.f32 %v4220, %v4371
      %v4373 = vpop.f32.mrb[0].mxu0
      %4374 = vmatprep.mubr.bf16.mxu0 0
      %4375 = vmatmul.mubr.bf16.gmra.mrb[0].mxu0 %v4142
      %v4376 = vpop.f32.mrb[0].mxu0
      %v4377 = vadd.f32 %v4220, %v4376
      %v4378 = vpop.f32.mrb[0].mxu0
      %v4379 = vpop.f32.mrb[0].mxu0
      %v4380 = vadd.f32 %v4220, %v4379
      %v4381 = vpop.f32.mrb[0].mxu0
      %4382 = vmatprep.mubr.bf16.mxu0 0
      %4383 = vmatmul.mubr.bf16.gmra.mrb[0].mxu0 %v4143
      %v4384 = vpop.f32.mrb[0].mxu0
      %v4385 = vadd.f32 %v4220, %v4384
      %v4386 = vpop.f32.mrb[0].mxu0
      %v4387 = vpop.f32.mrb[0].mxu0
      %v4388 = vadd.f32 %v4220, %v4387
      %v4389 = vpop.f32.mrb[0].mxu0
      %4390 = vmatprep.mubr.bf16.mxu0 0
      %4391 = vmatmul.mubr.bf16.gmra.mrb[0].mxu0 %v4144
      %v4392 = vpop.f32.mrb[0].mxu0
      %v4393 = vadd.f32 %v4220, %v4392
      %v4394 = vpop.f32.mrb[0].mxu0
      %v4395 = vpop.f32.mrb[0].mxu0
      %v4396 = vadd.f32 %v4220, %v4395
      %v4397 = vpop.f32.mrb[0].mxu0
      %4398 = vmatprep.mubr.bf16.mxu0 0
      %4399 = vmatmul.mubr.bf16.gmra.mrb[0].mxu0 %v4145
      %v4400 = vpop.f32.mrb[0].mxu0
      %v4401 = vadd.f32 %v4220, %v4400
      %v4402 = vpop.f32.mrb[0].mxu0
      %v4403 = vpop.f32.mrb[0].mxu0
      %v4404 = vadd.f32 %v4220, %v4403
      %v4405 = vpop.f32.mrb[0].mxu0
      %4406 = vmatprep.mubr.bf16.mxu0 0
      %4407 = vmatmul.mubr.bf16.gmra.mrb[0].mxu0 %v4146
      %v4408 = vpop.f32.mrb[0].mxu0
      %v4409 = vadd.f32 %v4220, %v4408
      %v4410 = vpop.f32.mrb[0].mxu0
      %v4411 = vpop.f32.mrb[0].mxu0
      %v4412 = vadd.f32 %v4220, %v4411
      %v4413 = vpop.f32.mrb[0].mxu0
      %4414 = vmatprep.mubr.bf16.mxu0 0
      %4415 = vmatmul.mubr.bf16.gmra.mrb[0].mxu0 %v4147
      %v4416 = vpop.f32.mrb[0].mxu0
      %v4417 = vadd.f32 %v4220, %v4416
      %v4418 = vpop.f32.mrb[0].mxu0
      %v4419 = vpop.f32.mrb[0].mxu0
      %v4420 = vadd.f32 %v4220, %v4419
      %v4421 = vpop.f32.mrb[0].mxu0
      %4422 = vmatprep.mubr.bf16.mxu0 0
      %4423 = vmatmul.mubr.bf16.gmra.mrb[0].mxu0 %v4148
      %v4424 = vpop.f32.mrb[0].mxu0
      %v4425 = vadd.f32 %v4220, %v4424
      %v4426 = vpop.f32.mrb[0].mxu0
      %v4427 = vpop.f32.mrb[0].mxu0
      %v4428 = vadd.f32 %v4220, %v4427
      %v4429 = vpop.f32.mrb[0].mxu0
      %4430 = vmatprep.mubr.bf16.mxu0 0
      %4431 = vmatmul.mubr.bf16.gmra.mrb[0].mxu0 %v4149
      %v4432 = vpop.f32.mrb[0].mxu0
      %v4433 = vadd.f32 %v4220, %v4432
      %v4434 = vpop.f32.mrb[0].mxu0
      %v4435 = vpop.f32.mrb[0].mxu0
      %v4436 = vadd.f32 %v4220, %v4435
      %v4437 = vpop.f32.mrb[0].mxu0
      %4438 = vmatprep.mubr.bf16.mxu0 0
      %4439 = vmatmul.mubr.bf16.gmra.mrb[0].mxu0 %v4150
      %v4440 = vpop.f32.mrb[0].mxu0
      %v4441 = vadd.f32 %v4220, %v4440
      %v4442 = vpop.f32.mrb[0].mxu0
      %v4443 = vpop.f32.mrb[0].mxu0
      %v4444 = vadd.f32 %v4220, %v4443
      %v4445 = vpop.f32.mrb[0].mxu0
      %4446 = vmatprep.mubr.bf16.mxu0 0
      %4447 = vmatmul.mubr.bf16.gmra.mrb[0].mxu0 %v4151
      %v4448 = vpop.f32.mrb[0].mxu0
      %v4449 = vadd.f32 %v4220, %v4448
      %v4450 = vpop.f32.mrb[0].mxu0
      %v4451 = vpop.f32.mrb[0].mxu0
      %v4452 = vadd.f32 %v4220, %v4451
      %v4453 = vpop.f32.mrb[0].mxu0
      %4454 = vmatprep.mubr.bf16.mxu0 0
      %4455 = vmatmul.mubr.bf16.gmra.mrb[0].mxu0 %v4152
      %v4456 = vpop.f32.mrb[0].mxu0
      %v4457 = vadd.f32 %v4220, %v4456
      %v4458 = vpop.f32.mrb[0].mxu0
      %v4459 = vpop.f32.mrb[0].mxu0
      %v4460 = vadd.f32 %v4220, %v4459
      %v4461 = vpop.f32.mrb[0].mxu0
      %4462 = vmatprep.mubr.bf16.mxu0 0
      %4463 = vmatmul.mubr.bf16.gmra.mrb[0].mxu0 %v4153
      %v4464 = vpop.f32.mrb[0].mxu0
      %v4465 = vadd.f32 %v4220, %v4464
      %v4466 = vpop.f32.mrb[0].mxu0
      %v4467 = vpop.f32.mrb[0].mxu0
      %v4468 = vadd.f32 %v4220, %v4467
      %v4469 = vpop.f32.mrb[0].mxu0
      %4470 = vmatprep.mubr.bf16.mxu0 0
      %4471 = vmatmul.mubr.bf16.gmra.mrb[0].mxu0 %v4154
      %v4472 = vpop.f32.mrb[0].mxu0
      %v4473 = vadd.f32 %v4220, %v4472
      %v4474 = vpop.f32.mrb[0].mxu0
      %v4475 = vpop.f32.mrb[0].mxu0
      %v4476 = vadd.f32 %v4220, %v4475
      %v4477 = vpop.f32.mrb[0].mxu0
      %4478 = vmatprep.mubr.bf16.mxu0 0
      %4479 = vmatmul.mubr.bf16.gmra.mrb[0].mxu0 %v4155
      %v4480 = vpop.f32.mrb[0].mxu0
      %v4481 = vadd.f32 %v4220, %v4480
      %v4482 = vpop.f32.mrb[0].mxu0
      %v4483 = vpop.f32.mrb[0].mxu0
      %v4484 = vadd.f32 %v4220, %v4483
      %v4485 = vpop.f32.mrb[0].mxu0
      %4486 = vmatprep.mubr.bf16.mxu0 0
      %4487 = vmatmul.mubr.bf16.gmra.mrb[0].mxu0 %v4156
      %v4488 = vpop.f32.mrb[0].mxu0
      %v4489 = vadd.f32 %v4220, %v4488
      %v4490 = vpop.f32.mrb[0].mxu0
      %v4491 = vpop.f32.mrb[0].mxu0
      %v4492 = vadd.f32 %v4220, %v4491
      %v4493 = vpop.f32.mrb[0].mxu0
      %4494 = vmatprep.mubr.bf16.mxu0 0
      %4495 = vmatmul.mubr.bf16.gmra.mrb[0].mxu0 %v4157
      %v4496 = vpop.f32.mrb[0].mxu0
      %v4497 = vadd.f32 %v4220, %v4496
      %v4498 = vpop.f32.mrb[0].mxu0
      %v4499 = vpop.f32.mrb[0].mxu0
      %v4500 = vadd.f32 %v4220, %v4499
      %v4501 = vpop.f32.mrb[0].mxu0
      %4502 = vmatprep.mubr.bf16.mxu0 0
      %4503 = vmatmul.mubr.bf16.gmra.mrb[0].mxu0 %v4158
      %v4504 = vpop.f32.mrb[0].mxu0
      %v4505 = vadd.f32 %v4220, %v4504
      %v4506 = vpop.f32.mrb[0].mxu0
      %v4507 = vpop.f32.mrb[0].mxu0
      %v4508 = vadd.f32 %v4220, %v4507
      %v4509 = vpop.f32.mrb[0].mxu0
      %4510 = vmatprep.mubr.bf16.mxu0 0
      %4511 = vmatmul.mubr.bf16.gmra.mrb[0].mxu0 %v4159
      %v4512 = vpop.f32.mrb[0].mxu0
      %v4513 = vadd.f32 %v4220, %v4512
      %v4514 = vpop.f32.mrb[0].mxu0
      %v4515 = vpop.f32.mrb[0].mxu0
      %v4516 = vadd.f32 %v4220, %v4515
      %v4517 = vpop.f32.mrb[0].mxu0
      %4518 = vmatprep.mubr.bf16.mxu0 0
      %4519 = vmatmul.mubr.bf16.gmra.mrb[0].mxu0 %v4160
      %v4520 = vpop.f32.mrb[0].mxu0
      %v4521 = vadd.f32 %v4220, %v4520
      %v4522 = vpop.f32.mrb[0].mxu0
      %v4523 = vpop.f32.mrb[0].mxu0
      %v4524 = vadd.f32 %v4220, %v4523
      %v4525 = vpop.f32.mrb[0].mxu0
      %4526 = vmatprep.mubr.bf16.mxu0 0
      %4527 = vmatmul.mubr.bf16.gmra.mrb[0].mxu0 %v4161
      %v4528 = vpop.f32.mrb[0].mxu0
      %v4529 = vadd.f32 %v4220, %v4528
      %v4530 = vpop.f32.mrb[0].mxu0
      %v4531 = vpop.f32.mrb[0].mxu0
      %v4532 = vadd.f32 %v4220, %v4531
      %v4533 = vpop.f32.mrb[0].mxu0
      %4534 = vmatprep.mubr.bf16.mxu0 0
      %4535 = vmatmul.mubr.bf16.gmra.mrb[0].mxu0 %v4162
      %v4536 = vpop.f32.mrb[0].mxu0
      %v4537 = vadd.f32 %v4220, %v4536
      %v4538 = vpop.f32.mrb[0].mxu0
      %v4539 = vpop.f32.mrb[0].mxu0
      %v4540 = vadd.f32 %v4220, %v4539
      %v4541 = vpop.f32.mrb[0].mxu0
      %4542 = vmatprep.mubr.bf16.mxu0 0
      %4543 = vmatmul.mubr.bf16.gmra.mrb[0].mxu0 %v4163
      %v4544 = vpop.f32.mrb[0].mxu0
      %v4545 = vadd.f32 %v4220, %v4544
      %v4546 = vpop.f32.mrb[0].mxu0
      %v4547 = vpop.f32.mrb[0].mxu0
      %v4548 = vadd.f32 %v4220, %v4547
      %v4549 = vpop.f32.mrb[0].mxu0
      %4550 = vmatprep.mubr.bf16.mxu0 0
      %4551 = vmatmul.mubr.bf16.gmra.mrb[0].mxu0 %v4164
      %v4552 = vpop.f32.mrb[0].mxu0
      %v4553 = vadd.f32 %v4220, %v4552
      %v4554 = vpop.f32.mrb[0].mxu0
      %v4555 = vpop.f32.mrb[0].mxu0
      %v4556 = vadd.f32 %v4220, %v4555
      %v4557 = vpop.f32.mrb[0].mxu0
      %4558 = vmatprep.mubr.bf16.mxu0 0
      %4559 = vmatmul.mubr.bf16.gmra.mrb[0].mxu0 %v4165
      %v4560 = vpop.f32.mrb[0].mxu0
      %v4561 = vadd.f32 %v4220, %v4560
      %v4562 = vpop.f32.mrb[0].mxu0
      %v4563 = vpop.f32.mrb[0].mxu0
      %v4564 = vadd.f32 %v4220, %v4563
      %v4565 = vpop.f32.mrb[0].mxu0
      %4566 = vmatprep.mubr.bf16.mxu0 0
      %4567 = vmatmul.mubr.bf16.gmra.mrb[0].mxu0 %v4166
      %v4568 = vpop.f32.mrb[0].mxu0
      %v4569 = vadd.f32 %v4220, %v4568
      %v4570 = vpop.f32.mrb[0].mxu0
      %v4571 = vpop.f32.mrb[0].mxu0
      %v4572 = vadd.f32 %v4220, %v4571
      %v4573 = vpop.f32.mrb[0].mxu0
      %4574 = vmatprep.mubr.bf16.mxu0 0
      %4575 = vmatmul.mubr.bf16.gmra.mrb[0].mxu0 %v4167
      %v4576 = vpop.f32.mrb[0].mxu0
      %v4577 = vadd.f32 %v4220, %v4576
      %v4578 = vpop.f32.mrb[0].mxu0
      %v4579 = vpop.f32.mrb[0].mxu0
      %v4580 = vadd.f32 %v4220, %v4579
      %v4581 = vpop.f32.mrb[0].mxu0
      %4582 = vmatprep.mubr.bf16.mxu0 0
      %4583 = vmatmul.mubr.bf16.gmra.mrb[0].mxu0 %v4168
      %v4584 = vpop.f32.mrb[0].mxu0
      %v4585 = vadd.f32 %v4220, %v4584
      %v4586 = vpop.f32.mrb[0].mxu0
      %v4587 = vpop.f32.mrb[0].mxu0
      %v4588 = vadd.f32 %v4220, %v4587
      %v4589 = vpop.f32.mrb[0].mxu0
      %4590 = vmatprep.mubr.bf16.mxu0 0
      %4591 = vmatmul.mubr.bf16.gmra.mrb[0].mxu0 %v4169
      %v4592 = vpop.f32.mrb[0].mxu0
      %v4593 = vadd.f32 %v4220, %v4592
      %v4594 = vpop.f32.mrb[0].mxu0
      %v4595 = vpop.f32.mrb[0].mxu0
      %v4596 = vadd.f32 %v4220, %v4595
      %v4597 = vpop.f32.mrb[0].mxu0
      %4598 = vmatprep.mubr.bf16.mxu0 0
      %4599 = vmatmul.mubr.bf16.gmra.mrb[0].mxu0 %v4170
      %v4600 = vpop.f32.mrb[0].mxu0
      %v4601 = vadd.f32 %v4220, %v4600
      %v4602 = vpop.f32.mrb[0].mxu0
      %v4603 = vpop.f32.mrb[0].mxu0
      %v4604 = vadd.f32 %v4220, %v4603
      %v4605 = vpop.f32.mrb[0].mxu0
      %4606 = vmatprep.mubr.bf16.mxu0 0
      %4607 = vmatmul.mubr.bf16.gmra.mrb[0].mxu0 %v4171
      %v4608 = vpop.f32.mrb[0].mxu0
      %v4609 = vadd.f32 %v4220, %v4608
      %v4610 = vpop.f32.mrb[0].mxu0
      %v4611 = vpop.f32.mrb[0].mxu0
      %v4612 = vadd.f32 %v4220, %v4611
      %v4613 = vpop.f32.mrb[0].mxu0
      %4614 = vmatprep.mubr.bf16.mxu0 0
      %4615 = vmatmul.mubr.bf16.gmra.mrb[0].mxu0 %v4172
      %v4616 = vpop.f32.mrb[0].mxu0
      %v4617 = vadd.f32 %v4220, %v4616
      %v4618 = vpop.f32.mrb[0].mxu0
      %v4619 = vpop.f32.mrb[0].mxu0
      %v4620 = vadd.f32 %v4220, %v4619
      %v4621 = vpop.f32.mrb[0].mxu0
      %4622 = vmatprep.mubr.bf16.mxu0 0
      %4623 = vmatmul.mubr.bf16.gmra.mrb[0].mxu0 %v4173
      %v4624 = vpop.f32.mrb[0].mxu0
      %v4625 = vadd.f32 %v4220, %v4624
      %v4626 = vpop.f32.mrb[0].mxu0
      %v4627 = vpop.f32.mrb[0].mxu0
      %v4628 = vadd.f32 %v4220, %v4627
      %v4629 = vpop.f32.mrb[0].mxu0
      %4630 = vmatprep.mubr.bf16.mxu0 0
      %4631 = vmatmul.mubr.bf16.gmra.mrb[0].mxu0 %v4174
      %v4632 = vpop.f32.mrb[0].mxu0
      %v4633 = vadd.f32 %v4220, %v4632
      %v4634 = vpop.f32.mrb[0].mxu0
      %v4635 = vpop.f32.mrb[0].mxu0
      %v4636 = vadd.f32 %v4220, %v4635
      %v4637 = vpop.f32.mrb[0].mxu0
      %4638 = vmatprep.mubr.bf16.mxu0 0
      %4639 = vmatmul.mubr.bf16.gmra.mrb[0].mxu0 %v4175
      %v4640 = vpop.f32.mrb[0].mxu0
      %v4641 = vadd.f32 %v4220, %v4640
      %v4642 = vpop.f32.mrb[0].mxu0
      %v4643 = vpop.f32.mrb[0].mxu0
      %v4644 = vadd.f32 %v4220, %v4643
      %v4645 = vpop.f32.mrb[0].mxu0
      %4646 = vmatprep.mubr.bf16.mxu0 0
      %4647 = vmatmul.mubr.bf16.gmra.mrb[0].mxu0 %v4176
      %v4648 = vpop.f32.mrb[0].mxu0
      %v4649 = vadd.f32 %v4220, %v4648
      %v4650 = vpop.f32.mrb[0].mxu0
      %v4651 = vpop.f32.mrb[0].mxu0
      %v4652 = vadd.f32 %v4220, %v4651
      %v4653 = vpop.f32.mrb[0].mxu0
      %4654 = vmatprep.mubr.bf16.mxu0 0
      %4655 = vmatmul.mubr.bf16.gmra.mrb[0].mxu0 %v4177
      %v4656 = vpop.f32.mrb[0].mxu0
      %v4657 = vadd.f32 %v4220, %v4656
      %v4658 = vpop.f32.mrb[0].mxu0
      %v4659 = vpop.f32.mrb[0].mxu0
      %v4660 = vadd.f32 %v4220, %v4659
      %v4661 = vpop.f32.mrb[0].mxu0
      %4662 = vmatprep.mubr.bf16.mxu0 0
      %4663 = vmatmul.mubr.bf16.gmra.mrb[0].mxu0 %v4178
      %v4664 = vpop.f32.mrb[0].mxu0
      %v4665 = vadd.f32 %v4220, %v4664
      %v4666 = vpop.f32.mrb[0].mxu0
      %v4667 = vpop.f32.mrb[0].mxu0
      %v4668 = vadd.f32 %v4220, %v4667
      %v4669 = vpop.f32.mrb[0].mxu0
      %4670 = vmatprep.mubr.bf16.mxu0 0
      %4671 = vmatmul.mubr.bf16.gmra.mrb[0].mxu0 %v4179
      %v4672 = vpop.f32.mrb[0].mxu0
      %v4673 = vadd.f32 %v4220, %v4672
      %v4674 = vpop.f32.mrb[0].mxu0
      %v4675 = vpop.f32.mrb[0].mxu0
      %v4676 = vadd.f32 %v4220, %v4675
      %v4677 = vpop.f32.mrb[0].mxu0
      %4678 = vmatprep.mubr.bf16.mxu0 0
      %4679 = vmatmul.mubr.bf16.gmra.mrb[0].mxu0 %v4180
      %v4680 = vpop.f32.mrb[0].mxu0
      %v4681 = vadd.f32 %v4220, %v4680
      %v4682 = vpop.f32.mrb[0].mxu0
      %v4683 = vpop.f32.mrb[0].mxu0
      %v4684 = vadd.f32 %v4220, %v4683
      %v4685 = vpop.f32.mrb[0].mxu0
      %4686 = vmatprep.mubr.bf16.mxu0 0
      %4687 = vmatmul.mubr.bf16.gmra.mrb[0].mxu0 %v4181
      %v4688 = vpop.f32.mrb[0].mxu0
      %v4689 = vadd.f32 %v4220, %v4688
      %v4690 = vpop.f32.mrb[0].mxu0
      %v4691 = vpop.f32.mrb[0].mxu0
      %v4692 = vadd.f32 %v4220, %v4691
      %v4693 = vpop.f32.mrb[0].mxu0
      %4694 = vmatprep.mubr.bf16.mxu0 0
      %4695 = vmatmul.mubr.bf16.gmra.mrb[0].mxu0 %v4182
      %v4696 = vpop.f32.mrb[0].mxu0
      %v4697 = vadd.f32 %v4220, %v4696
      %v4698 = vpop.f32.mrb[0].mxu0
      %v4699 = vpop.f32.mrb[0].mxu0
      %v4700 = vadd.f32 %v4220, %v4699
      %v4701 = vpop.f32.mrb[0].mxu0
      %4702 = vmatprep.mubr.bf16.mxu0 0
      %4703 = vmatmul.mubr.bf16.gmra.mrb[0].mxu0 %v4183
      %v4704 = vpop.f32.mrb[0].mxu0
      %v4705 = vadd.f32 %v4220, %v4704
      %v4706 = vpop.f32.mrb[0].mxu0
      %v4707 = vpop.f32.mrb[0].mxu0
      %v4708 = vadd.f32 %v4220, %v4707
      %v4709 = vpop.f32.mrb[0].mxu0
      %4710 = vmatprep.mubr.bf16.mxu0 0
      %4711 = vmatmul.mubr.bf16.gmra.mrb[0].mxu0 %v4184
      %v4712 = vpop.f32.mrb[0].mxu0
      %v4713 = vadd.f32 %v4220, %v4712
      %v4714 = vpop.f32.mrb[0].mxu0
      %v4715 = vpop.f32.mrb[0].mxu0
      %v4716 = vadd.f32 %v4220, %v4715
      %v4717 = vpop.f32.mrb[0].mxu0
      %4718 = vmatprep.mubr.bf16.mxu0 0
      %4719 = vmatmul.mubr.bf16.gmra.mrb[0].mxu0 %v4185
      %v4720 = vpop.f32.mrb[0].mxu0
      %v4721 = vadd.f32 %v4220, %v4720
      %v4722 = vpop.f32.mrb[0].mxu0
      %v4723 = vpop.f32.mrb[0].mxu0
      %v4724 = vadd.f32 %v4220, %v4723
      %v4725 = vpop.f32.mrb[0].mxu0
      %4726 = vmatprep.mubr.bf16.mxu0 0
      %4727 = vmatmul.mubr.bf16.gmra.mrb[0].mxu0 %v4186
      %v4728 = vpop.f32.mrb[0].mxu0
      %v4729 = vadd.f32 %v4220, %v4728
      %v4730 = vpop.f32.mrb[0].mxu0
      %v4731 = vpop.f32.mrb[0].mxu0
      %v4732 = vadd.f32 %v4220, %v4731
      %v4733 = vpop.f32.mrb[0].mxu0
      %4734 = vmatprep.mubr.bf16.mxu0 0
      %4735 = vmatmul.mubr.bf16.gmra.mrb[0].mxu0 %v4187
      %v4736 = vpop.f32.mrb[0].mxu0
      %v4737 = vadd.f32 %v4220, %v4736
      %v4738 = vpop.f32.mrb[0].mxu0
      %v4739 = vpop.f32.mrb[0].mxu0
      %v4740 = vadd.f32 %v4220, %v4739
      %v4741 = vpop.f32.mrb[0].mxu0
      %4742 = vmatprep.mubr.bf16.mxu0 0
      %4743 = vmatmul.mubr.bf16.gmra.mrb[0].mxu0 %v4188
      %v4744 = vpop.f32.mrb[0].mxu0
      %v4745 = vadd.f32 %v4220, %v4744
      %v4746 = vpop.f32.mrb[0].mxu0
      %v4747 = vpop.f32.mrb[0].mxu0
      %v4748 = vadd.f32 %v4220, %v4747
      %v4749 = vpop.f32.mrb[0].mxu0
      %4750 = vmatprep.mubr.bf16.mxu0 0
      %4751 = vmatmul.mubr.bf16.gmra.mrb[0].mxu0 %v4189
      %v4752 = vpop.f32.mrb[0].mxu0
      %v4753 = vadd.f32 %v4220, %v4752
      %v4754 = vpop.f32.mrb[0].mxu0
      %v4755 = vpop.f32.mrb[0].mxu0
      %v4756 = vadd.f32 %v4220, %v4755
      %v4757 = vpop.f32.mrb[0].mxu0
      %4758 = vmatprep.mubr.bf16.mxu0 0
      %4759 = vmatmul.mubr.bf16.gmra.mrb[0].mxu0 %v4190
      %v4760 = vpop.f32.mrb[0].mxu0
      %v4761 = vadd.f32 %v4220, %v4760
      %v4762 = vpop.f32.mrb[0].mxu0
      %v4763 = vpop.f32.mrb[0].mxu0
      %v4764 = vadd.f32 %v4220, %v4763
      %v4765 = vpop.f32.mrb[0].mxu0
      %4766 = vmatprep.mubr.bf16.mxu0 0
      %4767 = vmatmul.mubr.bf16.gmra.mrb[0].mxu0 %v4191
      %v4768 = vpop.f32.mrb[0].mxu0
      %v4769 = vadd.f32 %v4220, %v4768
      %v4770 = vpop.f32.mrb[0].mxu0
      %v4771 = vpop.f32.mrb[0].mxu0
      %v4772 = vadd.f32 %v4220, %v4771
      %v4773 = vpop.f32.mrb[0].mxu0
      %4774 = vmatprep.mubr.bf16.mxu0 0
      %4775 = vmatmul.mubr.bf16.gmra.mrb[0].mxu0 %v4192
      %v4776 = vpop.f32.mrb[0].mxu0
      %v4777 = vadd.f32 %v4220, %v4776
      %v4778 = vpop.f32.mrb[0].mxu0
      %v4779 = vpop.f32.mrb[0].mxu0
      %v4780 = vadd.f32 %v4220, %v4779
      %v4781 = vpop.f32.mrb[0].mxu0
      %4782 = vmatprep.mubr.bf16.mxu0 0
      %4783 = vmatmul.mubr.bf16.gmra.mrb[0].mxu0 %v4193
      %v4784 = vpop.f32.mrb[0].mxu0
      %v4785 = vadd.f32 %v4220, %v4784
      %v4786 = vpop.f32.mrb[0].mxu0
      %v4787 = vpop.f32.mrb[0].mxu0
      %v4788 = vadd.f32 %v4220, %v4787
      %v4789 = vpop.f32.mrb[0].mxu0
      %4790 = vmatprep.mubr.bf16.mxu0 0
      %4791 = vmatmul.mubr.bf16.gmra.mrb[0].mxu0 %v4194
      %v4792 = vpop.f32.mrb[0].mxu0
      %v4793 = vadd.f32 %v4220, %v4792
      %v4794 = vpop.f32.mrb[0].mxu0
      %v4795 = vpop.f32.mrb[0].mxu0
      %v4796 = vadd.f32 %v4220, %v4795
      %v4797 = vpop.f32.mrb[0].mxu0
      %4798 = vmatprep.mubr.bf16.mxu0 0
      %4799 = vmatmul.mubr.bf16.gmra.mrb[0].mxu0 %v4195
      %v4800 = vpop.f32.mrb[0].mxu0
      %v4801 = vadd.f32 %v4220, %v4800
      %v4802 = vpop.f32.mrb[0].mxu0
      %v4803 = vpop.f32.mrb[0].mxu0
      %v4804 = vadd.f32 %v4220, %v4803
      %v4805 = vpop.f32.mrb[0].mxu0
      %4806 = vmatprep.mubr.bf16.mxu0 0
      %4807 = vmatmul.mubr.bf16.gmra.mrb[0].mxu0 %v4196
      %v4808 = vpop.f32.mrb[0].mxu0
      %v4809 = vadd.f32 %v4220, %v4808
      %v4810 = vpop.f32.mrb[0].mxu0
      %v4811 = vpop.f32.mrb[0].mxu0
      %v4812 = vadd.f32 %v4220, %v4811
      %v4813 = vpop.f32.mrb[0].mxu0
      %4814 = vdwg.mxu0
      %v4815 = vmax.f32 %v4305, 0.0
      %v4816 = vmax.f32 %v4308, 0.0
      %v4817 = vmax.f32 %v4313, 0.0
      %v4818 = vmax.f32 %v4316, 0.0
      %v4819 = vmax.f32 %v4321, 0.0
      %v4820 = vmax.f32 %v4324, 0.0
      %v4821 = vmax.f32 %v4329, 0.0
      %v4822 = vmax.f32 %v4332, 0.0
      %v4823 = vmax.f32 %v4337, 0.0
      %v4824 = vmax.f32 %v4340, 0.0
      %v4825 = vmax.f32 %v4345, 0.0
      %v4826 = vmax.f32 %v4348, 0.0
      %v4827 = vmax.f32 %v4353, 0.0
      %v4828 = vmax.f32 %v4356, 0.0
      %v4829 = vmax.f32 %v4361, 0.0
      %v4830 = vmax.f32 %v4364, 0.0
      %v4831 = vmax.f32 %v4369, 0.0
      %v4832 = vmax.f32 %v4372, 0.0
      %v4833 = vmax.f32 %v4377, 0.0
      %v4834 = vmax.f32 %v4380, 0.0
      %v4835 = vmax.f32 %v4385, 0.0
      %v4836 = vmax.f32 %v4388, 0.0
      %v4837 = vmax.f32 %v4393, 0.0
      %v4838 = vmax.f32 %v4396, 0.0
      %v4839 = vmax.f32 %v4401, 0.0
      %v4840 = vmax.f32 %v4404, 0.0
      %v4841 = vmax.f32 %v4409, 0.0
      %v4842 = vmax.f32 %v4412, 0.0
      %v4843 = vmax.f32 %v4417, 0.0
      %v4844 = vmax.f32 %v4420, 0.0
      %v4845 = vmax.f32 %v4425, 0.0
      %v4846 = vmax.f32 %v4428, 0.0
      %v4847 = vmax.f32 %v4433, 0.0
      %v4848 = vmax.f32 %v4436, 0.0
      %v4849 = vmax.f32 %v4441, 0.0
      %v4850 = vmax.f32 %v4444, 0.0
      %v4851 = vmax.f32 %v4449, 0.0
      %v4852 = vmax.f32 %v4452, 0.0
      %v4853 = vmax.f32 %v4457, 0.0
      %v4854 = vmax.f32 %v4460, 0.0
      %v4855 = vmax.f32 %v4465, 0.0
      %v4856 = vmax.f32 %v4468, 0.0
      %v4857 = vmax.f32 %v4473, 0.0
      %v4858 = vmax.f32 %v4476, 0.0
      %v4859 = vmax.f32 %v4481, 0.0
      %v4860 = vmax.f32 %v4484, 0.0
      %v4861 = vmax.f32 %v4489, 0.0
      %v4862 = vmax.f32 %v4492, 0.0
      %v4863 = vmax.f32 %v4497, 0.0
      %v4864 = vmax.f32 %v4500, 0.0
      %v4865 = vmax.f32 %v4505, 0.0
      %v4866 = vmax.f32 %v4508, 0.0
      %v4867 = vmax.f32 %v4513, 0.0
      %v4868 = vmax.f32 %v4516, 0.0
      %v4869 = vmax.f32 %v4521, 0.0
      %v4870 = vmax.f32 %v4524, 0.0
      %v4871 = vmax.f32 %v4529, 0.0
      %v4872 = vmax.f32 %v4532, 0.0
      %v4873 = vmax.f32 %v4537, 0.0
      %v4874 = vmax.f32 %v4540, 0.0
      %v4875 = vmax.f32 %v4545, 0.0
      %v4876 = vmax.f32 %v4548, 0.0
      %v4877 = vmax.f32 %v4553, 0.0
      %v4878 = vmax.f32 %v4556, 0.0
      %v4879 = vmax.f32 %v4561, 0.0
      %v4880 = vmax.f32 %v4564, 0.0
      %v4881 = vmax.f32 %v4569, 0.0
      %v4882 = vmax.f32 %v4572, 0.0
      %v4883 = vmax.f32 %v4577, 0.0
      %v4884 = vmax.f32 %v4580, 0.0
      %v4885 = vmax.f32 %v4585, 0.0
      %v4886 = vmax.f32 %v4588, 0.0
      %v4887 = vmax.f32 %v4593, 0.0
      %v4888 = vmax.f32 %v4596, 0.0
      %v4889 = vmax.f32 %v4601, 0.0
      %v4890 = vmax.f32 %v4604, 0.0
      %v4891 = vmax.f32 %v4609, 0.0
      %v4892 = vmax.f32 %v4612, 0.0
      %v4893 = vmax.f32 %v4617, 0.0
      %v4894 = vmax.f32 %v4620, 0.0
      %v4895 = vmax.f32 %v4625, 0.0
      %v4896 = vmax.f32 %v4628, 0.0
      %v4897 = vmax.f32 %v4633, 0.0
      %v4898 = vmax.f32 %v4636, 0.0
      %v4899 = vmax.f32 %v4641, 0.0
      %v4900 = vmax.f32 %v4644, 0.0
      %v4901 = vmax.f32 %v4649, 0.0
      %v4902 = vmax.f32 %v4652, 0.0
      %v4903 = vmax.f32 %v4657, 0.0
      %v4904 = vmax.f32 %v4660, 0.0
      %v4905 = vmax.f32 %v4665, 0.0
      %v4906 = vmax.f32 %v4668, 0.0
      %v4907 = vmax.f32 %v4673, 0.0
      %v4908 = vmax.f32 %v4676, 0.0
      %v4909 = vmax.f32 %v4681, 0.0
      %v4910 = vmax.f32 %v4684, 0.0
      %v4911 = vmax.f32 %v4689, 0.0
      %v4912 = vmax.f32 %v4692, 0.0
      %v4913 = vmax.f32 %v4697, 0.0
      %v4914 = vmax.f32 %v4700, 0.0
      %v4915 = vmax.f32 %v4705, 0.0
      %v4916 = vmax.f32 %v4708, 0.0
      %v4917 = vmax.f32 %v4713, 0.0
      %v4918 = vmax.f32 %v4716, 0.0
      %v4919 = vmax.f32 %v4721, 0.0
      %v4920 = vmax.f32 %v4724, 0.0
      %v4921 = vmax.f32 %v4729, 0.0
      %v4922 = vmax.f32 %v4732, 0.0
      %v4923 = vmax.f32 %v4737, 0.0
      %v4924 = vmax.f32 %v4740, 0.0
      %v4925 = vmax.f32 %v4745, 0.0
      %v4926 = vmax.f32 %v4748, 0.0
      %v4927 = vmax.f32 %v4753, 0.0
      %v4928 = vmax.f32 %v4756, 0.0
      %v4929 = vmax.f32 %v4761, 0.0
      %v4930 = vmax.f32 %v4764, 0.0
      %v4931 = vmax.f32 %v4769, 0.0
      %v4932 = vmax.f32 %v4772, 0.0
      %v4933 = vmax.f32 %v4777, 0.0
      %v4934 = vmax.f32 %v4780, 0.0
      %v4935 = vmax.f32 %v4785, 0.0
      %v4936 = vmax.f32 %v4788, 0.0
      %v4937 = vmax.f32 %v4793, 0.0
      %v4938 = vmax.f32 %v4796, 0.0
      %v4939 = vmax.f32 %v4801, 0.0
      %v4940 = vmax.f32 %v4804, 0.0
      %v4941 = vmax.f32 %v4809, 0.0
      %v4942 = vmax.f32 %v4812, 0.0
      %v4943 = vpack.c.bf16 %v4816, %v4815
      %v4944 = vpack.c.bf16 %v4818, %v4817
      %v4945 = vpack.c.bf16 %v4820, %v4819
      %v4946 = vpack.c.bf16 %v4822, %v4821
      %v4947 = vpack.c.bf16 %v4824, %v4823
      %v4948 = vpack.c.bf16 %v4826, %v4825
      %v4949 = vpack.c.bf16 %v4828, %v4827
      %v4950 = vpack.c.bf16 %v4830, %v4829
      %v4951 = vpack.c.bf16 %v4832, %v4831
      %v4952 = vpack.c.bf16 %v4834, %v4833
      %v4953 = vpack.c.bf16 %v4836, %v4835
      %v4954 = vpack.c.bf16 %v4838, %v4837
      %v4955 = vpack.c.bf16 %v4840, %v4839
      %v4956 = vpack.c.bf16 %v4842, %v4841
      %v4957 = vpack.c.bf16 %v4844, %v4843
      %v4958 = vpack.c.bf16 %v4846, %v4845
      %v4959 = vpack.c.bf16 %v4848, %v4847
      %v4960 = vpack.c.bf16 %v4850, %v4849
      %v4961 = vpack.c.bf16 %v4852, %v4851
      %v4962 = vpack.c.bf16 %v4854, %v4853
      %v4963 = vpack.c.bf16 %v4856, %v4855
      %v4964 = vpack.c.bf16 %v4858, %v4857
      %v4965 = vpack.c.bf16 %v4860, %v4859
      %v4966 = vpack.c.bf16 %v4862, %v4861
      %v4967 = vpack.c.bf16 %v4864, %v4863
      %v4968 = vpack.c.bf16 %v4866, %v4865
      %v4969 = vpack.c.bf16 %v4868, %v4867
      %v4970 = vpack.c.bf16 %v4870, %v4869
      %v4971 = vpack.c.bf16 %v4872, %v4871
      %v4972 = vpack.c.bf16 %v4874, %v4873
      %v4973 = vpack.c.bf16 %v4876, %v4875
      %v4974 = vpack.c.bf16 %v4878, %v4877
      %v4975 = vpack.c.bf16 %v4880, %v4879
      %v4976 = vpack.c.bf16 %v4882, %v4881
      %v4977 = vpack.c.bf16 %v4884, %v4883
      %v4978 = vpack.c.bf16 %v4886, %v4885
      %v4979 = vpack.c.bf16 %v4888, %v4887
      %v4980 = vpack.c.bf16 %v4890, %v4889
      %v4981 = vpack.c.bf16 %v4892, %v4891
      %v4982 = vpack.c.bf16 %v4894, %v4893
      %v4983 = vpack.c.bf16 %v4896, %v4895
      %v4984 = vpack.c.bf16 %v4898, %v4897
      %v4985 = vpack.c.bf16 %v4900, %v4899
      %v4986 = vpack.c.bf16 %v4902, %v4901
      %v4987 = vpack.c.bf16 %v4904, %v4903
      %v4988 = vpack.c.bf16 %v4906, %v4905
      %v4989 = vpack.c.bf16 %v4908, %v4907
      %v4990 = vpack.c.bf16 %v4910, %v4909
      %v4991 = vpack.c.bf16 %v4912, %v4911
      %v4992 = vpack.c.bf16 %v4914, %v4913
      %v4993 = vpack.c.bf16 %v4916, %v4915
      %v4994 = vpack.c.bf16 %v4918, %v4917
      %v4995 = vpack.c.bf16 %v4920, %v4919
      %v4996 = vpack.c.bf16 %v4922, %v4921
      %v4997 = vpack.c.bf16 %v4924, %v4923
      %v4998 = vpack.c.bf16 %v4926, %v4925
      %v4999 = vpack.c.bf16 %v4928, %v4927
      %v5000 = vpack.c.bf16 %v4930, %v4929
      %v5001 = vpack.c.bf16 %v4932, %v4931
      %v5002 = vpack.c.bf16 %v4934, %v4933
      %v5003 = vpack.c.bf16 %v4936, %v4935
      %v5004 = vpack.c.bf16 %v4938, %v4937
      %v5005 = vpack.c.bf16 %v4940, %v4939
      %v5006 = vpack.c.bf16 %v4942, %v4941
      %s5007 = scalar_lea.vmem %s3, 192
      %v5008 = vld [vmem:[%s5007] sm:$0xf]
      %v5009 = vld [vmem:[%s5007 + $0x4] sm:$0xf]
      %v5010 = vld [vmem:[%s5007 + $0x8] sm:$0xf]
      %v5011 = vld [vmem:[%s5007 + $0xc] sm:$0xf]
      %v5012 = vld [vmem:[%s5007 + $0x10] sm:$0xf]
      %v5013 = vld [vmem:[%s5007 + $0x14] sm:$0xf]
      %v5014 = vld [vmem:[%s5007 + $0x18] sm:$0xf]
      %v5015 = vld [vmem:[%s5007 + $0x1c] sm:$0xf]
      %v5016 = vld [vmem:[%s5007 + $0x20] sm:$0xf]
      %v5017 = vld [vmem:[%s5007 + $0x24] sm:$0xf]
      %v5018 = vld [vmem:[%s5007 + $0x28] sm:$0xf]
      %v5019 = vld [vmem:[%s5007 + $0x2c] sm:$0xf]
      %v5020 = vld [vmem:[%s5007 + $0x30] sm:$0xf]
      %v5021 = vld [vmem:[%s5007 + $0x34] sm:$0xf]
      %v5022 = vld [vmem:[%s5007 + $0x38] sm:$0xf]
      %v5023 = vld [vmem:[%s5007 + $0x3c] sm:$0xf]
      %s5024 = scalar_lea.vmem %s4, 4
      %v5025 = vld [vmem:[%s5024] sm:$0x1]
      %v5027 = vlaneseq
      %v5028 = vshrl.u32 %v5027, 7
      %v5029 = vsub.s32 0, %v5028
      %v5030 = vrot.slane %v5025, %v5029
      %v5048 = vunpack.c.l.b16 %v5008
      %v5049 = vunpack.c.l.b16 %v5009
      %v5050 = vunpack.c.l.b16 %v5010
      %v5051 = vunpack.c.l.b16 %v5011
      %v5052 = vunpack.c.l.b16 %v5012
      %v5053 = vunpack.c.l.b16 %v5013
      %v5054 = vunpack.c.l.b16 %v5014
      %v5055 = vunpack.c.l.b16 %v5015
      %v5056 = vunpack.c.l.b16 %v5016
      %v5057 = vunpack.c.l.b16 %v5017
      %v5058 = vunpack.c.l.b16 %v5018
      %v5059 = vunpack.c.l.b16 %v5019
      %v5060 = vunpack.c.l.b16 %v5020
      %v5061 = vunpack.c.l.b16 %v5021
      %v5062 = vunpack.c.l.b16 %v5022
      %v5063 = vunpack.c.l.b16 %v5023
      %v5064 = vpack.c.b16 %v5049, %v5048
      %v5065 = vpack.c.b16 %v5051, %v5050
      %v5066 = vpack.c.b16 %v5053, %v5052
      %v5067 = vpack.c.b16 %v5055, %v5054
      %v5068 = vpack.c.b16 %v5057, %v5056
      %v5069 = vpack.c.b16 %v5059, %v5058
      %v5070 = vpack.c.b16 %v5061, %v5060
      %v5071 = vpack.c.b16 %v5063, %v5062
      %5080 = vmatprep.subr.bf16.mxu0 0
      %5081 = vmatpush1.bf16.msra.mxu0 %v5064
      %5082 = vmatprep.subr.bf16.mxu0 0
      %5083 = vmatpush1.bf16.msra.mxu0 %v5065
      %5084 = vmatprep.subr.bf16.mxu0 0
      %5085 = vmatpush1.bf16.msra.mxu0 %v5066
      %5086 = vmatprep.subr.bf16.mxu0 0
      %5087 = vmatpush1.bf16.msra.mxu0 %v5067
      %5088 = vmatprep.subr.bf16.mxu0 0
      %5089 = vmatpush1.bf16.msra.mxu0 %v5068
      %5090 = vmatprep.subr.bf16.mxu0 0
      %5091 = vmatpush1.bf16.msra.mxu0 %v5069
      %5092 = vmatprep.subr.bf16.mxu0 0
      %5093 = vmatpush1.bf16.msra.mxu0 %v5070
      %5094 = vmatprep.subr.bf16.mxu0 0
      %5095 = vmatpush1.bf16.msra.mxu0 %v5071
      %5096 = vmatprep.subr.bf16.mxu0 0
      %5097 = vmatpush1.bf16.msra.mxu0 0
      %5098 = vmatprep.subr.bf16.mxu0 0
      %5099 = vmatpush1.bf16.msra.mxu0 0
      %5100 = vmatprep.subr.bf16.mxu0 0
      %5101 = vmatpush1.bf16.msra.mxu0 0
      %5102 = vmatprep.subr.bf16.mxu0 0
      %5103 = vmatpush1.bf16.msra.mxu0 0
      %5104 = vmatprep.subr.bf16.mxu0 0
      %5105 = vmatpush1.bf16.msra.mxu0 0
      %5106 = vmatprep.subr.bf16.mxu0 0
      %5107 = vmatpush1.bf16.msra.mxu0 0
      %5108 = vmatprep.subr.bf16.mxu0 0
      %5109 = vmatpush1.bf16.msra.mxu0 0
      %5110 = vmatprep.subr.bf16.mxu0 0
      %5111 = vmatpush1.bf16.msra.mxu0 0
      %5112 = vmatprep.mubr.bf16.mxu0 0
      %5113 = vmatmul.mubr.bf16.gmra.mrb[0].mxu0 %v4943
      %v5114 = vpop.f32.mrb[0].mxu0
      %v5115 = vadd.f32 %v5030, %v5114
      %v5116 = vpop.f32.mrb[0].mxu0
      %v5117 = vpop.f32.mrb[0].mxu0
      %v5118 = vadd.f32 %v5030, %v5117
      %v5119 = vpop.f32.mrb[0].mxu0
      %5120 = vmatprep.mubr.bf16.mxu0 0
      %5121 = vmatmul.mubr.bf16.gmra.mrb[0].mxu0 %v4944
      %v5122 = vpop.f32.mrb[0].mxu0
      %v5123 = vadd.f32 %v5030, %v5122
      %v5124 = vpop.f32.mrb[0].mxu0
      %v5125 = vpop.f32.mrb[0].mxu0
      %v5126 = vadd.f32 %v5030, %v5125
      %v5127 = vpop.f32.mrb[0].mxu0
      %5128 = vmatprep.mubr.bf16.mxu0 0
      %5129 = vmatmul.mubr.bf16.gmra.mrb[0].mxu0 %v4945
      %v5130 = vpop.f32.mrb[0].mxu0
      %v5131 = vadd.f32 %v5030, %v5130
      %v5132 = vpop.f32.mrb[0].mxu0
      %v5133 = vpop.f32.mrb[0].mxu0
      %v5134 = vadd.f32 %v5030, %v5133
      %v5135 = vpop.f32.mrb[0].mxu0
      %5136 = vmatprep.mubr.bf16.mxu0 0
      %5137 = vmatmul.mubr.bf16.gmra.mrb[0].mxu0 %v4946
      %v5138 = vpop.f32.mrb[0].mxu0
      %v5139 = vadd.f32 %v5030, %v5138
      %v5140 = vpop.f32.mrb[0].mxu0
      %v5141 = vpop.f32.mrb[0].mxu0
      %v5142 = vadd.f32 %v5030, %v5141
      %v5143 = vpop.f32.mrb[0].mxu0
      %5144 = vmatprep.mubr.bf16.mxu0 0
      %5145 = vmatmul.mubr.bf16.gmra.mrb[0].mxu0 %v4947
      %v5146 = vpop.f32.mrb[0].mxu0
      %v5147 = vadd.f32 %v5030, %v5146
      %v5148 = vpop.f32.mrb[0].mxu0
      %v5149 = vpop.f32.mrb[0].mxu0
      %v5150 = vadd.f32 %v5030, %v5149
      %v5151 = vpop.f32.mrb[0].mxu0
      %5152 = vmatprep.mubr.bf16.mxu0 0
      %5153 = vmatmul.mubr.bf16.gmra.mrb[0].mxu0 %v4948
      %v5154 = vpop.f32.mrb[0].mxu0
      %v5155 = vadd.f32 %v5030, %v5154
      %v5156 = vpop.f32.mrb[0].mxu0
      %v5157 = vpop.f32.mrb[0].mxu0
      %v5158 = vadd.f32 %v5030, %v5157
      %v5159 = vpop.f32.mrb[0].mxu0
      %5160 = vmatprep.mubr.bf16.mxu0 0
      %5161 = vmatmul.mubr.bf16.gmra.mrb[0].mxu0 %v4949
      %v5162 = vpop.f32.mrb[0].mxu0
      %v5163 = vadd.f32 %v5030, %v5162
      %v5164 = vpop.f32.mrb[0].mxu0
      %v5165 = vpop.f32.mrb[0].mxu0
      %v5166 = vadd.f32 %v5030, %v5165
      %v5167 = vpop.f32.mrb[0].mxu0
      %5168 = vmatprep.mubr.bf16.mxu0 0
      %5169 = vmatmul.mubr.bf16.gmra.mrb[0].mxu0 %v4950
      %v5170 = vpop.f32.mrb[0].mxu0
      %v5171 = vadd.f32 %v5030, %v5170
      %v5172 = vpop.f32.mrb[0].mxu0
      %v5173 = vpop.f32.mrb[0].mxu0
      %v5174 = vadd.f32 %v5030, %v5173
      %v5175 = vpop.f32.mrb[0].mxu0
      %5176 = vmatprep.mubr.bf16.mxu0 0
      %5177 = vmatmul.mubr.bf16.gmra.mrb[0].mxu0 %v4951
      %v5178 = vpop.f32.mrb[0].mxu0
      %v5179 = vadd.f32 %v5030, %v5178
      %v5180 = vpop.f32.mrb[0].mxu0
      %v5181 = vpop.f32.mrb[0].mxu0
      %v5182 = vadd.f32 %v5030, %v5181
      %v5183 = vpop.f32.mrb[0].mxu0
      %5184 = vmatprep.mubr.bf16.mxu0 0
      %5185 = vmatmul.mubr.bf16.gmra.mrb[0].mxu0 %v4952
      %v5186 = vpop.f32.mrb[0].mxu0
      %v5187 = vadd.f32 %v5030, %v5186
      %v5188 = vpop.f32.mrb[0].mxu0
      %v5189 = vpop.f32.mrb[0].mxu0
      %v5190 = vadd.f32 %v5030, %v5189
      %v5191 = vpop.f32.mrb[0].mxu0
      %5192 = vmatprep.mubr.bf16.mxu0 0
      %5193 = vmatmul.mubr.bf16.gmra.mrb[0].mxu0 %v4953
      %v5194 = vpop.f32.mrb[0].mxu0
      %v5195 = vadd.f32 %v5030, %v5194
      %v5196 = vpop.f32.mrb[0].mxu0
      %v5197 = vpop.f32.mrb[0].mxu0
      %v5198 = vadd.f32 %v5030, %v5197
      %v5199 = vpop.f32.mrb[0].mxu0
      %5200 = vmatprep.mubr.bf16.mxu0 0
      %5201 = vmatmul.mubr.bf16.gmra.mrb[0].mxu0 %v4954
      %v5202 = vpop.f32.mrb[0].mxu0
      %v5203 = vadd.f32 %v5030, %v5202
      %v5204 = vpop.f32.mrb[0].mxu0
      %v5205 = vpop.f32.mrb[0].mxu0
      %v5206 = vadd.f32 %v5030, %v5205
      %v5207 = vpop.f32.mrb[0].mxu0
      %5208 = vmatprep.mubr.bf16.mxu0 0
      %5209 = vmatmul.mubr.bf16.gmra.mrb[0].mxu0 %v4955
      %v5210 = vpop.f32.mrb[0].mxu0
      %v5211 = vadd.f32 %v5030, %v5210
      %v5212 = vpop.f32.mrb[0].mxu0
      %v5213 = vpop.f32.mrb[0].mxu0
      %v5214 = vadd.f32 %v5030, %v5213
      %v5215 = vpop.f32.mrb[0].mxu0
      %5216 = vmatprep.mubr.bf16.mxu0 0
      %5217 = vmatmul.mubr.bf16.gmra.mrb[0].mxu0 %v4956
      %v5218 = vpop.f32.mrb[0].mxu0
      %v5219 = vadd.f32 %v5030, %v5218
      %v5220 = vpop.f32.mrb[0].mxu0
      %v5221 = vpop.f32.mrb[0].mxu0
      %v5222 = vadd.f32 %v5030, %v5221
      %v5223 = vpop.f32.mrb[0].mxu0
      %5224 = vmatprep.mubr.bf16.mxu0 0
      %5225 = vmatmul.mubr.bf16.gmra.mrb[0].mxu0 %v4957
      %v5226 = vpop.f32.mrb[0].mxu0
      %v5227 = vadd.f32 %v5030, %v5226
      %v5228 = vpop.f32.mrb[0].mxu0
      %v5229 = vpop.f32.mrb[0].mxu0
      %v5230 = vadd.f32 %v5030, %v5229
      %v5231 = vpop.f32.mrb[0].mxu0
      %5232 = vmatprep.mubr.bf16.mxu0 0
      %5233 = vmatmul.mubr.bf16.gmra.mrb[0].mxu0 %v4958
      %v5234 = vpop.f32.mrb[0].mxu0
      %v5235 = vadd.f32 %v5030, %v5234
      %v5236 = vpop.f32.mrb[0].mxu0
      %v5237 = vpop.f32.mrb[0].mxu0
      %v5238 = vadd.f32 %v5030, %v5237
      %v5239 = vpop.f32.mrb[0].mxu0
      %5240 = vmatprep.mubr.bf16.mxu0 0
      %5241 = vmatmul.mubr.bf16.gmra.mrb[0].mxu0 %v4959
      %v5242 = vpop.f32.mrb[0].mxu0
      %v5243 = vadd.f32 %v5030, %v5242
      %v5244 = vpop.f32.mrb[0].mxu0
      %v5245 = vpop.f32.mrb[0].mxu0
      %v5246 = vadd.f32 %v5030, %v5245
      %v5247 = vpop.f32.mrb[0].mxu0
      %5248 = vmatprep.mubr.bf16.mxu0 0
      %5249 = vmatmul.mubr.bf16.gmra.mrb[0].mxu0 %v4960
      %v5250 = vpop.f32.mrb[0].mxu0
      %v5251 = vadd.f32 %v5030, %v5250
      %v5252 = vpop.f32.mrb[0].mxu0
      %v5253 = vpop.f32.mrb[0].mxu0
      %v5254 = vadd.f32 %v5030, %v5253
      %v5255 = vpop.f32.mrb[0].mxu0
      %5256 = vmatprep.mubr.bf16.mxu0 0
      %5257 = vmatmul.mubr.bf16.gmra.mrb[0].mxu0 %v4961
      %v5258 = vpop.f32.mrb[0].mxu0
      %v5259 = vadd.f32 %v5030, %v5258
      %v5260 = vpop.f32.mrb[0].mxu0
      %v5261 = vpop.f32.mrb[0].mxu0
      %v5262 = vadd.f32 %v5030, %v5261
      %v5263 = vpop.f32.mrb[0].mxu0
      %5264 = vmatprep.mubr.bf16.mxu0 0
      %5265 = vmatmul.mubr.bf16.gmra.mrb[0].mxu0 %v4962
      %v5266 = vpop.f32.mrb[0].mxu0
      %v5267 = vadd.f32 %v5030, %v5266
      %v5268 = vpop.f32.mrb[0].mxu0
      %v5269 = vpop.f32.mrb[0].mxu0
      %v5270 = vadd.f32 %v5030, %v5269
      %v5271 = vpop.f32.mrb[0].mxu0
      %5272 = vmatprep.mubr.bf16.mxu0 0
      %5273 = vmatmul.mubr.bf16.gmra.mrb[0].mxu0 %v4963
      %v5274 = vpop.f32.mrb[0].mxu0
      %v5275 = vadd.f32 %v5030, %v5274
      %v5276 = vpop.f32.mrb[0].mxu0
      %v5277 = vpop.f32.mrb[0].mxu0
      %v5278 = vadd.f32 %v5030, %v5277
      %v5279 = vpop.f32.mrb[0].mxu0
      %5280 = vmatprep.mubr.bf16.mxu0 0
      %5281 = vmatmul.mubr.bf16.gmra.mrb[0].mxu0 %v4964
      %v5282 = vpop.f32.mrb[0].mxu0
      %v5283 = vadd.f32 %v5030, %v5282
      %v5284 = vpop.f32.mrb[0].mxu0
      %v5285 = vpop.f32.mrb[0].mxu0
      %v5286 = vadd.f32 %v5030, %v5285
      %v5287 = vpop.f32.mrb[0].mxu0
      %5288 = vmatprep.mubr.bf16.mxu0 0
      %5289 = vmatmul.mubr.bf16.gmra.mrb[0].mxu0 %v4965
      %v5290 = vpop.f32.mrb[0].mxu0
      %v5291 = vadd.f32 %v5030, %v5290
      %v5292 = vpop.f32.mrb[0].mxu0
      %v5293 = vpop.f32.mrb[0].mxu0
      %v5294 = vadd.f32 %v5030, %v5293
      %v5295 = vpop.f32.mrb[0].mxu0
      %5296 = vmatprep.mubr.bf16.mxu0 0
      %5297 = vmatmul.mubr.bf16.gmra.mrb[0].mxu0 %v4966
      %v5298 = vpop.f32.mrb[0].mxu0
      %v5299 = vadd.f32 %v5030, %v5298
      %v5300 = vpop.f32.mrb[0].mxu0
      %v5301 = vpop.f32.mrb[0].mxu0
      %v5302 = vadd.f32 %v5030, %v5301
      %v5303 = vpop.f32.mrb[0].mxu0
      %5304 = vmatprep.mubr.bf16.mxu0 0
      %5305 = vmatmul.mubr.bf16.gmra.mrb[0].mxu0 %v4967
      %v5306 = vpop.f32.mrb[0].mxu0
      %v5307 = vadd.f32 %v5030, %v5306
      %v5308 = vpop.f32.mrb[0].mxu0
      %v5309 = vpop.f32.mrb[0].mxu0
      %v5310 = vadd.f32 %v5030, %v5309
      %v5311 = vpop.f32.mrb[0].mxu0
      %5312 = vmatprep.mubr.bf16.mxu0 0
      %5313 = vmatmul.mubr.bf16.gmra.mrb[0].mxu0 %v4968
      %v5314 = vpop.f32.mrb[0].mxu0
      %v5315 = vadd.f32 %v5030, %v5314
      %v5316 = vpop.f32.mrb[0].mxu0
      %v5317 = vpop.f32.mrb[0].mxu0
      %v5318 = vadd.f32 %v5030, %v5317
      %v5319 = vpop.f32.mrb[0].mxu0
      %5320 = vmatprep.mubr.bf16.mxu0 0
      %5321 = vmatmul.mubr.bf16.gmra.mrb[0].mxu0 %v4969
      %v5322 = vpop.f32.mrb[0].mxu0
      %v5323 = vadd.f32 %v5030, %v5322
      %v5324 = vpop.f32.mrb[0].mxu0
      %v5325 = vpop.f32.mrb[0].mxu0
      %v5326 = vadd.f32 %v5030, %v5325
      %v5327 = vpop.f32.mrb[0].mxu0
      %5328 = vmatprep.mubr.bf16.mxu0 0
      %5329 = vmatmul.mubr.bf16.gmra.mrb[0].mxu0 %v4970
      %v5330 = vpop.f32.mrb[0].mxu0
      %v5331 = vadd.f32 %v5030, %v5330
      %v5332 = vpop.f32.mrb[0].mxu0
      %v5333 = vpop.f32.mrb[0].mxu0
      %v5334 = vadd.f32 %v5030, %v5333
      %v5335 = vpop.f32.mrb[0].mxu0
      %5336 = vmatprep.mubr.bf16.mxu0 0
      %5337 = vmatmul.mubr.bf16.gmra.mrb[0].mxu0 %v4971
      %v5338 = vpop.f32.mrb[0].mxu0
      %v5339 = vadd.f32 %v5030, %v5338
      %v5340 = vpop.f32.mrb[0].mxu0
      %v5341 = vpop.f32.mrb[0].mxu0
      %v5342 = vadd.f32 %v5030, %v5341
      %v5343 = vpop.f32.mrb[0].mxu0
      %5344 = vmatprep.mubr.bf16.mxu0 0
      %5345 = vmatmul.mubr.bf16.gmra.mrb[0].mxu0 %v4972
      %v5346 = vpop.f32.mrb[0].mxu0
      %v5347 = vadd.f32 %v5030, %v5346
      %v5348 = vpop.f32.mrb[0].mxu0
      %v5349 = vpop.f32.mrb[0].mxu0
      %v5350 = vadd.f32 %v5030, %v5349
      %v5351 = vpop.f32.mrb[0].mxu0
      %5352 = vmatprep.mubr.bf16.mxu0 0
      %5353 = vmatmul.mubr.bf16.gmra.mrb[0].mxu0 %v4973
      %v5354 = vpop.f32.mrb[0].mxu0
      %v5355 = vadd.f32 %v5030, %v5354
      %v5356 = vpop.f32.mrb[0].mxu0
      %v5357 = vpop.f32.mrb[0].mxu0
      %v5358 = vadd.f32 %v5030, %v5357
      %v5359 = vpop.f32.mrb[0].mxu0
      %5360 = vmatprep.mubr.bf16.mxu0 0
      %5361 = vmatmul.mubr.bf16.gmra.mrb[0].mxu0 %v4974
      %v5362 = vpop.f32.mrb[0].mxu0
      %v5363 = vadd.f32 %v5030, %v5362
      %v5364 = vpop.f32.mrb[0].mxu0
      %v5365 = vpop.f32.mrb[0].mxu0
      %v5366 = vadd.f32 %v5030, %v5365
      %v5367 = vpop.f32.mrb[0].mxu0
      %5368 = vmatprep.mubr.bf16.mxu0 0
      %5369 = vmatmul.mubr.bf16.gmra.mrb[0].mxu0 %v4975
      %v5370 = vpop.f32.mrb[0].mxu0
      %v5371 = vadd.f32 %v5030, %v5370
      %v5372 = vpop.f32.mrb[0].mxu0
      %v5373 = vpop.f32.mrb[0].mxu0
      %v5374 = vadd.f32 %v5030, %v5373
      %v5375 = vpop.f32.mrb[0].mxu0
      %5376 = vmatprep.mubr.bf16.mxu0 0
      %5377 = vmatmul.mubr.bf16.gmra.mrb[0].mxu0 %v4976
      %v5378 = vpop.f32.mrb[0].mxu0
      %v5379 = vadd.f32 %v5030, %v5378
      %v5380 = vpop.f32.mrb[0].mxu0
      %v5381 = vpop.f32.mrb[0].mxu0
      %v5382 = vadd.f32 %v5030, %v5381
      %v5383 = vpop.f32.mrb[0].mxu0
      %5384 = vmatprep.mubr.bf16.mxu0 0
      %5385 = vmatmul.mubr.bf16.gmra.mrb[0].mxu0 %v4977
      %v5386 = vpop.f32.mrb[0].mxu0
      %v5387 = vadd.f32 %v5030, %v5386
      %v5388 = vpop.f32.mrb[0].mxu0
      %v5389 = vpop.f32.mrb[0].mxu0
      %v5390 = vadd.f32 %v5030, %v5389
      %v5391 = vpop.f32.mrb[0].mxu0
      %5392 = vmatprep.mubr.bf16.mxu0 0
      %5393 = vmatmul.mubr.bf16.gmra.mrb[0].mxu0 %v4978
      %v5394 = vpop.f32.mrb[0].mxu0
      %v5395 = vadd.f32 %v5030, %v5394
      %v5396 = vpop.f32.mrb[0].mxu0
      %v5397 = vpop.f32.mrb[0].mxu0
      %v5398 = vadd.f32 %v5030, %v5397
      %v5399 = vpop.f32.mrb[0].mxu0
      %5400 = vmatprep.mubr.bf16.mxu0 0
      %5401 = vmatmul.mubr.bf16.gmra.mrb[0].mxu0 %v4979
      %v5402 = vpop.f32.mrb[0].mxu0
      %v5403 = vadd.f32 %v5030, %v5402
      %v5404 = vpop.f32.mrb[0].mxu0
      %v5405 = vpop.f32.mrb[0].mxu0
      %v5406 = vadd.f32 %v5030, %v5405
      %v5407 = vpop.f32.mrb[0].mxu0
      %5408 = vmatprep.mubr.bf16.mxu0 0
      %5409 = vmatmul.mubr.bf16.gmra.mrb[0].mxu0 %v4980
      %v5410 = vpop.f32.mrb[0].mxu0
      %v5411 = vadd.f32 %v5030, %v5410
      %v5412 = vpop.f32.mrb[0].mxu0
      %v5413 = vpop.f32.mrb[0].mxu0
      %v5414 = vadd.f32 %v5030, %v5413
      %v5415 = vpop.f32.mrb[0].mxu0
      %5416 = vmatprep.mubr.bf16.mxu0 0
      %5417 = vmatmul.mubr.bf16.gmra.mrb[0].mxu0 %v4981
      %v5418 = vpop.f32.mrb[0].mxu0
      %v5419 = vadd.f32 %v5030, %v5418
      %v5420 = vpop.f32.mrb[0].mxu0
      %v5421 = vpop.f32.mrb[0].mxu0
      %v5422 = vadd.f32 %v5030, %v5421
      %v5423 = vpop.f32.mrb[0].mxu0
      %5424 = vmatprep.mubr.bf16.mxu0 0
      %5425 = vmatmul.mubr.bf16.gmra.mrb[0].mxu0 %v4982
      %v5426 = vpop.f32.mrb[0].mxu0
      %v5427 = vadd.f32 %v5030, %v5426
      %v5428 = vpop.f32.mrb[0].mxu0
      %v5429 = vpop.f32.mrb[0].mxu0
      %v5430 = vadd.f32 %v5030, %v5429
      %v5431 = vpop.f32.mrb[0].mxu0
      %5432 = vmatprep.mubr.bf16.mxu0 0
      %5433 = vmatmul.mubr.bf16.gmra.mrb[0].mxu0 %v4983
      %v5434 = vpop.f32.mrb[0].mxu0
      %v5435 = vadd.f32 %v5030, %v5434
      %v5436 = vpop.f32.mrb[0].mxu0
      %v5437 = vpop.f32.mrb[0].mxu0
      %v5438 = vadd.f32 %v5030, %v5437
      %v5439 = vpop.f32.mrb[0].mxu0
      %5440 = vmatprep.mubr.bf16.mxu0 0
      %5441 = vmatmul.mubr.bf16.gmra.mrb[0].mxu0 %v4984
      %v5442 = vpop.f32.mrb[0].mxu0
      %v5443 = vadd.f32 %v5030, %v5442
      %v5444 = vpop.f32.mrb[0].mxu0
      %v5445 = vpop.f32.mrb[0].mxu0
      %v5446 = vadd.f32 %v5030, %v5445
      %v5447 = vpop.f32.mrb[0].mxu0
      %5448 = vmatprep.mubr.bf16.mxu0 0
      %5449 = vmatmul.mubr.bf16.gmra.mrb[0].mxu0 %v4985
      %v5450 = vpop.f32.mrb[0].mxu0
      %v5451 = vadd.f32 %v5030, %v5450
      %v5452 = vpop.f32.mrb[0].mxu0
      %v5453 = vpop.f32.mrb[0].mxu0
      %v5454 = vadd.f32 %v5030, %v5453
      %v5455 = vpop.f32.mrb[0].mxu0
      %5456 = vmatprep.mubr.bf16.mxu0 0
      %5457 = vmatmul.mubr.bf16.gmra.mrb[0].mxu0 %v4986
      %v5458 = vpop.f32.mrb[0].mxu0
      %v5459 = vadd.f32 %v5030, %v5458
      %v5460 = vpop.f32.mrb[0].mxu0
      %v5461 = vpop.f32.mrb[0].mxu0
      %v5462 = vadd.f32 %v5030, %v5461
      %v5463 = vpop.f32.mrb[0].mxu0
      %5464 = vmatprep.mubr.bf16.mxu0 0
      %5465 = vmatmul.mubr.bf16.gmra.mrb[0].mxu0 %v4987
      %v5466 = vpop.f32.mrb[0].mxu0
      %v5467 = vadd.f32 %v5030, %v5466
      %v5468 = vpop.f32.mrb[0].mxu0
      %v5469 = vpop.f32.mrb[0].mxu0
      %v5470 = vadd.f32 %v5030, %v5469
      %v5471 = vpop.f32.mrb[0].mxu0
      %5472 = vmatprep.mubr.bf16.mxu0 0
      %5473 = vmatmul.mubr.bf16.gmra.mrb[0].mxu0 %v4988
      %v5474 = vpop.f32.mrb[0].mxu0
      %v5475 = vadd.f32 %v5030, %v5474
      %v5476 = vpop.f32.mrb[0].mxu0
      %v5477 = vpop.f32.mrb[0].mxu0
      %v5478 = vadd.f32 %v5030, %v5477
      %v5479 = vpop.f32.mrb[0].mxu0
      %5480 = vmatprep.mubr.bf16.mxu0 0
      %5481 = vmatmul.mubr.bf16.gmra.mrb[0].mxu0 %v4989
      %v5482 = vpop.f32.mrb[0].mxu0
      %v5483 = vadd.f32 %v5030, %v5482
      %v5484 = vpop.f32.mrb[0].mxu0
      %v5485 = vpop.f32.mrb[0].mxu0
      %v5486 = vadd.f32 %v5030, %v5485
      %v5487 = vpop.f32.mrb[0].mxu0
      %5488 = vmatprep.mubr.bf16.mxu0 0
      %5489 = vmatmul.mubr.bf16.gmra.mrb[0].mxu0 %v4990
      %v5490 = vpop.f32.mrb[0].mxu0
      %v5491 = vadd.f32 %v5030, %v5490
      %v5492 = vpop.f32.mrb[0].mxu0
      %v5493 = vpop.f32.mrb[0].mxu0
      %v5494 = vadd.f32 %v5030, %v5493
      %v5495 = vpop.f32.mrb[0].mxu0
      %5496 = vmatprep.mubr.bf16.mxu0 0
      %5497 = vmatmul.mubr.bf16.gmra.mrb[0].mxu0 %v4991
      %v5498 = vpop.f32.mrb[0].mxu0
      %v5499 = vadd.f32 %v5030, %v5498
      %v5500 = vpop.f32.mrb[0].mxu0
      %v5501 = vpop.f32.mrb[0].mxu0
      %v5502 = vadd.f32 %v5030, %v5501
      %v5503 = vpop.f32.mrb[0].mxu0
      %5504 = vmatprep.mubr.bf16.mxu0 0
      %5505 = vmatmul.mubr.bf16.gmra.mrb[0].mxu0 %v4992
      %v5506 = vpop.f32.mrb[0].mxu0
      %v5507 = vadd.f32 %v5030, %v5506
      %v5508 = vpop.f32.mrb[0].mxu0
      %v5509 = vpop.f32.mrb[0].mxu0
      %v5510 = vadd.f32 %v5030, %v5509
      %v5511 = vpop.f32.mrb[0].mxu0
      %5512 = vmatprep.mubr.bf16.mxu0 0
      %5513 = vmatmul.mubr.bf16.gmra.mrb[0].mxu0 %v4993
      %v5514 = vpop.f32.mrb[0].mxu0
      %v5515 = vadd.f32 %v5030, %v5514
      %v5516 = vpop.f32.mrb[0].mxu0
      %v5517 = vpop.f32.mrb[0].mxu0
      %v5518 = vadd.f32 %v5030, %v5517
      %v5519 = vpop.f32.mrb[0].mxu0
      %5520 = vmatprep.mubr.bf16.mxu0 0
      %5521 = vmatmul.mubr.bf16.gmra.mrb[0].mxu0 %v4994
      %v5522 = vpop.f32.mrb[0].mxu0
      %v5523 = vadd.f32 %v5030, %v5522
      %v5524 = vpop.f32.mrb[0].mxu0
      %v5525 = vpop.f32.mrb[0].mxu0
      %v5526 = vadd.f32 %v5030, %v5525
      %v5527 = vpop.f32.mrb[0].mxu0
      %5528 = vmatprep.mubr.bf16.mxu0 0
      %5529 = vmatmul.mubr.bf16.gmra.mrb[0].mxu0 %v4995
      %v5530 = vpop.f32.mrb[0].mxu0
      %v5531 = vadd.f32 %v5030, %v5530
      %v5532 = vpop.f32.mrb[0].mxu0
      %v5533 = vpop.f32.mrb[0].mxu0
      %v5534 = vadd.f32 %v5030, %v5533
      %v5535 = vpop.f32.mrb[0].mxu0
      %5536 = vmatprep.mubr.bf16.mxu0 0
      %5537 = vmatmul.mubr.bf16.gmra.mrb[0].mxu0 %v4996
      %v5538 = vpop.f32.mrb[0].mxu0
      %v5539 = vadd.f32 %v5030, %v5538
      %v5540 = vpop.f32.mrb[0].mxu0
      %v5541 = vpop.f32.mrb[0].mxu0
      %v5542 = vadd.f32 %v5030, %v5541
      %v5543 = vpop.f32.mrb[0].mxu0
      %5544 = vmatprep.mubr.bf16.mxu0 0
      %5545 = vmatmul.mubr.bf16.gmra.mrb[0].mxu0 %v4997
      %v5546 = vpop.f32.mrb[0].mxu0
      %v5547 = vadd.f32 %v5030, %v5546
      %v5548 = vpop.f32.mrb[0].mxu0
      %v5549 = vpop.f32.mrb[0].mxu0
      %v5550 = vadd.f32 %v5030, %v5549
      %v5551 = vpop.f32.mrb[0].mxu0
      %5552 = vmatprep.mubr.bf16.mxu0 0
      %5553 = vmatmul.mubr.bf16.gmra.mrb[0].mxu0 %v4998
      %v5554 = vpop.f32.mrb[0].mxu0
      %v5555 = vadd.f32 %v5030, %v5554
      %v5556 = vpop.f32.mrb[0].mxu0
      %v5557 = vpop.f32.mrb[0].mxu0
      %v5558 = vadd.f32 %v5030, %v5557
      %v5559 = vpop.f32.mrb[0].mxu0
      %5560 = vmatprep.mubr.bf16.mxu0 0
      %5561 = vmatmul.mubr.bf16.gmra.mrb[0].mxu0 %v4999
      %v5562 = vpop.f32.mrb[0].mxu0
      %v5563 = vadd.f32 %v5030, %v5562
      %v5564 = vpop.f32.mrb[0].mxu0
      %v5565 = vpop.f32.mrb[0].mxu0
      %v5566 = vadd.f32 %v5030, %v5565
      %v5567 = vpop.f32.mrb[0].mxu0
      %5568 = vmatprep.mubr.bf16.mxu0 0
      %5569 = vmatmul.mubr.bf16.gmra.mrb[0].mxu0 %v5000
      %v5570 = vpop.f32.mrb[0].mxu0
      %v5571 = vadd.f32 %v5030, %v5570
      %v5572 = vpop.f32.mrb[0].mxu0
      %v5573 = vpop.f32.mrb[0].mxu0
      %v5574 = vadd.f32 %v5030, %v5573
      %v5575 = vpop.f32.mrb[0].mxu0
      %5576 = vmatprep.mubr.bf16.mxu0 0
      %5577 = vmatmul.mubr.bf16.gmra.mrb[0].mxu0 %v5001
      %v5578 = vpop.f32.mrb[0].mxu0
      %v5579 = vadd.f32 %v5030, %v5578
      %v5580 = vpop.f32.mrb[0].mxu0
      %v5581 = vpop.f32.mrb[0].mxu0
      %v5582 = vadd.f32 %v5030, %v5581
      %v5583 = vpop.f32.mrb[0].mxu0
      %5584 = vmatprep.mubr.bf16.mxu0 0
      %5585 = vmatmul.mubr.bf16.gmra.mrb[0].mxu0 %v5002
      %v5586 = vpop.f32.mrb[0].mxu0
      %v5587 = vadd.f32 %v5030, %v5586
      %v5588 = vpop.f32.mrb[0].mxu0
      %v5589 = vpop.f32.mrb[0].mxu0
      %v5590 = vadd.f32 %v5030, %v5589
      %v5591 = vpop.f32.mrb[0].mxu0
      %5592 = vmatprep.mubr.bf16.mxu0 0
      %5593 = vmatmul.mubr.bf16.gmra.mrb[0].mxu0 %v5003
      %v5594 = vpop.f32.mrb[0].mxu0
      %v5595 = vadd.f32 %v5030, %v5594
      %v5596 = vpop.f32.mrb[0].mxu0
      %v5597 = vpop.f32.mrb[0].mxu0
      %v5598 = vadd.f32 %v5030, %v5597
      %v5599 = vpop.f32.mrb[0].mxu0
      %5600 = vmatprep.mubr.bf16.mxu0 0
      %5601 = vmatmul.mubr.bf16.gmra.mrb[0].mxu0 %v5004
      %v5602 = vpop.f32.mrb[0].mxu0
      %v5603 = vadd.f32 %v5030, %v5602
      %v5604 = vpop.f32.mrb[0].mxu0
      %v5605 = vpop.f32.mrb[0].mxu0
      %v5606 = vadd.f32 %v5030, %v5605
      %v5607 = vpop.f32.mrb[0].mxu0
      %5608 = vmatprep.mubr.bf16.mxu0 0
      %5609 = vmatmul.mubr.bf16.gmra.mrb[0].mxu0 %v5005
      %v5610 = vpop.f32.mrb[0].mxu0
      %v5611 = vadd.f32 %v5030, %v5610
      %v5612 = vpop.f32.mrb[0].mxu0
      %v5613 = vpop.f32.mrb[0].mxu0
      %v5614 = vadd.f32 %v5030, %v5613
      %v5615 = vpop.f32.mrb[0].mxu0
      %5616 = vmatprep.mubr.bf16.mxu0 0
      %5617 = vmatmul.mubr.bf16.gmra.mrb[0].mxu0 %v5006
      %v5618 = vpop.f32.mrb[0].mxu0
      %v5619 = vadd.f32 %v5030, %v5618
      %v5620 = vpop.f32.mrb[0].mxu0
      %v5621 = vpop.f32.mrb[0].mxu0
      %v5622 = vadd.f32 %v5030, %v5621
      %v5623 = vpop.f32.mrb[0].mxu0
      %5624 = vdwg.mxu0
      %v5625 = vmax.f32 %v5115, 0.0
      %v5626 = vmax.f32 %v5118, 0.0
      %v5627 = vmax.f32 %v5123, 0.0
      %v5628 = vmax.f32 %v5126, 0.0
      %v5629 = vmax.f32 %v5131, 0.0
      %v5630 = vmax.f32 %v5134, 0.0
      %v5631 = vmax.f32 %v5139, 0.0
      %v5632 = vmax.f32 %v5142, 0.0
      %v5633 = vmax.f32 %v5147, 0.0
      %v5634 = vmax.f32 %v5150, 0.0
      %v5635 = vmax.f32 %v5155, 0.0
      %v5636 = vmax.f32 %v5158, 0.0
      %v5637 = vmax.f32 %v5163, 0.0
      %v5638 = vmax.f32 %v5166, 0.0
      %v5639 = vmax.f32 %v5171, 0.0
      %v5640 = vmax.f32 %v5174, 0.0
      %v5641 = vmax.f32 %v5179, 0.0
      %v5642 = vmax.f32 %v5182, 0.0
      %v5643 = vmax.f32 %v5187, 0.0
      %v5644 = vmax.f32 %v5190, 0.0
      %v5645 = vmax.f32 %v5195, 0.0
      %v5646 = vmax.f32 %v5198, 0.0
      %v5647 = vmax.f32 %v5203, 0.0
      %v5648 = vmax.f32 %v5206, 0.0
      %v5649 = vmax.f32 %v5211, 0.0
      %v5650 = vmax.f32 %v5214, 0.0
      %v5651 = vmax.f32 %v5219, 0.0
      %v5652 = vmax.f32 %v5222, 0.0
      %v5653 = vmax.f32 %v5227, 0.0
      %v5654 = vmax.f32 %v5230, 0.0
      %v5655 = vmax.f32 %v5235, 0.0
      %v5656 = vmax.f32 %v5238, 0.0
      %v5657 = vmax.f32 %v5243, 0.0
      %v5658 = vmax.f32 %v5246, 0.0
      %v5659 = vmax.f32 %v5251, 0.0
      %v5660 = vmax.f32 %v5254, 0.0
      %v5661 = vmax.f32 %v5259, 0.0
      %v5662 = vmax.f32 %v5262, 0.0
      %v5663 = vmax.f32 %v5267, 0.0
      %v5664 = vmax.f32 %v5270, 0.0
      %v5665 = vmax.f32 %v5275, 0.0
      %v5666 = vmax.f32 %v5278, 0.0
      %v5667 = vmax.f32 %v5283, 0.0
      %v5668 = vmax.f32 %v5286, 0.0
      %v5669 = vmax.f32 %v5291, 0.0
      %v5670 = vmax.f32 %v5294, 0.0
      %v5671 = vmax.f32 %v5299, 0.0
      %v5672 = vmax.f32 %v5302, 0.0
      %v5673 = vmax.f32 %v5307, 0.0
      %v5674 = vmax.f32 %v5310, 0.0
      %v5675 = vmax.f32 %v5315, 0.0
      %v5676 = vmax.f32 %v5318, 0.0
      %v5677 = vmax.f32 %v5323, 0.0
      %v5678 = vmax.f32 %v5326, 0.0
      %v5679 = vmax.f32 %v5331, 0.0
      %v5680 = vmax.f32 %v5334, 0.0
      %v5681 = vmax.f32 %v5339, 0.0
      %v5682 = vmax.f32 %v5342, 0.0
      %v5683 = vmax.f32 %v5347, 0.0
      %v5684 = vmax.f32 %v5350, 0.0
      %v5685 = vmax.f32 %v5355, 0.0
      %v5686 = vmax.f32 %v5358, 0.0
      %v5687 = vmax.f32 %v5363, 0.0
      %v5688 = vmax.f32 %v5366, 0.0
      %v5689 = vmax.f32 %v5371, 0.0
      %v5690 = vmax.f32 %v5374, 0.0
      %v5691 = vmax.f32 %v5379, 0.0
      %v5692 = vmax.f32 %v5382, 0.0
      %v5693 = vmax.f32 %v5387, 0.0
      %v5694 = vmax.f32 %v5390, 0.0
      %v5695 = vmax.f32 %v5395, 0.0
      %v5696 = vmax.f32 %v5398, 0.0
      %v5697 = vmax.f32 %v5403, 0.0
      %v5698 = vmax.f32 %v5406, 0.0
      %v5699 = vmax.f32 %v5411, 0.0
      %v5700 = vmax.f32 %v5414, 0.0
      %v5701 = vmax.f32 %v5419, 0.0
      %v5702 = vmax.f32 %v5422, 0.0
      %v5703 = vmax.f32 %v5427, 0.0
      %v5704 = vmax.f32 %v5430, 0.0
      %v5705 = vmax.f32 %v5435, 0.0
      %v5706 = vmax.f32 %v5438, 0.0
      %v5707 = vmax.f32 %v5443, 0.0
      %v5708 = vmax.f32 %v5446, 0.0
      %v5709 = vmax.f32 %v5451, 0.0
      %v5710 = vmax.f32 %v5454, 0.0
      %v5711 = vmax.f32 %v5459, 0.0
      %v5712 = vmax.f32 %v5462, 0.0
      %v5713 = vmax.f32 %v5467, 0.0
      %v5714 = vmax.f32 %v5470, 0.0
      %v5715 = vmax.f32 %v5475, 0.0
      %v5716 = vmax.f32 %v5478, 0.0
      %v5717 = vmax.f32 %v5483, 0.0
      %v5718 = vmax.f32 %v5486, 0.0
      %v5719 = vmax.f32 %v5491, 0.0
      %v5720 = vmax.f32 %v5494, 0.0
      %v5721 = vmax.f32 %v5499, 0.0
      %v5722 = vmax.f32 %v5502, 0.0
      %v5723 = vmax.f32 %v5507, 0.0
      %v5724 = vmax.f32 %v5510, 0.0
      %v5725 = vmax.f32 %v5515, 0.0
      %v5726 = vmax.f32 %v5518, 0.0
      %v5727 = vmax.f32 %v5523, 0.0
      %v5728 = vmax.f32 %v5526, 0.0
      %v5729 = vmax.f32 %v5531, 0.0
      %v5730 = vmax.f32 %v5534, 0.0
      %v5731 = vmax.f32 %v5539, 0.0
      %v5732 = vmax.f32 %v5542, 0.0
      %v5733 = vmax.f32 %v5547, 0.0
      %v5734 = vmax.f32 %v5550, 0.0
      %v5735 = vmax.f32 %v5555, 0.0
      %v5736 = vmax.f32 %v5558, 0.0
      %v5737 = vmax.f32 %v5563, 0.0
      %v5738 = vmax.f32 %v5566, 0.0
      %v5739 = vmax.f32 %v5571, 0.0
      %v5740 = vmax.f32 %v5574, 0.0
      %v5741 = vmax.f32 %v5579, 0.0
      %v5742 = vmax.f32 %v5582, 0.0
      %v5743 = vmax.f32 %v5587, 0.0
      %v5744 = vmax.f32 %v5590, 0.0
      %v5745 = vmax.f32 %v5595, 0.0
      %v5746 = vmax.f32 %v5598, 0.0
      %v5747 = vmax.f32 %v5603, 0.0
      %v5748 = vmax.f32 %v5606, 0.0
      %v5749 = vmax.f32 %v5611, 0.0
      %v5750 = vmax.f32 %v5614, 0.0
      %v5751 = vmax.f32 %v5619, 0.0
      %v5752 = vmax.f32 %v5622, 0.0
      %v5753 = vpack.c.bf16 %v5626, %v5625
      %v5754 = vpack.c.bf16 %v5628, %v5627
      %v5755 = vpack.c.bf16 %v5630, %v5629
      %v5756 = vpack.c.bf16 %v5632, %v5631
      %v5757 = vpack.c.bf16 %v5634, %v5633
      %v5758 = vpack.c.bf16 %v5636, %v5635
      %v5759 = vpack.c.bf16 %v5638, %v5637
      %v5760 = vpack.c.bf16 %v5640, %v5639
      %v5761 = vpack.c.bf16 %v5642, %v5641
      %v5762 = vpack.c.bf16 %v5644, %v5643
      %v5763 = vpack.c.bf16 %v5646, %v5645
      %v5764 = vpack.c.bf16 %v5648, %v5647
      %v5765 = vpack.c.bf16 %v5650, %v5649
      %v5766 = vpack.c.bf16 %v5652, %v5651
      %v5767 = vpack.c.bf16 %v5654, %v5653
      %v5768 = vpack.c.bf16 %v5656, %v5655
      %v5769 = vpack.c.bf16 %v5658, %v5657
      %v5770 = vpack.c.bf16 %v5660, %v5659
      %v5771 = vpack.c.bf16 %v5662, %v5661
      %v5772 = vpack.c.bf16 %v5664, %v5663
      %v5773 = vpack.c.bf16 %v5666, %v5665
      %v5774 = vpack.c.bf16 %v5668, %v5667
      %v5775 = vpack.c.bf16 %v5670, %v5669
      %v5776 = vpack.c.bf16 %v5672, %v5671
      %v5777 = vpack.c.bf16 %v5674, %v5673
      %v5778 = vpack.c.bf16 %v5676, %v5675
      %v5779 = vpack.c.bf16 %v5678, %v5677
      %v5780 = vpack.c.bf16 %v5680, %v5679
      %v5781 = vpack.c.bf16 %v5682, %v5681
      %v5782 = vpack.c.bf16 %v5684, %v5683
      %v5783 = vpack.c.bf16 %v5686, %v5685
      %v5784 = vpack.c.bf16 %v5688, %v5687
      %v5785 = vpack.c.bf16 %v5690, %v5689
      %v5786 = vpack.c.bf16 %v5692, %v5691
      %v5787 = vpack.c.bf16 %v5694, %v5693
      %v5788 = vpack.c.bf16 %v5696, %v5695
      %v5789 = vpack.c.bf16 %v5698, %v5697
      %v5790 = vpack.c.bf16 %v5700, %v5699
      %v5791 = vpack.c.bf16 %v5702, %v5701
      %v5792 = vpack.c.bf16 %v5704, %v5703
      %v5793 = vpack.c.bf16 %v5706, %v5705
      %v5794 = vpack.c.bf16 %v5708, %v5707
      %v5795 = vpack.c.bf16 %v5710, %v5709
      %v5796 = vpack.c.bf16 %v5712, %v5711
      %v5797 = vpack.c.bf16 %v5714, %v5713
      %v5798 = vpack.c.bf16 %v5716, %v5715
      %v5799 = vpack.c.bf16 %v5718, %v5717
      %v5800 = vpack.c.bf16 %v5720, %v5719
      %v5801 = vpack.c.bf16 %v5722, %v5721
      %v5802 = vpack.c.bf16 %v5724, %v5723
      %v5803 = vpack.c.bf16 %v5726, %v5725
      %v5804 = vpack.c.bf16 %v5728, %v5727
      %v5805 = vpack.c.bf16 %v5730, %v5729
      %v5806 = vpack.c.bf16 %v5732, %v5731
      %v5807 = vpack.c.bf16 %v5734, %v5733
      %v5808 = vpack.c.bf16 %v5736, %v5735
      %v5809 = vpack.c.bf16 %v5738, %v5737
      %v5810 = vpack.c.bf16 %v5740, %v5739
      %v5811 = vpack.c.bf16 %v5742, %v5741
      %v5812 = vpack.c.bf16 %v5744, %v5743
      %v5813 = vpack.c.bf16 %v5746, %v5745
      %v5814 = vpack.c.bf16 %v5748, %v5747
      %v5815 = vpack.c.bf16 %v5750, %v5749
      %v5816 = vpack.c.bf16 %v5752, %v5751
      %s5817 = scalar_lea.vmem %s3, 256
      %v5818 = vld [vmem:[%s5817] sm:$0xf]
      %v5819 = vld [vmem:[%s5817 + $0x4] sm:$0xf]
      %v5820 = vld [vmem:[%s5817 + $0x8] sm:$0xf]
      %v5821 = vld [vmem:[%s5817 + $0xc] sm:$0xf]
      %v5822 = vld [vmem:[%s5817 + $0x10] sm:$0xf]
      %v5823 = vld [vmem:[%s5817 + $0x14] sm:$0xf]
      %v5824 = vld [vmem:[%s5817 + $0x18] sm:$0xf]
      %v5825 = vld [vmem:[%s5817 + $0x1c] sm:$0xf]
      %v5826 = vld [vmem:[%s5817 + $0x20] sm:$0xf]
      %v5827 = vld [vmem:[%s5817 + $0x24] sm:$0xf]
      %v5828 = vld [vmem:[%s5817 + $0x28] sm:$0xf]
      %v5829 = vld [vmem:[%s5817 + $0x2c] sm:$0xf]
      %v5830 = vld [vmem:[%s5817 + $0x30] sm:$0xf]
      %v5831 = vld [vmem:[%s5817 + $0x34] sm:$0xf]
      %v5832 = vld [vmem:[%s5817 + $0x38] sm:$0xf]
      %v5833 = vld [vmem:[%s5817 + $0x3c] sm:$0xf]
      %s5834 = scalar_lea.vmem %s4, 5
      %v5835 = vld [vmem:[%s5834] sm:$0x1]
      %v5837 = vlaneseq
      %v5838 = vshrl.u32 %v5837, 7
      %v5839 = vsub.s32 0, %v5838
      %v5840 = vrot.slane %v5835, %v5839
      %v5858 = vunpack.c.l.b16 %v5818
      %v5859 = vunpack.c.l.b16 %v5819
      %v5860 = vunpack.c.l.b16 %v5820
      %v5861 = vunpack.c.l.b16 %v5821
      %v5862 = vunpack.c.l.b16 %v5822
      %v5863 = vunpack.c.l.b16 %v5823
      %v5864 = vunpack.c.l.b16 %v5824
      %v5865 = vunpack.c.l.b16 %v5825
      %v5866 = vunpack.c.l.b16 %v5826
      %v5867 = vunpack.c.l.b16 %v5827
      %v5868 = vunpack.c.l.b16 %v5828
      %v5869 = vunpack.c.l.b16 %v5829
      %v5870 = vunpack.c.l.b16 %v5830
      %v5871 = vunpack.c.l.b16 %v5831
      %v5872 = vunpack.c.l.b16 %v5832
      %v5873 = vunpack.c.l.b16 %v5833
      %v5874 = vpack.c.b16 %v5859, %v5858
      %v5875 = vpack.c.b16 %v5861, %v5860
      %v5876 = vpack.c.b16 %v5863, %v5862
      %v5877 = vpack.c.b16 %v5865, %v5864
      %v5878 = vpack.c.b16 %v5867, %v5866
      %v5879 = vpack.c.b16 %v5869, %v5868
      %v5880 = vpack.c.b16 %v5871, %v5870
      %v5881 = vpack.c.b16 %v5873, %v5872
      %5890 = vmatprep.subr.bf16.mxu0 0
      %5891 = vmatpush1.bf16.msra.mxu0 %v5874
      %5892 = vmatprep.subr.bf16.mxu0 0
      %5893 = vmatpush1.bf16.msra.mxu0 %v5875
      %5894 = vmatprep.subr.bf16.mxu0 0
      %5895 = vmatpush1.bf16.msra.mxu0 %v5876
      %5896 = vmatprep.subr.bf16.mxu0 0
      %5897 = vmatpush1.bf16.msra.mxu0 %v5877
      %5898 = vmatprep.subr.bf16.mxu0 0
      %5899 = vmatpush1.bf16.msra.mxu0 %v5878
      %5900 = vmatprep.subr.bf16.mxu0 0
      %5901 = vmatpush1.bf16.msra.mxu0 %v5879
      %5902 = vmatprep.subr.bf16.mxu0 0
      %5903 = vmatpush1.bf16.msra.mxu0 %v5880
      %5904 = vmatprep.subr.bf16.mxu0 0
      %5905 = vmatpush1.bf16.msra.mxu0 %v5881
      %5906 = vmatprep.subr.bf16.mxu0 0
      %5907 = vmatpush1.bf16.msra.mxu0 0
      %5908 = vmatprep.subr.bf16.mxu0 0
      %5909 = vmatpush1.bf16.msra.mxu0 0
      %5910 = vmatprep.subr.bf16.mxu0 0
      %5911 = vmatpush1.bf16.msra.mxu0 0
      %5912 = vmatprep.subr.bf16.mxu0 0
      %5913 = vmatpush1.bf16.msra.mxu0 0
      %5914 = vmatprep.subr.bf16.mxu0 0
      %5915 = vmatpush1.bf16.msra.mxu0 0
      %5916 = vmatprep.subr.bf16.mxu0 0
      %5917 = vmatpush1.bf16.msra.mxu0 0
      %5918 = vmatprep.subr.bf16.mxu0 0
      %5919 = vmatpush1.bf16.msra.mxu0 0
      %5920 = vmatprep.subr.bf16.mxu0 0
      %5921 = vmatpush1.bf16.msra.mxu0 0
      %5922 = vmatprep.mubr.bf16.mxu0 0
      %5923 = vmatmul.mubr.bf16.gmra.mrb[0].mxu0 %v5753
      %v5924 = vpop.f32.mrb[0].mxu0
      %v5925 = vadd.f32 %v5840, %v5924
      %v5926 = vpop.f32.mrb[0].mxu0
      %v5927 = vpop.f32.mrb[0].mxu0
      %v5928 = vadd.f32 %v5840, %v5927
      %v5929 = vpop.f32.mrb[0].mxu0
      %5930 = vmatprep.mubr.bf16.mxu0 0
      %5931 = vmatmul.mubr.bf16.gmra.mrb[0].mxu0 %v5754
      %v5932 = vpop.f32.mrb[0].mxu0
      %v5933 = vadd.f32 %v5840, %v5932
      %v5934 = vpop.f32.mrb[0].mxu0
      %v5935 = vpop.f32.mrb[0].mxu0
      %v5936 = vadd.f32 %v5840, %v5935
      %v5937 = vpop.f32.mrb[0].mxu0
      %5938 = vmatprep.mubr.bf16.mxu0 0
      %5939 = vmatmul.mubr.bf16.gmra.mrb[0].mxu0 %v5755
      %v5940 = vpop.f32.mrb[0].mxu0
      %v5941 = vadd.f32 %v5840, %v5940
      %v5942 = vpop.f32.mrb[0].mxu0
      %v5943 = vpop.f32.mrb[0].mxu0
      %v5944 = vadd.f32 %v5840, %v5943
      %v5945 = vpop.f32.mrb[0].mxu0
      %5946 = vmatprep.mubr.bf16.mxu0 0
      %5947 = vmatmul.mubr.bf16.gmra.mrb[0].mxu0 %v5756
      %v5948 = vpop.f32.mrb[0].mxu0
      %v5949 = vadd.f32 %v5840, %v5948
      %v5950 = vpop.f32.mrb[0].mxu0
      %v5951 = vpop.f32.mrb[0].mxu0
      %v5952 = vadd.f32 %v5840, %v5951
      %v5953 = vpop.f32.mrb[0].mxu0
      %5954 = vmatprep.mubr.bf16.mxu0 0
      %5955 = vmatmul.mubr.bf16.gmra.mrb[0].mxu0 %v5757
      %v5956 = vpop.f32.mrb[0].mxu0
      %v5957 = vadd.f32 %v5840, %v5956
      %v5958 = vpop.f32.mrb[0].mxu0
      %v5959 = vpop.f32.mrb[0].mxu0
      %v5960 = vadd.f32 %v5840, %v5959
      %v5961 = vpop.f32.mrb[0].mxu0
      %5962 = vmatprep.mubr.bf16.mxu0 0
      %5963 = vmatmul.mubr.bf16.gmra.mrb[0].mxu0 %v5758
      %v5964 = vpop.f32.mrb[0].mxu0
      %v5965 = vadd.f32 %v5840, %v5964
      %v5966 = vpop.f32.mrb[0].mxu0
      %v5967 = vpop.f32.mrb[0].mxu0
      %v5968 = vadd.f32 %v5840, %v5967
      %v5969 = vpop.f32.mrb[0].mxu0
      %5970 = vmatprep.mubr.bf16.mxu0 0
      %5971 = vmatmul.mubr.bf16.gmra.mrb[0].mxu0 %v5759
      %v5972 = vpop.f32.mrb[0].mxu0
      %v5973 = vadd.f32 %v5840, %v5972
      %v5974 = vpop.f32.mrb[0].mxu0
      %v5975 = vpop.f32.mrb[0].mxu0
      %v5976 = vadd.f32 %v5840, %v5975
      %v5977 = vpop.f32.mrb[0].mxu0
      %5978 = vmatprep.mubr.bf16.mxu0 0
      %5979 = vmatmul.mubr.bf16.gmra.mrb[0].mxu0 %v5760
      %v5980 = vpop.f32.mrb[0].mxu0
      %v5981 = vadd.f32 %v5840, %v5980
      %v5982 = vpop.f32.mrb[0].mxu0
      %v5983 = vpop.f32.mrb[0].mxu0
      %v5984 = vadd.f32 %v5840, %v5983
      %v5985 = vpop.f32.mrb[0].mxu0
      %5986 = vmatprep.mubr.bf16.mxu0 0
      %5987 = vmatmul.mubr.bf16.gmra.mrb[0].mxu0 %v5761
      %v5988 = vpop.f32.mrb[0].mxu0
      %v5989 = vadd.f32 %v5840, %v5988
      %v5990 = vpop.f32.mrb[0].mxu0
      %v5991 = vpop.f32.mrb[0].mxu0
      %v5992 = vadd.f32 %v5840, %v5991
      %v5993 = vpop.f32.mrb[0].mxu0
      %5994 = vmatprep.mubr.bf16.mxu0 0
      %5995 = vmatmul.mubr.bf16.gmra.mrb[0].mxu0 %v5762
      %v5996 = vpop.f32.mrb[0].mxu0
      %v5997 = vadd.f32 %v5840, %v5996
      %v5998 = vpop.f32.mrb[0].mxu0
      %v5999 = vpop.f32.mrb[0].mxu0
      %v6000 = vadd.f32 %v5840, %v5999
      %v6001 = vpop.f32.mrb[0].mxu0
      %6002 = vmatprep.mubr.bf16.mxu0 0
      %6003 = vmatmul.mubr.bf16.gmra.mrb[0].mxu0 %v5763
      %v6004 = vpop.f32.mrb[0].mxu0
      %v6005 = vadd.f32 %v5840, %v6004
      %v6006 = vpop.f32.mrb[0].mxu0
      %v6007 = vpop.f32.mrb[0].mxu0
      %v6008 = vadd.f32 %v5840, %v6007
      %v6009 = vpop.f32.mrb[0].mxu0
      %6010 = vmatprep.mubr.bf16.mxu0 0
      %6011 = vmatmul.mubr.bf16.gmra.mrb[0].mxu0 %v5764
      %v6012 = vpop.f32.mrb[0].mxu0
      %v6013 = vadd.f32 %v5840, %v6012
      %v6014 = vpop.f32.mrb[0].mxu0
      %v6015 = vpop.f32.mrb[0].mxu0
      %v6016 = vadd.f32 %v5840, %v6015
      %v6017 = vpop.f32.mrb[0].mxu0
      %6018 = vmatprep.mubr.bf16.mxu0 0
      %6019 = vmatmul.mubr.bf16.gmra.mrb[0].mxu0 %v5765
      %v6020 = vpop.f32.mrb[0].mxu0
      %v6021 = vadd.f32 %v5840, %v6020
      %v6022 = vpop.f32.mrb[0].mxu0
      %v6023 = vpop.f32.mrb[0].mxu0
      %v6024 = vadd.f32 %v5840, %v6023
      %v6025 = vpop.f32.mrb[0].mxu0
      %6026 = vmatprep.mubr.bf16.mxu0 0
      %6027 = vmatmul.mubr.bf16.gmra.mrb[0].mxu0 %v5766
      %v6028 = vpop.f32.mrb[0].mxu0
      %v6029 = vadd.f32 %v5840, %v6028
      %v6030 = vpop.f32.mrb[0].mxu0
      %v6031 = vpop.f32.mrb[0].mxu0
      %v6032 = vadd.f32 %v5840, %v6031
      %v6033 = vpop.f32.mrb[0].mxu0
      %6034 = vmatprep.mubr.bf16.mxu0 0
      %6035 = vmatmul.mubr.bf16.gmra.mrb[0].mxu0 %v5767
      %v6036 = vpop.f32.mrb[0].mxu0
      %v6037 = vadd.f32 %v5840, %v6036
      %v6038 = vpop.f32.mrb[0].mxu0
      %v6039 = vpop.f32.mrb[0].mxu0
      %v6040 = vadd.f32 %v5840, %v6039
      %v6041 = vpop.f32.mrb[0].mxu0
      %6042 = vmatprep.mubr.bf16.mxu0 0
      %6043 = vmatmul.mubr.bf16.gmra.mrb[0].mxu0 %v5768
      %v6044 = vpop.f32.mrb[0].mxu0
      %v6045 = vadd.f32 %v5840, %v6044
      %v6046 = vpop.f32.mrb[0].mxu0
      %v6047 = vpop.f32.mrb[0].mxu0
      %v6048 = vadd.f32 %v5840, %v6047
      %v6049 = vpop.f32.mrb[0].mxu0
      %6050 = vmatprep.mubr.bf16.mxu0 0
      %6051 = vmatmul.mubr.bf16.gmra.mrb[0].mxu0 %v5769
      %v6052 = vpop.f32.mrb[0].mxu0
      %v6053 = vadd.f32 %v5840, %v6052
      %v6054 = vpop.f32.mrb[0].mxu0
      %v6055 = vpop.f32.mrb[0].mxu0
      %v6056 = vadd.f32 %v5840, %v6055
      %v6057 = vpop.f32.mrb[0].mxu0
      %6058 = vmatprep.mubr.bf16.mxu0 0
      %6059 = vmatmul.mubr.bf16.gmra.mrb[0].mxu0 %v5770
      %v6060 = vpop.f32.mrb[0].mxu0
      %v6061 = vadd.f32 %v5840, %v6060
      %v6062 = vpop.f32.mrb[0].mxu0
      %v6063 = vpop.f32.mrb[0].mxu0
      %v6064 = vadd.f32 %v5840, %v6063
      %v6065 = vpop.f32.mrb[0].mxu0
      %6066 = vmatprep.mubr.bf16.mxu0 0
      %6067 = vmatmul.mubr.bf16.gmra.mrb[0].mxu0 %v5771
      %v6068 = vpop.f32.mrb[0].mxu0
      %v6069 = vadd.f32 %v5840, %v6068
      %v6070 = vpop.f32.mrb[0].mxu0
      %v6071 = vpop.f32.mrb[0].mxu0
      %v6072 = vadd.f32 %v5840, %v6071
      %v6073 = vpop.f32.mrb[0].mxu0
      %6074 = vmatprep.mubr.bf16.mxu0 0
      %6075 = vmatmul.mubr.bf16.gmra.mrb[0].mxu0 %v5772
      %v6076 = vpop.f32.mrb[0].mxu0
      %v6077 = vadd.f32 %v5840, %v6076
      %v6078 = vpop.f32.mrb[0].mxu0
      %v6079 = vpop.f32.mrb[0].mxu0
      %v6080 = vadd.f32 %v5840, %v6079
      %v6081 = vpop.f32.mrb[0].mxu0
      %6082 = vmatprep.mubr.bf16.mxu0 0
      %6083 = vmatmul.mubr.bf16.gmra.mrb[0].mxu0 %v5773
      %v6084 = vpop.f32.mrb[0].mxu0
      %v6085 = vadd.f32 %v5840, %v6084
      %v6086 = vpop.f32.mrb[0].mxu0
      %v6087 = vpop.f32.mrb[0].mxu0
      %v6088 = vadd.f32 %v5840, %v6087
      %v6089 = vpop.f32.mrb[0].mxu0
      %6090 = vmatprep.mubr.bf16.mxu0 0
      %6091 = vmatmul.mubr.bf16.gmra.mrb[0].mxu0 %v5774
      %v6092 = vpop.f32.mrb[0].mxu0
      %v6093 = vadd.f32 %v5840, %v6092
      %v6094 = vpop.f32.mrb[0].mxu0
      %v6095 = vpop.f32.mrb[0].mxu0
      %v6096 = vadd.f32 %v5840, %v6095
      %v6097 = vpop.f32.mrb[0].mxu0
      %6098 = vmatprep.mubr.bf16.mxu0 0
      %6099 = vmatmul.mubr.bf16.gmra.mrb[0].mxu0 %v5775
      %v6100 = vpop.f32.mrb[0].mxu0
      %v6101 = vadd.f32 %v5840, %v6100
      %v6102 = vpop.f32.mrb[0].mxu0
      %v6103 = vpop.f32.mrb[0].mxu0
      %v6104 = vadd.f32 %v5840, %v6103
      %v6105 = vpop.f32.mrb[0].mxu0
      %6106 = vmatprep.mubr.bf16.mxu0 0
      %6107 = vmatmul.mubr.bf16.gmra.mrb[0].mxu0 %v5776
      %v6108 = vpop.f32.mrb[0].mxu0
      %v6109 = vadd.f32 %v5840, %v6108
      %v6110 = vpop.f32.mrb[0].mxu0
      %v6111 = vpop.f32.mrb[0].mxu0
      %v6112 = vadd.f32 %v5840, %v6111
      %v6113 = vpop.f32.mrb[0].mxu0
      %6114 = vmatprep.mubr.bf16.mxu0 0
      %6115 = vmatmul.mubr.bf16.gmra.mrb[0].mxu0 %v5777
      %v6116 = vpop.f32.mrb[0].mxu0
      %v6117 = vadd.f32 %v5840, %v6116
      %v6118 = vpop.f32.mrb[0].mxu0
      %v6119 = vpop.f32.mrb[0].mxu0
      %v6120 = vadd.f32 %v5840, %v6119
      %v6121 = vpop.f32.mrb[0].mxu0
      %6122 = vmatprep.mubr.bf16.mxu0 0
      %6123 = vmatmul.mubr.bf16.gmra.mrb[0].mxu0 %v5778
      %v6124 = vpop.f32.mrb[0].mxu0
      %v6125 = vadd.f32 %v5840, %v6124
      %v6126 = vpop.f32.mrb[0].mxu0
      %v6127 = vpop.f32.mrb[0].mxu0
      %v6128 = vadd.f32 %v5840, %v6127
      %v6129 = vpop.f32.mrb[0].mxu0
      %6130 = vmatprep.mubr.bf16.mxu0 0
      %6131 = vmatmul.mubr.bf16.gmra.mrb[0].mxu0 %v5779
      %v6132 = vpop.f32.mrb[0].mxu0
      %v6133 = vadd.f32 %v5840, %v6132
      %v6134 = vpop.f32.mrb[0].mxu0
      %v6135 = vpop.f32.mrb[0].mxu0
      %v6136 = vadd.f32 %v5840, %v6135
      %v6137 = vpop.f32.mrb[0].mxu0
      %6138 = vmatprep.mubr.bf16.mxu0 0
      %6139 = vmatmul.mubr.bf16.gmra.mrb[0].mxu0 %v5780
      %v6140 = vpop.f32.mrb[0].mxu0
      %v6141 = vadd.f32 %v5840, %v6140
      %v6142 = vpop.f32.mrb[0].mxu0
      %v6143 = vpop.f32.mrb[0].mxu0
      %v6144 = vadd.f32 %v5840, %v6143
      %v6145 = vpop.f32.mrb[0].mxu0
      %6146 = vmatprep.mubr.bf16.mxu0 0
      %6147 = vmatmul.mubr.bf16.gmra.mrb[0].mxu0 %v5781
      %v6148 = vpop.f32.mrb[0].mxu0
      %v6149 = vadd.f32 %v5840, %v6148
      %v6150 = vpop.f32.mrb[0].mxu0
      %v6151 = vpop.f32.mrb[0].mxu0
      %v6152 = vadd.f32 %v5840, %v6151
      %v6153 = vpop.f32.mrb[0].mxu0
      %6154 = vmatprep.mubr.bf16.mxu0 0
      %6155 = vmatmul.mubr.bf16.gmra.mrb[0].mxu0 %v5782
      %v6156 = vpop.f32.mrb[0].mxu0
      %v6157 = vadd.f32 %v5840, %v6156
      %v6158 = vpop.f32.mrb[0].mxu0
      %v6159 = vpop.f32.mrb[0].mxu0
      %v6160 = vadd.f32 %v5840, %v6159
      %v6161 = vpop.f32.mrb[0].mxu0
      %6162 = vmatprep.mubr.bf16.mxu0 0
      %6163 = vmatmul.mubr.bf16.gmra.mrb[0].mxu0 %v5783
      %v6164 = vpop.f32.mrb[0].mxu0
      %v6165 = vadd.f32 %v5840, %v6164
      %v6166 = vpop.f32.mrb[0].mxu0
      %v6167 = vpop.f32.mrb[0].mxu0
      %v6168 = vadd.f32 %v5840, %v6167
      %v6169 = vpop.f32.mrb[0].mxu0
      %6170 = vmatprep.mubr.bf16.mxu0 0
      %6171 = vmatmul.mubr.bf16.gmra.mrb[0].mxu0 %v5784
      %v6172 = vpop.f32.mrb[0].mxu0
      %v6173 = vadd.f32 %v5840, %v6172
      %v6174 = vpop.f32.mrb[0].mxu0
      %v6175 = vpop.f32.mrb[0].mxu0
      %v6176 = vadd.f32 %v5840, %v6175
      %v6177 = vpop.f32.mrb[0].mxu0
      %6178 = vmatprep.mubr.bf16.mxu0 0
      %6179 = vmatmul.mubr.bf16.gmra.mrb[0].mxu0 %v5785
      %v6180 = vpop.f32.mrb[0].mxu0
      %v6181 = vadd.f32 %v5840, %v6180
      %v6182 = vpop.f32.mrb[0].mxu0
      %v6183 = vpop.f32.mrb[0].mxu0
      %v6184 = vadd.f32 %v5840, %v6183
      %v6185 = vpop.f32.mrb[0].mxu0
      %6186 = vmatprep.mubr.bf16.mxu0 0
      %6187 = vmatmul.mubr.bf16.gmra.mrb[0].mxu0 %v5786
      %v6188 = vpop.f32.mrb[0].mxu0
      %v6189 = vadd.f32 %v5840, %v6188
      %v6190 = vpop.f32.mrb[0].mxu0
      %v6191 = vpop.f32.mrb[0].mxu0
      %v6192 = vadd.f32 %v5840, %v6191
      %v6193 = vpop.f32.mrb[0].mxu0
      %6194 = vmatprep.mubr.bf16.mxu0 0
      %6195 = vmatmul.mubr.bf16.gmra.mrb[0].mxu0 %v5787
      %v6196 = vpop.f32.mrb[0].mxu0
      %v6197 = vadd.f32 %v5840, %v6196
      %v6198 = vpop.f32.mrb[0].mxu0
      %v6199 = vpop.f32.mrb[0].mxu0
      %v6200 = vadd.f32 %v5840, %v6199
      %v6201 = vpop.f32.mrb[0].mxu0
      %6202 = vmatprep.mubr.bf16.mxu0 0
      %6203 = vmatmul.mubr.bf16.gmra.mrb[0].mxu0 %v5788
      %v6204 = vpop.f32.mrb[0].mxu0
      %v6205 = vadd.f32 %v5840, %v6204
      %v6206 = vpop.f32.mrb[0].mxu0
      %v6207 = vpop.f32.mrb[0].mxu0
      %v6208 = vadd.f32 %v5840, %v6207
      %v6209 = vpop.f32.mrb[0].mxu0
      %6210 = vmatprep.mubr.bf16.mxu0 0
      %6211 = vmatmul.mubr.bf16.gmra.mrb[0].mxu0 %v5789
      %v6212 = vpop.f32.mrb[0].mxu0
      %v6213 = vadd.f32 %v5840, %v6212
      %v6214 = vpop.f32.mrb[0].mxu0
      %v6215 = vpop.f32.mrb[0].mxu0
      %v6216 = vadd.f32 %v5840, %v6215
      %v6217 = vpop.f32.mrb[0].mxu0
      %6218 = vmatprep.mubr.bf16.mxu0 0
      %6219 = vmatmul.mubr.bf16.gmra.mrb[0].mxu0 %v5790
      %v6220 = vpop.f32.mrb[0].mxu0
      %v6221 = vadd.f32 %v5840, %v6220
      %v6222 = vpop.f32.mrb[0].mxu0
      %v6223 = vpop.f32.mrb[0].mxu0
      %v6224 = vadd.f32 %v5840, %v6223
      %v6225 = vpop.f32.mrb[0].mxu0
      %6226 = vmatprep.mubr.bf16.mxu0 0
      %6227 = vmatmul.mubr.bf16.gmra.mrb[0].mxu0 %v5791
      %v6228 = vpop.f32.mrb[0].mxu0
      %v6229 = vadd.f32 %v5840, %v6228
      %v6230 = vpop.f32.mrb[0].mxu0
      %v6231 = vpop.f32.mrb[0].mxu0
      %v6232 = vadd.f32 %v5840, %v6231
      %v6233 = vpop.f32.mrb[0].mxu0
      %6234 = vmatprep.mubr.bf16.mxu0 0
      %6235 = vmatmul.mubr.bf16.gmra.mrb[0].mxu0 %v5792
      %v6236 = vpop.f32.mrb[0].mxu0
      %v6237 = vadd.f32 %v5840, %v6236
      %v6238 = vpop.f32.mrb[0].mxu0
      %v6239 = vpop.f32.mrb[0].mxu0
      %v6240 = vadd.f32 %v5840, %v6239
      %v6241 = vpop.f32.mrb[0].mxu0
      %6242 = vmatprep.mubr.bf16.mxu0 0
      %6243 = vmatmul.mubr.bf16.gmra.mrb[0].mxu0 %v5793
      %v6244 = vpop.f32.mrb[0].mxu0
      %v6245 = vadd.f32 %v5840, %v6244
      %v6246 = vpop.f32.mrb[0].mxu0
      %v6247 = vpop.f32.mrb[0].mxu0
      %v6248 = vadd.f32 %v5840, %v6247
      %v6249 = vpop.f32.mrb[0].mxu0
      %6250 = vmatprep.mubr.bf16.mxu0 0
      %6251 = vmatmul.mubr.bf16.gmra.mrb[0].mxu0 %v5794
      %v6252 = vpop.f32.mrb[0].mxu0
      %v6253 = vadd.f32 %v5840, %v6252
      %v6254 = vpop.f32.mrb[0].mxu0
      %v6255 = vpop.f32.mrb[0].mxu0
      %v6256 = vadd.f32 %v5840, %v6255
      %v6257 = vpop.f32.mrb[0].mxu0
      %6258 = vmatprep.mubr.bf16.mxu0 0
      %6259 = vmatmul.mubr.bf16.gmra.mrb[0].mxu0 %v5795
      %v6260 = vpop.f32.mrb[0].mxu0
      %v6261 = vadd.f32 %v5840, %v6260
      %v6262 = vpop.f32.mrb[0].mxu0
      %v6263 = vpop.f32.mrb[0].mxu0
      %v6264 = vadd.f32 %v5840, %v6263
      %v6265 = vpop.f32.mrb[0].mxu0
      %6266 = vmatprep.mubr.bf16.mxu0 0
      %6267 = vmatmul.mubr.bf16.gmra.mrb[0].mxu0 %v5796
      %v6268 = vpop.f32.mrb[0].mxu0
      %v6269 = vadd.f32 %v5840, %v6268
      %v6270 = vpop.f32.mrb[0].mxu0
      %v6271 = vpop.f32.mrb[0].mxu0
      %v6272 = vadd.f32 %v5840, %v6271
      %v6273 = vpop.f32.mrb[0].mxu0
      %6274 = vmatprep.mubr.bf16.mxu0 0
      %6275 = vmatmul.mubr.bf16.gmra.mrb[0].mxu0 %v5797
      %v6276 = vpop.f32.mrb[0].mxu0
      %v6277 = vadd.f32 %v5840, %v6276
      %v6278 = vpop.f32.mrb[0].mxu0
      %v6279 = vpop.f32.mrb[0].mxu0
      %v6280 = vadd.f32 %v5840, %v6279
      %v6281 = vpop.f32.mrb[0].mxu0
      %6282 = vmatprep.mubr.bf16.mxu0 0
      %6283 = vmatmul.mubr.bf16.gmra.mrb[0].mxu0 %v5798
      %v6284 = vpop.f32.mrb[0].mxu0
      %v6285 = vadd.f32 %v5840, %v6284
      %v6286 = vpop.f32.mrb[0].mxu0
      %v6287 = vpop.f32.mrb[0].mxu0
      %v6288 = vadd.f32 %v5840, %v6287
      %v6289 = vpop.f32.mrb[0].mxu0
      %6290 = vmatprep.mubr.bf16.mxu0 0
      %6291 = vmatmul.mubr.bf16.gmra.mrb[0].mxu0 %v5799
      %v6292 = vpop.f32.mrb[0].mxu0
      %v6293 = vadd.f32 %v5840, %v6292
      %v6294 = vpop.f32.mrb[0].mxu0
      %v6295 = vpop.f32.mrb[0].mxu0
      %v6296 = vadd.f32 %v5840, %v6295
      %v6297 = vpop.f32.mrb[0].mxu0
      %6298 = vmatprep.mubr.bf16.mxu0 0
      %6299 = vmatmul.mubr.bf16.gmra.mrb[0].mxu0 %v5800
      %v6300 = vpop.f32.mrb[0].mxu0
      %v6301 = vadd.f32 %v5840, %v6300
      %v6302 = vpop.f32.mrb[0].mxu0
      %v6303 = vpop.f32.mrb[0].mxu0
      %v6304 = vadd.f32 %v5840, %v6303
      %v6305 = vpop.f32.mrb[0].mxu0
      %6306 = vmatprep.mubr.bf16.mxu0 0
      %6307 = vmatmul.mubr.bf16.gmra.mrb[0].mxu0 %v5801
      %v6308 = vpop.f32.mrb[0].mxu0
      %v6309 = vadd.f32 %v5840, %v6308
      %v6310 = vpop.f32.mrb[0].mxu0
      %v6311 = vpop.f32.mrb[0].mxu0
      %v6312 = vadd.f32 %v5840, %v6311
      %v6313 = vpop.f32.mrb[0].mxu0
      %6314 = vmatprep.mubr.bf16.mxu0 0
      %6315 = vmatmul.mubr.bf16.gmra.mrb[0].mxu0 %v5802
      %v6316 = vpop.f32.mrb[0].mxu0
      %v6317 = vadd.f32 %v5840, %v6316
      %v6318 = vpop.f32.mrb[0].mxu0
      %v6319 = vpop.f32.mrb[0].mxu0
      %v6320 = vadd.f32 %v5840, %v6319
      %v6321 = vpop.f32.mrb[0].mxu0
      %6322 = vmatprep.mubr.bf16.mxu0 0
      %6323 = vmatmul.mubr.bf16.gmra.mrb[0].mxu0 %v5803
      %v6324 = vpop.f32.mrb[0].mxu0
      %v6325 = vadd.f32 %v5840, %v6324
      %v6326 = vpop.f32.mrb[0].mxu0
      %v6327 = vpop.f32.mrb[0].mxu0
      %v6328 = vadd.f32 %v5840, %v6327
      %v6329 = vpop.f32.mrb[0].mxu0
      %6330 = vmatprep.mubr.bf16.mxu0 0
      %6331 = vmatmul.mubr.bf16.gmra.mrb[0].mxu0 %v5804
      %v6332 = vpop.f32.mrb[0].mxu0
      %v6333 = vadd.f32 %v5840, %v6332
      %v6334 = vpop.f32.mrb[0].mxu0
      %v6335 = vpop.f32.mrb[0].mxu0
      %v6336 = vadd.f32 %v5840, %v6335
      %v6337 = vpop.f32.mrb[0].mxu0
      %6338 = vmatprep.mubr.bf16.mxu0 0
      %6339 = vmatmul.mubr.bf16.gmra.mrb[0].mxu0 %v5805
      %v6340 = vpop.f32.mrb[0].mxu0
      %v6341 = vadd.f32 %v5840, %v6340
      %v6342 = vpop.f32.mrb[0].mxu0
      %v6343 = vpop.f32.mrb[0].mxu0
      %v6344 = vadd.f32 %v5840, %v6343
      %v6345 = vpop.f32.mrb[0].mxu0
      %6346 = vmatprep.mubr.bf16.mxu0 0
      %6347 = vmatmul.mubr.bf16.gmra.mrb[0].mxu0 %v5806
      %v6348 = vpop.f32.mrb[0].mxu0
      %v6349 = vadd.f32 %v5840, %v6348
      %v6350 = vpop.f32.mrb[0].mxu0
      %v6351 = vpop.f32.mrb[0].mxu0
      %v6352 = vadd.f32 %v5840, %v6351
      %v6353 = vpop.f32.mrb[0].mxu0
      %6354 = vmatprep.mubr.bf16.mxu0 0
      %6355 = vmatmul.mubr.bf16.gmra.mrb[0].mxu0 %v5807
      %v6356 = vpop.f32.mrb[0].mxu0
      %v6357 = vadd.f32 %v5840, %v6356
      %v6358 = vpop.f32.mrb[0].mxu0
      %v6359 = vpop.f32.mrb[0].mxu0
      %v6360 = vadd.f32 %v5840, %v6359
      %v6361 = vpop.f32.mrb[0].mxu0
      %6362 = vmatprep.mubr.bf16.mxu0 0
      %6363 = vmatmul.mubr.bf16.gmra.mrb[0].mxu0 %v5808
      %v6364 = vpop.f32.mrb[0].mxu0
      %v6365 = vadd.f32 %v5840, %v6364
      %v6366 = vpop.f32.mrb[0].mxu0
      %v6367 = vpop.f32.mrb[0].mxu0
      %v6368 = vadd.f32 %v5840, %v6367
      %v6369 = vpop.f32.mrb[0].mxu0
      %6370 = vmatprep.mubr.bf16.mxu0 0
      %6371 = vmatmul.mubr.bf16.gmra.mrb[0].mxu0 %v5809
      %v6372 = vpop.f32.mrb[0].mxu0
      %v6373 = vadd.f32 %v5840, %v6372
      %v6374 = vpop.f32.mrb[0].mxu0
      %v6375 = vpop.f32.mrb[0].mxu0
      %v6376 = vadd.f32 %v5840, %v6375
      %v6377 = vpop.f32.mrb[0].mxu0
      %6378 = vmatprep.mubr.bf16.mxu0 0
      %6379 = vmatmul.mubr.bf16.gmra.mrb[0].mxu0 %v5810
      %v6380 = vpop.f32.mrb[0].mxu0
      %v6381 = vadd.f32 %v5840, %v6380
      %v6382 = vpop.f32.mrb[0].mxu0
      %v6383 = vpop.f32.mrb[0].mxu0
      %v6384 = vadd.f32 %v5840, %v6383
      %v6385 = vpop.f32.mrb[0].mxu0
      %6386 = vmatprep.mubr.bf16.mxu0 0
      %6387 = vmatmul.mubr.bf16.gmra.mrb[0].mxu0 %v5811
      %v6388 = vpop.f32.mrb[0].mxu0
      %v6389 = vadd.f32 %v5840, %v6388
      %v6390 = vpop.f32.mrb[0].mxu0
      %v6391 = vpop.f32.mrb[0].mxu0
      %v6392 = vadd.f32 %v5840, %v6391
      %v6393 = vpop.f32.mrb[0].mxu0
      %6394 = vmatprep.mubr.bf16.mxu0 0
      %6395 = vmatmul.mubr.bf16.gmra.mrb[0].mxu0 %v5812
      %v6396 = vpop.f32.mrb[0].mxu0
      %v6397 = vadd.f32 %v5840, %v6396
      %v6398 = vpop.f32.mrb[0].mxu0
      %v6399 = vpop.f32.mrb[0].mxu0
      %v6400 = vadd.f32 %v5840, %v6399
      %v6401 = vpop.f32.mrb[0].mxu0
      %6402 = vmatprep.mubr.bf16.mxu0 0
      %6403 = vmatmul.mubr.bf16.gmra.mrb[0].mxu0 %v5813
      %v6404 = vpop.f32.mrb[0].mxu0
      %v6405 = vadd.f32 %v5840, %v6404
      %v6406 = vpop.f32.mrb[0].mxu0
      %v6407 = vpop.f32.mrb[0].mxu0
      %v6408 = vadd.f32 %v5840, %v6407
      %v6409 = vpop.f32.mrb[0].mxu0
      %6410 = vmatprep.mubr.bf16.mxu0 0
      %6411 = vmatmul.mubr.bf16.gmra.mrb[0].mxu0 %v5814
      %v6412 = vpop.f32.mrb[0].mxu0
      %v6413 = vadd.f32 %v5840, %v6412
      %v6414 = vpop.f32.mrb[0].mxu0
      %v6415 = vpop.f32.mrb[0].mxu0
      %v6416 = vadd.f32 %v5840, %v6415
      %v6417 = vpop.f32.mrb[0].mxu0
      %6418 = vmatprep.mubr.bf16.mxu0 0
      %6419 = vmatmul.mubr.bf16.gmra.mrb[0].mxu0 %v5815
      %v6420 = vpop.f32.mrb[0].mxu0
      %v6421 = vadd.f32 %v5840, %v6420
      %v6422 = vpop.f32.mrb[0].mxu0
      %v6423 = vpop.f32.mrb[0].mxu0
      %v6424 = vadd.f32 %v5840, %v6423
      %v6425 = vpop.f32.mrb[0].mxu0
      %6426 = vmatprep.mubr.bf16.mxu0 0
      %6427 = vmatmul.mubr.bf16.gmra.mrb[0].mxu0 %v5816
      %v6428 = vpop.f32.mrb[0].mxu0
      %v6429 = vadd.f32 %v5840, %v6428
      %v6430 = vpop.f32.mrb[0].mxu0
      %v6431 = vpop.f32.mrb[0].mxu0
      %v6432 = vadd.f32 %v5840, %v6431
      %v6433 = vpop.f32.mrb[0].mxu0
      %6434 = vdwg.mxu0
      %v6435 = vmax.f32 %v5925, 0.0
      %v6436 = vmax.f32 %v5928, 0.0
      %v6437 = vmax.f32 %v5933, 0.0
      %v6438 = vmax.f32 %v5936, 0.0
      %v6439 = vmax.f32 %v5941, 0.0
      %v6440 = vmax.f32 %v5944, 0.0
      %v6441 = vmax.f32 %v5949, 0.0
      %v6442 = vmax.f32 %v5952, 0.0
      %v6443 = vmax.f32 %v5957, 0.0
      %v6444 = vmax.f32 %v5960, 0.0
      %v6445 = vmax.f32 %v5965, 0.0
      %v6446 = vmax.f32 %v5968, 0.0
      %v6447 = vmax.f32 %v5973, 0.0
      %v6448 = vmax.f32 %v5976, 0.0
      %v6449 = vmax.f32 %v5981, 0.0
      %v6450 = vmax.f32 %v5984, 0.0
      %v6451 = vmax.f32 %v5989, 0.0
      %v6452 = vmax.f32 %v5992, 0.0
      %v6453 = vmax.f32 %v5997, 0.0
      %v6454 = vmax.f32 %v6000, 0.0
      %v6455 = vmax.f32 %v6005, 0.0
      %v6456 = vmax.f32 %v6008, 0.0
      %v6457 = vmax.f32 %v6013, 0.0
      %v6458 = vmax.f32 %v6016, 0.0
      %v6459 = vmax.f32 %v6021, 0.0
      %v6460 = vmax.f32 %v6024, 0.0
      %v6461 = vmax.f32 %v6029, 0.0
      %v6462 = vmax.f32 %v6032, 0.0
      %v6463 = vmax.f32 %v6037, 0.0
      %v6464 = vmax.f32 %v6040, 0.0
      %v6465 = vmax.f32 %v6045, 0.0
      %v6466 = vmax.f32 %v6048, 0.0
      %v6467 = vmax.f32 %v6053, 0.0
      %v6468 = vmax.f32 %v6056, 0.0
      %v6469 = vmax.f32 %v6061, 0.0
      %v6470 = vmax.f32 %v6064, 0.0
      %v6471 = vmax.f32 %v6069, 0.0
      %v6472 = vmax.f32 %v6072, 0.0
      %v6473 = vmax.f32 %v6077, 0.0
      %v6474 = vmax.f32 %v6080, 0.0
      %v6475 = vmax.f32 %v6085, 0.0
      %v6476 = vmax.f32 %v6088, 0.0
      %v6477 = vmax.f32 %v6093, 0.0
      %v6478 = vmax.f32 %v6096, 0.0
      %v6479 = vmax.f32 %v6101, 0.0
      %v6480 = vmax.f32 %v6104, 0.0
      %v6481 = vmax.f32 %v6109, 0.0
      %v6482 = vmax.f32 %v6112, 0.0
      %v6483 = vmax.f32 %v6117, 0.0
      %v6484 = vmax.f32 %v6120, 0.0
      %v6485 = vmax.f32 %v6125, 0.0
      %v6486 = vmax.f32 %v6128, 0.0
      %v6487 = vmax.f32 %v6133, 0.0
      %v6488 = vmax.f32 %v6136, 0.0
      %v6489 = vmax.f32 %v6141, 0.0
      %v6490 = vmax.f32 %v6144, 0.0
      %v6491 = vmax.f32 %v6149, 0.0
      %v6492 = vmax.f32 %v6152, 0.0
      %v6493 = vmax.f32 %v6157, 0.0
      %v6494 = vmax.f32 %v6160, 0.0
      %v6495 = vmax.f32 %v6165, 0.0
      %v6496 = vmax.f32 %v6168, 0.0
      %v6497 = vmax.f32 %v6173, 0.0
      %v6498 = vmax.f32 %v6176, 0.0
      %v6499 = vmax.f32 %v6181, 0.0
      %v6500 = vmax.f32 %v6184, 0.0
      %v6501 = vmax.f32 %v6189, 0.0
      %v6502 = vmax.f32 %v6192, 0.0
      %v6503 = vmax.f32 %v6197, 0.0
      %v6504 = vmax.f32 %v6200, 0.0
      %v6505 = vmax.f32 %v6205, 0.0
      %v6506 = vmax.f32 %v6208, 0.0
      %v6507 = vmax.f32 %v6213, 0.0
      %v6508 = vmax.f32 %v6216, 0.0
      %v6509 = vmax.f32 %v6221, 0.0
      %v6510 = vmax.f32 %v6224, 0.0
      %v6511 = vmax.f32 %v6229, 0.0
      %v6512 = vmax.f32 %v6232, 0.0
      %v6513 = vmax.f32 %v6237, 0.0
      %v6514 = vmax.f32 %v6240, 0.0
      %v6515 = vmax.f32 %v6245, 0.0
      %v6516 = vmax.f32 %v6248, 0.0
      %v6517 = vmax.f32 %v6253, 0.0
      %v6518 = vmax.f32 %v6256, 0.0
      %v6519 = vmax.f32 %v6261, 0.0
      %v6520 = vmax.f32 %v6264, 0.0
      %v6521 = vmax.f32 %v6269, 0.0
      %v6522 = vmax.f32 %v6272, 0.0
      %v6523 = vmax.f32 %v6277, 0.0
      %v6524 = vmax.f32 %v6280, 0.0
      %v6525 = vmax.f32 %v6285, 0.0
      %v6526 = vmax.f32 %v6288, 0.0
      %v6527 = vmax.f32 %v6293, 0.0
      %v6528 = vmax.f32 %v6296, 0.0
      %v6529 = vmax.f32 %v6301, 0.0
      %v6530 = vmax.f32 %v6304, 0.0
      %v6531 = vmax.f32 %v6309, 0.0
      %v6532 = vmax.f32 %v6312, 0.0
      %v6533 = vmax.f32 %v6317, 0.0
      %v6534 = vmax.f32 %v6320, 0.0
      %v6535 = vmax.f32 %v6325, 0.0
      %v6536 = vmax.f32 %v6328, 0.0
      %v6537 = vmax.f32 %v6333, 0.0
      %v6538 = vmax.f32 %v6336, 0.0
      %v6539 = vmax.f32 %v6341, 0.0
      %v6540 = vmax.f32 %v6344, 0.0
      %v6541 = vmax.f32 %v6349, 0.0
      %v6542 = vmax.f32 %v6352, 0.0
      %v6543 = vmax.f32 %v6357, 0.0
      %v6544 = vmax.f32 %v6360, 0.0
      %v6545 = vmax.f32 %v6365, 0.0
      %v6546 = vmax.f32 %v6368, 0.0
      %v6547 = vmax.f32 %v6373, 0.0
      %v6548 = vmax.f32 %v6376, 0.0
      %v6549 = vmax.f32 %v6381, 0.0
      %v6550 = vmax.f32 %v6384, 0.0
      %v6551 = vmax.f32 %v6389, 0.0
      %v6552 = vmax.f32 %v6392, 0.0
      %v6553 = vmax.f32 %v6397, 0.0
      %v6554 = vmax.f32 %v6400, 0.0
      %v6555 = vmax.f32 %v6405, 0.0
      %v6556 = vmax.f32 %v6408, 0.0
      %v6557 = vmax.f32 %v6413, 0.0
      %v6558 = vmax.f32 %v6416, 0.0
      %v6559 = vmax.f32 %v6421, 0.0
      %v6560 = vmax.f32 %v6424, 0.0
      %v6561 = vmax.f32 %v6429, 0.0
      %v6562 = vmax.f32 %v6432, 0.0
      %v6563 = vpack.c.bf16 %v6436, %v6435
      %v6564 = vpack.c.bf16 %v6438, %v6437
      %v6565 = vpack.c.bf16 %v6440, %v6439
      %v6566 = vpack.c.bf16 %v6442, %v6441
      %v6567 = vpack.c.bf16 %v6444, %v6443
      %v6568 = vpack.c.bf16 %v6446, %v6445
      %v6569 = vpack.c.bf16 %v6448, %v6447
      %v6570 = vpack.c.bf16 %v6450, %v6449
      %v6571 = vpack.c.bf16 %v6452, %v6451
      %v6572 = vpack.c.bf16 %v6454, %v6453
      %v6573 = vpack.c.bf16 %v6456, %v6455
      %v6574 = vpack.c.bf16 %v6458, %v6457
      %v6575 = vpack.c.bf16 %v6460, %v6459
      %v6576 = vpack.c.bf16 %v6462, %v6461
      %v6577 = vpack.c.bf16 %v6464, %v6463
      %v6578 = vpack.c.bf16 %v6466, %v6465
      %v6579 = vpack.c.bf16 %v6468, %v6467
      %v6580 = vpack.c.bf16 %v6470, %v6469
      %v6581 = vpack.c.bf16 %v6472, %v6471
      %v6582 = vpack.c.bf16 %v6474, %v6473
      %v6583 = vpack.c.bf16 %v6476, %v6475
      %v6584 = vpack.c.bf16 %v6478, %v6477
      %v6585 = vpack.c.bf16 %v6480, %v6479
      %v6586 = vpack.c.bf16 %v6482, %v6481
      %v6587 = vpack.c.bf16 %v6484, %v6483
      %v6588 = vpack.c.bf16 %v6486, %v6485
      %v6589 = vpack.c.bf16 %v6488, %v6487
      %v6590 = vpack.c.bf16 %v6490, %v6489
      %v6591 = vpack.c.bf16 %v6492, %v6491
      %v6592 = vpack.c.bf16 %v6494, %v6493
      %v6593 = vpack.c.bf16 %v6496, %v6495
      %v6594 = vpack.c.bf16 %v6498, %v6497
      %v6595 = vpack.c.bf16 %v6500, %v6499
      %v6596 = vpack.c.bf16 %v6502, %v6501
      %v6597 = vpack.c.bf16 %v6504, %v6503
      %v6598 = vpack.c.bf16 %v6506, %v6505
      %v6599 = vpack.c.bf16 %v6508, %v6507
      %v6600 = vpack.c.bf16 %v6510, %v6509
      %v6601 = vpack.c.bf16 %v6512, %v6511
      %v6602 = vpack.c.bf16 %v6514, %v6513
      %v6603 = vpack.c.bf16 %v6516, %v6515
      %v6604 = vpack.c.bf16 %v6518, %v6517
      %v6605 = vpack.c.bf16 %v6520, %v6519
      %v6606 = vpack.c.bf16 %v6522, %v6521
      %v6607 = vpack.c.bf16 %v6524, %v6523
      %v6608 = vpack.c.bf16 %v6526, %v6525
      %v6609 = vpack.c.bf16 %v6528, %v6527
      %v6610 = vpack.c.bf16 %v6530, %v6529
      %v6611 = vpack.c.bf16 %v6532, %v6531
      %v6612 = vpack.c.bf16 %v6534, %v6533
      %v6613 = vpack.c.bf16 %v6536, %v6535
      %v6614 = vpack.c.bf16 %v6538, %v6537
      %v6615 = vpack.c.bf16 %v6540, %v6539
      %v6616 = vpack.c.bf16 %v6542, %v6541
      %v6617 = vpack.c.bf16 %v6544, %v6543
      %v6618 = vpack.c.bf16 %v6546, %v6545
      %v6619 = vpack.c.bf16 %v6548, %v6547
      %v6620 = vpack.c.bf16 %v6550, %v6549
      %v6621 = vpack.c.bf16 %v6552, %v6551
      %v6622 = vpack.c.bf16 %v6554, %v6553
      %v6623 = vpack.c.bf16 %v6556, %v6555
      %v6624 = vpack.c.bf16 %v6558, %v6557
      %v6625 = vpack.c.bf16 %v6560, %v6559
      %v6626 = vpack.c.bf16 %v6562, %v6561
      %s6627 = scalar_lea.vmem %s3, 320
      %v6628 = vld [vmem:[%s6627] sm:$0xf]
      %v6629 = vld [vmem:[%s6627 + $0x4] sm:$0xf]
      %v6630 = vld [vmem:[%s6627 + $0x8] sm:$0xf]
      %v6631 = vld [vmem:[%s6627 + $0xc] sm:$0xf]
      %v6632 = vld [vmem:[%s6627 + $0x10] sm:$0xf]
      %v6633 = vld [vmem:[%s6627 + $0x14] sm:$0xf]
      %v6634 = vld [vmem:[%s6627 + $0x18] sm:$0xf]
      %v6635 = vld [vmem:[%s6627 + $0x1c] sm:$0xf]
      %v6636 = vld [vmem:[%s6627 + $0x20] sm:$0xf]
      %v6637 = vld [vmem:[%s6627 + $0x24] sm:$0xf]
      %v6638 = vld [vmem:[%s6627 + $0x28] sm:$0xf]
      %v6639 = vld [vmem:[%s6627 + $0x2c] sm:$0xf]
      %v6640 = vld [vmem:[%s6627 + $0x30] sm:$0xf]
      %v6641 = vld [vmem:[%s6627 + $0x34] sm:$0xf]
      %v6642 = vld [vmem:[%s6627 + $0x38] sm:$0xf]
      %v6643 = vld [vmem:[%s6627 + $0x3c] sm:$0xf]
      %s6644 = scalar_lea.vmem %s4, 6
      %v6645 = vld [vmem:[%s6644] sm:$0x1]
      %v6647 = vlaneseq
      %v6648 = vshrl.u32 %v6647, 7
      %v6649 = vsub.s32 0, %v6648
      %v6650 = vrot.slane %v6645, %v6649
      %v6668 = vunpack.c.l.b16 %v6628
      %v6669 = vunpack.c.l.b16 %v6629
      %v6670 = vunpack.c.l.b16 %v6630
      %v6671 = vunpack.c.l.b16 %v6631
      %v6672 = vunpack.c.l.b16 %v6632
      %v6673 = vunpack.c.l.b16 %v6633
      %v6674 = vunpack.c.l.b16 %v6634
      %v6675 = vunpack.c.l.b16 %v6635
      %v6676 = vunpack.c.l.b16 %v6636
      %v6677 = vunpack.c.l.b16 %v6637
      %v6678 = vunpack.c.l.b16 %v6638
      %v6679 = vunpack.c.l.b16 %v6639
      %v6680 = vunpack.c.l.b16 %v6640
      %v6681 = vunpack.c.l.b16 %v6641
      %v6682 = vunpack.c.l.b16 %v6642
      %v6683 = vunpack.c.l.b16 %v6643
      %v6684 = vpack.c.b16 %v6669, %v6668
      %v6685 = vpack.c.b16 %v6671, %v6670
      %v6686 = vpack.c.b16 %v6673, %v6672
      %v6687 = vpack.c.b16 %v6675, %v6674
      %v6688 = vpack.c.b16 %v6677, %v6676
      %v6689 = vpack.c.b16 %v6679, %v6678
      %v6690 = vpack.c.b16 %v6681, %v6680
      %v6691 = vpack.c.b16 %v6683, %v6682
      %6700 = vmatprep.subr.bf16.mxu0 0
      %6701 = vmatpush1.bf16.msra.mxu0 %v6684
      %6702 = vmatprep.subr.bf16.mxu0 0
      %6703 = vmatpush1.bf16.msra.mxu0 %v6685
      %6704 = vmatprep.subr.bf16.mxu0 0
      %6705 = vmatpush1.bf16.msra.mxu0 %v6686
      %6706 = vmatprep.subr.bf16.mxu0 0
      %6707 = vmatpush1.bf16.msra.mxu0 %v6687
      %6708 = vmatprep.subr.bf16.mxu0 0
      %6709 = vmatpush1.bf16.msra.mxu0 %v6688
      %6710 = vmatprep.subr.bf16.mxu0 0
      %6711 = vmatpush1.bf16.msra.mxu0 %v6689
      %6712 = vmatprep.subr.bf16.mxu0 0
      %6713 = vmatpush1.bf16.msra.mxu0 %v6690
      %6714 = vmatprep.subr.bf16.mxu0 0
      %6715 = vmatpush1.bf16.msra.mxu0 %v6691
      %6716 = vmatprep.subr.bf16.mxu0 0
      %6717 = vmatpush1.bf16.msra.mxu0 0
      %6718 = vmatprep.subr.bf16.mxu0 0
      %6719 = vmatpush1.bf16.msra.mxu0 0
      %6720 = vmatprep.subr.bf16.mxu0 0
      %6721 = vmatpush1.bf16.msra.mxu0 0
      %6722 = vmatprep.subr.bf16.mxu0 0
      %6723 = vmatpush1.bf16.msra.mxu0 0
      %6724 = vmatprep.subr.bf16.mxu0 0
      %6725 = vmatpush1.bf16.msra.mxu0 0
      %6726 = vmatprep.subr.bf16.mxu0 0
      %6727 = vmatpush1.bf16.msra.mxu0 0
      %6728 = vmatprep.subr.bf16.mxu0 0
      %6729 = vmatpush1.bf16.msra.mxu0 0
      %6730 = vmatprep.subr.bf16.mxu0 0
      %6731 = vmatpush1.bf16.msra.mxu0 0
      %6732 = vmatprep.mubr.bf16.mxu0 0
      %6733 = vmatmul.mubr.bf16.gmra.mrb[0].mxu0 %v6563
      %v6734 = vpop.f32.mrb[0].mxu0
      %v6735 = vadd.f32 %v6650, %v6734
      %v6736 = vpop.f32.mrb[0].mxu0
      %v6737 = vpop.f32.mrb[0].mxu0
      %v6738 = vadd.f32 %v6650, %v6737
      %v6739 = vpop.f32.mrb[0].mxu0
      %6740 = vmatprep.mubr.bf16.mxu0 0
      %6741 = vmatmul.mubr.bf16.gmra.mrb[0].mxu0 %v6564
      %v6742 = vpop.f32.mrb[0].mxu0
      %v6743 = vadd.f32 %v6650, %v6742
      %v6744 = vpop.f32.mrb[0].mxu0
      %v6745 = vpop.f32.mrb[0].mxu0
      %v6746 = vadd.f32 %v6650, %v6745
      %v6747 = vpop.f32.mrb[0].mxu0
      %6748 = vmatprep.mubr.bf16.mxu0 0
      %6749 = vmatmul.mubr.bf16.gmra.mrb[0].mxu0 %v6565
      %v6750 = vpop.f32.mrb[0].mxu0
      %v6751 = vadd.f32 %v6650, %v6750
      %v6752 = vpop.f32.mrb[0].mxu0
      %v6753 = vpop.f32.mrb[0].mxu0
      %v6754 = vadd.f32 %v6650, %v6753
      %v6755 = vpop.f32.mrb[0].mxu0
      %6756 = vmatprep.mubr.bf16.mxu0 0
      %6757 = vmatmul.mubr.bf16.gmra.mrb[0].mxu0 %v6566
      %v6758 = vpop.f32.mrb[0].mxu0
      %v6759 = vadd.f32 %v6650, %v6758
      %v6760 = vpop.f32.mrb[0].mxu0
      %v6761 = vpop.f32.mrb[0].mxu0
      %v6762 = vadd.f32 %v6650, %v6761
      %v6763 = vpop.f32.mrb[0].mxu0
      %6764 = vmatprep.mubr.bf16.mxu0 0
      %6765 = vmatmul.mubr.bf16.gmra.mrb[0].mxu0 %v6567
      %v6766 = vpop.f32.mrb[0].mxu0
      %v6767 = vadd.f32 %v6650, %v6766
      %v6768 = vpop.f32.mrb[0].mxu0
      %v6769 = vpop.f32.mrb[0].mxu0
      %v6770 = vadd.f32 %v6650, %v6769
      %v6771 = vpop.f32.mrb[0].mxu0
      %6772 = vmatprep.mubr.bf16.mxu0 0
      %6773 = vmatmul.mubr.bf16.gmra.mrb[0].mxu0 %v6568
      %v6774 = vpop.f32.mrb[0].mxu0
      %v6775 = vadd.f32 %v6650, %v6774
      %v6776 = vpop.f32.mrb[0].mxu0
      %v6777 = vpop.f32.mrb[0].mxu0
      %v6778 = vadd.f32 %v6650, %v6777
      %v6779 = vpop.f32.mrb[0].mxu0
      %6780 = vmatprep.mubr.bf16.mxu0 0
      %6781 = vmatmul.mubr.bf16.gmra.mrb[0].mxu0 %v6569
      %v6782 = vpop.f32.mrb[0].mxu0
      %v6783 = vadd.f32 %v6650, %v6782
      %v6784 = vpop.f32.mrb[0].mxu0
      %v6785 = vpop.f32.mrb[0].mxu0
      %v6786 = vadd.f32 %v6650, %v6785
      %v6787 = vpop.f32.mrb[0].mxu0
      %6788 = vmatprep.mubr.bf16.mxu0 0
      %6789 = vmatmul.mubr.bf16.gmra.mrb[0].mxu0 %v6570
      %v6790 = vpop.f32.mrb[0].mxu0
      %v6791 = vadd.f32 %v6650, %v6790
      %v6792 = vpop.f32.mrb[0].mxu0
      %v6793 = vpop.f32.mrb[0].mxu0
      %v6794 = vadd.f32 %v6650, %v6793
      %v6795 = vpop.f32.mrb[0].mxu0
      %6796 = vmatprep.mubr.bf16.mxu0 0
      %6797 = vmatmul.mubr.bf16.gmra.mrb[0].mxu0 %v6571
      %v6798 = vpop.f32.mrb[0].mxu0
      %v6799 = vadd.f32 %v6650, %v6798
      %v6800 = vpop.f32.mrb[0].mxu0
      %v6801 = vpop.f32.mrb[0].mxu0
      %v6802 = vadd.f32 %v6650, %v6801
      %v6803 = vpop.f32.mrb[0].mxu0
      %6804 = vmatprep.mubr.bf16.mxu0 0
      %6805 = vmatmul.mubr.bf16.gmra.mrb[0].mxu0 %v6572
      %v6806 = vpop.f32.mrb[0].mxu0
      %v6807 = vadd.f32 %v6650, %v6806
      %v6808 = vpop.f32.mrb[0].mxu0
      %v6809 = vpop.f32.mrb[0].mxu0
      %v6810 = vadd.f32 %v6650, %v6809
      %v6811 = vpop.f32.mrb[0].mxu0
      %6812 = vmatprep.mubr.bf16.mxu0 0
      %6813 = vmatmul.mubr.bf16.gmra.mrb[0].mxu0 %v6573
      %v6814 = vpop.f32.mrb[0].mxu0
      %v6815 = vadd.f32 %v6650, %v6814
      %v6816 = vpop.f32.mrb[0].mxu0
      %v6817 = vpop.f32.mrb[0].mxu0
      %v6818 = vadd.f32 %v6650, %v6817
      %v6819 = vpop.f32.mrb[0].mxu0
      %6820 = vmatprep.mubr.bf16.mxu0 0
      %6821 = vmatmul.mubr.bf16.gmra.mrb[0].mxu0 %v6574
      %v6822 = vpop.f32.mrb[0].mxu0
      %v6823 = vadd.f32 %v6650, %v6822
      %v6824 = vpop.f32.mrb[0].mxu0
      %v6825 = vpop.f32.mrb[0].mxu0
      %v6826 = vadd.f32 %v6650, %v6825
      %v6827 = vpop.f32.mrb[0].mxu0
      %6828 = vmatprep.mubr.bf16.mxu0 0
      %6829 = vmatmul.mubr.bf16.gmra.mrb[0].mxu0 %v6575
      %v6830 = vpop.f32.mrb[0].mxu0
      %v6831 = vadd.f32 %v6650, %v6830
      %v6832 = vpop.f32.mrb[0].mxu0
      %v6833 = vpop.f32.mrb[0].mxu0
      %v6834 = vadd.f32 %v6650, %v6833
      %v6835 = vpop.f32.mrb[0].mxu0
      %6836 = vmatprep.mubr.bf16.mxu0 0
      %6837 = vmatmul.mubr.bf16.gmra.mrb[0].mxu0 %v6576
      %v6838 = vpop.f32.mrb[0].mxu0
      %v6839 = vadd.f32 %v6650, %v6838
      %v6840 = vpop.f32.mrb[0].mxu0
      %v6841 = vpop.f32.mrb[0].mxu0
      %v6842 = vadd.f32 %v6650, %v6841
      %v6843 = vpop.f32.mrb[0].mxu0
      %6844 = vmatprep.mubr.bf16.mxu0 0
      %6845 = vmatmul.mubr.bf16.gmra.mrb[0].mxu0 %v6577
      %v6846 = vpop.f32.mrb[0].mxu0
      %v6847 = vadd.f32 %v6650, %v6846
      %v6848 = vpop.f32.mrb[0].mxu0
      %v6849 = vpop.f32.mrb[0].mxu0
      %v6850 = vadd.f32 %v6650, %v6849
      %v6851 = vpop.f32.mrb[0].mxu0
      %6852 = vmatprep.mubr.bf16.mxu0 0
      %6853 = vmatmul.mubr.bf16.gmra.mrb[0].mxu0 %v6578
      %v6854 = vpop.f32.mrb[0].mxu0
      %v6855 = vadd.f32 %v6650, %v6854
      %v6856 = vpop.f32.mrb[0].mxu0
      %v6857 = vpop.f32.mrb[0].mxu0
      %v6858 = vadd.f32 %v6650, %v6857
      %v6859 = vpop.f32.mrb[0].mxu0
      %6860 = vmatprep.mubr.bf16.mxu0 0
      %6861 = vmatmul.mubr.bf16.gmra.mrb[0].mxu0 %v6579
      %v6862 = vpop.f32.mrb[0].mxu0
      %v6863 = vadd.f32 %v6650, %v6862
      %v6864 = vpop.f32.mrb[0].mxu0
      %v6865 = vpop.f32.mrb[0].mxu0
      %v6866 = vadd.f32 %v6650, %v6865
      %v6867 = vpop.f32.mrb[0].mxu0
      %6868 = vmatprep.mubr.bf16.mxu0 0
      %6869 = vmatmul.mubr.bf16.gmra.mrb[0].mxu0 %v6580
      %v6870 = vpop.f32.mrb[0].mxu0
      %v6871 = vadd.f32 %v6650, %v6870
      %v6872 = vpop.f32.mrb[0].mxu0
      %v6873 = vpop.f32.mrb[0].mxu0
      %v6874 = vadd.f32 %v6650, %v6873
      %v6875 = vpop.f32.mrb[0].mxu0
      %6876 = vmatprep.mubr.bf16.mxu0 0
      %6877 = vmatmul.mubr.bf16.gmra.mrb[0].mxu0 %v6581
      %v6878 = vpop.f32.mrb[0].mxu0
      %v6879 = vadd.f32 %v6650, %v6878
      %v6880 = vpop.f32.mrb[0].mxu0
      %v6881 = vpop.f32.mrb[0].mxu0
      %v6882 = vadd.f32 %v6650, %v6881
      %v6883 = vpop.f32.mrb[0].mxu0
      %6884 = vmatprep.mubr.bf16.mxu0 0
      %6885 = vmatmul.mubr.bf16.gmra.mrb[0].mxu0 %v6582
      %v6886 = vpop.f32.mrb[0].mxu0
      %v6887 = vadd.f32 %v6650, %v6886
      %v6888 = vpop.f32.mrb[0].mxu0
      %v6889 = vpop.f32.mrb[0].mxu0
      %v6890 = vadd.f32 %v6650, %v6889
      %v6891 = vpop.f32.mrb[0].mxu0
      %6892 = vmatprep.mubr.bf16.mxu0 0
      %6893 = vmatmul.mubr.bf16.gmra.mrb[0].mxu0 %v6583
      %v6894 = vpop.f32.mrb[0].mxu0
      %v6895 = vadd.f32 %v6650, %v6894
      %v6896 = vpop.f32.mrb[0].mxu0
      %v6897 = vpop.f32.mrb[0].mxu0
      %v6898 = vadd.f32 %v6650, %v6897
      %v6899 = vpop.f32.mrb[0].mxu0
      %6900 = vmatprep.mubr.bf16.mxu0 0
      %6901 = vmatmul.mubr.bf16.gmra.mrb[0].mxu0 %v6584
      %v6902 = vpop.f32.mrb[0].mxu0
      %v6903 = vadd.f32 %v6650, %v6902
      %v6904 = vpop.f32.mrb[0].mxu0
      %v6905 = vpop.f32.mrb[0].mxu0
      %v6906 = vadd.f32 %v6650, %v6905
      %v6907 = vpop.f32.mrb[0].mxu0
      %6908 = vmatprep.mubr.bf16.mxu0 0
      %6909 = vmatmul.mubr.bf16.gmra.mrb[0].mxu0 %v6585
      %v6910 = vpop.f32.mrb[0].mxu0
      %v6911 = vadd.f32 %v6650, %v6910
      %v6912 = vpop.f32.mrb[0].mxu0
      %v6913 = vpop.f32.mrb[0].mxu0
      %v6914 = vadd.f32 %v6650, %v6913
      %v6915 = vpop.f32.mrb[0].mxu0
      %6916 = vmatprep.mubr.bf16.mxu0 0
      %6917 = vmatmul.mubr.bf16.gmra.mrb[0].mxu0 %v6586
      %v6918 = vpop.f32.mrb[0].mxu0
      %v6919 = vadd.f32 %v6650, %v6918
      %v6920 = vpop.f32.mrb[0].mxu0
      %v6921 = vpop.f32.mrb[0].mxu0
      %v6922 = vadd.f32 %v6650, %v6921
      %v6923 = vpop.f32.mrb[0].mxu0
      %6924 = vmatprep.mubr.bf16.mxu0 0
      %6925 = vmatmul.mubr.bf16.gmra.mrb[0].mxu0 %v6587
      %v6926 = vpop.f32.mrb[0].mxu0
      %v6927 = vadd.f32 %v6650, %v6926
      %v6928 = vpop.f32.mrb[0].mxu0
      %v6929 = vpop.f32.mrb[0].mxu0
      %v6930 = vadd.f32 %v6650, %v6929
      %v6931 = vpop.f32.mrb[0].mxu0
      %6932 = vmatprep.mubr.bf16.mxu0 0
      %6933 = vmatmul.mubr.bf16.gmra.mrb[0].mxu0 %v6588
      %v6934 = vpop.f32.mrb[0].mxu0
      %v6935 = vadd.f32 %v6650, %v6934
      %v6936 = vpop.f32.mrb[0].mxu0
      %v6937 = vpop.f32.mrb[0].mxu0
      %v6938 = vadd.f32 %v6650, %v6937
      %v6939 = vpop.f32.mrb[0].mxu0
      %6940 = vmatprep.mubr.bf16.mxu0 0
      %6941 = vmatmul.mubr.bf16.gmra.mrb[0].mxu0 %v6589
      %v6942 = vpop.f32.mrb[0].mxu0
      %v6943 = vadd.f32 %v6650, %v6942
      %v6944 = vpop.f32.mrb[0].mxu0
      %v6945 = vpop.f32.mrb[0].mxu0
      %v6946 = vadd.f32 %v6650, %v6945
      %v6947 = vpop.f32.mrb[0].mxu0
      %6948 = vmatprep.mubr.bf16.mxu0 0
      %6949 = vmatmul.mubr.bf16.gmra.mrb[0].mxu0 %v6590
      %v6950 = vpop.f32.mrb[0].mxu0
      %v6951 = vadd.f32 %v6650, %v6950
      %v6952 = vpop.f32.mrb[0].mxu0
      %v6953 = vpop.f32.mrb[0].mxu0
      %v6954 = vadd.f32 %v6650, %v6953
      %v6955 = vpop.f32.mrb[0].mxu0
      %6956 = vmatprep.mubr.bf16.mxu0 0
      %6957 = vmatmul.mubr.bf16.gmra.mrb[0].mxu0 %v6591
      %v6958 = vpop.f32.mrb[0].mxu0
      %v6959 = vadd.f32 %v6650, %v6958
      %v6960 = vpop.f32.mrb[0].mxu0
      %v6961 = vpop.f32.mrb[0].mxu0
      %v6962 = vadd.f32 %v6650, %v6961
      %v6963 = vpop.f32.mrb[0].mxu0
      %6964 = vmatprep.mubr.bf16.mxu0 0
      %6965 = vmatmul.mubr.bf16.gmra.mrb[0].mxu0 %v6592
      %v6966 = vpop.f32.mrb[0].mxu0
      %v6967 = vadd.f32 %v6650, %v6966
      %v6968 = vpop.f32.mrb[0].mxu0
      %v6969 = vpop.f32.mrb[0].mxu0
      %v6970 = vadd.f32 %v6650, %v6969
      %v6971 = vpop.f32.mrb[0].mxu0
      %6972 = vmatprep.mubr.bf16.mxu0 0
      %6973 = vmatmul.mubr.bf16.gmra.mrb[0].mxu0 %v6593
      %v6974 = vpop.f32.mrb[0].mxu0
      %v6975 = vadd.f32 %v6650, %v6974
      %v6976 = vpop.f32.mrb[0].mxu0
      %v6977 = vpop.f32.mrb[0].mxu0
      %v6978 = vadd.f32 %v6650, %v6977
      %v6979 = vpop.f32.mrb[0].mxu0
      %6980 = vmatprep.mubr.bf16.mxu0 0
      %6981 = vmatmul.mubr.bf16.gmra.mrb[0].mxu0 %v6594
      %v6982 = vpop.f32.mrb[0].mxu0
      %v6983 = vadd.f32 %v6650, %v6982
      %v6984 = vpop.f32.mrb[0].mxu0
      %v6985 = vpop.f32.mrb[0].mxu0
      %v6986 = vadd.f32 %v6650, %v6985
      %v6987 = vpop.f32.mrb[0].mxu0
      %6988 = vmatprep.mubr.bf16.mxu0 0
      %6989 = vmatmul.mubr.bf16.gmra.mrb[0].mxu0 %v6595
      %v6990 = vpop.f32.mrb[0].mxu0
      %v6991 = vadd.f32 %v6650, %v6990
      %v6992 = vpop.f32.mrb[0].mxu0
      %v6993 = vpop.f32.mrb[0].mxu0
      %v6994 = vadd.f32 %v6650, %v6993
      %v6995 = vpop.f32.mrb[0].mxu0
      %6996 = vmatprep.mubr.bf16.mxu0 0
      %6997 = vmatmul.mubr.bf16.gmra.mrb[0].mxu0 %v6596
      %v6998 = vpop.f32.mrb[0].mxu0
      %v6999 = vadd.f32 %v6650, %v6998
      %v7000 = vpop.f32.mrb[0].mxu0
      %v7001 = vpop.f32.mrb[0].mxu0
      %v7002 = vadd.f32 %v6650, %v7001
      %v7003 = vpop.f32.mrb[0].mxu0
      %7004 = vmatprep.mubr.bf16.mxu0 0
      %7005 = vmatmul.mubr.bf16.gmra.mrb[0].mxu0 %v6597
      %v7006 = vpop.f32.mrb[0].mxu0
      %v7007 = vadd.f32 %v6650, %v7006
      %v7008 = vpop.f32.mrb[0].mxu0
      %v7009 = vpop.f32.mrb[0].mxu0
      %v7010 = vadd.f32 %v6650, %v7009
      %v7011 = vpop.f32.mrb[0].mxu0
      %7012 = vmatprep.mubr.bf16.mxu0 0
      %7013 = vmatmul.mubr.bf16.gmra.mrb[0].mxu0 %v6598
      %v7014 = vpop.f32.mrb[0].mxu0
      %v7015 = vadd.f32 %v6650, %v7014
      %v7016 = vpop.f32.mrb[0].mxu0
      %v7017 = vpop.f32.mrb[0].mxu0
      %v7018 = vadd.f32 %v6650, %v7017
      %v7019 = vpop.f32.mrb[0].mxu0
      %7020 = vmatprep.mubr.bf16.mxu0 0
      %7021 = vmatmul.mubr.bf16.gmra.mrb[0].mxu0 %v6599
      %v7022 = vpop.f32.mrb[0].mxu0
      %v7023 = vadd.f32 %v6650, %v7022
      %v7024 = vpop.f32.mrb[0].mxu0
      %v7025 = vpop.f32.mrb[0].mxu0
      %v7026 = vadd.f32 %v6650, %v7025
      %v7027 = vpop.f32.mrb[0].mxu0
      %7028 = vmatprep.mubr.bf16.mxu0 0
      %7029 = vmatmul.mubr.bf16.gmra.mrb[0].mxu0 %v6600
      %v7030 = vpop.f32.mrb[0].mxu0
      %v7031 = vadd.f32 %v6650, %v7030
      %v7032 = vpop.f32.mrb[0].mxu0
      %v7033 = vpop.f32.mrb[0].mxu0
      %v7034 = vadd.f32 %v6650, %v7033
      %v7035 = vpop.f32.mrb[0].mxu0
      %7036 = vmatprep.mubr.bf16.mxu0 0
      %7037 = vmatmul.mubr.bf16.gmra.mrb[0].mxu0 %v6601
      %v7038 = vpop.f32.mrb[0].mxu0
      %v7039 = vadd.f32 %v6650, %v7038
      %v7040 = vpop.f32.mrb[0].mxu0
      %v7041 = vpop.f32.mrb[0].mxu0
      %v7042 = vadd.f32 %v6650, %v7041
      %v7043 = vpop.f32.mrb[0].mxu0
      %7044 = vmatprep.mubr.bf16.mxu0 0
      %7045 = vmatmul.mubr.bf16.gmra.mrb[0].mxu0 %v6602
      %v7046 = vpop.f32.mrb[0].mxu0
      %v7047 = vadd.f32 %v6650, %v7046
      %v7048 = vpop.f32.mrb[0].mxu0
      %v7049 = vpop.f32.mrb[0].mxu0
      %v7050 = vadd.f32 %v6650, %v7049
      %v7051 = vpop.f32.mrb[0].mxu0
      %7052 = vmatprep.mubr.bf16.mxu0 0
      %7053 = vmatmul.mubr.bf16.gmra.mrb[0].mxu0 %v6603
      %v7054 = vpop.f32.mrb[0].mxu0
      %v7055 = vadd.f32 %v6650, %v7054
      %v7056 = vpop.f32.mrb[0].mxu0
      %v7057 = vpop.f32.mrb[0].mxu0
      %v7058 = vadd.f32 %v6650, %v7057
      %v7059 = vpop.f32.mrb[0].mxu0
      %7060 = vmatprep.mubr.bf16.mxu0 0
      %7061 = vmatmul.mubr.bf16.gmra.mrb[0].mxu0 %v6604
      %v7062 = vpop.f32.mrb[0].mxu0
      %v7063 = vadd.f32 %v6650, %v7062
      %v7064 = vpop.f32.mrb[0].mxu0
      %v7065 = vpop.f32.mrb[0].mxu0
      %v7066 = vadd.f32 %v6650, %v7065
      %v7067 = vpop.f32.mrb[0].mxu0
      %7068 = vmatprep.mubr.bf16.mxu0 0
      %7069 = vmatmul.mubr.bf16.gmra.mrb[0].mxu0 %v6605
      %v7070 = vpop.f32.mrb[0].mxu0
      %v7071 = vadd.f32 %v6650, %v7070
      %v7072 = vpop.f32.mrb[0].mxu0
      %v7073 = vpop.f32.mrb[0].mxu0
      %v7074 = vadd.f32 %v6650, %v7073
      %v7075 = vpop.f32.mrb[0].mxu0
      %7076 = vmatprep.mubr.bf16.mxu0 0
      %7077 = vmatmul.mubr.bf16.gmra.mrb[0].mxu0 %v6606
      %v7078 = vpop.f32.mrb[0].mxu0
      %v7079 = vadd.f32 %v6650, %v7078
      %v7080 = vpop.f32.mrb[0].mxu0
      %v7081 = vpop.f32.mrb[0].mxu0
      %v7082 = vadd.f32 %v6650, %v7081
      %v7083 = vpop.f32.mrb[0].mxu0
      %7084 = vmatprep.mubr.bf16.mxu0 0
      %7085 = vmatmul.mubr.bf16.gmra.mrb[0].mxu0 %v6607
      %v7086 = vpop.f32.mrb[0].mxu0
      %v7087 = vadd.f32 %v6650, %v7086
      %v7088 = vpop.f32.mrb[0].mxu0
      %v7089 = vpop.f32.mrb[0].mxu0
      %v7090 = vadd.f32 %v6650, %v7089
      %v7091 = vpop.f32.mrb[0].mxu0
      %7092 = vmatprep.mubr.bf16.mxu0 0
      %7093 = vmatmul.mubr.bf16.gmra.mrb[0].mxu0 %v6608
      %v7094 = vpop.f32.mrb[0].mxu0
      %v7095 = vadd.f32 %v6650, %v7094
      %v7096 = vpop.f32.mrb[0].mxu0
      %v7097 = vpop.f32.mrb[0].mxu0
      %v7098 = vadd.f32 %v6650, %v7097
      %v7099 = vpop.f32.mrb[0].mxu0
      %7100 = vmatprep.mubr.bf16.mxu0 0
      %7101 = vmatmul.mubr.bf16.gmra.mrb[0].mxu0 %v6609
      %v7102 = vpop.f32.mrb[0].mxu0
      %v7103 = vadd.f32 %v6650, %v7102
      %v7104 = vpop.f32.mrb[0].mxu0
      %v7105 = vpop.f32.mrb[0].mxu0
      %v7106 = vadd.f32 %v6650, %v7105
      %v7107 = vpop.f32.mrb[0].mxu0
      %7108 = vmatprep.mubr.bf16.mxu0 0
      %7109 = vmatmul.mubr.bf16.gmra.mrb[0].mxu0 %v6610
      %v7110 = vpop.f32.mrb[0].mxu0
      %v7111 = vadd.f32 %v6650, %v7110
      %v7112 = vpop.f32.mrb[0].mxu0
      %v7113 = vpop.f32.mrb[0].mxu0
      %v7114 = vadd.f32 %v6650, %v7113
      %v7115 = vpop.f32.mrb[0].mxu0
      %7116 = vmatprep.mubr.bf16.mxu0 0
      %7117 = vmatmul.mubr.bf16.gmra.mrb[0].mxu0 %v6611
      %v7118 = vpop.f32.mrb[0].mxu0
      %v7119 = vadd.f32 %v6650, %v7118
      %v7120 = vpop.f32.mrb[0].mxu0
      %v7121 = vpop.f32.mrb[0].mxu0
      %v7122 = vadd.f32 %v6650, %v7121
      %v7123 = vpop.f32.mrb[0].mxu0
      %7124 = vmatprep.mubr.bf16.mxu0 0
      %7125 = vmatmul.mubr.bf16.gmra.mrb[0].mxu0 %v6612
      %v7126 = vpop.f32.mrb[0].mxu0
      %v7127 = vadd.f32 %v6650, %v7126
      %v7128 = vpop.f32.mrb[0].mxu0
      %v7129 = vpop.f32.mrb[0].mxu0
      %v7130 = vadd.f32 %v6650, %v7129
      %v7131 = vpop.f32.mrb[0].mxu0
      %7132 = vmatprep.mubr.bf16.mxu0 0
      %7133 = vmatmul.mubr.bf16.gmra.mrb[0].mxu0 %v6613
      %v7134 = vpop.f32.mrb[0].mxu0
      %v7135 = vadd.f32 %v6650, %v7134
      %v7136 = vpop.f32.mrb[0].mxu0
      %v7137 = vpop.f32.mrb[0].mxu0
      %v7138 = vadd.f32 %v6650, %v7137
      %v7139 = vpop.f32.mrb[0].mxu0
      %7140 = vmatprep.mubr.bf16.mxu0 0
      %7141 = vmatmul.mubr.bf16.gmra.mrb[0].mxu0 %v6614
      %v7142 = vpop.f32.mrb[0].mxu0
      %v7143 = vadd.f32 %v6650, %v7142
      %v7144 = vpop.f32.mrb[0].mxu0
      %v7145 = vpop.f32.mrb[0].mxu0
      %v7146 = vadd.f32 %v6650, %v7145
      %v7147 = vpop.f32.mrb[0].mxu0
      %7148 = vmatprep.mubr.bf16.mxu0 0
      %7149 = vmatmul.mubr.bf16.gmra.mrb[0].mxu0 %v6615
      %v7150 = vpop.f32.mrb[0].mxu0
      %v7151 = vadd.f32 %v6650, %v7150
      %v7152 = vpop.f32.mrb[0].mxu0
      %v7153 = vpop.f32.mrb[0].mxu0
      %v7154 = vadd.f32 %v6650, %v7153
      %v7155 = vpop.f32.mrb[0].mxu0
      %7156 = vmatprep.mubr.bf16.mxu0 0
      %7157 = vmatmul.mubr.bf16.gmra.mrb[0].mxu0 %v6616
      %v7158 = vpop.f32.mrb[0].mxu0
      %v7159 = vadd.f32 %v6650, %v7158
      %v7160 = vpop.f32.mrb[0].mxu0
      %v7161 = vpop.f32.mrb[0].mxu0
      %v7162 = vadd.f32 %v6650, %v7161
      %v7163 = vpop.f32.mrb[0].mxu0
      %7164 = vmatprep.mubr.bf16.mxu0 0
      %7165 = vmatmul.mubr.bf16.gmra.mrb[0].mxu0 %v6617
      %v7166 = vpop.f32.mrb[0].mxu0
      %v7167 = vadd.f32 %v6650, %v7166
      %v7168 = vpop.f32.mrb[0].mxu0
      %v7169 = vpop.f32.mrb[0].mxu0
      %v7170 = vadd.f32 %v6650, %v7169
      %v7171 = vpop.f32.mrb[0].mxu0
      %7172 = vmatprep.mubr.bf16.mxu0 0
      %7173 = vmatmul.mubr.bf16.gmra.mrb[0].mxu0 %v6618
      %v7174 = vpop.f32.mrb[0].mxu0
      %v7175 = vadd.f32 %v6650, %v7174
      %v7176 = vpop.f32.mrb[0].mxu0
      %v7177 = vpop.f32.mrb[0].mxu0
      %v7178 = vadd.f32 %v6650, %v7177
      %v7179 = vpop.f32.mrb[0].mxu0
      %7180 = vmatprep.mubr.bf16.mxu0 0
      %7181 = vmatmul.mubr.bf16.gmra.mrb[0].mxu0 %v6619
      %v7182 = vpop.f32.mrb[0].mxu0
      %v7183 = vadd.f32 %v6650, %v7182
      %v7184 = vpop.f32.mrb[0].mxu0
      %v7185 = vpop.f32.mrb[0].mxu0
      %v7186 = vadd.f32 %v6650, %v7185
      %v7187 = vpop.f32.mrb[0].mxu0
      %7188 = vmatprep.mubr.bf16.mxu0 0
      %7189 = vmatmul.mubr.bf16.gmra.mrb[0].mxu0 %v6620
      %v7190 = vpop.f32.mrb[0].mxu0
      %v7191 = vadd.f32 %v6650, %v7190
      %v7192 = vpop.f32.mrb[0].mxu0
      %v7193 = vpop.f32.mrb[0].mxu0
      %v7194 = vadd.f32 %v6650, %v7193
      %v7195 = vpop.f32.mrb[0].mxu0
      %7196 = vmatprep.mubr.bf16.mxu0 0
      %7197 = vmatmul.mubr.bf16.gmra.mrb[0].mxu0 %v6621
      %v7198 = vpop.f32.mrb[0].mxu0
      %v7199 = vadd.f32 %v6650, %v7198
      %v7200 = vpop.f32.mrb[0].mxu0
      %v7201 = vpop.f32.mrb[0].mxu0
      %v7202 = vadd.f32 %v6650, %v7201
      %v7203 = vpop.f32.mrb[0].mxu0
      %7204 = vmatprep.mubr.bf16.mxu0 0
      %7205 = vmatmul.mubr.bf16.gmra.mrb[0].mxu0 %v6622
      %v7206 = vpop.f32.mrb[0].mxu0
      %v7207 = vadd.f32 %v6650, %v7206
      %v7208 = vpop.f32.mrb[0].mxu0
      %v7209 = vpop.f32.mrb[0].mxu0
      %v7210 = vadd.f32 %v6650, %v7209
      %v7211 = vpop.f32.mrb[0].mxu0
      %7212 = vmatprep.mubr.bf16.mxu0 0
      %7213 = vmatmul.mubr.bf16.gmra.mrb[0].mxu0 %v6623
      %v7214 = vpop.f32.mrb[0].mxu0
      %v7215 = vadd.f32 %v6650, %v7214
      %v7216 = vpop.f32.mrb[0].mxu0
      %v7217 = vpop.f32.mrb[0].mxu0
      %v7218 = vadd.f32 %v6650, %v7217
      %v7219 = vpop.f32.mrb[0].mxu0
      %7220 = vmatprep.mubr.bf16.mxu0 0
      %7221 = vmatmul.mubr.bf16.gmra.mrb[0].mxu0 %v6624
      %v7222 = vpop.f32.mrb[0].mxu0
      %v7223 = vadd.f32 %v6650, %v7222
      %v7224 = vpop.f32.mrb[0].mxu0
      %v7225 = vpop.f32.mrb[0].mxu0
      %v7226 = vadd.f32 %v6650, %v7225
      %v7227 = vpop.f32.mrb[0].mxu0
      %7228 = vmatprep.mubr.bf16.mxu0 0
      %7229 = vmatmul.mubr.bf16.gmra.mrb[0].mxu0 %v6625
      %v7230 = vpop.f32.mrb[0].mxu0
      %v7231 = vadd.f32 %v6650, %v7230
      %v7232 = vpop.f32.mrb[0].mxu0
      %v7233 = vpop.f32.mrb[0].mxu0
      %v7234 = vadd.f32 %v6650, %v7233
      %v7235 = vpop.f32.mrb[0].mxu0
      %7236 = vmatprep.mubr.bf16.mxu0 0
      %7237 = vmatmul.mubr.bf16.gmra.mrb[0].mxu0 %v6626
      %v7238 = vpop.f32.mrb[0].mxu0
      %v7239 = vadd.f32 %v6650, %v7238
      %v7240 = vpop.f32.mrb[0].mxu0
      %v7241 = vpop.f32.mrb[0].mxu0
      %v7242 = vadd.f32 %v6650, %v7241
      %v7243 = vpop.f32.mrb[0].mxu0
      %7244 = vdwg.mxu0
      %7245 = vst.msk [vmem:[%s248] sm:$0xff] %vm638, %v6735
      %7246 = vst.msk [vmem:[%s248 + $0x8] sm:$0xff] %vm638, %v6738
      %7247 = vst.msk [vmem:[%s248 + $0x10] sm:$0xff] %vm638, %v6743
      %7248 = vst.msk [vmem:[%s248 + $0x18] sm:$0xff] %vm638, %v6746
      %7249 = vst.msk [vmem:[%s248 + $0x20] sm:$0xff] %vm638, %v6751
      %7250 = vst.msk [vmem:[%s248 + $0x28] sm:$0xff] %vm638, %v6754
      %7251 = vst.msk [vmem:[%s248 + $0x30] sm:$0xff] %vm638, %v6759
      %7252 = vst.msk [vmem:[%s248 + $0x38] sm:$0xff] %vm638, %v6762
      %7253 = vst.msk [vmem:[%s248 + $0x40] sm:$0xff] %vm638, %v6767
      %7254 = vst.msk [vmem:[%s248 + $0x48] sm:$0xff] %vm638, %v6770
      %7255 = vst.msk [vmem:[%s248 + $0x50] sm:$0xff] %vm638, %v6775
      %7256 = vst.msk [vmem:[%s248 + $0x58] sm:$0xff] %vm638, %v6778
      %7257 = vst.msk [vmem:[%s248 + $0x60] sm:$0xff] %vm638, %v6783
      %7258 = vst.msk [vmem:[%s248 + $0x68] sm:$0xff] %vm638, %v6786
      %7259 = vst.msk [vmem:[%s248 + $0x70] sm:$0xff] %vm638, %v6791
      %7260 = vst.msk [vmem:[%s248 + $0x78] sm:$0xff] %vm638, %v6794
      %7261 = vst.msk [vmem:[%s248 + $0x80] sm:$0xff] %vm638, %v6799
      %7262 = vst.msk [vmem:[%s248 + $0x88] sm:$0xff] %vm638, %v6802
      %7263 = vst.msk [vmem:[%s248 + $0x90] sm:$0xff] %vm638, %v6807
      %7264 = vst.msk [vmem:[%s248 + $0x98] sm:$0xff] %vm638, %v6810
      %7265 = vst.msk [vmem:[%s248 + $0xa0] sm:$0xff] %vm638, %v6815
      %7266 = vst.msk [vmem:[%s248 + $0xa8] sm:$0xff] %vm638, %v6818
      %7267 = vst.msk [vmem:[%s248 + $0xb0] sm:$0xff] %vm638, %v6823
      %7268 = vst.msk [vmem:[%s248 + $0xb8] sm:$0xff] %vm638, %v6826
      %7269 = vst.msk [vmem:[%s248 + $0xc0] sm:$0xff] %vm638, %v6831
      %7270 = vst.msk [vmem:[%s248 + $0xc8] sm:$0xff] %vm638, %v6834
      %7271 = vst.msk [vmem:[%s248 + $0xd0] sm:$0xff] %vm638, %v6839
      %7272 = vst.msk [vmem:[%s248 + $0xd8] sm:$0xff] %vm638, %v6842
      %7273 = vst.msk [vmem:[%s248 + $0xe0] sm:$0xff] %vm638, %v6847
      %7274 = vst.msk [vmem:[%s248 + $0xe8] sm:$0xff] %vm638, %v6850
      %7275 = vst.msk [vmem:[%s248 + $0xf0] sm:$0xff] %vm638, %v6855
      %7276 = vst.msk [vmem:[%s248 + $0xf8] sm:$0xff] %vm638, %v6858
      %7277 = vst.msk [vmem:[%s248 + $0x100] sm:$0xff] %vm638, %v6863
      %7278 = vst.msk [vmem:[%s248 + $0x108] sm:$0xff] %vm638, %v6866
      %7279 = vst.msk [vmem:[%s248 + $0x110] sm:$0xff] %vm638, %v6871
      %7280 = vst.msk [vmem:[%s248 + $0x118] sm:$0xff] %vm638, %v6874
      %7281 = vst.msk [vmem:[%s248 + $0x120] sm:$0xff] %vm638, %v6879
      %7282 = vst.msk [vmem:[%s248 + $0x128] sm:$0xff] %vm638, %v6882
      %7283 = vst.msk [vmem:[%s248 + $0x130] sm:$0xff] %vm638, %v6887
      %7284 = vst.msk [vmem:[%s248 + $0x138] sm:$0xff] %vm638, %v6890
      %7285 = vst.msk [vmem:[%s248 + $0x140] sm:$0xff] %vm638, %v6895
      %7286 = vst.msk [vmem:[%s248 + $0x148] sm:$0xff] %vm638, %v6898
      %7287 = vst.msk [vmem:[%s248 + $0x150] sm:$0xff] %vm638, %v6903
      %7288 = vst.msk [vmem:[%s248 + $0x158] sm:$0xff] %vm638, %v6906
      %7289 = vst.msk [vmem:[%s248 + $0x160] sm:$0xff] %vm638, %v6911
      %7290 = vst.msk [vmem:[%s248 + $0x168] sm:$0xff] %vm638, %v6914
      %7291 = vst.msk [vmem:[%s248 + $0x170] sm:$0xff] %vm638, %v6919
      %7292 = vst.msk [vmem:[%s248 + $0x178] sm:$0xff] %vm638, %v6922
      %7293 = vst.msk [vmem:[%s248 + $0x180] sm:$0xff] %vm638, %v6927
      %7294 = vst.msk [vmem:[%s248 + $0x188] sm:$0xff] %vm638, %v6930
      %7295 = vst.msk [vmem:[%s248 + $0x190] sm:$0xff] %vm638, %v6935
      %7296 = vst.msk [vmem:[%s248 + $0x198] sm:$0xff] %vm638, %v6938
      %7297 = vst.msk [vmem:[%s248 + $0x1a0] sm:$0xff] %vm638, %v6943
      %7298 = vst.msk [vmem:[%s248 + $0x1a8] sm:$0xff] %vm638, %v6946
      %7299 = vst.msk [vmem:[%s248 + $0x1b0] sm:$0xff] %vm638, %v6951
      %7300 = vst.msk [vmem:[%s248 + $0x1b8] sm:$0xff] %vm638, %v6954
      %7301 = vst.msk [vmem:[%s248 + $0x1c0] sm:$0xff] %vm638, %v6959
      %7302 = vst.msk [vmem:[%s248 + $0x1c8] sm:$0xff] %vm638, %v6962
      %7303 = vst.msk [vmem:[%s248 + $0x1d0] sm:$0xff] %vm638, %v6967
      %7304 = vst.msk [vmem:[%s248 + $0x1d8] sm:$0xff] %vm638, %v6970
      %7305 = vst.msk [vmem:[%s248 + $0x1e0] sm:$0xff] %vm638, %v6975
      %7306 = vst.msk [vmem:[%s248 + $0x1e8] sm:$0xff] %vm638, %v6978
      %7307 = vst.msk [vmem:[%s248 + $0x1f0] sm:$0xff] %vm638, %v6983
      %7308 = vst.msk [vmem:[%s248 + $0x1f8] sm:$0xff] %vm638, %v6986
      %7309 = vst.msk [vmem:[%s248 + $0x200] sm:$0xff] %vm638, %v6991
      %7310 = vst.msk [vmem:[%s248 + $0x208] sm:$0xff] %vm638, %v6994
      %7311 = vst.msk [vmem:[%s248 + $0x210] sm:$0xff] %vm638, %v6999
      %7312 = vst.msk [vmem:[%s248 + $0x218] sm:$0xff] %vm638, %v7002
      %7313 = vst.msk [vmem:[%s248 + $0x220] sm:$0xff] %vm638, %v7007
      %7314 = vst.msk [vmem:[%s248 + $0x228] sm:$0xff] %vm638, %v7010
      %7315 = vst.msk [vmem:[%s248 + $0x230] sm:$0xff] %vm638, %v7015
      %7316 = vst.msk [vmem:[%s248 + $0x238] sm:$0xff] %vm638, %v7018
      %7317 = vst.msk [vmem:[%s248 + $0x240] sm:$0xff] %vm638, %v7023
      %7318 = vst.msk [vmem:[%s248 + $0x248] sm:$0xff] %vm638, %v7026
      %7319 = vst.msk [vmem:[%s248 + $0x250] sm:$0xff] %vm638, %v7031
      %7320 = vst.msk [vmem:[%s248 + $0x258] sm:$0xff] %vm638, %v7034
      %7321 = vst.msk [vmem:[%s248 + $0x260] sm:$0xff] %vm638, %v7039
      %7322 = vst.msk [vmem:[%s248 + $0x268] sm:$0xff] %vm638, %v7042
      %7323 = vst.msk [vmem:[%s248 + $0x270] sm:$0xff] %vm638, %v7047
      %7324 = vst.msk [vmem:[%s248 + $0x278] sm:$0xff] %vm638, %v7050
      %7325 = vst.msk [vmem:[%s248 + $0x280] sm:$0xff] %vm638, %v7055
      %7326 = vst.msk [vmem:[%s248 + $0x288] sm:$0xff] %vm638, %v7058
      %7327 = vst.msk [vmem:[%s248 + $0x290] sm:$0xff] %vm638, %v7063
      %7328 = vst.msk [vmem:[%s248 + $0x298] sm:$0xff] %vm638, %v7066
      %7329 = vst.msk [vmem:[%s248 + $0x2a0] sm:$0xff] %vm638, %v7071
      %7330 = vst.msk [vmem:[%s248 + $0x2a8] sm:$0xff] %vm638, %v7074
      %7331 = vst.msk [vmem:[%s248 + $0x2b0] sm:$0xff] %vm638, %v7079
      %7332 = vst.msk [vmem:[%s248 + $0x2b8] sm:$0xff] %vm638, %v7082
      %7333 = vst.msk [vmem:[%s248 + $0x2c0] sm:$0xff] %vm638, %v7087
      %7334 = vst.msk [vmem:[%s248 + $0x2c8] sm:$0xff] %vm638, %v7090
      %7335 = vst.msk [vmem:[%s248 + $0x2d0] sm:$0xff] %vm638, %v7095
      %7336 = vst.msk [vmem:[%s248 + $0x2d8] sm:$0xff] %vm638, %v7098
      %7337 = vst.msk [vmem:[%s248 + $0x2e0] sm:$0xff] %vm638, %v7103
      %7338 = vst.msk [vmem:[%s248 + $0x2e8] sm:$0xff] %vm638, %v7106
      %7339 = vst.msk [vmem:[%s248 + $0x2f0] sm:$0xff] %vm638, %v7111
      %7340 = vst.msk [vmem:[%s248 + $0x2f8] sm:$0xff] %vm638, %v7114
      %7341 = vst.msk [vmem:[%s248 + $0x300] sm:$0xff] %vm638, %v7119
      %7342 = vst.msk [vmem:[%s248 + $0x308] sm:$0xff] %vm638, %v7122
      %7343 = vst.msk [vmem:[%s248 + $0x310] sm:$0xff] %vm638, %v7127
      %7344 = vst.msk [vmem:[%s248 + $0x318] sm:$0xff] %vm638, %v7130
      %7345 = vst.msk [vmem:[%s248 + $0x320] sm:$0xff] %vm638, %v7135
      %7346 = vst.msk [vmem:[%s248 + $0x328] sm:$0xff] %vm638, %v7138
      %7347 = vst.msk [vmem:[%s248 + $0x330] sm:$0xff] %vm638, %v7143
      %7348 = vst.msk [vmem:[%s248 + $0x338] sm:$0xff] %vm638, %v7146
      %7349 = vst.msk [vmem:[%s248 + $0x340] sm:$0xff] %vm638, %v7151
      %7350 = vst.msk [vmem:[%s248 + $0x348] sm:$0xff] %vm638, %v7154
      %7351 = vst.msk [vmem:[%s248 + $0x350] sm:$0xff] %vm638, %v7159
      %7352 = vst.msk [vmem:[%s248 + $0x358] sm:$0xff] %vm638, %v7162
      %7353 = vst.msk [vmem:[%s248 + $0x360] sm:$0xff] %vm638, %v7167
      %7354 = vst.msk [vmem:[%s248 + $0x368] sm:$0xff] %vm638, %v7170
      %7355 = vst.msk [vmem:[%s248 + $0x370] sm:$0xff] %vm638, %v7175
      %7356 = vst.msk [vmem:[%s248 + $0x378] sm:$0xff] %vm638, %v7178
      %7357 = vst.msk [vmem:[%s248 + $0x380] sm:$0xff] %vm638, %v7183
      %7358 = vst.msk [vmem:[%s248 + $0x388] sm:$0xff] %vm638, %v7186
      %7359 = vst.msk [vmem:[%s248 + $0x390] sm:$0xff] %vm638, %v7191
      %7360 = vst.msk [vmem:[%s248 + $0x398] sm:$0xff] %vm638, %v7194
      %7361 = vst.msk [vmem:[%s248 + $0x3a0] sm:$0xff] %vm638, %v7199
      %7362 = vst.msk [vmem:[%s248 + $0x3a8] sm:$0xff] %vm638, %v7202
      %7363 = vst.msk [vmem:[%s248 + $0x3b0] sm:$0xff] %vm638, %v7207
      %7364 = vst.msk [vmem:[%s248 + $0x3b8] sm:$0xff] %vm638, %v7210
      %7365 = vst.msk [vmem:[%s248 + $0x3c0] sm:$0xff] %vm638, %v7215
      %7366 = vst.msk [vmem:[%s248 + $0x3c8] sm:$0xff] %vm638, %v7218
      %7367 = vst.msk [vmem:[%s248 + $0x3d0] sm:$0xff] %vm638, %v7223
      %7368 = vst.msk [vmem:[%s248 + $0x3d8] sm:$0xff] %vm638, %v7226
      %7369 = vst.msk [vmem:[%s248 + $0x3e0] sm:$0xff] %vm638, %v7231
      %7370 = vst.msk [vmem:[%s248 + $0x3e8] sm:$0xff] %vm638, %v7234
      %7371 = vst.msk [vmem:[%s248 + $0x3f0] sm:$0xff] %vm638, %v7239
      %7372 = vst.msk [vmem:[%s248 + $0x3f8] sm:$0xff] %vm638, %v7242
      %s7373 = smul.u32 128, %s16
      %p7374 = scmp.lt.s32.totalorder %s7373, 255
      %s7375 = scalar_select %p7374, %s7373, 255
      %s7376 = smul.addr %s7375, 8
      %s7377 = scalar_lea.vmem %s5, %s7376
      // Predicated region
      $region41: #{tpu_custom_call.1} parent=39 // pred_check
        %p7378 = pneg %p149
      $region42: #{tpu_custom_call.1} parent=39 // pred_check_branch
        %7380 = sbr.rel (%p7378) target = $region44
      $region43: #{tpu_custom_call.1} parent=39 // pred_region
        %s7381 = smul.u32 128, %s16
      $region44: #{tpu_custom_call.1} parent=39 // pred_fallthru
        _
    $region40: #{tpu_custom_call.1} parent=5 // pred_fallthru
      _
    %p7382 = scmp.le.s32.totalorder 2, %s11
    // Predicated region
    $region45: #{tpu_custom_call.1} parent=5 // pred_check
      %p7383 = pneg %p7382
    $region46: #{tpu_custom_call.1} parent=5 // pred_check_branch
      %7385 = sbr.rel (%p7383) target = $region48
    $region47: #{tpu_custom_call.1} parent=5 // pred_region
      %s7386 = ssub.s32 %s11, 2
      // Predicated region
      $region49: #{tpu_custom_call.1} parent=47 // pred_check
        %p7387 = pneg %p155
      $region50: #{tpu_custom_call.1} parent=47 // pred_check_branch
        %7389 = sbr.rel (%p7387) target = $region52
      $region51: #{tpu_custom_call.1} parent=47 // pred_region
        %s7390 = smul.u32 128, %s17
        %p7391 = scmp.lt.s32.totalorder %s7390, 255
        %s7392 = scalar_select %p7391, %s7390, 255
        %s7393 = smul.addr %s7392, 8
        %s7394 = scalar_lea.vmem %s5, %s7393
      $region52: #{tpu_custom_call.1} parent=47 // pred_fallthru
        _
    $region48: #{tpu_custom_call.1} parent=5 // pred_fallthru
      _
  $region6: #{tpu_custom_call.1} parent=0 // loop_footer
    %s15 = sadd.s32 1, %s11
  $region7: #{tpu_custom_call.1} parent=0 // loop_footer_branch
    %10 = sbr.rel target = $region3
  $region8: #{tpu_custom_call.1} parent=0 // loop_exit
    _

</llo_original>
